<compile_context>
chip_gen: v7x
topology: tpu7x:2x2x1
jax: 0.10.0
libtpu: 0.0.40
codegen_flags: <defaults>
</compile_context>

<pallas_src>
import math
from functools import partial

import jax
import jax.numpy as jnp
import numpy as np
from jax.experimental import pallas as pl
from jax.experimental.pallas import tpu as pltpu


def _nsf_kernel(x_ref, f_ref, h_ref, out_ref, feat_ref, *, width):
    """Channels-first forward: activations are [C, tile_n] (points on lanes).

    x_ref    : (3, TN)      f32   point coordinates (channels-first tile)
    f_ref    : (2w, 128)    f32   packed slab: rank-1 (K=3) weights (lanes 0:3),
                                  biases (one lane-column each), final head
                                  weight (lanes 16:16+2w), output scale column
    h_ref    : (7w, 128)    bf16  packed slab: hidden-layer matmul weights
    out_ref  : (4, TN)      f32   rows 0:3 colors, row 3 displacement
    feat_ref : (2w, TN)     bf16  scratch: [sin(res); cos(res)]
    """
    w = width
    f32 = jnp.float32
    bf16 = jnp.bfloat16

    x = x_ref[...]                                            # (3, TN) f32

    # --- K=3 contractions on the VPU (rank-1 broadcast-FMA), not the MXU ----
    # rows 0:w  of f_ref[:, 0:3] = 2*pi*B^T  -> Fourier argument `res`
    # rows w:2w of f_ref[:, 0:3] = w0x^T     -> x-contribution to base Linear
    wk = f_ref[0:2 * w, 0:3]                                  # (2w, 3) f32
    t = (wk[:, 0:1] * x[0:1, :]
         + wk[:, 1:2] * x[1:2, :]
         + wk[:, 2:3] * x[2:3, :])                            # (2w, TN) f32
    res = t[0:w, :]
    hx = t[w:2 * w, :]

    # --- Fourier features (ProgressiveEncoding alphas are folded into the
    #     sin/cos columns of the first Linear, so sin/cos are stored raw) -----
    feat_ref[0:w, :] = jnp.sin(res).astype(bf16)
    feat_ref[w:2 * w, :] = jnp.cos(res).astype(bf16)

    # --- base[2]: Linear(2w+3, w) = one K=2w bf16 dot + VPU x-term + bias ----
    h = jnp.dot(h_ref[0:w, 0:2 * w], feat_ref[...],
                preferred_element_type=f32)                   # (w, TN)
    h = jnp.maximum(h + hx + f_ref[0:w, 3:4], 0.0)

    # --- base hidden layers (depth=2), bf16 operands / f32 accumulation ------
    h = jnp.maximum(jnp.dot(h_ref[w:2 * w, 0:w], h.astype(bf16),
                            preferred_element_type=f32) + f_ref[0:w, 4:5], 0.0)
    h = jnp.maximum(jnp.dot(h_ref[2 * w:3 * w, 0:w], h.astype(bf16),
                            preferred_element_type=f32) + f_ref[0:w, 5:6], 0.0)

    # --- fused rgb+normal heads: rows 0:w color branch, rows w:2w normal branch
    #     (layer 1 is block-diagonal so the branches stay independent) --------
    g = jnp.maximum(jnp.dot(h_ref[3 * w:5 * w, 0:w], h.astype(bf16),
                            preferred_element_type=f32) + f_ref[0:2 * w, 6:7], 0.0)
    g = jnp.maximum(jnp.dot(h_ref[5 * w:7 * w, 0:2 * w], g.astype(bf16),
                            preferred_element_type=f32) + f_ref[0:2 * w, 7:8], 0.0)

    # --- merged final layer (4, 2w); kept f32 (tiny, feeds tanh directly) ----
    o = jnp.dot(f_ref[0:4, 16:16 + 2 * w], g,
                preferred_element_type=f32) + f_ref[0:4, 8:9]

    # clamp == 'tanh' (rows 0:3 -> *0.5) / normclamp == 'tanh' (row 3 ->
    # *normratio); scale is a precomputed (4,1) column in the f32 slab.
    out_ref[...] = jnp.tanh(o) * f_ref[0:4, 9:10]


def _full_spec(arr):
    zeros = (0,) * arr.ndim
    return pl.BlockSpec(arr.shape, lambda i, _z=zeros: _z)   # whole slab resident


def neural_style_field(x, prepared, *, tile_n=8192):
    """x: (N, 3) points. Returns (colors (N, 3), displ (N, 1))."""
    N, d = x.shape
    w = prepared["width"]
    F = prepared["f32"]
    H = prepared["bf16"]

    # Generation-aware tiling:
    #  * single-TC chips (v5e/v6e): one big tile; forced multi-step grids only
    #    add ~0.35us/step of pure overhead.
    #  * megacore chips (v4/v5p/v7x): >=2 and EVEN step count so
    #    dimension_semantics=("parallel",) load-balances both TensorCores.
    kind = jax.devices()[0].device_kind.lower()
    multi_tc = any(tag in kind for tag in ("v4", "v5p", "7"))
    steps = max(1, pl.cdiv(N, int(tile_n)))
    if multi_tc:
        steps = max(2, steps + (steps % 2))
    tn = max(128, ((pl.cdiv(N, steps) + 127) // 128) * 128)
    n_pad = pl.cdiv(N, tn) * tn

    xp = x if n_pad == N else jnp.concatenate(
        [x, jnp.zeros((n_pad - N, d), x.dtype)], axis=0)
    # Channels-first kernel layout (points on the lane axis).  Transposes stay
    # in the wrapper: the kernel is compute-bound and an in-kernel (tn,3)->(3,tn)
    # relayout would add substantial XLU work; the output must stay (4, TN) in
    # the kernel to keep lane-dense (unmasked) stores.
    xt = xp.T                                                 # (3, n_pad)

    out = pl.pallas_call(
        partial(_nsf_kernel, width=w),
        grid=(n_pad // tn,),
        in_specs=[pl.BlockSpec((d, tn), lambda i: (0, i)),
                  _full_spec(F),
                  _full_spec(H)],
        out_specs=pl.BlockSpec((4, tn), lambda i: (0, i)),
        out_shape=jax.ShapeDtypeStruct((4, n_pad), jnp.float32),
        scratch_shapes=[pltpu.VMEM((2 * w, tn), jnp.bfloat16)],
        compiler_params=pltpu.CompilerParams(
            dimension_semantics=("parallel",),
            vmem_limit_bytes=32 * 1024 * 1024),
    )(xt, F, H)

    out = out.T                                               # (n_pad, 4)
    return out[:N, :3], out[:N, 3:4]


def init_params(key, *, input_dim=3, width=32, sigma=5.0, niter=6000, t=30):
    """Deterministic synthetic parameters matching the torch module's __init__ shapes."""
    keys = list(jax.random.split(key, 16))
    kit = iter(keys)

    # FourierFeatureTransform: B = randn(input_dim, width)*sigma, rows sorted by L2 norm
    B = jax.random.normal(next(kit), (input_dim, width), jnp.float32) * sigma
    B = B[jnp.argsort(jnp.linalg.norm(B, axis=1))]

    # ProgressiveEncoding alpha at fixed step t (the torch module increments _t per call)
    tau = 2.0 * width / niter
    idx = jnp.arange(width, dtype=jnp.float32)
    alpha = jnp.clip((t - tau * idx) / tau, 0.0, 1.0)
    a_sin = alpha.reshape(1, width)
    a_cos = alpha.reshape(1, width)

    def linear(k, fan_in, fan_out):
        kw, kb = jax.random.split(k)
        bound = 1.0 / math.sqrt(fan_in)
        wgt = jax.random.uniform(kw, (fan_in, fan_out), jnp.float32, -bound, bound)
        b = jax.random.uniform(kb, (1, fan_out), jnp.float32, -bound, bound)
        return wgt, b

    d0 = 2 * width + input_dim
    w0, b0 = linear(next(kit), d0, width)
    params = dict(B=B, a_sin=a_sin, a_cos=a_cos,
                  w0x=w0[:input_dim], w0s=w0[input_dim:input_dim + width],
                  w0c=w0[input_dim + width:], b0=b0)
    params["wb1"], params["bb1"] = linear(next(kit), width, width)
    params["wb2"], params["bb2"] = linear(next(kit), width, width)
    params["wc0"], params["bc0"] = linear(next(kit), width, width)
    params["wc1"], params["bc1"] = linear(next(kit), width, width)
    params["wc2"], params["bc2"] = linear(next(kit), width, 3)
    params["wn0"], params["bn0"] = linear(next(kit), width, width)
    params["wn1"], params["bn1"] = linear(next(kit), width, width)
    params["wn2"], params["bn2"] = linear(next(kit), width, 1)
    return params


def prepare_params(params, *, width=32, input_dim=3, normratio=0.1):
    """Fold constants, fuse heads, and pack everything into two resident slabs.

    f32 slab (2w, 128):
      rows 0:w  lanes 0:3  = 2*pi*B^T         rows w:2w lanes 0:3 = w0x^T
      lane 3 = b0, lane 4 = bb1, lane 5 = bb2,
      lane 6 = [bc0; bn0], lane 7 = [bc1; bn1],
      lane 8 rows 0:4 = [bc2; bn2], lane 9 rows 0:4 = (0.5,0.5,0.5,normratio),
      lanes 16:16+2w rows 0:4 = merged final layer [[wc2^T, 0],[0, wn2^T]].
    bf16 slab (7w, 128): w0_sin|w0_cos (alpha folded), wb1, wb2, [wc0;wn0],
      block-diag [wc1,0;0,wn1] — all transposed to channels-first.
    """
    f32, bf16 = jnp.float32, jnp.bfloat16
    w = width
    a = params["a_sin"].reshape(-1)          # == a_cos for this module

    F = jnp.zeros((2 * w, 128), f32)
    F = F.at[0:w, 0:input_dim].set((2.0 * math.pi) * params["B"].T)
    F = F.at[w:2 * w, 0:input_dim].set(params["w0x"].T)
    F = F.at[0:w, 3].set(params["b0"].reshape(-1))
    F = F.at[0:w, 4].set(params["bb1"].reshape(-1))
    F = F.at[0:w, 5].set(params["bb2"].reshape(-1))
    F = F.at[0:w, 6].set(params["bc0"].reshape(-1))
    F = F.at[w:2 * w, 6].set(params["bn0"].reshape(-1))
    F = F.at[0:w, 7].set(params["bc1"].reshape(-1))
    F = F.at[w:2 * w, 7].set(params["bn1"].reshape(-1))
    F = F.at[0:3, 8].set(params["bc2"].reshape(-1))
    F = F.at[3:4, 8].set(params["bn2"].reshape(-1))
    F = F.at[0:3, 9].set(0.5)
    F = F.at[3:4, 9].set(jnp.full((1,), normratio, f32))
    F = F.at[0:3, 16:16 + w].set(params["wc2"].T)
    F = F.at[3:4, 16 + w:16 + 2 * w].set(params["wn2"].T)

    H = jnp.zeros((7 * w, 128), f32)
    H = H.at[0:w, 0:w].set(params["w0s"].T * a[None, :])        # alpha folded
    H = H.at[0:w, w:2 * w].set(params["w0c"].T * a[None, :])
    H = H.at[w:2 * w, 0:w].set(params["wb1"].T)
    H = H.at[2 * w:3 * w, 0:w].set(params["wb2"].T)
    H = H.at[3 * w:4 * w, 0:w].set(params["wc0"].T)
    H = H.at[4 * w:5 * w, 0:w].set(params["wn0"].T)
    H = H.at[5 * w:6 * w, 0:w].set(params["wc1"].T)             # block-diag head L1
    H = H.at[6 * w:7 * w, w:2 * w].set(params["wn1"].T)
    H = H.astype(bf16)

    return {"f32": F, "bf16": H, "width": w}


def reference(x, p, normratio=0.1):
    """Pure-JAX f32 reference of the same forward pass, using the RAW (unfolded) params."""
    res = 2.0 * np.pi * (x @ p["B"])
    feat = jnp.concatenate([x, jnp.sin(res) * p["a_sin"], jnp.cos(res) * p["a_cos"]], axis=1)
    w0 = jnp.concatenate([p["w0x"], p["w0s"], p["w0c"]], axis=0)
    h = jax.nn.relu(feat @ w0 + p["b0"])
    h = jax.nn.relu(h @ p["wb1"] + p["bb1"])
    h = jax.nn.relu(h @ p["wb2"] + p["bb2"])
    col = jax.nn.relu(h @ p["wc0"] + p["bc0"])
    col = jax.nn.relu(col @ p["wc1"] + p["bc1"])
    col = col @ p["wc2"] + p["bc2"]
    dsp = jax.nn.relu(h @ p["wn0"] + p["bn0"])
    dsp = jax.nn.relu(dsp @ p["wn1"] + p["bn1"])
    dsp = dsp @ p["wn2"] + p["bn2"]
    return jnp.tanh(col) * 0.5, jnp.tanh(dsp) * normratio


if __name__ == "__main__":
    key = jax.random.PRNGKey(0)
    kx, kp = jax.random.split(key)

    # Ragged N (not a multiple of the tile) to exercise the pad+slice path.
    N, INPUT_DIM, WIDTH = 1000, 3, 32
    x = jax.random.normal(kx, (N, INPUT_DIM), jnp.float32)
    params = init_params(kp, input_dim=INPUT_DIM, width=WIDTH, sigma=5.0)
    prepared = prepare_params(params, width=WIDTH, input_dim=INPUT_DIM, normratio=0.1)

    colors, displ = neural_style_field(x, prepared, tile_n=8192)
    colors = jax.block_until_ready(colors)
    displ = jax.block_until_ready(displ)

    ref_colors, ref_displ = reference(x, params, normratio=0.1)
    # Tolerance accounts for bf16 matmul operands (f32 accumulation) in the
    # hidden layers; outputs are bounded by +/-0.5 (colors) and +/-0.1 (displ).
    np.testing.assert_allclose(np.asarray(colors), np.asarray(ref_colors), rtol=1e-2, atol=1e-2)
    np.testing.assert_allclose(np.asarray(displ), np.asarray(ref_displ), rtol=1e-2, atol=1e-2)
    assert colors.shape == (N, 3) and displ.shape == (N, 1)

    print("KERNEL_OK")
</pallas_src>

<mosaic_0001>
module attributes {stable_mosaic.version = 11 : i64} {
  func.func @_nsf_kernel(%arg0: i32, %arg1: memref<3x1024xf32, #tpu.memory_space<vmem>>, %arg2: memref<64x128xf32, #tpu.memory_space<vmem>>, %arg3: memref<224x128xbf16, #tpu.memory_space<vmem>>, %arg4: memref<4x1024xf32, #tpu.memory_space<vmem>>, %arg5: memref<64x1024xbf16, #tpu.memory_space<vmem>>) attributes {dimension_semantics = [#tpu.dimension_semantics<parallel>], iteration_bounds = array<i64: 1>, scalar_prefetch = 0 : i64, scratch_operands = 1 : i64, tpu.core_type = #tpu.core_type<tc>, window_params = [{transform_indices = @transform_0, window_bounds = array<i64: 3, 1024>}, {pipeline_mode = #tpu.pipeline_mode<synchronous>, transform_indices = @transform_1, window_bounds = array<i64: 64, 128>}, {pipeline_mode = #tpu.pipeline_mode<synchronous>, transform_indices = @transform_2, window_bounds = array<i64: 224, 128>}, {transform_indices = @transform_3, window_bounds = array<i64: 4, 1024>}]} {
    %c0 = arith.constant 0 : index
    %c0_0 = arith.constant 0 : index
    %0 = vector.load %arg1[%c0, %c0_0] : memref<3x1024xf32, #tpu.memory_space<vmem>>, vector<3x1024xf32>
    %c0_1 = arith.constant 0 : index
    %c0_2 = arith.constant 0 : index
    %1 = vector.load %arg2[%c0_1, %c0_2] : memref<64x128xf32, #tpu.memory_space<vmem>>, vector<64x3xf32>
    %2 = vector.extract_strided_slice %1 {offsets = [0, 0], sizes = [64, 1], strides = [1, 1]} : vector<64x3xf32> to vector<64x1xf32>
    %3 = vector.extract_strided_slice %0 {offsets = [0, 0], sizes = [1, 1024], strides = [1, 1]} : vector<3x1024xf32> to vector<1x1024xf32>
    %4 = vector.broadcast %2 : vector<64x1xf32> to vector<64x1024xf32>
    %5 = vector.broadcast %3 : vector<1x1024xf32> to vector<64x1024xf32>
    %6 = arith.mulf %4, %5 : vector<64x1024xf32>
    %7 = vector.extract_strided_slice %1 {offsets = [0, 1], sizes = [64, 1], strides = [1, 1]} : vector<64x3xf32> to vector<64x1xf32>
    %8 = vector.extract_strided_slice %0 {offsets = [1, 0], sizes = [1, 1024], strides = [1, 1]} : vector<3x1024xf32> to vector<1x1024xf32>
    %9 = vector.broadcast %7 : vector<64x1xf32> to vector<64x1024xf32>
    %10 = vector.broadcast %8 : vector<1x1024xf32> to vector<64x1024xf32>
    %11 = arith.mulf %9, %10 : vector<64x1024xf32>
    %12 = arith.addf %6, %11 : vector<64x1024xf32>
    %13 = vector.extract_strided_slice %1 {offsets = [0, 2], sizes = [64, 1], strides = [1, 1]} : vector<64x3xf32> to vector<64x1xf32>
    %14 = vector.extract_strided_slice %0 {offsets = [2, 0], sizes = [1, 1024], strides = [1, 1]} : vector<3x1024xf32> to vector<1x1024xf32>
    %15 = vector.broadcast %13 : vector<64x1xf32> to vector<64x1024xf32>
    %16 = vector.broadcast %14 : vector<1x1024xf32> to vector<64x1024xf32>
    %17 = arith.mulf %15, %16 : vector<64x1024xf32>
    %18 = arith.addf %12, %17 : vector<64x1024xf32>
    %19 = vector.extract_strided_slice %18 {offsets = [0, 0], sizes = [32, 1024], strides = [1, 1]} : vector<64x1024xf32> to vector<32x1024xf32>
    %20 = vector.extract_strided_slice %18 {offsets = [32, 0], sizes = [32, 1024], strides = [1, 1]} : vector<64x1024xf32> to vector<32x1024xf32>
    %21 = math.sin %19 : vector<32x1024xf32>
    %22 = arith.truncf %21 : vector<32x1024xf32> to vector<32x1024xbf16>
    %c0_3 = arith.constant 0 : index
    %c0_4 = arith.constant 0 : index
    %23 = vector.load %arg5[%c0_3, %c0_4] : memref<64x1024xbf16, #tpu.memory_space<vmem>>, vector<32x1024xbf16>
    tpu.vector_store %arg5[%c0_3, %c0_4], %22 {strides = array<i32>} : memref<64x1024xbf16, #tpu.memory_space<vmem>>, vector<32x1024xbf16>,
    %24 = math.cos %19 : vector<32x1024xf32>
    %25 = arith.truncf %24 : vector<32x1024xf32> to vector<32x1024xbf16>
    %c32 = arith.constant 32 : index
    %c0_5 = arith.constant 0 : index
    %26 = vector.load %arg5[%c32, %c0_5] : memref<64x1024xbf16, #tpu.memory_space<vmem>>, vector<32x1024xbf16>
    tpu.vector_store %arg5[%c32, %c0_5], %25 {strides = array<i32>} : memref<64x1024xbf16, #tpu.memory_space<vmem>>, vector<32x1024xbf16>,
    %c0_6 = arith.constant 0 : index
    %c0_7 = arith.constant 0 : index
    %27 = vector.load %arg3[%c0_6, %c0_7] : memref<224x128xbf16, #tpu.memory_space<vmem>>, vector<32x64xbf16>
    %c0_8 = arith.constant 0 : index
    %c0_9 = arith.constant 0 : index
    %28 = vector.load %arg5[%c0_8, %c0_9] : memref<64x1024xbf16, #tpu.memory_space<vmem>>, vector<64x1024xbf16>
    %cst = arith.constant dense<0.000000e+00> : vector<32x1024xf32>
    %29 = tpu.matmul %27, %28, %cst {dimension_numbers = #tpu.dot_dimension_numbers<[1], [0], [0], [1], [0, 0, 1, 1], [], []>} : vector<32x64xbf16>, vector<64x1024xbf16>, vector<32x1024xf32> -> vector<32x1024xf32>
    %30 = arith.addf %29, %20 : vector<32x1024xf32>
    %c0_10 = arith.constant 0 : index
    %c3 = arith.constant 3 : index
    %31 = vector.load %arg2[%c0_10, %c3] : memref<64x128xf32, #tpu.memory_space<vmem>>, vector<32x1xf32>
    %32 = vector.broadcast %31 : vector<32x1xf32> to vector<32x1024xf32>
    %33 = arith.addf %30, %32 : vector<32x1024xf32>
    %cst_11 = arith.constant 0.000000e+00 : f32
    %34 = vector.broadcast %cst_11 : f32 to vector<32x1024xf32>
    %35 = arith.maximumf %33, %34 : vector<32x1024xf32>
    %c32_12 = arith.constant 32 : index
    %c0_13 = arith.constant 0 : index
    %36 = vector.load %arg3[%c32_12, %c0_13] : memref<224x128xbf16, #tpu.memory_space<vmem>>, vector<32x32xbf16>
    %37 = arith.truncf %35 : vector<32x1024xf32> to vector<32x1024xbf16>
    %cst_14 = arith.constant dense<0.000000e+00> : vector<32x1024xf32>
    %38 = tpu.matmul %36, %37, %cst_14 {dimension_numbers = #tpu.dot_dimension_numbers<[1], [0], [0], [1], [0, 0, 1, 1], [], []>} : vector<32x32xbf16>, vector<32x1024xbf16>, vector<32x1024xf32> -> vector<32x1024xf32>
    %c0_15 = arith.constant 0 : index
    %c4 = arith.constant 4 : index
    %39 = vector.load %arg2[%c0_15, %c4] : memref<64x128xf32, #tpu.memory_space<vmem>>, vector<32x1xf32>
    %40 = vector.broadcast %39 : vector<32x1xf32> to vector<32x1024xf32>
    %41 = arith.addf %38, %40 : vector<32x1024xf32>
    %cst_16 = arith.constant 0.000000e+00 : f32
    %42 = vector.broadcast %cst_16 : f32 to vector<32x1024xf32>
    %43 = arith.maximumf %41, %42 : vector<32x1024xf32>
    %c64 = arith.constant 64 : index
    %c0_17 = arith.constant 0 : index
    %44 = vector.load %arg3[%c64, %c0_17] : memref<224x128xbf16, #tpu.memory_space<vmem>>, vector<32x32xbf16>
    %45 = arith.truncf %43 : vector<32x1024xf32> to vector<32x1024xbf16>
    %cst_18 = arith.constant dense<0.000000e+00> : vector<32x1024xf32>
    %46 = tpu.matmul %44, %45, %cst_18 {dimension_numbers = #tpu.dot_dimension_numbers<[1], [0], [0], [1], [0, 0, 1, 1], [], []>} : vector<32x32xbf16>, vector<32x1024xbf16>, vector<32x1024xf32> -> vector<32x1024xf32>
    %c0_19 = arith.constant 0 : index
    %c5 = arith.constant 5 : index
    %47 = vector.load %arg2[%c0_19, %c5] : memref<64x128xf32, #tpu.memory_space<vmem>>, vector<32x1xf32>
    %48 = vector.broadcast %47 : vector<32x1xf32> to vector<32x1024xf32>
    %49 = arith.addf %46, %48 : vector<32x1024xf32>
    %cst_20 = arith.constant 0.000000e+00 : f32
    %50 = vector.broadcast %cst_20 : f32 to vector<32x1024xf32>
    %51 = arith.maximumf %49, %50 : vector<32x1024xf32>
    %c96 = arith.constant 96 : index
    %c0_21 = arith.constant 0 : index
    %52 = vector.load %arg3[%c96, %c0_21] : memref<224x128xbf16, #tpu.memory_space<vmem>>, vector<64x32xbf16>
    %53 = arith.truncf %51 : vector<32x1024xf32> to vector<32x1024xbf16>
    %cst_22 = arith.constant dense<0.000000e+00> : vector<64x1024xf32>
    %54 = tpu.matmul %52, %53, %cst_22 {dimension_numbers = #tpu.dot_dimension_numbers<[1], [0], [0], [1], [0, 0, 1, 1], [], []>} : vector<64x32xbf16>, vector<32x1024xbf16>, vector<64x1024xf32> -> vector<64x1024xf32>
    %c0_23 = arith.constant 0 : index
    %c6 = arith.constant 6 : index
    %55 = vector.load %arg2[%c0_23, %c6] : memref<64x128xf32, #tpu.memory_space<vmem>>, vector<64x1xf32>
    %56 = vector.broadcast %55 : vector<64x1xf32> to vector<64x1024xf32>
    %57 = arith.addf %54, %56 : vector<64x1024xf32>
    %cst_24 = arith.constant 0.000000e+00 : f32
    %58 = vector.broadcast %cst_24 : f32 to vector<64x1024xf32>
    %59 = arith.maximumf %57, %58 : vector<64x1024xf32>
    %c160 = arith.constant 160 : index
    %c0_25 = arith.constant 0 : index
    %60 = vector.load %arg3[%c160, %c0_25] : memref<224x128xbf16, #tpu.memory_space<vmem>>, vector<64x64xbf16>
    %61 = arith.truncf %59 : vector<64x1024xf32> to vector<64x1024xbf16>
    %cst_26 = arith.constant dense<0.000000e+00> : vector<64x1024xf32>
    %62 = tpu.matmul %60, %61, %cst_26 {dimension_numbers = #tpu.dot_dimension_numbers<[1], [0], [0], [1], [0, 0, 1, 1], [], []>} : vector<64x64xbf16>, vector<64x1024xbf16>, vector<64x1024xf32> -> vector<64x1024xf32>
    %c0_27 = arith.constant 0 : index
    %c7 = arith.constant 7 : index
    %63 = vector.load %arg2[%c0_27, %c7] : memref<64x128xf32, #tpu.memory_space<vmem>>, vector<64x1xf32>
    %64 = vector.broadcast %63 : vector<64x1xf32> to vector<64x1024xf32>
    %65 = arith.addf %62, %64 : vector<64x1024xf32>
    %cst_28 = arith.constant 0.000000e+00 : f32
    %66 = vector.broadcast %cst_28 : f32 to vector<64x1024xf32>
    %67 = arith.maximumf %65, %66 : vector<64x1024xf32>
    %c0_29 = arith.constant 0 : index
    %c16 = arith.constant 16 : index
    %68 = vector.load %arg2[%c0_29, %c16] : memref<64x128xf32, #tpu.memory_space<vmem>>, vector<4x64xf32>
    %cst_30 = arith.constant dense<0.000000e+00> : vector<4x1024xf32>
    %69 = tpu.matmul %68, %67, %cst_30 {dimension_numbers = #tpu.dot_dimension_numbers<[1], [0], [0], [1], [0, 0, 1, 1], [], []>} : vector<4x64xf32>, vector<64x1024xf32>, vector<4x1024xf32> -> vector<4x1024xf32>
    %c0_31 = arith.constant 0 : index
    %c8 = arith.constant 8 : index
    %70 = vector.load %arg2[%c0_31, %c8] : memref<64x128xf32, #tpu.memory_space<vmem>>, vector<4x1xf32>
    %71 = vector.broadcast %70 : vector<4x1xf32> to vector<4x1024xf32>
    %72 = arith.addf %69, %71 : vector<4x1024xf32>
    %73 = math.tanh %72 : vector<4x1024xf32>
    %c0_32 = arith.constant 0 : index
    %c9 = arith.constant 9 : index
    %74 = vector.load %arg2[%c0_32, %c9] : memref<64x128xf32, #tpu.memory_space<vmem>>, vector<4x1xf32>
    %75 = vector.broadcast %74 : vector<4x1xf32> to vector<4x1024xf32>
    %76 = arith.mulf %73, %75 : vector<4x1024xf32>
    %c0_33 = arith.constant 0 : index
    %c0_34 = arith.constant 0 : index
    %77 = vector.load %arg4[%c0_33, %c0_34] : memref<4x1024xf32, #tpu.memory_space<vmem>>, vector<4x1024xf32>
    tpu.vector_store %arg4[%c0_33, %c0_34], %76 {strides = array<i32>} : memref<4x1024xf32, #tpu.memory_space<vmem>>, vector<4x1024xf32>,
    return
  }
  func.func @transform_0(%arg0: i32) -> (i32, i32) {
    %c0_i32 = arith.constant 0 : i32
    %c0_i32_0 = arith.constant 0 : i32
    return %c0_i32, %arg0 : i32, i32
  }
  func.func @transform_1(%arg0: i32) -> (i32, i32) {
    %c0_i32 = arith.constant 0 : i32
    %c0_i32_0 = arith.constant 0 : i32
    %c0_i32_1 = arith.constant 0 : i32
    return %c0_i32, %c0_i32_0 : i32, i32
  }
  func.func @transform_2(%arg0: i32) -> (i32, i32) {
    %c0_i32 = arith.constant 0 : i32
    %c0_i32_0 = arith.constant 0 : i32
    %c0_i32_1 = arith.constant 0 : i32
    return %c0_i32, %c0_i32_0 : i32, i32
  }
  func.func @transform_3(%arg0: i32) -> (i32, i32) {
    %c0_i32 = arith.constant 0 : i32
    %c0_i32_0 = arith.constant 0 : i32
    return %c0_i32, %arg0 : i32, i32
  }
}

</mosaic_0001>

<llo_original>
// kernel: tpu_custom_call.1
$region0: #{tpu_custom_call.1}
  #allocation0 [shape = 'u32[]', space=smem, size = 0x4, offset = 0x4, fixed_abs, tag = 'smem constant byte address 0x4 - core index']
  #allocation1 [shape = 'u32[144,128]{1,0:T(1,128)}', space=vmem, size = 0x12000, scoped, tag = 'internal scratch']
  #allocation2 [shape = 'bf16[64,1024]{1,0:T(16,128)(2,1)}', space=vmem, size = 0x20000, scoped, tag = 'scratch operand']
  %s0 = inlined_call_operand.hbm [shape: f32[3,1024], index: 0, kind: input, shape index: {}]
  %s1 = inlined_call_operand.hbm [shape: f32[64,128], index: 1, kind: input, shape index: {}]
  %s2 = inlined_call_operand.hbm [shape: bf16[224,128], index: 2, kind: input, shape index: {}]
  %s3 = inlined_call_operand.hbm [shape: f32[4,1024], index: 3, kind: output, shape index: {}]
  %s4 = sld [smem:[#allocation0]]
  $region34: #{tpu_custom_call.1} parent=0
    _
  %s6 = ssub.s32 1, %s4
  %s7 = scalar_select 0, %s6, %s4
  $region1: #{tpu_custom_call.1} parent=0
    #allocation3 [shape = 'u8[16384]{0}', space=vmem, size = 0x4000, scoped, tag = 'input window, operand 0, single buffered']
    #allocation4 [shape = 's32[1]{0}', space=sflag, size = 0x4, scoped, tag = 'scoped memory for tpu_custom_call.1']
    #allocation5 [shape = 's32[1]{0}', space=sflag, size = 0x4, scoped, tag = 'scoped memory for tpu_custom_call.1']
    #allocation6 [shape = 'u8[32768]{0}', space=vmem, size = 0x8000, scoped, tag = 'input window, operand 1, single buffered']
    #allocation7 [shape = 's32[1]{0}', space=sflag, size = 0x4, scoped, tag = 'scoped memory for tpu_custom_call.1']
    #allocation8 [shape = 'u8[57344]{0}', space=vmem, size = 0xe000, scoped, tag = 'input window, operand 2, single buffered']
    #allocation9 [shape = 'u8[16384]{0}', space=vmem, size = 0x4000, scoped, tag = 'output window, operand 0, single buffered']
    %8 = vsyncpa [#allocation4], 0
    %9 = vsyncpa [#allocation7], 0
    %10 = vsyncpa [#allocation5], 0
    // Predicated region
    $region2: #{tpu_custom_call.1} parent=1 // pred_check
      _
    $region3: #{tpu_custom_call.1} parent=1 // pred_check_branch
      %12 = sbr.rel (0) target = $region5
    $region4: #{tpu_custom_call.1} parent=1 // pred_region
      %s14 = ssub.s32 512, 512
      %15 = vsyncadd [#allocation4], %s14
      %s17 = sshll.u32 [#allocation3], 4
      %s18 = int_to_ptr.vmem [resolvable:$true] %s17
      %20 = dma.hbm_to_vmem [thread:$0]  %s0, 512, %s18, [#allocation4]
    $region5: #{tpu_custom_call.1} parent=1 // pred_fallthru
      _
    // Predicated region
    $region6: #{tpu_custom_call.1} parent=1 // pred_check
      _
    $region7: #{tpu_custom_call.1} parent=1 // pred_check_branch
      %22 = sbr.rel (0) target = $region9
    $region8: #{tpu_custom_call.1} parent=1 // pred_region
      %s24 = ssub.s32 1024, 1024
      %25 = vsyncadd [#allocation7], %s24
      %s26 = sshll.u32 [#allocation6], 4
      %s27 = int_to_ptr.vmem [resolvable:$true] %s26
      %32 = dma.hbm_to_vmem [thread:$0]  %s1, 1024, %s27, [#allocation7], 128, 128, 8
    $region9: #{tpu_custom_call.1} parent=1 // pred_fallthru
      _
    // Predicated region
    $region10: #{tpu_custom_call.1} parent=1 // pred_check
      _
    $region11: #{tpu_custom_call.1} parent=1 // pred_check_branch
      %34 = sbr.rel (0) target = $region13
    $region12: #{tpu_custom_call.1} parent=1 // pred_region
      %s36 = ssub.s32 1792, 1792
      %37 = vsyncadd [#allocation7], %s36
      %s38 = sshll.u32 [#allocation8], 4
      %s39 = int_to_ptr.vmem [resolvable:$true] %s38
      %44 = dma.hbm_to_vmem [thread:$0]  %s2, 1792, %s39, [#allocation7], 64, 64, 4
    $region13: #{tpu_custom_call.1} parent=1 // pred_fallthru
      _
    // Predicated region
    $region14: #{tpu_custom_call.1} parent=1 // pred_check
      _
    $region15: #{tpu_custom_call.1} parent=1 // pred_check_branch
      %46 = sbr.rel (0) target = $region17
    $region16: #{tpu_custom_call.1} parent=1 // pred_region
      %47 = dma.done [#allocation4], 512
    $region17: #{tpu_custom_call.1} parent=1 // pred_fallthru
      _
    // Predicated region
    $region18: #{tpu_custom_call.1} parent=1 // pred_check
      _
    $region19: #{tpu_custom_call.1} parent=1 // pred_check_branch
      %49 = sbr.rel (0) target = $region21
    $region20: #{tpu_custom_call.1} parent=1 // pred_region
      %50 = dma.done [#allocation7], 1024
    $region21: #{tpu_custom_call.1} parent=1 // pred_fallthru
      _
    // Predicated region
    $region22: #{tpu_custom_call.1} parent=1 // pred_check
      _
    $region23: #{tpu_custom_call.1} parent=1 // pred_check_branch
      %52 = sbr.rel (0) target = $region25
    $region24: #{tpu_custom_call.1} parent=1 // pred_region
      %53 = dma.done [#allocation7], 1792
    $region25: #{tpu_custom_call.1} parent=1 // pred_fallthru
      _
    %v55 = vld [vmem:[#allocation3] sm:$0x77]
    %v56 = vld [vmem:[#allocation3 + $0x8] sm:$0x77]
    %v57 = vld [vmem:[#allocation3 + $0x10] sm:$0x77]
    %v58 = vld [vmem:[#allocation3 + $0x18] sm:$0x77]
    %v59 = vld [vmem:[#allocation6] sm:$0xff]
    %v60 = vld [vmem:[#allocation6 + $0x8] sm:$0xff]
    %v61 = vld [vmem:[#allocation6 + $0x10] sm:$0xff]
    %v62 = vld [vmem:[#allocation6 + $0x18] sm:$0xff]
    %v63 = vld [vmem:[#allocation6 + $0x20] sm:$0xff]
    %v64 = vld [vmem:[#allocation6 + $0x28] sm:$0xff]
    %v65 = vld [vmem:[#allocation6 + $0x30] sm:$0xff]
    %v66 = vld [vmem:[#allocation6 + $0x38] sm:$0xff]
    %68 = vset.pattern.permute.xlu0 0
    %69 = vperm.xlu0 %68, %v59
    %v70 = vpop.permute.xlu0 %69
    %73 = vset.pattern.permute.xlu0 0
    %74 = vperm.xlu0 %73, %v60
    %v75 = vpop.permute.xlu0 %74
    %78 = vset.pattern.permute.xlu0 0
    %79 = vperm.xlu0 %78, %v61
    %v80 = vpop.permute.xlu0 %79
    %83 = vset.pattern.permute.xlu0 0
    %84 = vperm.xlu0 %83, %v62
    %v85 = vpop.permute.xlu0 %84
    %88 = vset.pattern.permute.xlu0 0
    %89 = vperm.xlu0 %88, %v63
    %v90 = vpop.permute.xlu0 %89
    %93 = vset.pattern.permute.xlu0 0
    %94 = vperm.xlu0 %93, %v64
    %v95 = vpop.permute.xlu0 %94
    %98 = vset.pattern.permute.xlu0 0
    %99 = vperm.xlu0 %98, %v65
    %v100 = vpop.permute.xlu0 %99
    %103 = vset.pattern.permute.xlu0 0
    %104 = vperm.xlu0 %103, %v66
    %v105 = vpop.permute.xlu0 %104
    %v111 = vlaneseq
    %v112 = vshrl.u32 %v111, 7
    %v113 = vsub.s32 0, %v112
    %v114 = vrot.slane %v55, %v113
    %v115 = vlaneseq
    %v116 = vshrl.u32 %v115, 7
    %v117 = vsub.s32 4, %v116
    %v118 = vrot.slane %v55, %v117
    %v119 = vlaneseq
    %v120 = vshrl.u32 %v119, 7
    %v121 = vsub.s32 0, %v120
    %v122 = vrot.slane %v56, %v121
    %v123 = vlaneseq
    %v124 = vshrl.u32 %v123, 7
    %v125 = vsub.s32 4, %v124
    %v126 = vrot.slane %v56, %v125
    %v127 = vlaneseq
    %v128 = vshrl.u32 %v127, 7
    %v129 = vsub.s32 0, %v128
    %v130 = vrot.slane %v57, %v129
    %v131 = vlaneseq
    %v132 = vshrl.u32 %v131, 7
    %v133 = vsub.s32 4, %v132
    %v134 = vrot.slane %v57, %v133
    %v135 = vlaneseq
    %v136 = vshrl.u32 %v135, 7
    %v137 = vsub.s32 0, %v136
    %v138 = vrot.slane %v58, %v137
    %v139 = vlaneseq
    %v140 = vshrl.u32 %v139, 7
    %v141 = vsub.s32 4, %v140
    %v142 = vrot.slane %v58, %v141
    %v151 = vlaneseq
    %v152 = vshrl.u32 %v151, 7
    %v153 = vsub.s32 0, %v152
    %v154 = vrot.slane %v114, %v153
    %v155 = vlaneseq
    %v156 = vshrl.u32 %v155, 7
    %v157 = vsub.s32 0, %v156
    %v158 = vrot.slane %v118, %v157
    %v159 = vlaneseq
    %v160 = vshrl.u32 %v159, 7
    %v161 = vsub.s32 0, %v160
    %v162 = vrot.slane %v122, %v161
    %v163 = vlaneseq
    %v164 = vshrl.u32 %v163, 7
    %v165 = vsub.s32 0, %v164
    %v166 = vrot.slane %v126, %v165
    %v167 = vlaneseq
    %v168 = vshrl.u32 %v167, 7
    %v169 = vsub.s32 0, %v168
    %v170 = vrot.slane %v130, %v169
    %v171 = vlaneseq
    %v172 = vshrl.u32 %v171, 7
    %v173 = vsub.s32 0, %v172
    %v174 = vrot.slane %v134, %v173
    %v175 = vlaneseq
    %v176 = vshrl.u32 %v175, 7
    %v177 = vsub.s32 0, %v176
    %v178 = vrot.slane %v138, %v177
    %v179 = vlaneseq
    %v180 = vshrl.u32 %v179, 7
    %v181 = vsub.s32 0, %v180
    %v182 = vrot.slane %v142, %v181
    %v183 = vmul.f32 %v70, %v154
    %v184 = vmul.f32 %v70, %v158
    %v185 = vmul.f32 %v70, %v162
    %v186 = vmul.f32 %v70, %v166
    %v187 = vmul.f32 %v70, %v170
    %v188 = vmul.f32 %v70, %v174
    %v189 = vmul.f32 %v70, %v178
    %v190 = vmul.f32 %v70, %v182
    %v191 = vmul.f32 %v75, %v154
    %v192 = vmul.f32 %v75, %v158
    %v193 = vmul.f32 %v75, %v162
    %v194 = vmul.f32 %v75, %v166
    %v195 = vmul.f32 %v75, %v170
    %v196 = vmul.f32 %v75, %v174
    %v197 = vmul.f32 %v75, %v178
    %v198 = vmul.f32 %v75, %v182
    %v199 = vmul.f32 %v80, %v154
    %v200 = vmul.f32 %v80, %v158
    %v201 = vmul.f32 %v80, %v162
    %v202 = vmul.f32 %v80, %v166
    %v203 = vmul.f32 %v80, %v170
    %v204 = vmul.f32 %v80, %v174
    %v205 = vmul.f32 %v80, %v178
    %v206 = vmul.f32 %v80, %v182
    %v207 = vmul.f32 %v85, %v154
    %v208 = vmul.f32 %v85, %v158
    %v209 = vmul.f32 %v85, %v162
    %v210 = vmul.f32 %v85, %v166
    %v211 = vmul.f32 %v85, %v170
    %v212 = vmul.f32 %v85, %v174
    %v213 = vmul.f32 %v85, %v178
    %v214 = vmul.f32 %v85, %v182
    %v215 = vmul.f32 %v90, %v154
    %v216 = vmul.f32 %v90, %v158
    %v217 = vmul.f32 %v90, %v162
    %v218 = vmul.f32 %v90, %v166
    %v219 = vmul.f32 %v90, %v170
    %v220 = vmul.f32 %v90, %v174
    %v221 = vmul.f32 %v90, %v178
    %v222 = vmul.f32 %v90, %v182
    %v223 = vmul.f32 %v95, %v154
    %v224 = vmul.f32 %v95, %v158
    %v225 = vmul.f32 %v95, %v162
    %v226 = vmul.f32 %v95, %v166
    %v227 = vmul.f32 %v95, %v170
    %v228 = vmul.f32 %v95, %v174
    %v229 = vmul.f32 %v95, %v178
    %v230 = vmul.f32 %v95, %v182
    %v231 = vmul.f32 %v100, %v154
    %v232 = vmul.f32 %v100, %v158
    %v233 = vmul.f32 %v100, %v162
    %v234 = vmul.f32 %v100, %v166
    %v235 = vmul.f32 %v100, %v170
    %v236 = vmul.f32 %v100, %v174
    %v237 = vmul.f32 %v100, %v178
    %v238 = vmul.f32 %v100, %v182
    %v239 = vmul.f32 %v105, %v154
    %v240 = vmul.f32 %v105, %v158
    %v241 = vmul.f32 %v105, %v162
    %v242 = vmul.f32 %v105, %v166
    %v243 = vmul.f32 %v105, %v170
    %v244 = vmul.f32 %v105, %v174
    %v245 = vmul.f32 %v105, %v178
    %v246 = vmul.f32 %v105, %v182
    %247 = vset.pattern.permute.xlu0 1
    %248 = vperm.xlu0 %247, %v59
    %v249 = vpop.permute.xlu0 %248
    %251 = vset.pattern.permute.xlu0 1
    %252 = vperm.xlu0 %251, %v60
    %v253 = vpop.permute.xlu0 %252
    %255 = vset.pattern.permute.xlu0 1
    %256 = vperm.xlu0 %255, %v61
    %v257 = vpop.permute.xlu0 %256
    %259 = vset.pattern.permute.xlu0 1
    %260 = vperm.xlu0 %259, %v62
    %v261 = vpop.permute.xlu0 %260
    %263 = vset.pattern.permute.xlu0 1
    %264 = vperm.xlu0 %263, %v63
    %v265 = vpop.permute.xlu0 %264
    %267 = vset.pattern.permute.xlu0 1
    %268 = vperm.xlu0 %267, %v64
    %v269 = vpop.permute.xlu0 %268
    %271 = vset.pattern.permute.xlu0 1
    %272 = vperm.xlu0 %271, %v65
    %v273 = vpop.permute.xlu0 %272
    %275 = vset.pattern.permute.xlu0 1
    %276 = vperm.xlu0 %275, %v66
    %v277 = vpop.permute.xlu0 %276
    %v279 = vlaneseq
    %v280 = vshrl.u32 %v279, 7
    %v281 = vsub.s32 1, %v280
    %v282 = vrot.slane %v55, %v281
    %v283 = vlaneseq
    %v284 = vshrl.u32 %v283, 7
    %v285 = vsub.s32 5, %v284
    %v286 = vrot.slane %v55, %v285
    %v287 = vlaneseq
    %v288 = vshrl.u32 %v287, 7
    %v289 = vsub.s32 1, %v288
    %v290 = vrot.slane %v56, %v289
    %v291 = vlaneseq
    %v292 = vshrl.u32 %v291, 7
    %v293 = vsub.s32 5, %v292
    %v294 = vrot.slane %v56, %v293
    %v295 = vlaneseq
    %v296 = vshrl.u32 %v295, 7
    %v297 = vsub.s32 1, %v296
    %v298 = vrot.slane %v57, %v297
    %v299 = vlaneseq
    %v300 = vshrl.u32 %v299, 7
    %v301 = vsub.s32 5, %v300
    %v302 = vrot.slane %v57, %v301
    %v303 = vlaneseq
    %v304 = vshrl.u32 %v303, 7
    %v305 = vsub.s32 1, %v304
    %v306 = vrot.slane %v58, %v305
    %v307 = vlaneseq
    %v308 = vshrl.u32 %v307, 7
    %v309 = vsub.s32 5, %v308
    %v310 = vrot.slane %v58, %v309
    %v319 = vlaneseq
    %v320 = vshrl.u32 %v319, 7
    %v321 = vsub.s32 1, %v320
    %v322 = vrot.slane %v282, %v321
    %v323 = vlaneseq
    %v324 = vshrl.u32 %v323, 7
    %v325 = vsub.s32 1, %v324
    %v326 = vrot.slane %v286, %v325
    %v327 = vlaneseq
    %v328 = vshrl.u32 %v327, 7
    %v329 = vsub.s32 1, %v328
    %v330 = vrot.slane %v290, %v329
    %v331 = vlaneseq
    %v332 = vshrl.u32 %v331, 7
    %v333 = vsub.s32 1, %v332
    %v334 = vrot.slane %v294, %v333
    %v335 = vlaneseq
    %v336 = vshrl.u32 %v335, 7
    %v337 = vsub.s32 1, %v336
    %v338 = vrot.slane %v298, %v337
    %v339 = vlaneseq
    %v340 = vshrl.u32 %v339, 7
    %v341 = vsub.s32 1, %v340
    %v342 = vrot.slane %v302, %v341
    %v343 = vlaneseq
    %v344 = vshrl.u32 %v343, 7
    %v345 = vsub.s32 1, %v344
    %v346 = vrot.slane %v306, %v345
    %v347 = vlaneseq
    %v348 = vshrl.u32 %v347, 7
    %v349 = vsub.s32 1, %v348
    %v350 = vrot.slane %v310, %v349
    %v351 = vmul.f32 %v249, %v322
    %v352 = vmul.f32 %v249, %v326
    %v353 = vmul.f32 %v249, %v330
    %v354 = vmul.f32 %v249, %v334
    %v355 = vmul.f32 %v249, %v338
    %v356 = vmul.f32 %v249, %v342
    %v357 = vmul.f32 %v249, %v346
    %v358 = vmul.f32 %v249, %v350
    %v359 = vmul.f32 %v253, %v322
    %v360 = vmul.f32 %v253, %v326
    %v361 = vmul.f32 %v253, %v330
    %v362 = vmul.f32 %v253, %v334
    %v363 = vmul.f32 %v253, %v338
    %v364 = vmul.f32 %v253, %v342
    %v365 = vmul.f32 %v253, %v346
    %v366 = vmul.f32 %v253, %v350
    %v367 = vmul.f32 %v257, %v322
    %v368 = vmul.f32 %v257, %v326
    %v369 = vmul.f32 %v257, %v330
    %v370 = vmul.f32 %v257, %v334
    %v371 = vmul.f32 %v257, %v338
    %v372 = vmul.f32 %v257, %v342
    %v373 = vmul.f32 %v257, %v346
    %v374 = vmul.f32 %v257, %v350
    %v375 = vmul.f32 %v261, %v322
    %v376 = vmul.f32 %v261, %v326
    %v377 = vmul.f32 %v261, %v330
    %v378 = vmul.f32 %v261, %v334
    %v379 = vmul.f32 %v261, %v338
    %v380 = vmul.f32 %v261, %v342
    %v381 = vmul.f32 %v261, %v346
    %v382 = vmul.f32 %v261, %v350
    %v383 = vmul.f32 %v265, %v322
    %v384 = vmul.f32 %v265, %v326
    %v385 = vmul.f32 %v265, %v330
    %v386 = vmul.f32 %v265, %v334
    %v387 = vmul.f32 %v265, %v338
    %v388 = vmul.f32 %v265, %v342
    %v389 = vmul.f32 %v265, %v346
    %v390 = vmul.f32 %v265, %v350
    %v391 = vmul.f32 %v269, %v322
    %v392 = vmul.f32 %v269, %v326
    %v393 = vmul.f32 %v269, %v330
    %v394 = vmul.f32 %v269, %v334
    %v395 = vmul.f32 %v269, %v338
    %v396 = vmul.f32 %v269, %v342
    %v397 = vmul.f32 %v269, %v346
    %v398 = vmul.f32 %v269, %v350
    %v399 = vmul.f32 %v273, %v322
    %v400 = vmul.f32 %v273, %v326
    %v401 = vmul.f32 %v273, %v330
    %v402 = vmul.f32 %v273, %v334
    %v403 = vmul.f32 %v273, %v338
    %v404 = vmul.f32 %v273, %v342
    %v405 = vmul.f32 %v273, %v346
    %v406 = vmul.f32 %v273, %v350
    %v407 = vmul.f32 %v277, %v322
    %v408 = vmul.f32 %v277, %v326
    %v409 = vmul.f32 %v277, %v330
    %v410 = vmul.f32 %v277, %v334
    %v411 = vmul.f32 %v277, %v338
    %v412 = vmul.f32 %v277, %v342
    %v413 = vmul.f32 %v277, %v346
    %v414 = vmul.f32 %v277, %v350
    %v415 = vadd.f32 %v183, %v351
    %v416 = vadd.f32 %v184, %v352
    %v417 = vadd.f32 %v185, %v353
    %v418 = vadd.f32 %v186, %v354
    %v419 = vadd.f32 %v187, %v355
    %v420 = vadd.f32 %v188, %v356
    %v421 = vadd.f32 %v189, %v357
    %v422 = vadd.f32 %v190, %v358
    %v423 = vadd.f32 %v191, %v359
    %v424 = vadd.f32 %v192, %v360
    %v425 = vadd.f32 %v193, %v361
    %v426 = vadd.f32 %v194, %v362
    %v427 = vadd.f32 %v195, %v363
    %v428 = vadd.f32 %v196, %v364
    %v429 = vadd.f32 %v197, %v365
    %v430 = vadd.f32 %v198, %v366
    %v431 = vadd.f32 %v199, %v367
    %v432 = vadd.f32 %v200, %v368
    %v433 = vadd.f32 %v201, %v369
    %v434 = vadd.f32 %v202, %v370
    %v435 = vadd.f32 %v203, %v371
    %v436 = vadd.f32 %v204, %v372
    %v437 = vadd.f32 %v205, %v373
    %v438 = vadd.f32 %v206, %v374
    %v439 = vadd.f32 %v207, %v375
    %v440 = vadd.f32 %v208, %v376
    %v441 = vadd.f32 %v209, %v377
    %v442 = vadd.f32 %v210, %v378
    %v443 = vadd.f32 %v211, %v379
    %v444 = vadd.f32 %v212, %v380
    %v445 = vadd.f32 %v213, %v381
    %v446 = vadd.f32 %v214, %v382
    %v447 = vadd.f32 %v215, %v383
    %v448 = vadd.f32 %v216, %v384
    %v449 = vadd.f32 %v217, %v385
    %v450 = vadd.f32 %v218, %v386
    %v451 = vadd.f32 %v219, %v387
    %v452 = vadd.f32 %v220, %v388
    %v453 = vadd.f32 %v221, %v389
    %v454 = vadd.f32 %v222, %v390
    %v455 = vadd.f32 %v223, %v391
    %v456 = vadd.f32 %v224, %v392
    %v457 = vadd.f32 %v225, %v393
    %v458 = vadd.f32 %v226, %v394
    %v459 = vadd.f32 %v227, %v395
    %v460 = vadd.f32 %v228, %v396
    %v461 = vadd.f32 %v229, %v397
    %v462 = vadd.f32 %v230, %v398
    %v463 = vadd.f32 %v231, %v399
    %v464 = vadd.f32 %v232, %v400
    %v465 = vadd.f32 %v233, %v401
    %v466 = vadd.f32 %v234, %v402
    %v467 = vadd.f32 %v235, %v403
    %v468 = vadd.f32 %v236, %v404
    %v469 = vadd.f32 %v237, %v405
    %v470 = vadd.f32 %v238, %v406
    %v471 = vadd.f32 %v239, %v407
    %v472 = vadd.f32 %v240, %v408
    %v473 = vadd.f32 %v241, %v409
    %v474 = vadd.f32 %v242, %v410
    %v475 = vadd.f32 %v243, %v411
    %v476 = vadd.f32 %v244, %v412
    %v477 = vadd.f32 %v245, %v413
    %v478 = vadd.f32 %v246, %v414
    %479 = vset.pattern.permute.xlu0 2
    %480 = vperm.xlu0 %479, %v59
    %v481 = vpop.permute.xlu0 %480
    %483 = vset.pattern.permute.xlu0 2
    %484 = vperm.xlu0 %483, %v60
    %v485 = vpop.permute.xlu0 %484
    %487 = vset.pattern.permute.xlu0 2
    %488 = vperm.xlu0 %487, %v61
    %v489 = vpop.permute.xlu0 %488
    %491 = vset.pattern.permute.xlu0 2
    %492 = vperm.xlu0 %491, %v62
    %v493 = vpop.permute.xlu0 %492
    %495 = vset.pattern.permute.xlu0 2
    %496 = vperm.xlu0 %495, %v63
    %v497 = vpop.permute.xlu0 %496
    %499 = vset.pattern.permute.xlu0 2
    %500 = vperm.xlu0 %499, %v64
    %v501 = vpop.permute.xlu0 %500
    %503 = vset.pattern.permute.xlu0 2
    %504 = vperm.xlu0 %503, %v65
    %v505 = vpop.permute.xlu0 %504
    %507 = vset.pattern.permute.xlu0 2
    %508 = vperm.xlu0 %507, %v66
    %v509 = vpop.permute.xlu0 %508
    %v511 = vlaneseq
    %v512 = vshrl.u32 %v511, 7
    %v513 = vsub.s32 2, %v512
    %v514 = vrot.slane %v55, %v513
    %v515 = vlaneseq
    %v516 = vshrl.u32 %v515, 7
    %v517 = vsub.s32 6, %v516
    %v518 = vrot.slane %v55, %v517
    %v519 = vlaneseq
    %v520 = vshrl.u32 %v519, 7
    %v521 = vsub.s32 2, %v520
    %v522 = vrot.slane %v56, %v521
    %v523 = vlaneseq
    %v524 = vshrl.u32 %v523, 7
    %v525 = vsub.s32 6, %v524
    %v526 = vrot.slane %v56, %v525
    %v527 = vlaneseq
    %v528 = vshrl.u32 %v527, 7
    %v529 = vsub.s32 2, %v528
    %v530 = vrot.slane %v57, %v529
    %v531 = vlaneseq
    %v532 = vshrl.u32 %v531, 7
    %v533 = vsub.s32 6, %v532
    %v534 = vrot.slane %v57, %v533
    %v535 = vlaneseq
    %v536 = vshrl.u32 %v535, 7
    %v537 = vsub.s32 2, %v536
    %v538 = vrot.slane %v58, %v537
    %v539 = vlaneseq
    %v540 = vshrl.u32 %v539, 7
    %v541 = vsub.s32 6, %v540
    %v542 = vrot.slane %v58, %v541
    %v551 = vlaneseq
    %v552 = vshrl.u32 %v551, 7
    %v553 = vsub.s32 2, %v552
    %v554 = vrot.slane %v514, %v553
    %v555 = vlaneseq
    %v556 = vshrl.u32 %v555, 7
    %v557 = vsub.s32 2, %v556
    %v558 = vrot.slane %v518, %v557
    %v559 = vlaneseq
    %v560 = vshrl.u32 %v559, 7
    %v561 = vsub.s32 2, %v560
    %v562 = vrot.slane %v522, %v561
    %v563 = vlaneseq
    %v564 = vshrl.u32 %v563, 7
    %v565 = vsub.s32 2, %v564
    %v566 = vrot.slane %v526, %v565
    %v567 = vlaneseq
    %v568 = vshrl.u32 %v567, 7
    %v569 = vsub.s32 2, %v568
    %v570 = vrot.slane %v530, %v569
    %v571 = vlaneseq
    %v572 = vshrl.u32 %v571, 7
    %v573 = vsub.s32 2, %v572
    %v574 = vrot.slane %v534, %v573
    %v575 = vlaneseq
    %v576 = vshrl.u32 %v575, 7
    %v577 = vsub.s32 2, %v576
    %v578 = vrot.slane %v538, %v577
    %v579 = vlaneseq
    %v580 = vshrl.u32 %v579, 7
    %v581 = vsub.s32 2, %v580
    %v582 = vrot.slane %v542, %v581
    %v583 = vmul.f32 %v481, %v554
    %v584 = vmul.f32 %v481, %v558
    %v585 = vmul.f32 %v481, %v562
    %v586 = vmul.f32 %v481, %v566
    %v587 = vmul.f32 %v481, %v570
    %v588 = vmul.f32 %v481, %v574
    %v589 = vmul.f32 %v481, %v578
    %v590 = vmul.f32 %v481, %v582
    %v591 = vmul.f32 %v485, %v554
    %v592 = vmul.f32 %v485, %v558
    %v593 = vmul.f32 %v485, %v562
    %v594 = vmul.f32 %v485, %v566
    %v595 = vmul.f32 %v485, %v570
    %v596 = vmul.f32 %v485, %v574
    %v597 = vmul.f32 %v485, %v578
    %v598 = vmul.f32 %v485, %v582
    %v599 = vmul.f32 %v489, %v554
    %v600 = vmul.f32 %v489, %v558
    %v601 = vmul.f32 %v489, %v562
    %v602 = vmul.f32 %v489, %v566
    %v603 = vmul.f32 %v489, %v570
    %v604 = vmul.f32 %v489, %v574
    %v605 = vmul.f32 %v489, %v578
    %v606 = vmul.f32 %v489, %v582
    %v607 = vmul.f32 %v493, %v554
    %v608 = vmul.f32 %v493, %v558
    %v609 = vmul.f32 %v493, %v562
    %v610 = vmul.f32 %v493, %v566
    %v611 = vmul.f32 %v493, %v570
    %v612 = vmul.f32 %v493, %v574
    %v613 = vmul.f32 %v493, %v578
    %v614 = vmul.f32 %v493, %v582
    %v615 = vmul.f32 %v497, %v554
    %v616 = vmul.f32 %v497, %v558
    %v617 = vmul.f32 %v497, %v562
    %v618 = vmul.f32 %v497, %v566
    %v619 = vmul.f32 %v497, %v570
    %v620 = vmul.f32 %v497, %v574
    %v621 = vmul.f32 %v497, %v578
    %v622 = vmul.f32 %v497, %v582
    %v623 = vmul.f32 %v501, %v554
    %v624 = vmul.f32 %v501, %v558
    %v625 = vmul.f32 %v501, %v562
    %v626 = vmul.f32 %v501, %v566
    %v627 = vmul.f32 %v501, %v570
    %v628 = vmul.f32 %v501, %v574
    %v629 = vmul.f32 %v501, %v578
    %v630 = vmul.f32 %v501, %v582
    %v631 = vmul.f32 %v505, %v554
    %v632 = vmul.f32 %v505, %v558
    %v633 = vmul.f32 %v505, %v562
    %v634 = vmul.f32 %v505, %v566
    %v635 = vmul.f32 %v505, %v570
    %v636 = vmul.f32 %v505, %v574
    %v637 = vmul.f32 %v505, %v578
    %v638 = vmul.f32 %v505, %v582
    %v639 = vmul.f32 %v509, %v554
    %v640 = vmul.f32 %v509, %v558
    %v641 = vmul.f32 %v509, %v562
    %v642 = vmul.f32 %v509, %v566
    %v643 = vmul.f32 %v509, %v570
    %v644 = vmul.f32 %v509, %v574
    %v645 = vmul.f32 %v509, %v578
    %v646 = vmul.f32 %v509, %v582
    %v647 = vadd.f32 %v415, %v583
    %v648 = vadd.f32 %v416, %v584
    %v649 = vadd.f32 %v417, %v585
    %v650 = vadd.f32 %v418, %v586
    %v651 = vadd.f32 %v419, %v587
    %v652 = vadd.f32 %v420, %v588
    %v653 = vadd.f32 %v421, %v589
    %v654 = vadd.f32 %v422, %v590
    %v655 = vadd.f32 %v423, %v591
    %v656 = vadd.f32 %v424, %v592
    %v657 = vadd.f32 %v425, %v593
    %v658 = vadd.f32 %v426, %v594
    %v659 = vadd.f32 %v427, %v595
    %v660 = vadd.f32 %v428, %v596
    %v661 = vadd.f32 %v429, %v597
    %v662 = vadd.f32 %v430, %v598
    %v663 = vadd.f32 %v431, %v599
    %v664 = vadd.f32 %v432, %v600
    %v665 = vadd.f32 %v433, %v601
    %v666 = vadd.f32 %v434, %v602
    %v667 = vadd.f32 %v435, %v603
    %v668 = vadd.f32 %v436, %v604
    %v669 = vadd.f32 %v437, %v605
    %v670 = vadd.f32 %v438, %v606
    %v671 = vadd.f32 %v439, %v607
    %v672 = vadd.f32 %v440, %v608
    %v673 = vadd.f32 %v441, %v609
    %v674 = vadd.f32 %v442, %v610
    %v675 = vadd.f32 %v443, %v611
    %v676 = vadd.f32 %v444, %v612
    %v677 = vadd.f32 %v445, %v613
    %v678 = vadd.f32 %v446, %v614
    %v679 = vadd.f32 %v447, %v615
    %v680 = vadd.f32 %v448, %v616
    %v681 = vadd.f32 %v449, %v617
    %v682 = vadd.f32 %v450, %v618
    %v683 = vadd.f32 %v451, %v619
    %v684 = vadd.f32 %v452, %v620
    %v685 = vadd.f32 %v453, %v621
    %v686 = vadd.f32 %v454, %v622
    %v687 = vadd.f32 %v455, %v623
    %v688 = vadd.f32 %v456, %v624
    %v689 = vadd.f32 %v457, %v625
    %v690 = vadd.f32 %v458, %v626
    %v691 = vadd.f32 %v459, %v627
    %v692 = vadd.f32 %v460, %v628
    %v693 = vadd.f32 %v461, %v629
    %v694 = vadd.f32 %v462, %v630
    %v695 = vadd.f32 %v463, %v631
    %v696 = vadd.f32 %v464, %v632
    %v697 = vadd.f32 %v465, %v633
    %v698 = vadd.f32 %v466, %v634
    %v699 = vadd.f32 %v467, %v635
    %v700 = vadd.f32 %v468, %v636
    %v701 = vadd.f32 %v469, %v637
    %v702 = vadd.f32 %v470, %v638
    %v703 = vadd.f32 %v471, %v639
    %v704 = vadd.f32 %v472, %v640
    %v705 = vadd.f32 %v473, %v641
    %v706 = vadd.f32 %v474, %v642
    %v707 = vadd.f32 %v475, %v643
    %v708 = vadd.f32 %v476, %v644
    %v709 = vadd.f32 %v477, %v645
    %v710 = vadd.f32 %v478, %v646
    %v711 = vand.u32 2147483647, %v647
    %vm712 = vcmp.le.f32.partialorder %v711, 0.7853982
    %vm713 = vcmp.lt.s32.totalorder %v647, 0
    %v714 = vand.u32 %v647, 2139095040
    %v715 = vshrl.u32 %v714, 23
    %v716 = vsub.s32 %v715, 127
    %v717 = vand.u32 2147483647, %v647
    %v718 = vand.u32 %v717, 8388607
    %v719 = vor.u32 %v718, 8388608
    %v720 = vsub.s32 0, %v719
    %v721 = vadd.s32 %v716, 1
    %vm722 = vcmp.gt.s32.totalorder %v721, 0
    %v723 = vsel %vm722, %v721, 0
    %v724 = vshrl.u32 %v723, 5
    %v725 = vand.u32 %v723, 31
    %v726 = vsub.s32 32, %v725
    %v727 = vshrl.u32 683565275, %v726
    %v728 = vshll.u32 683565275, %v725
    %v729 = vshrl.u32 2475754826, %v726
    %v730 = vor.u32 %v728, %v729
    %v731 = vshll.u32 2475754826, %v725
    %v732 = vshrl.u32 2131351028, %v726
    %v733 = vor.u32 %v731, %v732
    %v734 = vshll.u32 2131351028, %v725
    %v735 = vshrl.u32 2102212464, %v726
    %v736 = vor.u32 %v734, %v735
    %v737 = vshll.u32 2102212464, %v725
    %v738 = vshrl.u32 920167782, %v726
    %v739 = vor.u32 %v737, %v738
    %v740 = vshll.u32 920167782, %v725
    %v741 = vshrl.u32 1326507024, %v726
    %v742 = vor.u32 %v740, %v741
    %vm743 = vcmp.lt.s32.totalorder %v724, 1
    %vm744 = vcmp.lt.s32.totalorder %v724, 2
    %vm745 = vcmp.lt.s32.totalorder %v724, 3
    %vm746 = vcmp.lt.s32.totalorder %v724, 4
    %v747 = vsel %vm743, %v727, %v730
    %v748 = vsel %vm746, %v736, 2102212464
    %v749 = vsel %vm745, %v733, %v748
    %v750 = vsel %vm744, %v747, %v749
    %v751 = vsel %vm743, %v730, %v733
    %v752 = vsel %vm746, %v739, 920167782
    %v753 = vsel %vm745, %v736, %v752
    %v754 = vsel %vm744, %v751, %v753
    %v755 = vsel %vm743, %v733, %v736
    %v756 = vsel %vm746, %v742, 1326507024
    %v757 = vsel %vm745, %v739, %v756
    %v758 = vsel %vm744, %v755, %v757
    %v759 = vshll.u32 %v719, 8
    %v760 = vmul.u32.u64.compose %v759, %v758
    %v761 = vextract.low.u32 %v760
    %v762 = vextract.high.u32 %v760
    %v763 = vmul.u32.u64.compose %v759, %v754
    %v764 = vextract.low.u32 %v763
    %v765 = vextract.high.u32 %v763
    %v766 = vmul.u32 %v759, %v750
    %v767 = vadd.s32 %v762, %v764
    %vm768 = vc.u32 %v762, %v764
    %v769 = vadd.s32 %v765, 1
    %v770 = vsel %vm768, %v769, %v765
    %v771 = vadd.s32 %v766, %v770
    %v772 = vadd.s32 %v771, 536870912
    %v773 = vshrl.u32 %v772, 30
    %v774 = vshll.u32 %v773, 30
    %v775 = vsub.s32 %v771, %v774
    %vm776 = vcmp.lt.s32.totalorder %v775, 0
    %v777 = vsub.s32 0, %v775
    %v778 = vsel %vm776, %v777, %v775
    %v779 = vclz %v778
    %v780 = vsub.s32 %v779, 2
    %vm781 = vcmp.gt.s32.totalorder 0, %v780
    %v782 = vsel %vm781, 0, %v780
    %v783 = vsub.s32 32, %v782
    %v784 = vshll.u32 %v775, %v782
    %v785 = vshrl.u32 %v767, %v783
    %v786 = vor.u32 %v784, %v785
    %v787 = vsub.s32 4294967266, %v782
    %v788 = vadd.s32 %v787, 127
    %v789 = vshll.u32 %v788, 23
    %v790 = vor.u32 4788187, %v789
    %v791 = vand.u32 2147483647, %v790
    %v793 = vcvt.s32.f32 %v786
    %v794 = vmul.f32 %v793, %v791
    %v795 = vxor.u32 %v794, 2147483648
    %v796 = vsel %vm713, %v795, %v794
    %v797 = vsub.s32 4, %v773
    %v798 = vsel %vm713, %v797, %v773
    %v799 = vsel %vm712, %v647, %v796
    %v800 = vsel %vm712, 0, %v798
    %v801 = vcosq.f32.pop %v799
    %v802 = vsinq.f32.pop %v799
    %vm803 = vweird.f32 %v647
    %v804 = vadd.s32 %v800, 3
    %v805 = vand.u32 %v804, 3
    %vm806 = vcmp.lt.s32.totalorder %v805, 2
    %vm807 = vcmp.eq.s32.totalorder %v805, 0
    %v808 = vxor.u32 %v802, 2147483648
    %v809 = vsel %vm807, %v801, %v808
    %vm810 = vcmp.eq.s32.totalorder %v805, 2
    %v811 = vxor.u32 %v801, 2147483648
    %v812 = vsel %vm810, %v811, %v802
    %v813 = vsel %vm806, %v809, %v812
    %v814 = vsel %vm803, nan, %v813
    %v815 = vand.u32 2147483647, %v648
    %vm816 = vcmp.le.f32.partialorder %v815, 0.7853982
    %vm817 = vcmp.lt.s32.totalorder %v648, 0
    %v818 = vand.u32 %v648, 2139095040
    %v819 = vshrl.u32 %v818, 23
    %v820 = vsub.s32 %v819, 127
    %v821 = vand.u32 2147483647, %v648
    %v822 = vand.u32 %v821, 8388607
    %v823 = vor.u32 %v822, 8388608
    %v824 = vsub.s32 0, %v823
    %v825 = vadd.s32 %v820, 1
    %vm826 = vcmp.gt.s32.totalorder %v825, 0
    %v827 = vsel %vm826, %v825, 0
    %v828 = vshrl.u32 %v827, 5
    %v829 = vand.u32 %v827, 31
    %v830 = vsub.s32 32, %v829
    %v831 = vshrl.u32 683565275, %v830
    %v832 = vshll.u32 683565275, %v829
    %v833 = vshrl.u32 2475754826, %v830
    %v834 = vor.u32 %v832, %v833
    %v835 = vshll.u32 2475754826, %v829
    %v836 = vshrl.u32 2131351028, %v830
    %v837 = vor.u32 %v835, %v836
    %v838 = vshll.u32 2131351028, %v829
    %v839 = vshrl.u32 2102212464, %v830
    %v840 = vor.u32 %v838, %v839
    %v841 = vshll.u32 2102212464, %v829
    %v842 = vshrl.u32 920167782, %v830
    %v843 = vor.u32 %v841, %v842
    %v844 = vshll.u32 920167782, %v829
    %v845 = vshrl.u32 1326507024, %v830
    %v846 = vor.u32 %v844, %v845
    %vm847 = vcmp.lt.s32.totalorder %v828, 1
    %vm848 = vcmp.lt.s32.totalorder %v828, 2
    %vm849 = vcmp.lt.s32.totalorder %v828, 3
    %vm850 = vcmp.lt.s32.totalorder %v828, 4
    %v851 = vsel %vm847, %v831, %v834
    %v852 = vsel %vm850, %v840, 2102212464
    %v853 = vsel %vm849, %v837, %v852
    %v854 = vsel %vm848, %v851, %v853
    %v855 = vsel %vm847, %v834, %v837
    %v856 = vsel %vm850, %v843, 920167782
    %v857 = vsel %vm849, %v840, %v856
    %v858 = vsel %vm848, %v855, %v857
    %v859 = vsel %vm847, %v837, %v840
    %v860 = vsel %vm850, %v846, 1326507024
    %v861 = vsel %vm849, %v843, %v860
    %v862 = vsel %vm848, %v859, %v861
    %v863 = vshll.u32 %v823, 8
    %v864 = vmul.u32.u64.compose %v863, %v862
    %v865 = vextract.low.u32 %v864
    %v866 = vextract.high.u32 %v864
    %v867 = vmul.u32.u64.compose %v863, %v858
    %v868 = vextract.low.u32 %v867
    %v869 = vextract.high.u32 %v867
    %v870 = vmul.u32 %v863, %v854
    %v871 = vadd.s32 %v866, %v868
    %vm872 = vc.u32 %v866, %v868
    %v873 = vadd.s32 %v869, 1
    %v874 = vsel %vm872, %v873, %v869
    %v875 = vadd.s32 %v870, %v874
    %v876 = vadd.s32 %v875, 536870912
    %v877 = vshrl.u32 %v876, 30
    %v878 = vshll.u32 %v877, 30
    %v879 = vsub.s32 %v875, %v878
    %vm880 = vcmp.lt.s32.totalorder %v879, 0
    %v881 = vsub.s32 0, %v879
    %v882 = vsel %vm880, %v881, %v879
    %v883 = vclz %v882
    %v884 = vsub.s32 %v883, 2
    %vm885 = vcmp.gt.s32.totalorder 0, %v884
    %v886 = vsel %vm885, 0, %v884
    %v887 = vsub.s32 32, %v886
    %v888 = vshll.u32 %v879, %v886
    %v889 = vshrl.u32 %v871, %v887
    %v890 = vor.u32 %v888, %v889
    %v891 = vsub.s32 4294967266, %v886
    %v892 = vadd.s32 %v891, 127
    %v893 = vshll.u32 %v892, 23
    %v894 = vor.u32 4788187, %v893
    %v895 = vand.u32 2147483647, %v894
    %v897 = vcvt.s32.f32 %v890
    %v898 = vmul.f32 %v897, %v895
    %v899 = vxor.u32 %v898, 2147483648
    %v900 = vsel %vm817, %v899, %v898
    %v901 = vsub.s32 4, %v877
    %v902 = vsel %vm817, %v901, %v877
    %v903 = vsel %vm816, %v648, %v900
    %v904 = vsel %vm816, 0, %v902
    %v905 = vcosq.f32.pop %v903
    %v906 = vsinq.f32.pop %v903
    %vm907 = vweird.f32 %v648
    %v908 = vadd.s32 %v904, 3
    %v909 = vand.u32 %v908, 3
    %vm910 = vcmp.lt.s32.totalorder %v909, 2
    %vm911 = vcmp.eq.s32.totalorder %v909, 0
    %v912 = vxor.u32 %v906, 2147483648
    %v913 = vsel %vm911, %v905, %v912
    %vm914 = vcmp.eq.s32.totalorder %v909, 2
    %v915 = vxor.u32 %v905, 2147483648
    %v916 = vsel %vm914, %v915, %v906
    %v917 = vsel %vm910, %v913, %v916
    %v918 = vsel %vm907, nan, %v917
    %v919 = vand.u32 2147483647, %v649
    %vm920 = vcmp.le.f32.partialorder %v919, 0.7853982
    %vm921 = vcmp.lt.s32.totalorder %v649, 0
    %v922 = vand.u32 %v649, 2139095040
    %v923 = vshrl.u32 %v922, 23
    %v924 = vsub.s32 %v923, 127
    %v925 = vand.u32 2147483647, %v649
    %v926 = vand.u32 %v925, 8388607
    %v927 = vor.u32 %v926, 8388608
    %v928 = vsub.s32 0, %v927
    %v929 = vadd.s32 %v924, 1
    %vm930 = vcmp.gt.s32.totalorder %v929, 0
    %v931 = vsel %vm930, %v929, 0
    %v932 = vshrl.u32 %v931, 5
    %v933 = vand.u32 %v931, 31
    %v934 = vsub.s32 32, %v933
    %v935 = vshrl.u32 683565275, %v934
    %v936 = vshll.u32 683565275, %v933
    %v937 = vshrl.u32 2475754826, %v934
    %v938 = vor.u32 %v936, %v937
    %v939 = vshll.u32 2475754826, %v933
    %v940 = vshrl.u32 2131351028, %v934
    %v941 = vor.u32 %v939, %v940
    %v942 = vshll.u32 2131351028, %v933
    %v943 = vshrl.u32 2102212464, %v934
    %v944 = vor.u32 %v942, %v943
    %v945 = vshll.u32 2102212464, %v933
    %v946 = vshrl.u32 920167782, %v934
    %v947 = vor.u32 %v945, %v946
    %v948 = vshll.u32 920167782, %v933
    %v949 = vshrl.u32 1326507024, %v934
    %v950 = vor.u32 %v948, %v949
    %vm951 = vcmp.lt.s32.totalorder %v932, 1
    %vm952 = vcmp.lt.s32.totalorder %v932, 2
    %vm953 = vcmp.lt.s32.totalorder %v932, 3
    %vm954 = vcmp.lt.s32.totalorder %v932, 4
    %v955 = vsel %vm951, %v935, %v938
    %v956 = vsel %vm954, %v944, 2102212464
    %v957 = vsel %vm953, %v941, %v956
    %v958 = vsel %vm952, %v955, %v957
    %v959 = vsel %vm951, %v938, %v941
    %v960 = vsel %vm954, %v947, 920167782
    %v961 = vsel %vm953, %v944, %v960
    %v962 = vsel %vm952, %v959, %v961
    %v963 = vsel %vm951, %v941, %v944
    %v964 = vsel %vm954, %v950, 1326507024
    %v965 = vsel %vm953, %v947, %v964
    %v966 = vsel %vm952, %v963, %v965
    %v967 = vshll.u32 %v927, 8
    %v968 = vmul.u32.u64.compose %v967, %v966
    %v969 = vextract.low.u32 %v968
    %v970 = vextract.high.u32 %v968
    %v971 = vmul.u32.u64.compose %v967, %v962
    %v972 = vextract.low.u32 %v971
    %v973 = vextract.high.u32 %v971
    %v974 = vmul.u32 %v967, %v958
    %v975 = vadd.s32 %v970, %v972
    %vm976 = vc.u32 %v970, %v972
    %v977 = vadd.s32 %v973, 1
    %v978 = vsel %vm976, %v977, %v973
    %v979 = vadd.s32 %v974, %v978
    %v980 = vadd.s32 %v979, 536870912
    %v981 = vshrl.u32 %v980, 30
    %v982 = vshll.u32 %v981, 30
    %v983 = vsub.s32 %v979, %v982
    %vm984 = vcmp.lt.s32.totalorder %v983, 0
    %v985 = vsub.s32 0, %v983
    %v986 = vsel %vm984, %v985, %v983
    %v987 = vclz %v986
    %v988 = vsub.s32 %v987, 2
    %vm989 = vcmp.gt.s32.totalorder 0, %v988
    %v990 = vsel %vm989, 0, %v988
    %v991 = vsub.s32 32, %v990
    %v992 = vshll.u32 %v983, %v990
    %v993 = vshrl.u32 %v975, %v991
    %v994 = vor.u32 %v992, %v993
    %v995 = vsub.s32 4294967266, %v990
    %v996 = vadd.s32 %v995, 127
    %v997 = vshll.u32 %v996, 23
    %v998 = vor.u32 4788187, %v997
    %v999 = vand.u32 2147483647, %v998
    %v1001 = vcvt.s32.f32 %v994
    %v1002 = vmul.f32 %v1001, %v999
    %v1003 = vxor.u32 %v1002, 2147483648
    %v1004 = vsel %vm921, %v1003, %v1002
    %v1005 = vsub.s32 4, %v981
    %v1006 = vsel %vm921, %v1005, %v981
    %v1007 = vsel %vm920, %v649, %v1004
    %v1008 = vsel %vm920, 0, %v1006
    %v1009 = vcosq.f32.pop %v1007
    %v1010 = vsinq.f32.pop %v1007
    %vm1011 = vweird.f32 %v649
    %v1012 = vadd.s32 %v1008, 3
    %v1013 = vand.u32 %v1012, 3
    %vm1014 = vcmp.lt.s32.totalorder %v1013, 2
    %vm1015 = vcmp.eq.s32.totalorder %v1013, 0
    %v1016 = vxor.u32 %v1010, 2147483648
    %v1017 = vsel %vm1015, %v1009, %v1016
    %vm1018 = vcmp.eq.s32.totalorder %v1013, 2
    %v1019 = vxor.u32 %v1009, 2147483648
    %v1020 = vsel %vm1018, %v1019, %v1010
    %v1021 = vsel %vm1014, %v1017, %v1020
    %v1022 = vsel %vm1011, nan, %v1021
    %v1023 = vand.u32 2147483647, %v650
    %vm1024 = vcmp.le.f32.partialorder %v1023, 0.7853982
    %vm1025 = vcmp.lt.s32.totalorder %v650, 0
    %v1026 = vand.u32 %v650, 2139095040
    %v1027 = vshrl.u32 %v1026, 23
    %v1028 = vsub.s32 %v1027, 127
    %v1029 = vand.u32 2147483647, %v650
    %v1030 = vand.u32 %v1029, 8388607
    %v1031 = vor.u32 %v1030, 8388608
    %v1032 = vsub.s32 0, %v1031
    %v1033 = vadd.s32 %v1028, 1
    %vm1034 = vcmp.gt.s32.totalorder %v1033, 0
    %v1035 = vsel %vm1034, %v1033, 0
    %v1036 = vshrl.u32 %v1035, 5
    %v1037 = vand.u32 %v1035, 31
    %v1038 = vsub.s32 32, %v1037
    %v1039 = vshrl.u32 683565275, %v1038
    %v1040 = vshll.u32 683565275, %v1037
    %v1041 = vshrl.u32 2475754826, %v1038
    %v1042 = vor.u32 %v1040, %v1041
    %v1043 = vshll.u32 2475754826, %v1037
    %v1044 = vshrl.u32 2131351028, %v1038
    %v1045 = vor.u32 %v1043, %v1044
    %v1046 = vshll.u32 2131351028, %v1037
    %v1047 = vshrl.u32 2102212464, %v1038
    %v1048 = vor.u32 %v1046, %v1047
    %v1049 = vshll.u32 2102212464, %v1037
    %v1050 = vshrl.u32 920167782, %v1038
    %v1051 = vor.u32 %v1049, %v1050
    %v1052 = vshll.u32 920167782, %v1037
    %v1053 = vshrl.u32 1326507024, %v1038
    %v1054 = vor.u32 %v1052, %v1053
    %vm1055 = vcmp.lt.s32.totalorder %v1036, 1
    %vm1056 = vcmp.lt.s32.totalorder %v1036, 2
    %vm1057 = vcmp.lt.s32.totalorder %v1036, 3
    %vm1058 = vcmp.lt.s32.totalorder %v1036, 4
    %v1059 = vsel %vm1055, %v1039, %v1042
    %v1060 = vsel %vm1058, %v1048, 2102212464
    %v1061 = vsel %vm1057, %v1045, %v1060
    %v1062 = vsel %vm1056, %v1059, %v1061
    %v1063 = vsel %vm1055, %v1042, %v1045
    %v1064 = vsel %vm1058, %v1051, 920167782
    %v1065 = vsel %vm1057, %v1048, %v1064
    %v1066 = vsel %vm1056, %v1063, %v1065
    %v1067 = vsel %vm1055, %v1045, %v1048
    %v1068 = vsel %vm1058, %v1054, 1326507024
    %v1069 = vsel %vm1057, %v1051, %v1068
    %v1070 = vsel %vm1056, %v1067, %v1069
    %v1071 = vshll.u32 %v1031, 8
    %v1072 = vmul.u32.u64.compose %v1071, %v1070
    %v1073 = vextract.low.u32 %v1072
    %v1074 = vextract.high.u32 %v1072
    %v1075 = vmul.u32.u64.compose %v1071, %v1066
    %v1076 = vextract.low.u32 %v1075
    %v1077 = vextract.high.u32 %v1075
    %v1078 = vmul.u32 %v1071, %v1062
    %v1079 = vadd.s32 %v1074, %v1076
    %vm1080 = vc.u32 %v1074, %v1076
    %v1081 = vadd.s32 %v1077, 1
    %v1082 = vsel %vm1080, %v1081, %v1077
    %v1083 = vadd.s32 %v1078, %v1082
    %v1084 = vadd.s32 %v1083, 536870912
    %v1085 = vshrl.u32 %v1084, 30
    %v1086 = vshll.u32 %v1085, 30
    %v1087 = vsub.s32 %v1083, %v1086
    %vm1088 = vcmp.lt.s32.totalorder %v1087, 0
    %v1089 = vsub.s32 0, %v1087
    %v1090 = vsel %vm1088, %v1089, %v1087
    %v1091 = vclz %v1090
    %v1092 = vsub.s32 %v1091, 2
    %vm1093 = vcmp.gt.s32.totalorder 0, %v1092
    %v1094 = vsel %vm1093, 0, %v1092
    %v1095 = vsub.s32 32, %v1094
    %v1096 = vshll.u32 %v1087, %v1094
    %v1097 = vshrl.u32 %v1079, %v1095
    %v1098 = vor.u32 %v1096, %v1097
    %v1099 = vsub.s32 4294967266, %v1094
    %v1100 = vadd.s32 %v1099, 127
    %v1101 = vshll.u32 %v1100, 23
    %v1102 = vor.u32 4788187, %v1101
    %v1103 = vand.u32 2147483647, %v1102
    %v1105 = vcvt.s32.f32 %v1098
    %v1106 = vmul.f32 %v1105, %v1103
    %v1107 = vxor.u32 %v1106, 2147483648
    %v1108 = vsel %vm1025, %v1107, %v1106
    %v1109 = vsub.s32 4, %v1085
    %v1110 = vsel %vm1025, %v1109, %v1085
    %v1111 = vsel %vm1024, %v650, %v1108
    %v1112 = vsel %vm1024, 0, %v1110
    %v1113 = vcosq.f32.pop %v1111
    %v1114 = vsinq.f32.pop %v1111
    %vm1115 = vweird.f32 %v650
    %v1116 = vadd.s32 %v1112, 3
    %v1117 = vand.u32 %v1116, 3
    %vm1118 = vcmp.lt.s32.totalorder %v1117, 2
    %vm1119 = vcmp.eq.s32.totalorder %v1117, 0
    %v1120 = vxor.u32 %v1114, 2147483648
    %v1121 = vsel %vm1119, %v1113, %v1120
    %vm1122 = vcmp.eq.s32.totalorder %v1117, 2
    %v1123 = vxor.u32 %v1113, 2147483648
    %v1124 = vsel %vm1122, %v1123, %v1114
    %v1125 = vsel %vm1118, %v1121, %v1124
    %v1126 = vsel %vm1115, nan, %v1125
    %v1127 = vand.u32 2147483647, %v651
    %vm1128 = vcmp.le.f32.partialorder %v1127, 0.7853982
    %vm1129 = vcmp.lt.s32.totalorder %v651, 0
    %v1130 = vand.u32 %v651, 2139095040
    %v1131 = vshrl.u32 %v1130, 23
    %v1132 = vsub.s32 %v1131, 127
    %v1133 = vand.u32 2147483647, %v651
    %v1134 = vand.u32 %v1133, 8388607
    %v1135 = vor.u32 %v1134, 8388608
    %v1136 = vsub.s32 0, %v1135
    %v1137 = vadd.s32 %v1132, 1
    %vm1138 = vcmp.gt.s32.totalorder %v1137, 0
    %v1139 = vsel %vm1138, %v1137, 0
    %v1140 = vshrl.u32 %v1139, 5
    %v1141 = vand.u32 %v1139, 31
    %v1142 = vsub.s32 32, %v1141
    %v1143 = vshrl.u32 683565275, %v1142
    %v1144 = vshll.u32 683565275, %v1141
    %v1145 = vshrl.u32 2475754826, %v1142
    %v1146 = vor.u32 %v1144, %v1145
    %v1147 = vshll.u32 2475754826, %v1141
    %v1148 = vshrl.u32 2131351028, %v1142
    %v1149 = vor.u32 %v1147, %v1148
    %v1150 = vshll.u32 2131351028, %v1141
    %v1151 = vshrl.u32 2102212464, %v1142
    %v1152 = vor.u32 %v1150, %v1151
    %v1153 = vshll.u32 2102212464, %v1141
    %v1154 = vshrl.u32 920167782, %v1142
    %v1155 = vor.u32 %v1153, %v1154
    %v1156 = vshll.u32 920167782, %v1141
    %v1157 = vshrl.u32 1326507024, %v1142
    %v1158 = vor.u32 %v1156, %v1157
    %vm1159 = vcmp.lt.s32.totalorder %v1140, 1
    %vm1160 = vcmp.lt.s32.totalorder %v1140, 2
    %vm1161 = vcmp.lt.s32.totalorder %v1140, 3
    %vm1162 = vcmp.lt.s32.totalorder %v1140, 4
    %v1163 = vsel %vm1159, %v1143, %v1146
    %v1164 = vsel %vm1162, %v1152, 2102212464
    %v1165 = vsel %vm1161, %v1149, %v1164
    %v1166 = vsel %vm1160, %v1163, %v1165
    %v1167 = vsel %vm1159, %v1146, %v1149
    %v1168 = vsel %vm1162, %v1155, 920167782
    %v1169 = vsel %vm1161, %v1152, %v1168
    %v1170 = vsel %vm1160, %v1167, %v1169
    %v1171 = vsel %vm1159, %v1149, %v1152
    %v1172 = vsel %vm1162, %v1158, 1326507024
    %v1173 = vsel %vm1161, %v1155, %v1172
    %v1174 = vsel %vm1160, %v1171, %v1173
    %v1175 = vshll.u32 %v1135, 8
    %v1176 = vmul.u32.u64.compose %v1175, %v1174
    %v1177 = vextract.low.u32 %v1176
    %v1178 = vextract.high.u32 %v1176
    %v1179 = vmul.u32.u64.compose %v1175, %v1170
    %v1180 = vextract.low.u32 %v1179
    %v1181 = vextract.high.u32 %v1179
    %v1182 = vmul.u32 %v1175, %v1166
    %v1183 = vadd.s32 %v1178, %v1180
    %vm1184 = vc.u32 %v1178, %v1180
    %v1185 = vadd.s32 %v1181, 1
    %v1186 = vsel %vm1184, %v1185, %v1181
    %v1187 = vadd.s32 %v1182, %v1186
    %v1188 = vadd.s32 %v1187, 536870912
    %v1189 = vshrl.u32 %v1188, 30
    %v1190 = vshll.u32 %v1189, 30
    %v1191 = vsub.s32 %v1187, %v1190
    %vm1192 = vcmp.lt.s32.totalorder %v1191, 0
    %v1193 = vsub.s32 0, %v1191
    %v1194 = vsel %vm1192, %v1193, %v1191
    %v1195 = vclz %v1194
    %v1196 = vsub.s32 %v1195, 2
    %vm1197 = vcmp.gt.s32.totalorder 0, %v1196
    %v1198 = vsel %vm1197, 0, %v1196
    %v1199 = vsub.s32 32, %v1198
    %v1200 = vshll.u32 %v1191, %v1198
    %v1201 = vshrl.u32 %v1183, %v1199
    %v1202 = vor.u32 %v1200, %v1201
    %v1203 = vsub.s32 4294967266, %v1198
    %v1204 = vadd.s32 %v1203, 127
    %v1205 = vshll.u32 %v1204, 23
    %v1206 = vor.u32 4788187, %v1205
    %v1207 = vand.u32 2147483647, %v1206
    %v1209 = vcvt.s32.f32 %v1202
    %v1210 = vmul.f32 %v1209, %v1207
    %v1211 = vxor.u32 %v1210, 2147483648
    %v1212 = vsel %vm1129, %v1211, %v1210
    %v1213 = vsub.s32 4, %v1189
    %v1214 = vsel %vm1129, %v1213, %v1189
    %v1215 = vsel %vm1128, %v651, %v1212
    %v1216 = vsel %vm1128, 0, %v1214
    %v1217 = vcosq.f32.pop %v1215
    %v1218 = vsinq.f32.pop %v1215
    %vm1219 = vweird.f32 %v651
    %v1220 = vadd.s32 %v1216, 3
    %v1221 = vand.u32 %v1220, 3
    %vm1222 = vcmp.lt.s32.totalorder %v1221, 2
    %vm1223 = vcmp.eq.s32.totalorder %v1221, 0
    %v1224 = vxor.u32 %v1218, 2147483648
    %v1225 = vsel %vm1223, %v1217, %v1224
    %vm1226 = vcmp.eq.s32.totalorder %v1221, 2
    %v1227 = vxor.u32 %v1217, 2147483648
    %v1228 = vsel %vm1226, %v1227, %v1218
    %v1229 = vsel %vm1222, %v1225, %v1228
    %v1230 = vsel %vm1219, nan, %v1229
    %v1231 = vand.u32 2147483647, %v652
    %vm1232 = vcmp.le.f32.partialorder %v1231, 0.7853982
    %vm1233 = vcmp.lt.s32.totalorder %v652, 0
    %v1234 = vand.u32 %v652, 2139095040
    %v1235 = vshrl.u32 %v1234, 23
    %v1236 = vsub.s32 %v1235, 127
    %v1237 = vand.u32 2147483647, %v652
    %v1238 = vand.u32 %v1237, 8388607
    %v1239 = vor.u32 %v1238, 8388608
    %v1240 = vsub.s32 0, %v1239
    %v1241 = vadd.s32 %v1236, 1
    %vm1242 = vcmp.gt.s32.totalorder %v1241, 0
    %v1243 = vsel %vm1242, %v1241, 0
    %v1244 = vshrl.u32 %v1243, 5
    %v1245 = vand.u32 %v1243, 31
    %v1246 = vsub.s32 32, %v1245
    %v1247 = vshrl.u32 683565275, %v1246
    %v1248 = vshll.u32 683565275, %v1245
    %v1249 = vshrl.u32 2475754826, %v1246
    %v1250 = vor.u32 %v1248, %v1249
    %v1251 = vshll.u32 2475754826, %v1245
    %v1252 = vshrl.u32 2131351028, %v1246
    %v1253 = vor.u32 %v1251, %v1252
    %v1254 = vshll.u32 2131351028, %v1245
    %v1255 = vshrl.u32 2102212464, %v1246
    %v1256 = vor.u32 %v1254, %v1255
    %v1257 = vshll.u32 2102212464, %v1245
    %v1258 = vshrl.u32 920167782, %v1246
    %v1259 = vor.u32 %v1257, %v1258
    %v1260 = vshll.u32 920167782, %v1245
    %v1261 = vshrl.u32 1326507024, %v1246
    %v1262 = vor.u32 %v1260, %v1261
    %vm1263 = vcmp.lt.s32.totalorder %v1244, 1
    %vm1264 = vcmp.lt.s32.totalorder %v1244, 2
    %vm1265 = vcmp.lt.s32.totalorder %v1244, 3
    %vm1266 = vcmp.lt.s32.totalorder %v1244, 4
    %v1267 = vsel %vm1263, %v1247, %v1250
    %v1268 = vsel %vm1266, %v1256, 2102212464
    %v1269 = vsel %vm1265, %v1253, %v1268
    %v1270 = vsel %vm1264, %v1267, %v1269
    %v1271 = vsel %vm1263, %v1250, %v1253
    %v1272 = vsel %vm1266, %v1259, 920167782
    %v1273 = vsel %vm1265, %v1256, %v1272
    %v1274 = vsel %vm1264, %v1271, %v1273
    %v1275 = vsel %vm1263, %v1253, %v1256
    %v1276 = vsel %vm1266, %v1262, 1326507024
    %v1277 = vsel %vm1265, %v1259, %v1276
    %v1278 = vsel %vm1264, %v1275, %v1277
    %v1279 = vshll.u32 %v1239, 8
    %v1280 = vmul.u32.u64.compose %v1279, %v1278
    %v1281 = vextract.low.u32 %v1280
    %v1282 = vextract.high.u32 %v1280
    %v1283 = vmul.u32.u64.compose %v1279, %v1274
    %v1284 = vextract.low.u32 %v1283
    %v1285 = vextract.high.u32 %v1283
    %v1286 = vmul.u32 %v1279, %v1270
    %v1287 = vadd.s32 %v1282, %v1284
    %vm1288 = vc.u32 %v1282, %v1284
    %v1289 = vadd.s32 %v1285, 1
    %v1290 = vsel %vm1288, %v1289, %v1285
    %v1291 = vadd.s32 %v1286, %v1290
    %v1292 = vadd.s32 %v1291, 536870912
    %v1293 = vshrl.u32 %v1292, 30
    %v1294 = vshll.u32 %v1293, 30
    %v1295 = vsub.s32 %v1291, %v1294
    %vm1296 = vcmp.lt.s32.totalorder %v1295, 0
    %v1297 = vsub.s32 0, %v1295
    %v1298 = vsel %vm1296, %v1297, %v1295
    %v1299 = vclz %v1298
    %v1300 = vsub.s32 %v1299, 2
    %vm1301 = vcmp.gt.s32.totalorder 0, %v1300
    %v1302 = vsel %vm1301, 0, %v1300
    %v1303 = vsub.s32 32, %v1302
    %v1304 = vshll.u32 %v1295, %v1302
    %v1305 = vshrl.u32 %v1287, %v1303
    %v1306 = vor.u32 %v1304, %v1305
    %v1307 = vsub.s32 4294967266, %v1302
    %v1308 = vadd.s32 %v1307, 127
    %v1309 = vshll.u32 %v1308, 23
    %v1310 = vor.u32 4788187, %v1309
    %v1311 = vand.u32 2147483647, %v1310
    %v1313 = vcvt.s32.f32 %v1306
    %v1314 = vmul.f32 %v1313, %v1311
    %v1315 = vxor.u32 %v1314, 2147483648
    %v1316 = vsel %vm1233, %v1315, %v1314
    %v1317 = vsub.s32 4, %v1293
    %v1318 = vsel %vm1233, %v1317, %v1293
    %v1319 = vsel %vm1232, %v652, %v1316
    %v1320 = vsel %vm1232, 0, %v1318
    %v1321 = vcosq.f32.pop %v1319
    %v1322 = vsinq.f32.pop %v1319
    %vm1323 = vweird.f32 %v652
    %v1324 = vadd.s32 %v1320, 3
    %v1325 = vand.u32 %v1324, 3
    %vm1326 = vcmp.lt.s32.totalorder %v1325, 2
    %vm1327 = vcmp.eq.s32.totalorder %v1325, 0
    %v1328 = vxor.u32 %v1322, 2147483648
    %v1329 = vsel %vm1327, %v1321, %v1328
    %vm1330 = vcmp.eq.s32.totalorder %v1325, 2
    %v1331 = vxor.u32 %v1321, 2147483648
    %v1332 = vsel %vm1330, %v1331, %v1322
    %v1333 = vsel %vm1326, %v1329, %v1332
    %v1334 = vsel %vm1323, nan, %v1333
    %v1335 = vand.u32 2147483647, %v653
    %vm1336 = vcmp.le.f32.partialorder %v1335, 0.7853982
    %vm1337 = vcmp.lt.s32.totalorder %v653, 0
    %v1338 = vand.u32 %v653, 2139095040
    %v1339 = vshrl.u32 %v1338, 23
    %v1340 = vsub.s32 %v1339, 127
    %v1341 = vand.u32 2147483647, %v653
    %v1342 = vand.u32 %v1341, 8388607
    %v1343 = vor.u32 %v1342, 8388608
    %v1344 = vsub.s32 0, %v1343
    %v1345 = vadd.s32 %v1340, 1
    %vm1346 = vcmp.gt.s32.totalorder %v1345, 0
    %v1347 = vsel %vm1346, %v1345, 0
    %v1348 = vshrl.u32 %v1347, 5
    %v1349 = vand.u32 %v1347, 31
    %v1350 = vsub.s32 32, %v1349
    %v1351 = vshrl.u32 683565275, %v1350
    %v1352 = vshll.u32 683565275, %v1349
    %v1353 = vshrl.u32 2475754826, %v1350
    %v1354 = vor.u32 %v1352, %v1353
    %v1355 = vshll.u32 2475754826, %v1349
    %v1356 = vshrl.u32 2131351028, %v1350
    %v1357 = vor.u32 %v1355, %v1356
    %v1358 = vshll.u32 2131351028, %v1349
    %v1359 = vshrl.u32 2102212464, %v1350
    %v1360 = vor.u32 %v1358, %v1359
    %v1361 = vshll.u32 2102212464, %v1349
    %v1362 = vshrl.u32 920167782, %v1350
    %v1363 = vor.u32 %v1361, %v1362
    %v1364 = vshll.u32 920167782, %v1349
    %v1365 = vshrl.u32 1326507024, %v1350
    %v1366 = vor.u32 %v1364, %v1365
    %vm1367 = vcmp.lt.s32.totalorder %v1348, 1
    %vm1368 = vcmp.lt.s32.totalorder %v1348, 2
    %vm1369 = vcmp.lt.s32.totalorder %v1348, 3
    %vm1370 = vcmp.lt.s32.totalorder %v1348, 4
    %v1371 = vsel %vm1367, %v1351, %v1354
    %v1372 = vsel %vm1370, %v1360, 2102212464
    %v1373 = vsel %vm1369, %v1357, %v1372
    %v1374 = vsel %vm1368, %v1371, %v1373
    %v1375 = vsel %vm1367, %v1354, %v1357
    %v1376 = vsel %vm1370, %v1363, 920167782
    %v1377 = vsel %vm1369, %v1360, %v1376
    %v1378 = vsel %vm1368, %v1375, %v1377
    %v1379 = vsel %vm1367, %v1357, %v1360
    %v1380 = vsel %vm1370, %v1366, 1326507024
    %v1381 = vsel %vm1369, %v1363, %v1380
    %v1382 = vsel %vm1368, %v1379, %v1381
    %v1383 = vshll.u32 %v1343, 8
    %v1384 = vmul.u32.u64.compose %v1383, %v1382
    %v1385 = vextract.low.u32 %v1384
    %v1386 = vextract.high.u32 %v1384
    %v1387 = vmul.u32.u64.compose %v1383, %v1378
    %v1388 = vextract.low.u32 %v1387
    %v1389 = vextract.high.u32 %v1387
    %v1390 = vmul.u32 %v1383, %v1374
    %v1391 = vadd.s32 %v1386, %v1388
    %vm1392 = vc.u32 %v1386, %v1388
    %v1393 = vadd.s32 %v1389, 1
    %v1394 = vsel %vm1392, %v1393, %v1389
    %v1395 = vadd.s32 %v1390, %v1394
    %v1396 = vadd.s32 %v1395, 536870912
    %v1397 = vshrl.u32 %v1396, 30
    %v1398 = vshll.u32 %v1397, 30
    %v1399 = vsub.s32 %v1395, %v1398
    %vm1400 = vcmp.lt.s32.totalorder %v1399, 0
    %v1401 = vsub.s32 0, %v1399
    %v1402 = vsel %vm1400, %v1401, %v1399
    %v1403 = vclz %v1402
    %v1404 = vsub.s32 %v1403, 2
    %vm1405 = vcmp.gt.s32.totalorder 0, %v1404
    %v1406 = vsel %vm1405, 0, %v1404
    %v1407 = vsub.s32 32, %v1406
    %v1408 = vshll.u32 %v1399, %v1406
    %v1409 = vshrl.u32 %v1391, %v1407
    %v1410 = vor.u32 %v1408, %v1409
    %v1411 = vsub.s32 4294967266, %v1406
    %v1412 = vadd.s32 %v1411, 127
    %v1413 = vshll.u32 %v1412, 23
    %v1414 = vor.u32 4788187, %v1413
    %v1415 = vand.u32 2147483647, %v1414
    %v1417 = vcvt.s32.f32 %v1410
    %v1418 = vmul.f32 %v1417, %v1415
    %v1419 = vxor.u32 %v1418, 2147483648
    %v1420 = vsel %vm1337, %v1419, %v1418
    %v1421 = vsub.s32 4, %v1397
    %v1422 = vsel %vm1337, %v1421, %v1397
    %v1423 = vsel %vm1336, %v653, %v1420
    %v1424 = vsel %vm1336, 0, %v1422
    %v1425 = vcosq.f32.pop %v1423
    %v1426 = vsinq.f32.pop %v1423
    %vm1427 = vweird.f32 %v653
    %v1428 = vadd.s32 %v1424, 3
    %v1429 = vand.u32 %v1428, 3
    %vm1430 = vcmp.lt.s32.totalorder %v1429, 2
    %vm1431 = vcmp.eq.s32.totalorder %v1429, 0
    %v1432 = vxor.u32 %v1426, 2147483648
    %v1433 = vsel %vm1431, %v1425, %v1432
    %vm1434 = vcmp.eq.s32.totalorder %v1429, 2
    %v1435 = vxor.u32 %v1425, 2147483648
    %v1436 = vsel %vm1434, %v1435, %v1426
    %v1437 = vsel %vm1430, %v1433, %v1436
    %v1438 = vsel %vm1427, nan, %v1437
    %v1439 = vand.u32 2147483647, %v654
    %vm1440 = vcmp.le.f32.partialorder %v1439, 0.7853982
    %vm1441 = vcmp.lt.s32.totalorder %v654, 0
    %v1442 = vand.u32 %v654, 2139095040
    %v1443 = vshrl.u32 %v1442, 23
    %v1444 = vsub.s32 %v1443, 127
    %v1445 = vand.u32 2147483647, %v654
    %v1446 = vand.u32 %v1445, 8388607
    %v1447 = vor.u32 %v1446, 8388608
    %v1448 = vsub.s32 0, %v1447
    %v1449 = vadd.s32 %v1444, 1
    %vm1450 = vcmp.gt.s32.totalorder %v1449, 0
    %v1451 = vsel %vm1450, %v1449, 0
    %v1452 = vshrl.u32 %v1451, 5
    %v1453 = vand.u32 %v1451, 31
    %v1454 = vsub.s32 32, %v1453
    %v1455 = vshrl.u32 683565275, %v1454
    %v1456 = vshll.u32 683565275, %v1453
    %v1457 = vshrl.u32 2475754826, %v1454
    %v1458 = vor.u32 %v1456, %v1457
    %v1459 = vshll.u32 2475754826, %v1453
    %v1460 = vshrl.u32 2131351028, %v1454
    %v1461 = vor.u32 %v1459, %v1460
    %v1462 = vshll.u32 2131351028, %v1453
    %v1463 = vshrl.u32 2102212464, %v1454
    %v1464 = vor.u32 %v1462, %v1463
    %v1465 = vshll.u32 2102212464, %v1453
    %v1466 = vshrl.u32 920167782, %v1454
    %v1467 = vor.u32 %v1465, %v1466
    %v1468 = vshll.u32 920167782, %v1453
    %v1469 = vshrl.u32 1326507024, %v1454
    %v1470 = vor.u32 %v1468, %v1469
    %vm1471 = vcmp.lt.s32.totalorder %v1452, 1
    %vm1472 = vcmp.lt.s32.totalorder %v1452, 2
    %vm1473 = vcmp.lt.s32.totalorder %v1452, 3
    %vm1474 = vcmp.lt.s32.totalorder %v1452, 4
    %v1475 = vsel %vm1471, %v1455, %v1458
    %v1476 = vsel %vm1474, %v1464, 2102212464
    %v1477 = vsel %vm1473, %v1461, %v1476
    %v1478 = vsel %vm1472, %v1475, %v1477
    %v1479 = vsel %vm1471, %v1458, %v1461
    %v1480 = vsel %vm1474, %v1467, 920167782
    %v1481 = vsel %vm1473, %v1464, %v1480
    %v1482 = vsel %vm1472, %v1479, %v1481
    %v1483 = vsel %vm1471, %v1461, %v1464
    %v1484 = vsel %vm1474, %v1470, 1326507024
    %v1485 = vsel %vm1473, %v1467, %v1484
    %v1486 = vsel %vm1472, %v1483, %v1485
    %v1487 = vshll.u32 %v1447, 8
    %v1488 = vmul.u32.u64.compose %v1487, %v1486
    %v1489 = vextract.low.u32 %v1488
    %v1490 = vextract.high.u32 %v1488
    %v1491 = vmul.u32.u64.compose %v1487, %v1482
    %v1492 = vextract.low.u32 %v1491
    %v1493 = vextract.high.u32 %v1491
    %v1494 = vmul.u32 %v1487, %v1478
    %v1495 = vadd.s32 %v1490, %v1492
    %vm1496 = vc.u32 %v1490, %v1492
    %v1497 = vadd.s32 %v1493, 1
    %v1498 = vsel %vm1496, %v1497, %v1493
    %v1499 = vadd.s32 %v1494, %v1498
    %v1500 = vadd.s32 %v1499, 536870912
    %v1501 = vshrl.u32 %v1500, 30
    %v1502 = vshll.u32 %v1501, 30
    %v1503 = vsub.s32 %v1499, %v1502
    %vm1504 = vcmp.lt.s32.totalorder %v1503, 0
    %v1505 = vsub.s32 0, %v1503
    %v1506 = vsel %vm1504, %v1505, %v1503
    %v1507 = vclz %v1506
    %v1508 = vsub.s32 %v1507, 2
    %vm1509 = vcmp.gt.s32.totalorder 0, %v1508
    %v1510 = vsel %vm1509, 0, %v1508
    %v1511 = vsub.s32 32, %v1510
    %v1512 = vshll.u32 %v1503, %v1510
    %v1513 = vshrl.u32 %v1495, %v1511
    %v1514 = vor.u32 %v1512, %v1513
    %v1515 = vsub.s32 4294967266, %v1510
    %v1516 = vadd.s32 %v1515, 127
    %v1517 = vshll.u32 %v1516, 23
    %v1518 = vor.u32 4788187, %v1517
    %v1519 = vand.u32 2147483647, %v1518
    %v1521 = vcvt.s32.f32 %v1514
    %v1522 = vmul.f32 %v1521, %v1519
    %v1523 = vxor.u32 %v1522, 2147483648
    %v1524 = vsel %vm1441, %v1523, %v1522
    %v1525 = vsub.s32 4, %v1501
    %v1526 = vsel %vm1441, %v1525, %v1501
    %v1527 = vsel %vm1440, %v654, %v1524
    %v1528 = vsel %vm1440, 0, %v1526
    %v1529 = vcosq.f32.pop %v1527
    %v1530 = vsinq.f32.pop %v1527
    %vm1531 = vweird.f32 %v654
    %v1532 = vadd.s32 %v1528, 3
    %v1533 = vand.u32 %v1532, 3
    %vm1534 = vcmp.lt.s32.totalorder %v1533, 2
    %vm1535 = vcmp.eq.s32.totalorder %v1533, 0
    %v1536 = vxor.u32 %v1530, 2147483648
    %v1537 = vsel %vm1535, %v1529, %v1536
    %vm1538 = vcmp.eq.s32.totalorder %v1533, 2
    %v1539 = vxor.u32 %v1529, 2147483648
    %v1540 = vsel %vm1538, %v1539, %v1530
    %v1541 = vsel %vm1534, %v1537, %v1540
    %v1542 = vsel %vm1531, nan, %v1541
    %v1543 = vand.u32 2147483647, %v655
    %vm1544 = vcmp.le.f32.partialorder %v1543, 0.7853982
    %vm1545 = vcmp.lt.s32.totalorder %v655, 0
    %v1546 = vand.u32 %v655, 2139095040
    %v1547 = vshrl.u32 %v1546, 23
    %v1548 = vsub.s32 %v1547, 127
    %v1549 = vand.u32 2147483647, %v655
    %v1550 = vand.u32 %v1549, 8388607
    %v1551 = vor.u32 %v1550, 8388608
    %v1552 = vsub.s32 0, %v1551
    %v1553 = vadd.s32 %v1548, 1
    %vm1554 = vcmp.gt.s32.totalorder %v1553, 0
    %v1555 = vsel %vm1554, %v1553, 0
    %v1556 = vshrl.u32 %v1555, 5
    %v1557 = vand.u32 %v1555, 31
    %v1558 = vsub.s32 32, %v1557
    %v1559 = vshrl.u32 683565275, %v1558
    %v1560 = vshll.u32 683565275, %v1557
    %v1561 = vshrl.u32 2475754826, %v1558
    %v1562 = vor.u32 %v1560, %v1561
    %v1563 = vshll.u32 2475754826, %v1557
    %v1564 = vshrl.u32 2131351028, %v1558
    %v1565 = vor.u32 %v1563, %v1564
    %v1566 = vshll.u32 2131351028, %v1557
    %v1567 = vshrl.u32 2102212464, %v1558
    %v1568 = vor.u32 %v1566, %v1567
    %v1569 = vshll.u32 2102212464, %v1557
    %v1570 = vshrl.u32 920167782, %v1558
    %v1571 = vor.u32 %v1569, %v1570
    %v1572 = vshll.u32 920167782, %v1557
    %v1573 = vshrl.u32 1326507024, %v1558
    %v1574 = vor.u32 %v1572, %v1573
    %vm1575 = vcmp.lt.s32.totalorder %v1556, 1
    %vm1576 = vcmp.lt.s32.totalorder %v1556, 2
    %vm1577 = vcmp.lt.s32.totalorder %v1556, 3
    %vm1578 = vcmp.lt.s32.totalorder %v1556, 4
    %v1579 = vsel %vm1575, %v1559, %v1562
    %v1580 = vsel %vm1578, %v1568, 2102212464
    %v1581 = vsel %vm1577, %v1565, %v1580
    %v1582 = vsel %vm1576, %v1579, %v1581
    %v1583 = vsel %vm1575, %v1562, %v1565
    %v1584 = vsel %vm1578, %v1571, 920167782
    %v1585 = vsel %vm1577, %v1568, %v1584
    %v1586 = vsel %vm1576, %v1583, %v1585
    %v1587 = vsel %vm1575, %v1565, %v1568
    %v1588 = vsel %vm1578, %v1574, 1326507024
    %v1589 = vsel %vm1577, %v1571, %v1588
    %v1590 = vsel %vm1576, %v1587, %v1589
    %v1591 = vshll.u32 %v1551, 8
    %v1592 = vmul.u32.u64.compose %v1591, %v1590
    %v1593 = vextract.low.u32 %v1592
    %v1594 = vextract.high.u32 %v1592
    %v1595 = vmul.u32.u64.compose %v1591, %v1586
    %v1596 = vextract.low.u32 %v1595
    %v1597 = vextract.high.u32 %v1595
    %v1598 = vmul.u32 %v1591, %v1582
    %v1599 = vadd.s32 %v1594, %v1596
    %vm1600 = vc.u32 %v1594, %v1596
    %v1601 = vadd.s32 %v1597, 1
    %v1602 = vsel %vm1600, %v1601, %v1597
    %v1603 = vadd.s32 %v1598, %v1602
    %v1604 = vadd.s32 %v1603, 536870912
    %v1605 = vshrl.u32 %v1604, 30
    %v1606 = vshll.u32 %v1605, 30
    %v1607 = vsub.s32 %v1603, %v1606
    %vm1608 = vcmp.lt.s32.totalorder %v1607, 0
    %v1609 = vsub.s32 0, %v1607
    %v1610 = vsel %vm1608, %v1609, %v1607
    %v1611 = vclz %v1610
    %v1612 = vsub.s32 %v1611, 2
    %vm1613 = vcmp.gt.s32.totalorder 0, %v1612
    %v1614 = vsel %vm1613, 0, %v1612
    %v1615 = vsub.s32 32, %v1614
    %v1616 = vshll.u32 %v1607, %v1614
    %v1617 = vshrl.u32 %v1599, %v1615
    %v1618 = vor.u32 %v1616, %v1617
    %v1619 = vsub.s32 4294967266, %v1614
    %v1620 = vadd.s32 %v1619, 127
    %v1621 = vshll.u32 %v1620, 23
    %v1622 = vor.u32 4788187, %v1621
    %v1623 = vand.u32 2147483647, %v1622
    %v1625 = vcvt.s32.f32 %v1618
    %v1626 = vmul.f32 %v1625, %v1623
    %v1627 = vxor.u32 %v1626, 2147483648
    %v1628 = vsel %vm1545, %v1627, %v1626
    %v1629 = vsub.s32 4, %v1605
    %v1630 = vsel %vm1545, %v1629, %v1605
    %v1631 = vsel %vm1544, %v655, %v1628
    %v1632 = vsel %vm1544, 0, %v1630
    %v1633 = vcosq.f32.pop %v1631
    %v1634 = vsinq.f32.pop %v1631
    %vm1635 = vweird.f32 %v655
    %v1636 = vadd.s32 %v1632, 3
    %v1637 = vand.u32 %v1636, 3
    %vm1638 = vcmp.lt.s32.totalorder %v1637, 2
    %vm1639 = vcmp.eq.s32.totalorder %v1637, 0
    %v1640 = vxor.u32 %v1634, 2147483648
    %v1641 = vsel %vm1639, %v1633, %v1640
    %vm1642 = vcmp.eq.s32.totalorder %v1637, 2
    %v1643 = vxor.u32 %v1633, 2147483648
    %v1644 = vsel %vm1642, %v1643, %v1634
    %v1645 = vsel %vm1638, %v1641, %v1644
    %v1646 = vsel %vm1635, nan, %v1645
    %v1647 = vand.u32 2147483647, %v656
    %vm1648 = vcmp.le.f32.partialorder %v1647, 0.7853982
    %vm1649 = vcmp.lt.s32.totalorder %v656, 0
    %v1650 = vand.u32 %v656, 2139095040
    %v1651 = vshrl.u32 %v1650, 23
    %v1652 = vsub.s32 %v1651, 127
    %v1653 = vand.u32 2147483647, %v656
    %v1654 = vand.u32 %v1653, 8388607
    %v1655 = vor.u32 %v1654, 8388608
    %v1656 = vsub.s32 0, %v1655
    %v1657 = vadd.s32 %v1652, 1
    %vm1658 = vcmp.gt.s32.totalorder %v1657, 0
    %v1659 = vsel %vm1658, %v1657, 0
    %v1660 = vshrl.u32 %v1659, 5
    %v1661 = vand.u32 %v1659, 31
    %v1662 = vsub.s32 32, %v1661
    %v1663 = vshrl.u32 683565275, %v1662
    %v1664 = vshll.u32 683565275, %v1661
    %v1665 = vshrl.u32 2475754826, %v1662
    %v1666 = vor.u32 %v1664, %v1665
    %v1667 = vshll.u32 2475754826, %v1661
    %v1668 = vshrl.u32 2131351028, %v1662
    %v1669 = vor.u32 %v1667, %v1668
    %v1670 = vshll.u32 2131351028, %v1661
    %v1671 = vshrl.u32 2102212464, %v1662
    %v1672 = vor.u32 %v1670, %v1671
    %v1673 = vshll.u32 2102212464, %v1661
    %v1674 = vshrl.u32 920167782, %v1662
    %v1675 = vor.u32 %v1673, %v1674
    %v1676 = vshll.u32 920167782, %v1661
    %v1677 = vshrl.u32 1326507024, %v1662
    %v1678 = vor.u32 %v1676, %v1677
    %vm1679 = vcmp.lt.s32.totalorder %v1660, 1
    %vm1680 = vcmp.lt.s32.totalorder %v1660, 2
    %vm1681 = vcmp.lt.s32.totalorder %v1660, 3
    %vm1682 = vcmp.lt.s32.totalorder %v1660, 4
    %v1683 = vsel %vm1679, %v1663, %v1666
    %v1684 = vsel %vm1682, %v1672, 2102212464
    %v1685 = vsel %vm1681, %v1669, %v1684
    %v1686 = vsel %vm1680, %v1683, %v1685
    %v1687 = vsel %vm1679, %v1666, %v1669
    %v1688 = vsel %vm1682, %v1675, 920167782
    %v1689 = vsel %vm1681, %v1672, %v1688
    %v1690 = vsel %vm1680, %v1687, %v1689
    %v1691 = vsel %vm1679, %v1669, %v1672
    %v1692 = vsel %vm1682, %v1678, 1326507024
    %v1693 = vsel %vm1681, %v1675, %v1692
    %v1694 = vsel %vm1680, %v1691, %v1693
    %v1695 = vshll.u32 %v1655, 8
    %v1696 = vmul.u32.u64.compose %v1695, %v1694
    %v1697 = vextract.low.u32 %v1696
    %v1698 = vextract.high.u32 %v1696
    %v1699 = vmul.u32.u64.compose %v1695, %v1690
    %v1700 = vextract.low.u32 %v1699
    %v1701 = vextract.high.u32 %v1699
    %v1702 = vmul.u32 %v1695, %v1686
    %v1703 = vadd.s32 %v1698, %v1700
    %vm1704 = vc.u32 %v1698, %v1700
    %v1705 = vadd.s32 %v1701, 1
    %v1706 = vsel %vm1704, %v1705, %v1701
    %v1707 = vadd.s32 %v1702, %v1706
    %v1708 = vadd.s32 %v1707, 536870912
    %v1709 = vshrl.u32 %v1708, 30
    %v1710 = vshll.u32 %v1709, 30
    %v1711 = vsub.s32 %v1707, %v1710
    %vm1712 = vcmp.lt.s32.totalorder %v1711, 0
    %v1713 = vsub.s32 0, %v1711
    %v1714 = vsel %vm1712, %v1713, %v1711
    %v1715 = vclz %v1714
    %v1716 = vsub.s32 %v1715, 2
    %vm1717 = vcmp.gt.s32.totalorder 0, %v1716
    %v1718 = vsel %vm1717, 0, %v1716
    %v1719 = vsub.s32 32, %v1718
    %v1720 = vshll.u32 %v1711, %v1718
    %v1721 = vshrl.u32 %v1703, %v1719
    %v1722 = vor.u32 %v1720, %v1721
    %v1723 = vsub.s32 4294967266, %v1718
    %v1724 = vadd.s32 %v1723, 127
    %v1725 = vshll.u32 %v1724, 23
    %v1726 = vor.u32 4788187, %v1725
    %v1727 = vand.u32 2147483647, %v1726
    %v1729 = vcvt.s32.f32 %v1722
    %v1730 = vmul.f32 %v1729, %v1727
    %v1731 = vxor.u32 %v1730, 2147483648
    %v1732 = vsel %vm1649, %v1731, %v1730
    %v1733 = vsub.s32 4, %v1709
    %v1734 = vsel %vm1649, %v1733, %v1709
    %v1735 = vsel %vm1648, %v656, %v1732
    %v1736 = vsel %vm1648, 0, %v1734
    %v1737 = vcosq.f32.pop %v1735
    %v1738 = vsinq.f32.pop %v1735
    %vm1739 = vweird.f32 %v656
    %v1740 = vadd.s32 %v1736, 3
    %v1741 = vand.u32 %v1740, 3
    %vm1742 = vcmp.lt.s32.totalorder %v1741, 2
    %vm1743 = vcmp.eq.s32.totalorder %v1741, 0
    %v1744 = vxor.u32 %v1738, 2147483648
    %v1745 = vsel %vm1743, %v1737, %v1744
    %vm1746 = vcmp.eq.s32.totalorder %v1741, 2
    %v1747 = vxor.u32 %v1737, 2147483648
    %v1748 = vsel %vm1746, %v1747, %v1738
    %v1749 = vsel %vm1742, %v1745, %v1748
    %v1750 = vsel %vm1739, nan, %v1749
    %v1751 = vand.u32 2147483647, %v657
    %vm1752 = vcmp.le.f32.partialorder %v1751, 0.7853982
    %vm1753 = vcmp.lt.s32.totalorder %v657, 0
    %v1754 = vand.u32 %v657, 2139095040
    %v1755 = vshrl.u32 %v1754, 23
    %v1756 = vsub.s32 %v1755, 127
    %v1757 = vand.u32 2147483647, %v657
    %v1758 = vand.u32 %v1757, 8388607
    %v1759 = vor.u32 %v1758, 8388608
    %v1760 = vsub.s32 0, %v1759
    %v1761 = vadd.s32 %v1756, 1
    %vm1762 = vcmp.gt.s32.totalorder %v1761, 0
    %v1763 = vsel %vm1762, %v1761, 0
    %v1764 = vshrl.u32 %v1763, 5
    %v1765 = vand.u32 %v1763, 31
    %v1766 = vsub.s32 32, %v1765
    %v1767 = vshrl.u32 683565275, %v1766
    %v1768 = vshll.u32 683565275, %v1765
    %v1769 = vshrl.u32 2475754826, %v1766
    %v1770 = vor.u32 %v1768, %v1769
    %v1771 = vshll.u32 2475754826, %v1765
    %v1772 = vshrl.u32 2131351028, %v1766
    %v1773 = vor.u32 %v1771, %v1772
    %v1774 = vshll.u32 2131351028, %v1765
    %v1775 = vshrl.u32 2102212464, %v1766
    %v1776 = vor.u32 %v1774, %v1775
    %v1777 = vshll.u32 2102212464, %v1765
    %v1778 = vshrl.u32 920167782, %v1766
    %v1779 = vor.u32 %v1777, %v1778
    %v1780 = vshll.u32 920167782, %v1765
    %v1781 = vshrl.u32 1326507024, %v1766
    %v1782 = vor.u32 %v1780, %v1781
    %vm1783 = vcmp.lt.s32.totalorder %v1764, 1
    %vm1784 = vcmp.lt.s32.totalorder %v1764, 2
    %vm1785 = vcmp.lt.s32.totalorder %v1764, 3
    %vm1786 = vcmp.lt.s32.totalorder %v1764, 4
    %v1787 = vsel %vm1783, %v1767, %v1770
    %v1788 = vsel %vm1786, %v1776, 2102212464
    %v1789 = vsel %vm1785, %v1773, %v1788
    %v1790 = vsel %vm1784, %v1787, %v1789
    %v1791 = vsel %vm1783, %v1770, %v1773
    %v1792 = vsel %vm1786, %v1779, 920167782
    %v1793 = vsel %vm1785, %v1776, %v1792
    %v1794 = vsel %vm1784, %v1791, %v1793
    %v1795 = vsel %vm1783, %v1773, %v1776
    %v1796 = vsel %vm1786, %v1782, 1326507024
    %v1797 = vsel %vm1785, %v1779, %v1796
    %v1798 = vsel %vm1784, %v1795, %v1797
    %v1799 = vshll.u32 %v1759, 8
    %v1800 = vmul.u32.u64.compose %v1799, %v1798
    %v1801 = vextract.low.u32 %v1800
    %v1802 = vextract.high.u32 %v1800
    %v1803 = vmul.u32.u64.compose %v1799, %v1794
    %v1804 = vextract.low.u32 %v1803
    %v1805 = vextract.high.u32 %v1803
    %v1806 = vmul.u32 %v1799, %v1790
    %v1807 = vadd.s32 %v1802, %v1804
    %vm1808 = vc.u32 %v1802, %v1804
    %v1809 = vadd.s32 %v1805, 1
    %v1810 = vsel %vm1808, %v1809, %v1805
    %v1811 = vadd.s32 %v1806, %v1810
    %v1812 = vadd.s32 %v1811, 536870912
    %v1813 = vshrl.u32 %v1812, 30
    %v1814 = vshll.u32 %v1813, 30
    %v1815 = vsub.s32 %v1811, %v1814
    %vm1816 = vcmp.lt.s32.totalorder %v1815, 0
    %v1817 = vsub.s32 0, %v1815
    %v1818 = vsel %vm1816, %v1817, %v1815
    %v1819 = vclz %v1818
    %v1820 = vsub.s32 %v1819, 2
    %vm1821 = vcmp.gt.s32.totalorder 0, %v1820
    %v1822 = vsel %vm1821, 0, %v1820
    %v1823 = vsub.s32 32, %v1822
    %v1824 = vshll.u32 %v1815, %v1822
    %v1825 = vshrl.u32 %v1807, %v1823
    %v1826 = vor.u32 %v1824, %v1825
    %v1827 = vsub.s32 4294967266, %v1822
    %v1828 = vadd.s32 %v1827, 127
    %v1829 = vshll.u32 %v1828, 23
    %v1830 = vor.u32 4788187, %v1829
    %v1831 = vand.u32 2147483647, %v1830
    %v1833 = vcvt.s32.f32 %v1826
    %v1834 = vmul.f32 %v1833, %v1831
    %v1835 = vxor.u32 %v1834, 2147483648
    %v1836 = vsel %vm1753, %v1835, %v1834
    %v1837 = vsub.s32 4, %v1813
    %v1838 = vsel %vm1753, %v1837, %v1813
    %v1839 = vsel %vm1752, %v657, %v1836
    %v1840 = vsel %vm1752, 0, %v1838
    %v1841 = vcosq.f32.pop %v1839
    %v1842 = vsinq.f32.pop %v1839
    %vm1843 = vweird.f32 %v657
    %v1844 = vadd.s32 %v1840, 3
    %v1845 = vand.u32 %v1844, 3
    %vm1846 = vcmp.lt.s32.totalorder %v1845, 2
    %vm1847 = vcmp.eq.s32.totalorder %v1845, 0
    %v1848 = vxor.u32 %v1842, 2147483648
    %v1849 = vsel %vm1847, %v1841, %v1848
    %vm1850 = vcmp.eq.s32.totalorder %v1845, 2
    %v1851 = vxor.u32 %v1841, 2147483648
    %v1852 = vsel %vm1850, %v1851, %v1842
    %v1853 = vsel %vm1846, %v1849, %v1852
    %v1854 = vsel %vm1843, nan, %v1853
    %v1855 = vand.u32 2147483647, %v658
    %vm1856 = vcmp.le.f32.partialorder %v1855, 0.7853982
    %vm1857 = vcmp.lt.s32.totalorder %v658, 0
    %v1858 = vand.u32 %v658, 2139095040
    %v1859 = vshrl.u32 %v1858, 23
    %v1860 = vsub.s32 %v1859, 127
    %v1861 = vand.u32 2147483647, %v658
    %v1862 = vand.u32 %v1861, 8388607
    %v1863 = vor.u32 %v1862, 8388608
    %v1864 = vsub.s32 0, %v1863
    %v1865 = vadd.s32 %v1860, 1
    %vm1866 = vcmp.gt.s32.totalorder %v1865, 0
    %v1867 = vsel %vm1866, %v1865, 0
    %v1868 = vshrl.u32 %v1867, 5
    %v1869 = vand.u32 %v1867, 31
    %v1870 = vsub.s32 32, %v1869
    %v1871 = vshrl.u32 683565275, %v1870
    %v1872 = vshll.u32 683565275, %v1869
    %v1873 = vshrl.u32 2475754826, %v1870
    %v1874 = vor.u32 %v1872, %v1873
    %v1875 = vshll.u32 2475754826, %v1869
    %v1876 = vshrl.u32 2131351028, %v1870
    %v1877 = vor.u32 %v1875, %v1876
    %v1878 = vshll.u32 2131351028, %v1869
    %v1879 = vshrl.u32 2102212464, %v1870
    %v1880 = vor.u32 %v1878, %v1879
    %v1881 = vshll.u32 2102212464, %v1869
    %v1882 = vshrl.u32 920167782, %v1870
    %v1883 = vor.u32 %v1881, %v1882
    %v1884 = vshll.u32 920167782, %v1869
    %v1885 = vshrl.u32 1326507024, %v1870
    %v1886 = vor.u32 %v1884, %v1885
    %vm1887 = vcmp.lt.s32.totalorder %v1868, 1
    %vm1888 = vcmp.lt.s32.totalorder %v1868, 2
    %vm1889 = vcmp.lt.s32.totalorder %v1868, 3
    %vm1890 = vcmp.lt.s32.totalorder %v1868, 4
    %v1891 = vsel %vm1887, %v1871, %v1874
    %v1892 = vsel %vm1890, %v1880, 2102212464
    %v1893 = vsel %vm1889, %v1877, %v1892
    %v1894 = vsel %vm1888, %v1891, %v1893
    %v1895 = vsel %vm1887, %v1874, %v1877
    %v1896 = vsel %vm1890, %v1883, 920167782
    %v1897 = vsel %vm1889, %v1880, %v1896
    %v1898 = vsel %vm1888, %v1895, %v1897
    %v1899 = vsel %vm1887, %v1877, %v1880
    %v1900 = vsel %vm1890, %v1886, 1326507024
    %v1901 = vsel %vm1889, %v1883, %v1900
    %v1902 = vsel %vm1888, %v1899, %v1901
    %v1903 = vshll.u32 %v1863, 8
    %v1904 = vmul.u32.u64.compose %v1903, %v1902
    %v1905 = vextract.low.u32 %v1904
    %v1906 = vextract.high.u32 %v1904
    %v1907 = vmul.u32.u64.compose %v1903, %v1898
    %v1908 = vextract.low.u32 %v1907
    %v1909 = vextract.high.u32 %v1907
    %v1910 = vmul.u32 %v1903, %v1894
    %v1911 = vadd.s32 %v1906, %v1908
    %vm1912 = vc.u32 %v1906, %v1908
    %v1913 = vadd.s32 %v1909, 1
    %v1914 = vsel %vm1912, %v1913, %v1909
    %v1915 = vadd.s32 %v1910, %v1914
    %v1916 = vadd.s32 %v1915, 536870912
    %v1917 = vshrl.u32 %v1916, 30
    %v1918 = vshll.u32 %v1917, 30
    %v1919 = vsub.s32 %v1915, %v1918
    %vm1920 = vcmp.lt.s32.totalorder %v1919, 0
    %v1921 = vsub.s32 0, %v1919
    %v1922 = vsel %vm1920, %v1921, %v1919
    %v1923 = vclz %v1922
    %v1924 = vsub.s32 %v1923, 2
    %vm1925 = vcmp.gt.s32.totalorder 0, %v1924
    %v1926 = vsel %vm1925, 0, %v1924
    %v1927 = vsub.s32 32, %v1926
    %v1928 = vshll.u32 %v1919, %v1926
    %v1929 = vshrl.u32 %v1911, %v1927
    %v1930 = vor.u32 %v1928, %v1929
    %v1931 = vsub.s32 4294967266, %v1926
    %v1932 = vadd.s32 %v1931, 127
    %v1933 = vshll.u32 %v1932, 23
    %v1934 = vor.u32 4788187, %v1933
    %v1935 = vand.u32 2147483647, %v1934
    %v1937 = vcvt.s32.f32 %v1930
    %v1938 = vmul.f32 %v1937, %v1935
    %v1939 = vxor.u32 %v1938, 2147483648
    %v1940 = vsel %vm1857, %v1939, %v1938
    %v1941 = vsub.s32 4, %v1917
    %v1942 = vsel %vm1857, %v1941, %v1917
    %v1943 = vsel %vm1856, %v658, %v1940
    %v1944 = vsel %vm1856, 0, %v1942
    %v1945 = vcosq.f32.pop %v1943
    %v1946 = vsinq.f32.pop %v1943
    %vm1947 = vweird.f32 %v658
    %v1948 = vadd.s32 %v1944, 3
    %v1949 = vand.u32 %v1948, 3
    %vm1950 = vcmp.lt.s32.totalorder %v1949, 2
    %vm1951 = vcmp.eq.s32.totalorder %v1949, 0
    %v1952 = vxor.u32 %v1946, 2147483648
    %v1953 = vsel %vm1951, %v1945, %v1952
    %vm1954 = vcmp.eq.s32.totalorder %v1949, 2
    %v1955 = vxor.u32 %v1945, 2147483648
    %v1956 = vsel %vm1954, %v1955, %v1946
    %v1957 = vsel %vm1950, %v1953, %v1956
    %v1958 = vsel %vm1947, nan, %v1957
    %v1959 = vand.u32 2147483647, %v659
    %vm1960 = vcmp.le.f32.partialorder %v1959, 0.7853982
    %vm1961 = vcmp.lt.s32.totalorder %v659, 0
    %v1962 = vand.u32 %v659, 2139095040
    %v1963 = vshrl.u32 %v1962, 23
    %v1964 = vsub.s32 %v1963, 127
    %v1965 = vand.u32 2147483647, %v659
    %v1966 = vand.u32 %v1965, 8388607
    %v1967 = vor.u32 %v1966, 8388608
    %v1968 = vsub.s32 0, %v1967
    %v1969 = vadd.s32 %v1964, 1
    %vm1970 = vcmp.gt.s32.totalorder %v1969, 0
    %v1971 = vsel %vm1970, %v1969, 0
    %v1972 = vshrl.u32 %v1971, 5
    %v1973 = vand.u32 %v1971, 31
    %v1974 = vsub.s32 32, %v1973
    %v1975 = vshrl.u32 683565275, %v1974
    %v1976 = vshll.u32 683565275, %v1973
    %v1977 = vshrl.u32 2475754826, %v1974
    %v1978 = vor.u32 %v1976, %v1977
    %v1979 = vshll.u32 2475754826, %v1973
    %v1980 = vshrl.u32 2131351028, %v1974
    %v1981 = vor.u32 %v1979, %v1980
    %v1982 = vshll.u32 2131351028, %v1973
    %v1983 = vshrl.u32 2102212464, %v1974
    %v1984 = vor.u32 %v1982, %v1983
    %v1985 = vshll.u32 2102212464, %v1973
    %v1986 = vshrl.u32 920167782, %v1974
    %v1987 = vor.u32 %v1985, %v1986
    %v1988 = vshll.u32 920167782, %v1973
    %v1989 = vshrl.u32 1326507024, %v1974
    %v1990 = vor.u32 %v1988, %v1989
    %vm1991 = vcmp.lt.s32.totalorder %v1972, 1
    %vm1992 = vcmp.lt.s32.totalorder %v1972, 2
    %vm1993 = vcmp.lt.s32.totalorder %v1972, 3
    %vm1994 = vcmp.lt.s32.totalorder %v1972, 4
    %v1995 = vsel %vm1991, %v1975, %v1978
    %v1996 = vsel %vm1994, %v1984, 2102212464
    %v1997 = vsel %vm1993, %v1981, %v1996
    %v1998 = vsel %vm1992, %v1995, %v1997
    %v1999 = vsel %vm1991, %v1978, %v1981
    %v2000 = vsel %vm1994, %v1987, 920167782
    %v2001 = vsel %vm1993, %v1984, %v2000
    %v2002 = vsel %vm1992, %v1999, %v2001
    %v2003 = vsel %vm1991, %v1981, %v1984
    %v2004 = vsel %vm1994, %v1990, 1326507024
    %v2005 = vsel %vm1993, %v1987, %v2004
    %v2006 = vsel %vm1992, %v2003, %v2005
    %v2007 = vshll.u32 %v1967, 8
    %v2008 = vmul.u32.u64.compose %v2007, %v2006
    %v2009 = vextract.low.u32 %v2008
    %v2010 = vextract.high.u32 %v2008
    %v2011 = vmul.u32.u64.compose %v2007, %v2002
    %v2012 = vextract.low.u32 %v2011
    %v2013 = vextract.high.u32 %v2011
    %v2014 = vmul.u32 %v2007, %v1998
    %v2015 = vadd.s32 %v2010, %v2012
    %vm2016 = vc.u32 %v2010, %v2012
    %v2017 = vadd.s32 %v2013, 1
    %v2018 = vsel %vm2016, %v2017, %v2013
    %v2019 = vadd.s32 %v2014, %v2018
    %v2020 = vadd.s32 %v2019, 536870912
    %v2021 = vshrl.u32 %v2020, 30
    %v2022 = vshll.u32 %v2021, 30
    %v2023 = vsub.s32 %v2019, %v2022
    %vm2024 = vcmp.lt.s32.totalorder %v2023, 0
    %v2025 = vsub.s32 0, %v2023
    %v2026 = vsel %vm2024, %v2025, %v2023
    %v2027 = vclz %v2026
    %v2028 = vsub.s32 %v2027, 2
    %vm2029 = vcmp.gt.s32.totalorder 0, %v2028
    %v2030 = vsel %vm2029, 0, %v2028
    %v2031 = vsub.s32 32, %v2030
    %v2032 = vshll.u32 %v2023, %v2030
    %v2033 = vshrl.u32 %v2015, %v2031
    %v2034 = vor.u32 %v2032, %v2033
    %v2035 = vsub.s32 4294967266, %v2030
    %v2036 = vadd.s32 %v2035, 127
    %v2037 = vshll.u32 %v2036, 23
    %v2038 = vor.u32 4788187, %v2037
    %v2039 = vand.u32 2147483647, %v2038
    %v2041 = vcvt.s32.f32 %v2034
    %v2042 = vmul.f32 %v2041, %v2039
    %v2043 = vxor.u32 %v2042, 2147483648
    %v2044 = vsel %vm1961, %v2043, %v2042
    %v2045 = vsub.s32 4, %v2021
    %v2046 = vsel %vm1961, %v2045, %v2021
    %v2047 = vsel %vm1960, %v659, %v2044
    %v2048 = vsel %vm1960, 0, %v2046
    %v2049 = vcosq.f32.pop %v2047
    %v2050 = vsinq.f32.pop %v2047
    %vm2051 = vweird.f32 %v659
    %v2052 = vadd.s32 %v2048, 3
    %v2053 = vand.u32 %v2052, 3
    %vm2054 = vcmp.lt.s32.totalorder %v2053, 2
    %vm2055 = vcmp.eq.s32.totalorder %v2053, 0
    %v2056 = vxor.u32 %v2050, 2147483648
    %v2057 = vsel %vm2055, %v2049, %v2056
    %vm2058 = vcmp.eq.s32.totalorder %v2053, 2
    %v2059 = vxor.u32 %v2049, 2147483648
    %v2060 = vsel %vm2058, %v2059, %v2050
    %v2061 = vsel %vm2054, %v2057, %v2060
    %v2062 = vsel %vm2051, nan, %v2061
    %v2063 = vand.u32 2147483647, %v660
    %vm2064 = vcmp.le.f32.partialorder %v2063, 0.7853982
    %vm2065 = vcmp.lt.s32.totalorder %v660, 0
    %v2066 = vand.u32 %v660, 2139095040
    %v2067 = vshrl.u32 %v2066, 23
    %v2068 = vsub.s32 %v2067, 127
    %v2069 = vand.u32 2147483647, %v660
    %v2070 = vand.u32 %v2069, 8388607
    %v2071 = vor.u32 %v2070, 8388608
    %v2072 = vsub.s32 0, %v2071
    %v2073 = vadd.s32 %v2068, 1
    %vm2074 = vcmp.gt.s32.totalorder %v2073, 0
    %v2075 = vsel %vm2074, %v2073, 0
    %v2076 = vshrl.u32 %v2075, 5
    %v2077 = vand.u32 %v2075, 31
    %v2078 = vsub.s32 32, %v2077
    %v2079 = vshrl.u32 683565275, %v2078
    %v2080 = vshll.u32 683565275, %v2077
    %v2081 = vshrl.u32 2475754826, %v2078
    %v2082 = vor.u32 %v2080, %v2081
    %v2083 = vshll.u32 2475754826, %v2077
    %v2084 = vshrl.u32 2131351028, %v2078
    %v2085 = vor.u32 %v2083, %v2084
    %v2086 = vshll.u32 2131351028, %v2077
    %v2087 = vshrl.u32 2102212464, %v2078
    %v2088 = vor.u32 %v2086, %v2087
    %v2089 = vshll.u32 2102212464, %v2077
    %v2090 = vshrl.u32 920167782, %v2078
    %v2091 = vor.u32 %v2089, %v2090
    %v2092 = vshll.u32 920167782, %v2077
    %v2093 = vshrl.u32 1326507024, %v2078
    %v2094 = vor.u32 %v2092, %v2093
    %vm2095 = vcmp.lt.s32.totalorder %v2076, 1
    %vm2096 = vcmp.lt.s32.totalorder %v2076, 2
    %vm2097 = vcmp.lt.s32.totalorder %v2076, 3
    %vm2098 = vcmp.lt.s32.totalorder %v2076, 4
    %v2099 = vsel %vm2095, %v2079, %v2082
    %v2100 = vsel %vm2098, %v2088, 2102212464
    %v2101 = vsel %vm2097, %v2085, %v2100
    %v2102 = vsel %vm2096, %v2099, %v2101
    %v2103 = vsel %vm2095, %v2082, %v2085
    %v2104 = vsel %vm2098, %v2091, 920167782
    %v2105 = vsel %vm2097, %v2088, %v2104
    %v2106 = vsel %vm2096, %v2103, %v2105
    %v2107 = vsel %vm2095, %v2085, %v2088
    %v2108 = vsel %vm2098, %v2094, 1326507024
    %v2109 = vsel %vm2097, %v2091, %v2108
    %v2110 = vsel %vm2096, %v2107, %v2109
    %v2111 = vshll.u32 %v2071, 8
    %v2112 = vmul.u32.u64.compose %v2111, %v2110
    %v2113 = vextract.low.u32 %v2112
    %v2114 = vextract.high.u32 %v2112
    %v2115 = vmul.u32.u64.compose %v2111, %v2106
    %v2116 = vextract.low.u32 %v2115
    %v2117 = vextract.high.u32 %v2115
    %v2118 = vmul.u32 %v2111, %v2102
    %v2119 = vadd.s32 %v2114, %v2116
    %vm2120 = vc.u32 %v2114, %v2116
    %v2121 = vadd.s32 %v2117, 1
    %v2122 = vsel %vm2120, %v2121, %v2117
    %v2123 = vadd.s32 %v2118, %v2122
    %v2124 = vadd.s32 %v2123, 536870912
    %v2125 = vshrl.u32 %v2124, 30
    %v2126 = vshll.u32 %v2125, 30
    %v2127 = vsub.s32 %v2123, %v2126
    %vm2128 = vcmp.lt.s32.totalorder %v2127, 0
    %v2129 = vsub.s32 0, %v2127
    %v2130 = vsel %vm2128, %v2129, %v2127
    %v2131 = vclz %v2130
    %v2132 = vsub.s32 %v2131, 2
    %vm2133 = vcmp.gt.s32.totalorder 0, %v2132
    %v2134 = vsel %vm2133, 0, %v2132
    %v2135 = vsub.s32 32, %v2134
    %v2136 = vshll.u32 %v2127, %v2134
    %v2137 = vshrl.u32 %v2119, %v2135
    %v2138 = vor.u32 %v2136, %v2137
    %v2139 = vsub.s32 4294967266, %v2134
    %v2140 = vadd.s32 %v2139, 127
    %v2141 = vshll.u32 %v2140, 23
    %v2142 = vor.u32 4788187, %v2141
    %v2143 = vand.u32 2147483647, %v2142
    %v2145 = vcvt.s32.f32 %v2138
    %v2146 = vmul.f32 %v2145, %v2143
    %v2147 = vxor.u32 %v2146, 2147483648
    %v2148 = vsel %vm2065, %v2147, %v2146
    %v2149 = vsub.s32 4, %v2125
    %v2150 = vsel %vm2065, %v2149, %v2125
    %v2151 = vsel %vm2064, %v660, %v2148
    %v2152 = vsel %vm2064, 0, %v2150
    %v2153 = vcosq.f32.pop %v2151
    %v2154 = vsinq.f32.pop %v2151
    %vm2155 = vweird.f32 %v660
    %v2156 = vadd.s32 %v2152, 3
    %v2157 = vand.u32 %v2156, 3
    %vm2158 = vcmp.lt.s32.totalorder %v2157, 2
    %vm2159 = vcmp.eq.s32.totalorder %v2157, 0
    %v2160 = vxor.u32 %v2154, 2147483648
    %v2161 = vsel %vm2159, %v2153, %v2160
    %vm2162 = vcmp.eq.s32.totalorder %v2157, 2
    %v2163 = vxor.u32 %v2153, 2147483648
    %v2164 = vsel %vm2162, %v2163, %v2154
    %v2165 = vsel %vm2158, %v2161, %v2164
    %v2166 = vsel %vm2155, nan, %v2165
    %v2167 = vand.u32 2147483647, %v661
    %vm2168 = vcmp.le.f32.partialorder %v2167, 0.7853982
    %vm2169 = vcmp.lt.s32.totalorder %v661, 0
    %v2170 = vand.u32 %v661, 2139095040
    %v2171 = vshrl.u32 %v2170, 23
    %v2172 = vsub.s32 %v2171, 127
    %v2173 = vand.u32 2147483647, %v661
    %v2174 = vand.u32 %v2173, 8388607
    %v2175 = vor.u32 %v2174, 8388608
    %v2176 = vsub.s32 0, %v2175
    %v2177 = vadd.s32 %v2172, 1
    %vm2178 = vcmp.gt.s32.totalorder %v2177, 0
    %v2179 = vsel %vm2178, %v2177, 0
    %v2180 = vshrl.u32 %v2179, 5
    %v2181 = vand.u32 %v2179, 31
    %v2182 = vsub.s32 32, %v2181
    %v2183 = vshrl.u32 683565275, %v2182
    %v2184 = vshll.u32 683565275, %v2181
    %v2185 = vshrl.u32 2475754826, %v2182
    %v2186 = vor.u32 %v2184, %v2185
    %v2187 = vshll.u32 2475754826, %v2181
    %v2188 = vshrl.u32 2131351028, %v2182
    %v2189 = vor.u32 %v2187, %v2188
    %v2190 = vshll.u32 2131351028, %v2181
    %v2191 = vshrl.u32 2102212464, %v2182
    %v2192 = vor.u32 %v2190, %v2191
    %v2193 = vshll.u32 2102212464, %v2181
    %v2194 = vshrl.u32 920167782, %v2182
    %v2195 = vor.u32 %v2193, %v2194
    %v2196 = vshll.u32 920167782, %v2181
    %v2197 = vshrl.u32 1326507024, %v2182
    %v2198 = vor.u32 %v2196, %v2197
    %vm2199 = vcmp.lt.s32.totalorder %v2180, 1
    %vm2200 = vcmp.lt.s32.totalorder %v2180, 2
    %vm2201 = vcmp.lt.s32.totalorder %v2180, 3
    %vm2202 = vcmp.lt.s32.totalorder %v2180, 4
    %v2203 = vsel %vm2199, %v2183, %v2186
    %v2204 = vsel %vm2202, %v2192, 2102212464
    %v2205 = vsel %vm2201, %v2189, %v2204
    %v2206 = vsel %vm2200, %v2203, %v2205
    %v2207 = vsel %vm2199, %v2186, %v2189
    %v2208 = vsel %vm2202, %v2195, 920167782
    %v2209 = vsel %vm2201, %v2192, %v2208
    %v2210 = vsel %vm2200, %v2207, %v2209
    %v2211 = vsel %vm2199, %v2189, %v2192
    %v2212 = vsel %vm2202, %v2198, 1326507024
    %v2213 = vsel %vm2201, %v2195, %v2212
    %v2214 = vsel %vm2200, %v2211, %v2213
    %v2215 = vshll.u32 %v2175, 8
    %v2216 = vmul.u32.u64.compose %v2215, %v2214
    %v2217 = vextract.low.u32 %v2216
    %v2218 = vextract.high.u32 %v2216
    %v2219 = vmul.u32.u64.compose %v2215, %v2210
    %v2220 = vextract.low.u32 %v2219
    %v2221 = vextract.high.u32 %v2219
    %v2222 = vmul.u32 %v2215, %v2206
    %v2223 = vadd.s32 %v2218, %v2220
    %vm2224 = vc.u32 %v2218, %v2220
    %v2225 = vadd.s32 %v2221, 1
    %v2226 = vsel %vm2224, %v2225, %v2221
    %v2227 = vadd.s32 %v2222, %v2226
    %v2228 = vadd.s32 %v2227, 536870912
    %v2229 = vshrl.u32 %v2228, 30
    %v2230 = vshll.u32 %v2229, 30
    %v2231 = vsub.s32 %v2227, %v2230
    %vm2232 = vcmp.lt.s32.totalorder %v2231, 0
    %v2233 = vsub.s32 0, %v2231
    %v2234 = vsel %vm2232, %v2233, %v2231
    %v2235 = vclz %v2234
    %v2236 = vsub.s32 %v2235, 2
    %vm2237 = vcmp.gt.s32.totalorder 0, %v2236
    %v2238 = vsel %vm2237, 0, %v2236
    %v2239 = vsub.s32 32, %v2238
    %v2240 = vshll.u32 %v2231, %v2238
    %v2241 = vshrl.u32 %v2223, %v2239
    %v2242 = vor.u32 %v2240, %v2241
    %v2243 = vsub.s32 4294967266, %v2238
    %v2244 = vadd.s32 %v2243, 127
    %v2245 = vshll.u32 %v2244, 23
    %v2246 = vor.u32 4788187, %v2245
    %v2247 = vand.u32 2147483647, %v2246
    %v2249 = vcvt.s32.f32 %v2242
    %v2250 = vmul.f32 %v2249, %v2247
    %v2251 = vxor.u32 %v2250, 2147483648
    %v2252 = vsel %vm2169, %v2251, %v2250
    %v2253 = vsub.s32 4, %v2229
    %v2254 = vsel %vm2169, %v2253, %v2229
    %v2255 = vsel %vm2168, %v661, %v2252
    %v2256 = vsel %vm2168, 0, %v2254
    %v2257 = vcosq.f32.pop %v2255
    %v2258 = vsinq.f32.pop %v2255
    %vm2259 = vweird.f32 %v661
    %v2260 = vadd.s32 %v2256, 3
    %v2261 = vand.u32 %v2260, 3
    %vm2262 = vcmp.lt.s32.totalorder %v2261, 2
    %vm2263 = vcmp.eq.s32.totalorder %v2261, 0
    %v2264 = vxor.u32 %v2258, 2147483648
    %v2265 = vsel %vm2263, %v2257, %v2264
    %vm2266 = vcmp.eq.s32.totalorder %v2261, 2
    %v2267 = vxor.u32 %v2257, 2147483648
    %v2268 = vsel %vm2266, %v2267, %v2258
    %v2269 = vsel %vm2262, %v2265, %v2268
    %v2270 = vsel %vm2259, nan, %v2269
    %v2271 = vand.u32 2147483647, %v662
    %vm2272 = vcmp.le.f32.partialorder %v2271, 0.7853982
    %vm2273 = vcmp.lt.s32.totalorder %v662, 0
    %v2274 = vand.u32 %v662, 2139095040
    %v2275 = vshrl.u32 %v2274, 23
    %v2276 = vsub.s32 %v2275, 127
    %v2277 = vand.u32 2147483647, %v662
    %v2278 = vand.u32 %v2277, 8388607
    %v2279 = vor.u32 %v2278, 8388608
    %v2280 = vsub.s32 0, %v2279
    %v2281 = vadd.s32 %v2276, 1
    %vm2282 = vcmp.gt.s32.totalorder %v2281, 0
    %v2283 = vsel %vm2282, %v2281, 0
    %v2284 = vshrl.u32 %v2283, 5
    %v2285 = vand.u32 %v2283, 31
    %v2286 = vsub.s32 32, %v2285
    %v2287 = vshrl.u32 683565275, %v2286
    %v2288 = vshll.u32 683565275, %v2285
    %v2289 = vshrl.u32 2475754826, %v2286
    %v2290 = vor.u32 %v2288, %v2289
    %v2291 = vshll.u32 2475754826, %v2285
    %v2292 = vshrl.u32 2131351028, %v2286
    %v2293 = vor.u32 %v2291, %v2292
    %v2294 = vshll.u32 2131351028, %v2285
    %v2295 = vshrl.u32 2102212464, %v2286
    %v2296 = vor.u32 %v2294, %v2295
    %v2297 = vshll.u32 2102212464, %v2285
    %v2298 = vshrl.u32 920167782, %v2286
    %v2299 = vor.u32 %v2297, %v2298
    %v2300 = vshll.u32 920167782, %v2285
    %v2301 = vshrl.u32 1326507024, %v2286
    %v2302 = vor.u32 %v2300, %v2301
    %vm2303 = vcmp.lt.s32.totalorder %v2284, 1
    %vm2304 = vcmp.lt.s32.totalorder %v2284, 2
    %vm2305 = vcmp.lt.s32.totalorder %v2284, 3
    %vm2306 = vcmp.lt.s32.totalorder %v2284, 4
    %v2307 = vsel %vm2303, %v2287, %v2290
    %v2308 = vsel %vm2306, %v2296, 2102212464
    %v2309 = vsel %vm2305, %v2293, %v2308
    %v2310 = vsel %vm2304, %v2307, %v2309
    %v2311 = vsel %vm2303, %v2290, %v2293
    %v2312 = vsel %vm2306, %v2299, 920167782
    %v2313 = vsel %vm2305, %v2296, %v2312
    %v2314 = vsel %vm2304, %v2311, %v2313
    %v2315 = vsel %vm2303, %v2293, %v2296
    %v2316 = vsel %vm2306, %v2302, 1326507024
    %v2317 = vsel %vm2305, %v2299, %v2316
    %v2318 = vsel %vm2304, %v2315, %v2317
    %v2319 = vshll.u32 %v2279, 8
    %v2320 = vmul.u32.u64.compose %v2319, %v2318
    %v2321 = vextract.low.u32 %v2320
    %v2322 = vextract.high.u32 %v2320
    %v2323 = vmul.u32.u64.compose %v2319, %v2314
    %v2324 = vextract.low.u32 %v2323
    %v2325 = vextract.high.u32 %v2323
    %v2326 = vmul.u32 %v2319, %v2310
    %v2327 = vadd.s32 %v2322, %v2324
    %vm2328 = vc.u32 %v2322, %v2324
    %v2329 = vadd.s32 %v2325, 1
    %v2330 = vsel %vm2328, %v2329, %v2325
    %v2331 = vadd.s32 %v2326, %v2330
    %v2332 = vadd.s32 %v2331, 536870912
    %v2333 = vshrl.u32 %v2332, 30
    %v2334 = vshll.u32 %v2333, 30
    %v2335 = vsub.s32 %v2331, %v2334
    %vm2336 = vcmp.lt.s32.totalorder %v2335, 0
    %v2337 = vsub.s32 0, %v2335
    %v2338 = vsel %vm2336, %v2337, %v2335
    %v2339 = vclz %v2338
    %v2340 = vsub.s32 %v2339, 2
    %vm2341 = vcmp.gt.s32.totalorder 0, %v2340
    %v2342 = vsel %vm2341, 0, %v2340
    %v2343 = vsub.s32 32, %v2342
    %v2344 = vshll.u32 %v2335, %v2342
    %v2345 = vshrl.u32 %v2327, %v2343
    %v2346 = vor.u32 %v2344, %v2345
    %v2347 = vsub.s32 4294967266, %v2342
    %v2348 = vadd.s32 %v2347, 127
    %v2349 = vshll.u32 %v2348, 23
    %v2350 = vor.u32 4788187, %v2349
    %v2351 = vand.u32 2147483647, %v2350
    %v2353 = vcvt.s32.f32 %v2346
    %v2354 = vmul.f32 %v2353, %v2351
    %v2355 = vxor.u32 %v2354, 2147483648
    %v2356 = vsel %vm2273, %v2355, %v2354
    %v2357 = vsub.s32 4, %v2333
    %v2358 = vsel %vm2273, %v2357, %v2333
    %v2359 = vsel %vm2272, %v662, %v2356
    %v2360 = vsel %vm2272, 0, %v2358
    %v2361 = vcosq.f32.pop %v2359
    %v2362 = vsinq.f32.pop %v2359
    %vm2363 = vweird.f32 %v662
    %v2364 = vadd.s32 %v2360, 3
    %v2365 = vand.u32 %v2364, 3
    %vm2366 = vcmp.lt.s32.totalorder %v2365, 2
    %vm2367 = vcmp.eq.s32.totalorder %v2365, 0
    %v2368 = vxor.u32 %v2362, 2147483648
    %v2369 = vsel %vm2367, %v2361, %v2368
    %vm2370 = vcmp.eq.s32.totalorder %v2365, 2
    %v2371 = vxor.u32 %v2361, 2147483648
    %v2372 = vsel %vm2370, %v2371, %v2362
    %v2373 = vsel %vm2366, %v2369, %v2372
    %v2374 = vsel %vm2363, nan, %v2373
    %v2375 = vand.u32 2147483647, %v663
    %vm2376 = vcmp.le.f32.partialorder %v2375, 0.7853982
    %vm2377 = vcmp.lt.s32.totalorder %v663, 0
    %v2378 = vand.u32 %v663, 2139095040
    %v2379 = vshrl.u32 %v2378, 23
    %v2380 = vsub.s32 %v2379, 127
    %v2381 = vand.u32 2147483647, %v663
    %v2382 = vand.u32 %v2381, 8388607
    %v2383 = vor.u32 %v2382, 8388608
    %v2384 = vsub.s32 0, %v2383
    %v2385 = vadd.s32 %v2380, 1
    %vm2386 = vcmp.gt.s32.totalorder %v2385, 0
    %v2387 = vsel %vm2386, %v2385, 0
    %v2388 = vshrl.u32 %v2387, 5
    %v2389 = vand.u32 %v2387, 31
    %v2390 = vsub.s32 32, %v2389
    %v2391 = vshrl.u32 683565275, %v2390
    %v2392 = vshll.u32 683565275, %v2389
    %v2393 = vshrl.u32 2475754826, %v2390
    %v2394 = vor.u32 %v2392, %v2393
    %v2395 = vshll.u32 2475754826, %v2389
    %v2396 = vshrl.u32 2131351028, %v2390
    %v2397 = vor.u32 %v2395, %v2396
    %v2398 = vshll.u32 2131351028, %v2389
    %v2399 = vshrl.u32 2102212464, %v2390
    %v2400 = vor.u32 %v2398, %v2399
    %v2401 = vshll.u32 2102212464, %v2389
    %v2402 = vshrl.u32 920167782, %v2390
    %v2403 = vor.u32 %v2401, %v2402
    %v2404 = vshll.u32 920167782, %v2389
    %v2405 = vshrl.u32 1326507024, %v2390
    %v2406 = vor.u32 %v2404, %v2405
    %vm2407 = vcmp.lt.s32.totalorder %v2388, 1
    %vm2408 = vcmp.lt.s32.totalorder %v2388, 2
    %vm2409 = vcmp.lt.s32.totalorder %v2388, 3
    %vm2410 = vcmp.lt.s32.totalorder %v2388, 4
    %v2411 = vsel %vm2407, %v2391, %v2394
    %v2412 = vsel %vm2410, %v2400, 2102212464
    %v2413 = vsel %vm2409, %v2397, %v2412
    %v2414 = vsel %vm2408, %v2411, %v2413
    %v2415 = vsel %vm2407, %v2394, %v2397
    %v2416 = vsel %vm2410, %v2403, 920167782
    %v2417 = vsel %vm2409, %v2400, %v2416
    %v2418 = vsel %vm2408, %v2415, %v2417
    %v2419 = vsel %vm2407, %v2397, %v2400
    %v2420 = vsel %vm2410, %v2406, 1326507024
    %v2421 = vsel %vm2409, %v2403, %v2420
    %v2422 = vsel %vm2408, %v2419, %v2421
    %v2423 = vshll.u32 %v2383, 8
    %v2424 = vmul.u32.u64.compose %v2423, %v2422
    %v2425 = vextract.low.u32 %v2424
    %v2426 = vextract.high.u32 %v2424
    %v2427 = vmul.u32.u64.compose %v2423, %v2418
    %v2428 = vextract.low.u32 %v2427
    %v2429 = vextract.high.u32 %v2427
    %v2430 = vmul.u32 %v2423, %v2414
    %v2431 = vadd.s32 %v2426, %v2428
    %vm2432 = vc.u32 %v2426, %v2428
    %v2433 = vadd.s32 %v2429, 1
    %v2434 = vsel %vm2432, %v2433, %v2429
    %v2435 = vadd.s32 %v2430, %v2434
    %v2436 = vadd.s32 %v2435, 536870912
    %v2437 = vshrl.u32 %v2436, 30
    %v2438 = vshll.u32 %v2437, 30
    %v2439 = vsub.s32 %v2435, %v2438
    %vm2440 = vcmp.lt.s32.totalorder %v2439, 0
    %v2441 = vsub.s32 0, %v2439
    %v2442 = vsel %vm2440, %v2441, %v2439
    %v2443 = vclz %v2442
    %v2444 = vsub.s32 %v2443, 2
    %vm2445 = vcmp.gt.s32.totalorder 0, %v2444
    %v2446 = vsel %vm2445, 0, %v2444
    %v2447 = vsub.s32 32, %v2446
    %v2448 = vshll.u32 %v2439, %v2446
    %v2449 = vshrl.u32 %v2431, %v2447
    %v2450 = vor.u32 %v2448, %v2449
    %v2451 = vsub.s32 4294967266, %v2446
    %v2452 = vadd.s32 %v2451, 127
    %v2453 = vshll.u32 %v2452, 23
    %v2454 = vor.u32 4788187, %v2453
    %v2455 = vand.u32 2147483647, %v2454
    %v2457 = vcvt.s32.f32 %v2450
    %v2458 = vmul.f32 %v2457, %v2455
    %v2459 = vxor.u32 %v2458, 2147483648
    %v2460 = vsel %vm2377, %v2459, %v2458
    %v2461 = vsub.s32 4, %v2437
    %v2462 = vsel %vm2377, %v2461, %v2437
    %v2463 = vsel %vm2376, %v663, %v2460
    %v2464 = vsel %vm2376, 0, %v2462
    %v2465 = vcosq.f32.pop %v2463
    %v2466 = vsinq.f32.pop %v2463
    %vm2467 = vweird.f32 %v663
    %v2468 = vadd.s32 %v2464, 3
    %v2469 = vand.u32 %v2468, 3
    %vm2470 = vcmp.lt.s32.totalorder %v2469, 2
    %vm2471 = vcmp.eq.s32.totalorder %v2469, 0
    %v2472 = vxor.u32 %v2466, 2147483648
    %v2473 = vsel %vm2471, %v2465, %v2472
    %vm2474 = vcmp.eq.s32.totalorder %v2469, 2
    %v2475 = vxor.u32 %v2465, 2147483648
    %v2476 = vsel %vm2474, %v2475, %v2466
    %v2477 = vsel %vm2470, %v2473, %v2476
    %v2478 = vsel %vm2467, nan, %v2477
    %v2479 = vand.u32 2147483647, %v664
    %vm2480 = vcmp.le.f32.partialorder %v2479, 0.7853982
    %vm2481 = vcmp.lt.s32.totalorder %v664, 0
    %v2482 = vand.u32 %v664, 2139095040
    %v2483 = vshrl.u32 %v2482, 23
    %v2484 = vsub.s32 %v2483, 127
    %v2485 = vand.u32 2147483647, %v664
    %v2486 = vand.u32 %v2485, 8388607
    %v2487 = vor.u32 %v2486, 8388608
    %v2488 = vsub.s32 0, %v2487
    %v2489 = vadd.s32 %v2484, 1
    %vm2490 = vcmp.gt.s32.totalorder %v2489, 0
    %v2491 = vsel %vm2490, %v2489, 0
    %v2492 = vshrl.u32 %v2491, 5
    %v2493 = vand.u32 %v2491, 31
    %v2494 = vsub.s32 32, %v2493
    %v2495 = vshrl.u32 683565275, %v2494
    %v2496 = vshll.u32 683565275, %v2493
    %v2497 = vshrl.u32 2475754826, %v2494
    %v2498 = vor.u32 %v2496, %v2497
    %v2499 = vshll.u32 2475754826, %v2493
    %v2500 = vshrl.u32 2131351028, %v2494
    %v2501 = vor.u32 %v2499, %v2500
    %v2502 = vshll.u32 2131351028, %v2493
    %v2503 = vshrl.u32 2102212464, %v2494
    %v2504 = vor.u32 %v2502, %v2503
    %v2505 = vshll.u32 2102212464, %v2493
    %v2506 = vshrl.u32 920167782, %v2494
    %v2507 = vor.u32 %v2505, %v2506
    %v2508 = vshll.u32 920167782, %v2493
    %v2509 = vshrl.u32 1326507024, %v2494
    %v2510 = vor.u32 %v2508, %v2509
    %vm2511 = vcmp.lt.s32.totalorder %v2492, 1
    %vm2512 = vcmp.lt.s32.totalorder %v2492, 2
    %vm2513 = vcmp.lt.s32.totalorder %v2492, 3
    %vm2514 = vcmp.lt.s32.totalorder %v2492, 4
    %v2515 = vsel %vm2511, %v2495, %v2498
    %v2516 = vsel %vm2514, %v2504, 2102212464
    %v2517 = vsel %vm2513, %v2501, %v2516
    %v2518 = vsel %vm2512, %v2515, %v2517
    %v2519 = vsel %vm2511, %v2498, %v2501
    %v2520 = vsel %vm2514, %v2507, 920167782
    %v2521 = vsel %vm2513, %v2504, %v2520
    %v2522 = vsel %vm2512, %v2519, %v2521
    %v2523 = vsel %vm2511, %v2501, %v2504
    %v2524 = vsel %vm2514, %v2510, 1326507024
    %v2525 = vsel %vm2513, %v2507, %v2524
    %v2526 = vsel %vm2512, %v2523, %v2525
    %v2527 = vshll.u32 %v2487, 8
    %v2528 = vmul.u32.u64.compose %v2527, %v2526
    %v2529 = vextract.low.u32 %v2528
    %v2530 = vextract.high.u32 %v2528
    %v2531 = vmul.u32.u64.compose %v2527, %v2522
    %v2532 = vextract.low.u32 %v2531
    %v2533 = vextract.high.u32 %v2531
    %v2534 = vmul.u32 %v2527, %v2518
    %v2535 = vadd.s32 %v2530, %v2532
    %vm2536 = vc.u32 %v2530, %v2532
    %v2537 = vadd.s32 %v2533, 1
    %v2538 = vsel %vm2536, %v2537, %v2533
    %v2539 = vadd.s32 %v2534, %v2538
    %v2540 = vadd.s32 %v2539, 536870912
    %v2541 = vshrl.u32 %v2540, 30
    %v2542 = vshll.u32 %v2541, 30
    %v2543 = vsub.s32 %v2539, %v2542
    %vm2544 = vcmp.lt.s32.totalorder %v2543, 0
    %v2545 = vsub.s32 0, %v2543
    %v2546 = vsel %vm2544, %v2545, %v2543
    %v2547 = vclz %v2546
    %v2548 = vsub.s32 %v2547, 2
    %vm2549 = vcmp.gt.s32.totalorder 0, %v2548
    %v2550 = vsel %vm2549, 0, %v2548
    %v2551 = vsub.s32 32, %v2550
    %v2552 = vshll.u32 %v2543, %v2550
    %v2553 = vshrl.u32 %v2535, %v2551
    %v2554 = vor.u32 %v2552, %v2553
    %v2555 = vsub.s32 4294967266, %v2550
    %v2556 = vadd.s32 %v2555, 127
    %v2557 = vshll.u32 %v2556, 23
    %v2558 = vor.u32 4788187, %v2557
    %v2559 = vand.u32 2147483647, %v2558
    %v2561 = vcvt.s32.f32 %v2554
    %v2562 = vmul.f32 %v2561, %v2559
    %v2563 = vxor.u32 %v2562, 2147483648
    %v2564 = vsel %vm2481, %v2563, %v2562
    %v2565 = vsub.s32 4, %v2541
    %v2566 = vsel %vm2481, %v2565, %v2541
    %v2567 = vsel %vm2480, %v664, %v2564
    %v2568 = vsel %vm2480, 0, %v2566
    %v2569 = vcosq.f32.pop %v2567
    %v2570 = vsinq.f32.pop %v2567
    %vm2571 = vweird.f32 %v664
    %v2572 = vadd.s32 %v2568, 3
    %v2573 = vand.u32 %v2572, 3
    %vm2574 = vcmp.lt.s32.totalorder %v2573, 2
    %vm2575 = vcmp.eq.s32.totalorder %v2573, 0
    %v2576 = vxor.u32 %v2570, 2147483648
    %v2577 = vsel %vm2575, %v2569, %v2576
    %vm2578 = vcmp.eq.s32.totalorder %v2573, 2
    %v2579 = vxor.u32 %v2569, 2147483648
    %v2580 = vsel %vm2578, %v2579, %v2570
    %v2581 = vsel %vm2574, %v2577, %v2580
    %v2582 = vsel %vm2571, nan, %v2581
    %v2583 = vand.u32 2147483647, %v665
    %vm2584 = vcmp.le.f32.partialorder %v2583, 0.7853982
    %vm2585 = vcmp.lt.s32.totalorder %v665, 0
    %v2586 = vand.u32 %v665, 2139095040
    %v2587 = vshrl.u32 %v2586, 23
    %v2588 = vsub.s32 %v2587, 127
    %v2589 = vand.u32 2147483647, %v665
    %v2590 = vand.u32 %v2589, 8388607
    %v2591 = vor.u32 %v2590, 8388608
    %v2592 = vsub.s32 0, %v2591
    %v2593 = vadd.s32 %v2588, 1
    %vm2594 = vcmp.gt.s32.totalorder %v2593, 0
    %v2595 = vsel %vm2594, %v2593, 0
    %v2596 = vshrl.u32 %v2595, 5
    %v2597 = vand.u32 %v2595, 31
    %v2598 = vsub.s32 32, %v2597
    %v2599 = vshrl.u32 683565275, %v2598
    %v2600 = vshll.u32 683565275, %v2597
    %v2601 = vshrl.u32 2475754826, %v2598
    %v2602 = vor.u32 %v2600, %v2601
    %v2603 = vshll.u32 2475754826, %v2597
    %v2604 = vshrl.u32 2131351028, %v2598
    %v2605 = vor.u32 %v2603, %v2604
    %v2606 = vshll.u32 2131351028, %v2597
    %v2607 = vshrl.u32 2102212464, %v2598
    %v2608 = vor.u32 %v2606, %v2607
    %v2609 = vshll.u32 2102212464, %v2597
    %v2610 = vshrl.u32 920167782, %v2598
    %v2611 = vor.u32 %v2609, %v2610
    %v2612 = vshll.u32 920167782, %v2597
    %v2613 = vshrl.u32 1326507024, %v2598
    %v2614 = vor.u32 %v2612, %v2613
    %vm2615 = vcmp.lt.s32.totalorder %v2596, 1
    %vm2616 = vcmp.lt.s32.totalorder %v2596, 2
    %vm2617 = vcmp.lt.s32.totalorder %v2596, 3
    %vm2618 = vcmp.lt.s32.totalorder %v2596, 4
    %v2619 = vsel %vm2615, %v2599, %v2602
    %v2620 = vsel %vm2618, %v2608, 2102212464
    %v2621 = vsel %vm2617, %v2605, %v2620
    %v2622 = vsel %vm2616, %v2619, %v2621
    %v2623 = vsel %vm2615, %v2602, %v2605
    %v2624 = vsel %vm2618, %v2611, 920167782
    %v2625 = vsel %vm2617, %v2608, %v2624
    %v2626 = vsel %vm2616, %v2623, %v2625
    %v2627 = vsel %vm2615, %v2605, %v2608
    %v2628 = vsel %vm2618, %v2614, 1326507024
    %v2629 = vsel %vm2617, %v2611, %v2628
    %v2630 = vsel %vm2616, %v2627, %v2629
    %v2631 = vshll.u32 %v2591, 8
    %v2632 = vmul.u32.u64.compose %v2631, %v2630
    %v2633 = vextract.low.u32 %v2632
    %v2634 = vextract.high.u32 %v2632
    %v2635 = vmul.u32.u64.compose %v2631, %v2626
    %v2636 = vextract.low.u32 %v2635
    %v2637 = vextract.high.u32 %v2635
    %v2638 = vmul.u32 %v2631, %v2622
    %v2639 = vadd.s32 %v2634, %v2636
    %vm2640 = vc.u32 %v2634, %v2636
    %v2641 = vadd.s32 %v2637, 1
    %v2642 = vsel %vm2640, %v2641, %v2637
    %v2643 = vadd.s32 %v2638, %v2642
    %v2644 = vadd.s32 %v2643, 536870912
    %v2645 = vshrl.u32 %v2644, 30
    %v2646 = vshll.u32 %v2645, 30
    %v2647 = vsub.s32 %v2643, %v2646
    %vm2648 = vcmp.lt.s32.totalorder %v2647, 0
    %v2649 = vsub.s32 0, %v2647
    %v2650 = vsel %vm2648, %v2649, %v2647
    %v2651 = vclz %v2650
    %v2652 = vsub.s32 %v2651, 2
    %vm2653 = vcmp.gt.s32.totalorder 0, %v2652
    %v2654 = vsel %vm2653, 0, %v2652
    %v2655 = vsub.s32 32, %v2654
    %v2656 = vshll.u32 %v2647, %v2654
    %v2657 = vshrl.u32 %v2639, %v2655
    %v2658 = vor.u32 %v2656, %v2657
    %v2659 = vsub.s32 4294967266, %v2654
    %v2660 = vadd.s32 %v2659, 127
    %v2661 = vshll.u32 %v2660, 23
    %v2662 = vor.u32 4788187, %v2661
    %v2663 = vand.u32 2147483647, %v2662
    %v2665 = vcvt.s32.f32 %v2658
    %v2666 = vmul.f32 %v2665, %v2663
    %v2667 = vxor.u32 %v2666, 2147483648
    %v2668 = vsel %vm2585, %v2667, %v2666
    %v2669 = vsub.s32 4, %v2645
    %v2670 = vsel %vm2585, %v2669, %v2645
    %v2671 = vsel %vm2584, %v665, %v2668
    %v2672 = vsel %vm2584, 0, %v2670
    %v2673 = vcosq.f32.pop %v2671
    %v2674 = vsinq.f32.pop %v2671
    %vm2675 = vweird.f32 %v665
    %v2676 = vadd.s32 %v2672, 3
    %v2677 = vand.u32 %v2676, 3
    %vm2678 = vcmp.lt.s32.totalorder %v2677, 2
    %vm2679 = vcmp.eq.s32.totalorder %v2677, 0
    %v2680 = vxor.u32 %v2674, 2147483648
    %v2681 = vsel %vm2679, %v2673, %v2680
    %vm2682 = vcmp.eq.s32.totalorder %v2677, 2
    %v2683 = vxor.u32 %v2673, 2147483648
    %v2684 = vsel %vm2682, %v2683, %v2674
    %v2685 = vsel %vm2678, %v2681, %v2684
    %v2686 = vsel %vm2675, nan, %v2685
    %v2687 = vand.u32 2147483647, %v666
    %vm2688 = vcmp.le.f32.partialorder %v2687, 0.7853982
    %vm2689 = vcmp.lt.s32.totalorder %v666, 0
    %v2690 = vand.u32 %v666, 2139095040
    %v2691 = vshrl.u32 %v2690, 23
    %v2692 = vsub.s32 %v2691, 127
    %v2693 = vand.u32 2147483647, %v666
    %v2694 = vand.u32 %v2693, 8388607
    %v2695 = vor.u32 %v2694, 8388608
    %v2696 = vsub.s32 0, %v2695
    %v2697 = vadd.s32 %v2692, 1
    %vm2698 = vcmp.gt.s32.totalorder %v2697, 0
    %v2699 = vsel %vm2698, %v2697, 0
    %v2700 = vshrl.u32 %v2699, 5
    %v2701 = vand.u32 %v2699, 31
    %v2702 = vsub.s32 32, %v2701
    %v2703 = vshrl.u32 683565275, %v2702
    %v2704 = vshll.u32 683565275, %v2701
    %v2705 = vshrl.u32 2475754826, %v2702
    %v2706 = vor.u32 %v2704, %v2705
    %v2707 = vshll.u32 2475754826, %v2701
    %v2708 = vshrl.u32 2131351028, %v2702
    %v2709 = vor.u32 %v2707, %v2708
    %v2710 = vshll.u32 2131351028, %v2701
    %v2711 = vshrl.u32 2102212464, %v2702
    %v2712 = vor.u32 %v2710, %v2711
    %v2713 = vshll.u32 2102212464, %v2701
    %v2714 = vshrl.u32 920167782, %v2702
    %v2715 = vor.u32 %v2713, %v2714
    %v2716 = vshll.u32 920167782, %v2701
    %v2717 = vshrl.u32 1326507024, %v2702
    %v2718 = vor.u32 %v2716, %v2717
    %vm2719 = vcmp.lt.s32.totalorder %v2700, 1
    %vm2720 = vcmp.lt.s32.totalorder %v2700, 2
    %vm2721 = vcmp.lt.s32.totalorder %v2700, 3
    %vm2722 = vcmp.lt.s32.totalorder %v2700, 4
    %v2723 = vsel %vm2719, %v2703, %v2706
    %v2724 = vsel %vm2722, %v2712, 2102212464
    %v2725 = vsel %vm2721, %v2709, %v2724
    %v2726 = vsel %vm2720, %v2723, %v2725
    %v2727 = vsel %vm2719, %v2706, %v2709
    %v2728 = vsel %vm2722, %v2715, 920167782
    %v2729 = vsel %vm2721, %v2712, %v2728
    %v2730 = vsel %vm2720, %v2727, %v2729
    %v2731 = vsel %vm2719, %v2709, %v2712
    %v2732 = vsel %vm2722, %v2718, 1326507024
    %v2733 = vsel %vm2721, %v2715, %v2732
    %v2734 = vsel %vm2720, %v2731, %v2733
    %v2735 = vshll.u32 %v2695, 8
    %v2736 = vmul.u32.u64.compose %v2735, %v2734
    %v2737 = vextract.low.u32 %v2736
    %v2738 = vextract.high.u32 %v2736
    %v2739 = vmul.u32.u64.compose %v2735, %v2730
    %v2740 = vextract.low.u32 %v2739
    %v2741 = vextract.high.u32 %v2739
    %v2742 = vmul.u32 %v2735, %v2726
    %v2743 = vadd.s32 %v2738, %v2740
    %vm2744 = vc.u32 %v2738, %v2740
    %v2745 = vadd.s32 %v2741, 1
    %v2746 = vsel %vm2744, %v2745, %v2741
    %v2747 = vadd.s32 %v2742, %v2746
    %v2748 = vadd.s32 %v2747, 536870912
    %v2749 = vshrl.u32 %v2748, 30
    %v2750 = vshll.u32 %v2749, 30
    %v2751 = vsub.s32 %v2747, %v2750
    %vm2752 = vcmp.lt.s32.totalorder %v2751, 0
    %v2753 = vsub.s32 0, %v2751
    %v2754 = vsel %vm2752, %v2753, %v2751
    %v2755 = vclz %v2754
    %v2756 = vsub.s32 %v2755, 2
    %vm2757 = vcmp.gt.s32.totalorder 0, %v2756
    %v2758 = vsel %vm2757, 0, %v2756
    %v2759 = vsub.s32 32, %v2758
    %v2760 = vshll.u32 %v2751, %v2758
    %v2761 = vshrl.u32 %v2743, %v2759
    %v2762 = vor.u32 %v2760, %v2761
    %v2763 = vsub.s32 4294967266, %v2758
    %v2764 = vadd.s32 %v2763, 127
    %v2765 = vshll.u32 %v2764, 23
    %v2766 = vor.u32 4788187, %v2765
    %v2767 = vand.u32 2147483647, %v2766
    %v2769 = vcvt.s32.f32 %v2762
    %v2770 = vmul.f32 %v2769, %v2767
    %v2771 = vxor.u32 %v2770, 2147483648
    %v2772 = vsel %vm2689, %v2771, %v2770
    %v2773 = vsub.s32 4, %v2749
    %v2774 = vsel %vm2689, %v2773, %v2749
    %v2775 = vsel %vm2688, %v666, %v2772
    %v2776 = vsel %vm2688, 0, %v2774
    %v2777 = vcosq.f32.pop %v2775
    %v2778 = vsinq.f32.pop %v2775
    %vm2779 = vweird.f32 %v666
    %v2780 = vadd.s32 %v2776, 3
    %v2781 = vand.u32 %v2780, 3
    %vm2782 = vcmp.lt.s32.totalorder %v2781, 2
    %vm2783 = vcmp.eq.s32.totalorder %v2781, 0
    %v2784 = vxor.u32 %v2778, 2147483648
    %v2785 = vsel %vm2783, %v2777, %v2784
    %vm2786 = vcmp.eq.s32.totalorder %v2781, 2
    %v2787 = vxor.u32 %v2777, 2147483648
    %v2788 = vsel %vm2786, %v2787, %v2778
    %v2789 = vsel %vm2782, %v2785, %v2788
    %v2790 = vsel %vm2779, nan, %v2789
    %v2791 = vand.u32 2147483647, %v667
    %vm2792 = vcmp.le.f32.partialorder %v2791, 0.7853982
    %vm2793 = vcmp.lt.s32.totalorder %v667, 0
    %v2794 = vand.u32 %v667, 2139095040
    %v2795 = vshrl.u32 %v2794, 23
    %v2796 = vsub.s32 %v2795, 127
    %v2797 = vand.u32 2147483647, %v667
    %v2798 = vand.u32 %v2797, 8388607
    %v2799 = vor.u32 %v2798, 8388608
    %v2800 = vsub.s32 0, %v2799
    %v2801 = vadd.s32 %v2796, 1
    %vm2802 = vcmp.gt.s32.totalorder %v2801, 0
    %v2803 = vsel %vm2802, %v2801, 0
    %v2804 = vshrl.u32 %v2803, 5
    %v2805 = vand.u32 %v2803, 31
    %v2806 = vsub.s32 32, %v2805
    %v2807 = vshrl.u32 683565275, %v2806
    %v2808 = vshll.u32 683565275, %v2805
    %v2809 = vshrl.u32 2475754826, %v2806
    %v2810 = vor.u32 %v2808, %v2809
    %v2811 = vshll.u32 2475754826, %v2805
    %v2812 = vshrl.u32 2131351028, %v2806
    %v2813 = vor.u32 %v2811, %v2812
    %v2814 = vshll.u32 2131351028, %v2805
    %v2815 = vshrl.u32 2102212464, %v2806
    %v2816 = vor.u32 %v2814, %v2815
    %v2817 = vshll.u32 2102212464, %v2805
    %v2818 = vshrl.u32 920167782, %v2806
    %v2819 = vor.u32 %v2817, %v2818
    %v2820 = vshll.u32 920167782, %v2805
    %v2821 = vshrl.u32 1326507024, %v2806
    %v2822 = vor.u32 %v2820, %v2821
    %vm2823 = vcmp.lt.s32.totalorder %v2804, 1
    %vm2824 = vcmp.lt.s32.totalorder %v2804, 2
    %vm2825 = vcmp.lt.s32.totalorder %v2804, 3
    %vm2826 = vcmp.lt.s32.totalorder %v2804, 4
    %v2827 = vsel %vm2823, %v2807, %v2810
    %v2828 = vsel %vm2826, %v2816, 2102212464
    %v2829 = vsel %vm2825, %v2813, %v2828
    %v2830 = vsel %vm2824, %v2827, %v2829
    %v2831 = vsel %vm2823, %v2810, %v2813
    %v2832 = vsel %vm2826, %v2819, 920167782
    %v2833 = vsel %vm2825, %v2816, %v2832
    %v2834 = vsel %vm2824, %v2831, %v2833
    %v2835 = vsel %vm2823, %v2813, %v2816
    %v2836 = vsel %vm2826, %v2822, 1326507024
    %v2837 = vsel %vm2825, %v2819, %v2836
    %v2838 = vsel %vm2824, %v2835, %v2837
    %v2839 = vshll.u32 %v2799, 8
    %v2840 = vmul.u32.u64.compose %v2839, %v2838
    %v2841 = vextract.low.u32 %v2840
    %v2842 = vextract.high.u32 %v2840
    %v2843 = vmul.u32.u64.compose %v2839, %v2834
    %v2844 = vextract.low.u32 %v2843
    %v2845 = vextract.high.u32 %v2843
    %v2846 = vmul.u32 %v2839, %v2830
    %v2847 = vadd.s32 %v2842, %v2844
    %vm2848 = vc.u32 %v2842, %v2844
    %v2849 = vadd.s32 %v2845, 1
    %v2850 = vsel %vm2848, %v2849, %v2845
    %v2851 = vadd.s32 %v2846, %v2850
    %v2852 = vadd.s32 %v2851, 536870912
    %v2853 = vshrl.u32 %v2852, 30
    %v2854 = vshll.u32 %v2853, 30
    %v2855 = vsub.s32 %v2851, %v2854
    %vm2856 = vcmp.lt.s32.totalorder %v2855, 0
    %v2857 = vsub.s32 0, %v2855
    %v2858 = vsel %vm2856, %v2857, %v2855
    %v2859 = vclz %v2858
    %v2860 = vsub.s32 %v2859, 2
    %vm2861 = vcmp.gt.s32.totalorder 0, %v2860
    %v2862 = vsel %vm2861, 0, %v2860
    %v2863 = vsub.s32 32, %v2862
    %v2864 = vshll.u32 %v2855, %v2862
    %v2865 = vshrl.u32 %v2847, %v2863
    %v2866 = vor.u32 %v2864, %v2865
    %v2867 = vsub.s32 4294967266, %v2862
    %v2868 = vadd.s32 %v2867, 127
    %v2869 = vshll.u32 %v2868, 23
    %v2870 = vor.u32 4788187, %v2869
    %v2871 = vand.u32 2147483647, %v2870
    %v2873 = vcvt.s32.f32 %v2866
    %v2874 = vmul.f32 %v2873, %v2871
    %v2875 = vxor.u32 %v2874, 2147483648
    %v2876 = vsel %vm2793, %v2875, %v2874
    %v2877 = vsub.s32 4, %v2853
    %v2878 = vsel %vm2793, %v2877, %v2853
    %v2879 = vsel %vm2792, %v667, %v2876
    %v2880 = vsel %vm2792, 0, %v2878
    %v2881 = vcosq.f32.pop %v2879
    %v2882 = vsinq.f32.pop %v2879
    %vm2883 = vweird.f32 %v667
    %v2884 = vadd.s32 %v2880, 3
    %v2885 = vand.u32 %v2884, 3
    %vm2886 = vcmp.lt.s32.totalorder %v2885, 2
    %vm2887 = vcmp.eq.s32.totalorder %v2885, 0
    %v2888 = vxor.u32 %v2882, 2147483648
    %v2889 = vsel %vm2887, %v2881, %v2888
    %vm2890 = vcmp.eq.s32.totalorder %v2885, 2
    %v2891 = vxor.u32 %v2881, 2147483648
    %v2892 = vsel %vm2890, %v2891, %v2882
    %v2893 = vsel %vm2886, %v2889, %v2892
    %v2894 = vsel %vm2883, nan, %v2893
    %v2895 = vand.u32 2147483647, %v668
    %vm2896 = vcmp.le.f32.partialorder %v2895, 0.7853982
    %vm2897 = vcmp.lt.s32.totalorder %v668, 0
    %v2898 = vand.u32 %v668, 2139095040
    %v2899 = vshrl.u32 %v2898, 23
    %v2900 = vsub.s32 %v2899, 127
    %v2901 = vand.u32 2147483647, %v668
    %v2902 = vand.u32 %v2901, 8388607
    %v2903 = vor.u32 %v2902, 8388608
    %v2904 = vsub.s32 0, %v2903
    %v2905 = vadd.s32 %v2900, 1
    %vm2906 = vcmp.gt.s32.totalorder %v2905, 0
    %v2907 = vsel %vm2906, %v2905, 0
    %v2908 = vshrl.u32 %v2907, 5
    %v2909 = vand.u32 %v2907, 31
    %v2910 = vsub.s32 32, %v2909
    %v2911 = vshrl.u32 683565275, %v2910
    %v2912 = vshll.u32 683565275, %v2909
    %v2913 = vshrl.u32 2475754826, %v2910
    %v2914 = vor.u32 %v2912, %v2913
    %v2915 = vshll.u32 2475754826, %v2909
    %v2916 = vshrl.u32 2131351028, %v2910
    %v2917 = vor.u32 %v2915, %v2916
    %v2918 = vshll.u32 2131351028, %v2909
    %v2919 = vshrl.u32 2102212464, %v2910
    %v2920 = vor.u32 %v2918, %v2919
    %v2921 = vshll.u32 2102212464, %v2909
    %v2922 = vshrl.u32 920167782, %v2910
    %v2923 = vor.u32 %v2921, %v2922
    %v2924 = vshll.u32 920167782, %v2909
    %v2925 = vshrl.u32 1326507024, %v2910
    %v2926 = vor.u32 %v2924, %v2925
    %vm2927 = vcmp.lt.s32.totalorder %v2908, 1
    %vm2928 = vcmp.lt.s32.totalorder %v2908, 2
    %vm2929 = vcmp.lt.s32.totalorder %v2908, 3
    %vm2930 = vcmp.lt.s32.totalorder %v2908, 4
    %v2931 = vsel %vm2927, %v2911, %v2914
    %v2932 = vsel %vm2930, %v2920, 2102212464
    %v2933 = vsel %vm2929, %v2917, %v2932
    %v2934 = vsel %vm2928, %v2931, %v2933
    %v2935 = vsel %vm2927, %v2914, %v2917
    %v2936 = vsel %vm2930, %v2923, 920167782
    %v2937 = vsel %vm2929, %v2920, %v2936
    %v2938 = vsel %vm2928, %v2935, %v2937
    %v2939 = vsel %vm2927, %v2917, %v2920
    %v2940 = vsel %vm2930, %v2926, 1326507024
    %v2941 = vsel %vm2929, %v2923, %v2940
    %v2942 = vsel %vm2928, %v2939, %v2941
    %v2943 = vshll.u32 %v2903, 8
    %v2944 = vmul.u32.u64.compose %v2943, %v2942
    %v2945 = vextract.low.u32 %v2944
    %v2946 = vextract.high.u32 %v2944
    %v2947 = vmul.u32.u64.compose %v2943, %v2938
    %v2948 = vextract.low.u32 %v2947
    %v2949 = vextract.high.u32 %v2947
    %v2950 = vmul.u32 %v2943, %v2934
    %v2951 = vadd.s32 %v2946, %v2948
    %vm2952 = vc.u32 %v2946, %v2948
    %v2953 = vadd.s32 %v2949, 1
    %v2954 = vsel %vm2952, %v2953, %v2949
    %v2955 = vadd.s32 %v2950, %v2954
    %v2956 = vadd.s32 %v2955, 536870912
    %v2957 = vshrl.u32 %v2956, 30
    %v2958 = vshll.u32 %v2957, 30
    %v2959 = vsub.s32 %v2955, %v2958
    %vm2960 = vcmp.lt.s32.totalorder %v2959, 0
    %v2961 = vsub.s32 0, %v2959
    %v2962 = vsel %vm2960, %v2961, %v2959
    %v2963 = vclz %v2962
    %v2964 = vsub.s32 %v2963, 2
    %vm2965 = vcmp.gt.s32.totalorder 0, %v2964
    %v2966 = vsel %vm2965, 0, %v2964
    %v2967 = vsub.s32 32, %v2966
    %v2968 = vshll.u32 %v2959, %v2966
    %v2969 = vshrl.u32 %v2951, %v2967
    %v2970 = vor.u32 %v2968, %v2969
    %v2971 = vsub.s32 4294967266, %v2966
    %v2972 = vadd.s32 %v2971, 127
    %v2973 = vshll.u32 %v2972, 23
    %v2974 = vor.u32 4788187, %v2973
    %v2975 = vand.u32 2147483647, %v2974
    %v2977 = vcvt.s32.f32 %v2970
    %v2978 = vmul.f32 %v2977, %v2975
    %v2979 = vxor.u32 %v2978, 2147483648
    %v2980 = vsel %vm2897, %v2979, %v2978
    %v2981 = vsub.s32 4, %v2957
    %v2982 = vsel %vm2897, %v2981, %v2957
    %v2983 = vsel %vm2896, %v668, %v2980
    %v2984 = vsel %vm2896, 0, %v2982
    %v2985 = vcosq.f32.pop %v2983
    %v2986 = vsinq.f32.pop %v2983
    %vm2987 = vweird.f32 %v668
    %v2988 = vadd.s32 %v2984, 3
    %v2989 = vand.u32 %v2988, 3
    %vm2990 = vcmp.lt.s32.totalorder %v2989, 2
    %vm2991 = vcmp.eq.s32.totalorder %v2989, 0
    %v2992 = vxor.u32 %v2986, 2147483648
    %v2993 = vsel %vm2991, %v2985, %v2992
    %vm2994 = vcmp.eq.s32.totalorder %v2989, 2
    %v2995 = vxor.u32 %v2985, 2147483648
    %v2996 = vsel %vm2994, %v2995, %v2986
    %v2997 = vsel %vm2990, %v2993, %v2996
    %v2998 = vsel %vm2987, nan, %v2997
    %v2999 = vand.u32 2147483647, %v669
    %vm3000 = vcmp.le.f32.partialorder %v2999, 0.7853982
    %vm3001 = vcmp.lt.s32.totalorder %v669, 0
    %v3002 = vand.u32 %v669, 2139095040
    %v3003 = vshrl.u32 %v3002, 23
    %v3004 = vsub.s32 %v3003, 127
    %v3005 = vand.u32 2147483647, %v669
    %v3006 = vand.u32 %v3005, 8388607
    %v3007 = vor.u32 %v3006, 8388608
    %v3008 = vsub.s32 0, %v3007
    %v3009 = vadd.s32 %v3004, 1
    %vm3010 = vcmp.gt.s32.totalorder %v3009, 0
    %v3011 = vsel %vm3010, %v3009, 0
    %v3012 = vshrl.u32 %v3011, 5
    %v3013 = vand.u32 %v3011, 31
    %v3014 = vsub.s32 32, %v3013
    %v3015 = vshrl.u32 683565275, %v3014
    %v3016 = vshll.u32 683565275, %v3013
    %v3017 = vshrl.u32 2475754826, %v3014
    %v3018 = vor.u32 %v3016, %v3017
    %v3019 = vshll.u32 2475754826, %v3013
    %v3020 = vshrl.u32 2131351028, %v3014
    %v3021 = vor.u32 %v3019, %v3020
    %v3022 = vshll.u32 2131351028, %v3013
    %v3023 = vshrl.u32 2102212464, %v3014
    %v3024 = vor.u32 %v3022, %v3023
    %v3025 = vshll.u32 2102212464, %v3013
    %v3026 = vshrl.u32 920167782, %v3014
    %v3027 = vor.u32 %v3025, %v3026
    %v3028 = vshll.u32 920167782, %v3013
    %v3029 = vshrl.u32 1326507024, %v3014
    %v3030 = vor.u32 %v3028, %v3029
    %vm3031 = vcmp.lt.s32.totalorder %v3012, 1
    %vm3032 = vcmp.lt.s32.totalorder %v3012, 2
    %vm3033 = vcmp.lt.s32.totalorder %v3012, 3
    %vm3034 = vcmp.lt.s32.totalorder %v3012, 4
    %v3035 = vsel %vm3031, %v3015, %v3018
    %v3036 = vsel %vm3034, %v3024, 2102212464
    %v3037 = vsel %vm3033, %v3021, %v3036
    %v3038 = vsel %vm3032, %v3035, %v3037
    %v3039 = vsel %vm3031, %v3018, %v3021
    %v3040 = vsel %vm3034, %v3027, 920167782
    %v3041 = vsel %vm3033, %v3024, %v3040
    %v3042 = vsel %vm3032, %v3039, %v3041
    %v3043 = vsel %vm3031, %v3021, %v3024
    %v3044 = vsel %vm3034, %v3030, 1326507024
    %v3045 = vsel %vm3033, %v3027, %v3044
    %v3046 = vsel %vm3032, %v3043, %v3045
    %v3047 = vshll.u32 %v3007, 8
    %v3048 = vmul.u32.u64.compose %v3047, %v3046
    %v3049 = vextract.low.u32 %v3048
    %v3050 = vextract.high.u32 %v3048
    %v3051 = vmul.u32.u64.compose %v3047, %v3042
    %v3052 = vextract.low.u32 %v3051
    %v3053 = vextract.high.u32 %v3051
    %v3054 = vmul.u32 %v3047, %v3038
    %v3055 = vadd.s32 %v3050, %v3052
    %vm3056 = vc.u32 %v3050, %v3052
    %v3057 = vadd.s32 %v3053, 1
    %v3058 = vsel %vm3056, %v3057, %v3053
    %v3059 = vadd.s32 %v3054, %v3058
    %v3060 = vadd.s32 %v3059, 536870912
    %v3061 = vshrl.u32 %v3060, 30
    %v3062 = vshll.u32 %v3061, 30
    %v3063 = vsub.s32 %v3059, %v3062
    %vm3064 = vcmp.lt.s32.totalorder %v3063, 0
    %v3065 = vsub.s32 0, %v3063
    %v3066 = vsel %vm3064, %v3065, %v3063
    %v3067 = vclz %v3066
    %v3068 = vsub.s32 %v3067, 2
    %vm3069 = vcmp.gt.s32.totalorder 0, %v3068
    %v3070 = vsel %vm3069, 0, %v3068
    %v3071 = vsub.s32 32, %v3070
    %v3072 = vshll.u32 %v3063, %v3070
    %v3073 = vshrl.u32 %v3055, %v3071
    %v3074 = vor.u32 %v3072, %v3073
    %v3075 = vsub.s32 4294967266, %v3070
    %v3076 = vadd.s32 %v3075, 127
    %v3077 = vshll.u32 %v3076, 23
    %v3078 = vor.u32 4788187, %v3077
    %v3079 = vand.u32 2147483647, %v3078
    %v3081 = vcvt.s32.f32 %v3074
    %v3082 = vmul.f32 %v3081, %v3079
    %v3083 = vxor.u32 %v3082, 2147483648
    %v3084 = vsel %vm3001, %v3083, %v3082
    %v3085 = vsub.s32 4, %v3061
    %v3086 = vsel %vm3001, %v3085, %v3061
    %v3087 = vsel %vm3000, %v669, %v3084
    %v3088 = vsel %vm3000, 0, %v3086
    %v3089 = vcosq.f32.pop %v3087
    %v3090 = vsinq.f32.pop %v3087
    %vm3091 = vweird.f32 %v669
    %v3092 = vadd.s32 %v3088, 3
    %v3093 = vand.u32 %v3092, 3
    %vm3094 = vcmp.lt.s32.totalorder %v3093, 2
    %vm3095 = vcmp.eq.s32.totalorder %v3093, 0
    %v3096 = vxor.u32 %v3090, 2147483648
    %v3097 = vsel %vm3095, %v3089, %v3096
    %vm3098 = vcmp.eq.s32.totalorder %v3093, 2
    %v3099 = vxor.u32 %v3089, 2147483648
    %v3100 = vsel %vm3098, %v3099, %v3090
    %v3101 = vsel %vm3094, %v3097, %v3100
    %v3102 = vsel %vm3091, nan, %v3101
    %v3103 = vand.u32 2147483647, %v670
    %vm3104 = vcmp.le.f32.partialorder %v3103, 0.7853982
    %vm3105 = vcmp.lt.s32.totalorder %v670, 0
    %v3106 = vand.u32 %v670, 2139095040
    %v3107 = vshrl.u32 %v3106, 23
    %v3108 = vsub.s32 %v3107, 127
    %v3109 = vand.u32 2147483647, %v670
    %v3110 = vand.u32 %v3109, 8388607
    %v3111 = vor.u32 %v3110, 8388608
    %v3112 = vsub.s32 0, %v3111
    %v3113 = vadd.s32 %v3108, 1
    %vm3114 = vcmp.gt.s32.totalorder %v3113, 0
    %v3115 = vsel %vm3114, %v3113, 0
    %v3116 = vshrl.u32 %v3115, 5
    %v3117 = vand.u32 %v3115, 31
    %v3118 = vsub.s32 32, %v3117
    %v3119 = vshrl.u32 683565275, %v3118
    %v3120 = vshll.u32 683565275, %v3117
    %v3121 = vshrl.u32 2475754826, %v3118
    %v3122 = vor.u32 %v3120, %v3121
    %v3123 = vshll.u32 2475754826, %v3117
    %v3124 = vshrl.u32 2131351028, %v3118
    %v3125 = vor.u32 %v3123, %v3124
    %v3126 = vshll.u32 2131351028, %v3117
    %v3127 = vshrl.u32 2102212464, %v3118
    %v3128 = vor.u32 %v3126, %v3127
    %v3129 = vshll.u32 2102212464, %v3117
    %v3130 = vshrl.u32 920167782, %v3118
    %v3131 = vor.u32 %v3129, %v3130
    %v3132 = vshll.u32 920167782, %v3117
    %v3133 = vshrl.u32 1326507024, %v3118
    %v3134 = vor.u32 %v3132, %v3133
    %vm3135 = vcmp.lt.s32.totalorder %v3116, 1
    %vm3136 = vcmp.lt.s32.totalorder %v3116, 2
    %vm3137 = vcmp.lt.s32.totalorder %v3116, 3
    %vm3138 = vcmp.lt.s32.totalorder %v3116, 4
    %v3139 = vsel %vm3135, %v3119, %v3122
    %v3140 = vsel %vm3138, %v3128, 2102212464
    %v3141 = vsel %vm3137, %v3125, %v3140
    %v3142 = vsel %vm3136, %v3139, %v3141
    %v3143 = vsel %vm3135, %v3122, %v3125
    %v3144 = vsel %vm3138, %v3131, 920167782
    %v3145 = vsel %vm3137, %v3128, %v3144
    %v3146 = vsel %vm3136, %v3143, %v3145
    %v3147 = vsel %vm3135, %v3125, %v3128
    %v3148 = vsel %vm3138, %v3134, 1326507024
    %v3149 = vsel %vm3137, %v3131, %v3148
    %v3150 = vsel %vm3136, %v3147, %v3149
    %v3151 = vshll.u32 %v3111, 8
    %v3152 = vmul.u32.u64.compose %v3151, %v3150
    %v3153 = vextract.low.u32 %v3152
    %v3154 = vextract.high.u32 %v3152
    %v3155 = vmul.u32.u64.compose %v3151, %v3146
    %v3156 = vextract.low.u32 %v3155
    %v3157 = vextract.high.u32 %v3155
    %v3158 = vmul.u32 %v3151, %v3142
    %v3159 = vadd.s32 %v3154, %v3156
    %vm3160 = vc.u32 %v3154, %v3156
    %v3161 = vadd.s32 %v3157, 1
    %v3162 = vsel %vm3160, %v3161, %v3157
    %v3163 = vadd.s32 %v3158, %v3162
    %v3164 = vadd.s32 %v3163, 536870912
    %v3165 = vshrl.u32 %v3164, 30
    %v3166 = vshll.u32 %v3165, 30
    %v3167 = vsub.s32 %v3163, %v3166
    %vm3168 = vcmp.lt.s32.totalorder %v3167, 0
    %v3169 = vsub.s32 0, %v3167
    %v3170 = vsel %vm3168, %v3169, %v3167
    %v3171 = vclz %v3170
    %v3172 = vsub.s32 %v3171, 2
    %vm3173 = vcmp.gt.s32.totalorder 0, %v3172
    %v3174 = vsel %vm3173, 0, %v3172
    %v3175 = vsub.s32 32, %v3174
    %v3176 = vshll.u32 %v3167, %v3174
    %v3177 = vshrl.u32 %v3159, %v3175
    %v3178 = vor.u32 %v3176, %v3177
    %v3179 = vsub.s32 4294967266, %v3174
    %v3180 = vadd.s32 %v3179, 127
    %v3181 = vshll.u32 %v3180, 23
    %v3182 = vor.u32 4788187, %v3181
    %v3183 = vand.u32 2147483647, %v3182
    %v3185 = vcvt.s32.f32 %v3178
    %v3186 = vmul.f32 %v3185, %v3183
    %v3187 = vxor.u32 %v3186, 2147483648
    %v3188 = vsel %vm3105, %v3187, %v3186
    %v3189 = vsub.s32 4, %v3165
    %v3190 = vsel %vm3105, %v3189, %v3165
    %v3191 = vsel %vm3104, %v670, %v3188
    %v3192 = vsel %vm3104, 0, %v3190
    %v3193 = vcosq.f32.pop %v3191
    %v3194 = vsinq.f32.pop %v3191
    %vm3195 = vweird.f32 %v670
    %v3196 = vadd.s32 %v3192, 3
    %v3197 = vand.u32 %v3196, 3
    %vm3198 = vcmp.lt.s32.totalorder %v3197, 2
    %vm3199 = vcmp.eq.s32.totalorder %v3197, 0
    %v3200 = vxor.u32 %v3194, 2147483648
    %v3201 = vsel %vm3199, %v3193, %v3200
    %vm3202 = vcmp.eq.s32.totalorder %v3197, 2
    %v3203 = vxor.u32 %v3193, 2147483648
    %v3204 = vsel %vm3202, %v3203, %v3194
    %v3205 = vsel %vm3198, %v3201, %v3204
    %v3206 = vsel %vm3195, nan, %v3205
    %v3207 = vand.u32 2147483647, %v671
    %vm3208 = vcmp.le.f32.partialorder %v3207, 0.7853982
    %vm3209 = vcmp.lt.s32.totalorder %v671, 0
    %v3210 = vand.u32 %v671, 2139095040
    %v3211 = vshrl.u32 %v3210, 23
    %v3212 = vsub.s32 %v3211, 127
    %v3213 = vand.u32 2147483647, %v671
    %v3214 = vand.u32 %v3213, 8388607
    %v3215 = vor.u32 %v3214, 8388608
    %v3216 = vsub.s32 0, %v3215
    %v3217 = vadd.s32 %v3212, 1
    %vm3218 = vcmp.gt.s32.totalorder %v3217, 0
    %v3219 = vsel %vm3218, %v3217, 0
    %v3220 = vshrl.u32 %v3219, 5
    %v3221 = vand.u32 %v3219, 31
    %v3222 = vsub.s32 32, %v3221
    %v3223 = vshrl.u32 683565275, %v3222
    %v3224 = vshll.u32 683565275, %v3221
    %v3225 = vshrl.u32 2475754826, %v3222
    %v3226 = vor.u32 %v3224, %v3225
    %v3227 = vshll.u32 2475754826, %v3221
    %v3228 = vshrl.u32 2131351028, %v3222
    %v3229 = vor.u32 %v3227, %v3228
    %v3230 = vshll.u32 2131351028, %v3221
    %v3231 = vshrl.u32 2102212464, %v3222
    %v3232 = vor.u32 %v3230, %v3231
    %v3233 = vshll.u32 2102212464, %v3221
    %v3234 = vshrl.u32 920167782, %v3222
    %v3235 = vor.u32 %v3233, %v3234
    %v3236 = vshll.u32 920167782, %v3221
    %v3237 = vshrl.u32 1326507024, %v3222
    %v3238 = vor.u32 %v3236, %v3237
    %vm3239 = vcmp.lt.s32.totalorder %v3220, 1
    %vm3240 = vcmp.lt.s32.totalorder %v3220, 2
    %vm3241 = vcmp.lt.s32.totalorder %v3220, 3
    %vm3242 = vcmp.lt.s32.totalorder %v3220, 4
    %v3243 = vsel %vm3239, %v3223, %v3226
    %v3244 = vsel %vm3242, %v3232, 2102212464
    %v3245 = vsel %vm3241, %v3229, %v3244
    %v3246 = vsel %vm3240, %v3243, %v3245
    %v3247 = vsel %vm3239, %v3226, %v3229
    %v3248 = vsel %vm3242, %v3235, 920167782
    %v3249 = vsel %vm3241, %v3232, %v3248
    %v3250 = vsel %vm3240, %v3247, %v3249
    %v3251 = vsel %vm3239, %v3229, %v3232
    %v3252 = vsel %vm3242, %v3238, 1326507024
    %v3253 = vsel %vm3241, %v3235, %v3252
    %v3254 = vsel %vm3240, %v3251, %v3253
    %v3255 = vshll.u32 %v3215, 8
    %v3256 = vmul.u32.u64.compose %v3255, %v3254
    %v3257 = vextract.low.u32 %v3256
    %v3258 = vextract.high.u32 %v3256
    %v3259 = vmul.u32.u64.compose %v3255, %v3250
    %v3260 = vextract.low.u32 %v3259
    %v3261 = vextract.high.u32 %v3259
    %v3262 = vmul.u32 %v3255, %v3246
    %v3263 = vadd.s32 %v3258, %v3260
    %vm3264 = vc.u32 %v3258, %v3260
    %v3265 = vadd.s32 %v3261, 1
    %v3266 = vsel %vm3264, %v3265, %v3261
    %v3267 = vadd.s32 %v3262, %v3266
    %v3268 = vadd.s32 %v3267, 536870912
    %v3269 = vshrl.u32 %v3268, 30
    %v3270 = vshll.u32 %v3269, 30
    %v3271 = vsub.s32 %v3267, %v3270
    %vm3272 = vcmp.lt.s32.totalorder %v3271, 0
    %v3273 = vsub.s32 0, %v3271
    %v3274 = vsel %vm3272, %v3273, %v3271
    %v3275 = vclz %v3274
    %v3276 = vsub.s32 %v3275, 2
    %vm3277 = vcmp.gt.s32.totalorder 0, %v3276
    %v3278 = vsel %vm3277, 0, %v3276
    %v3279 = vsub.s32 32, %v3278
    %v3280 = vshll.u32 %v3271, %v3278
    %v3281 = vshrl.u32 %v3263, %v3279
    %v3282 = vor.u32 %v3280, %v3281
    %v3283 = vsub.s32 4294967266, %v3278
    %v3284 = vadd.s32 %v3283, 127
    %v3285 = vshll.u32 %v3284, 23
    %v3286 = vor.u32 4788187, %v3285
    %v3287 = vand.u32 2147483647, %v3286
    %v3289 = vcvt.s32.f32 %v3282
    %v3290 = vmul.f32 %v3289, %v3287
    %v3291 = vxor.u32 %v3290, 2147483648
    %v3292 = vsel %vm3209, %v3291, %v3290
    %v3293 = vsub.s32 4, %v3269
    %v3294 = vsel %vm3209, %v3293, %v3269
    %v3295 = vsel %vm3208, %v671, %v3292
    %v3296 = vsel %vm3208, 0, %v3294
    %v3297 = vcosq.f32.pop %v3295
    %v3298 = vsinq.f32.pop %v3295
    %vm3299 = vweird.f32 %v671
    %v3300 = vadd.s32 %v3296, 3
    %v3301 = vand.u32 %v3300, 3
    %vm3302 = vcmp.lt.s32.totalorder %v3301, 2
    %vm3303 = vcmp.eq.s32.totalorder %v3301, 0
    %v3304 = vxor.u32 %v3298, 2147483648
    %v3305 = vsel %vm3303, %v3297, %v3304
    %vm3306 = vcmp.eq.s32.totalorder %v3301, 2
    %v3307 = vxor.u32 %v3297, 2147483648
    %v3308 = vsel %vm3306, %v3307, %v3298
    %v3309 = vsel %vm3302, %v3305, %v3308
    %v3310 = vsel %vm3299, nan, %v3309
    %v3311 = vand.u32 2147483647, %v672
    %vm3312 = vcmp.le.f32.partialorder %v3311, 0.7853982
    %vm3313 = vcmp.lt.s32.totalorder %v672, 0
    %v3314 = vand.u32 %v672, 2139095040
    %v3315 = vshrl.u32 %v3314, 23
    %v3316 = vsub.s32 %v3315, 127
    %v3317 = vand.u32 2147483647, %v672
    %v3318 = vand.u32 %v3317, 8388607
    %v3319 = vor.u32 %v3318, 8388608
    %v3320 = vsub.s32 0, %v3319
    %v3321 = vadd.s32 %v3316, 1
    %vm3322 = vcmp.gt.s32.totalorder %v3321, 0
    %v3323 = vsel %vm3322, %v3321, 0
    %v3324 = vshrl.u32 %v3323, 5
    %v3325 = vand.u32 %v3323, 31
    %v3326 = vsub.s32 32, %v3325
    %v3327 = vshrl.u32 683565275, %v3326
    %v3328 = vshll.u32 683565275, %v3325
    %v3329 = vshrl.u32 2475754826, %v3326
    %v3330 = vor.u32 %v3328, %v3329
    %v3331 = vshll.u32 2475754826, %v3325
    %v3332 = vshrl.u32 2131351028, %v3326
    %v3333 = vor.u32 %v3331, %v3332
    %v3334 = vshll.u32 2131351028, %v3325
    %v3335 = vshrl.u32 2102212464, %v3326
    %v3336 = vor.u32 %v3334, %v3335
    %v3337 = vshll.u32 2102212464, %v3325
    %v3338 = vshrl.u32 920167782, %v3326
    %v3339 = vor.u32 %v3337, %v3338
    %v3340 = vshll.u32 920167782, %v3325
    %v3341 = vshrl.u32 1326507024, %v3326
    %v3342 = vor.u32 %v3340, %v3341
    %vm3343 = vcmp.lt.s32.totalorder %v3324, 1
    %vm3344 = vcmp.lt.s32.totalorder %v3324, 2
    %vm3345 = vcmp.lt.s32.totalorder %v3324, 3
    %vm3346 = vcmp.lt.s32.totalorder %v3324, 4
    %v3347 = vsel %vm3343, %v3327, %v3330
    %v3348 = vsel %vm3346, %v3336, 2102212464
    %v3349 = vsel %vm3345, %v3333, %v3348
    %v3350 = vsel %vm3344, %v3347, %v3349
    %v3351 = vsel %vm3343, %v3330, %v3333
    %v3352 = vsel %vm3346, %v3339, 920167782
    %v3353 = vsel %vm3345, %v3336, %v3352
    %v3354 = vsel %vm3344, %v3351, %v3353
    %v3355 = vsel %vm3343, %v3333, %v3336
    %v3356 = vsel %vm3346, %v3342, 1326507024
    %v3357 = vsel %vm3345, %v3339, %v3356
    %v3358 = vsel %vm3344, %v3355, %v3357
    %v3359 = vshll.u32 %v3319, 8
    %v3360 = vmul.u32.u64.compose %v3359, %v3358
    %v3361 = vextract.low.u32 %v3360
    %v3362 = vextract.high.u32 %v3360
    %v3363 = vmul.u32.u64.compose %v3359, %v3354
    %v3364 = vextract.low.u32 %v3363
    %v3365 = vextract.high.u32 %v3363
    %v3366 = vmul.u32 %v3359, %v3350
    %v3367 = vadd.s32 %v3362, %v3364
    %vm3368 = vc.u32 %v3362, %v3364
    %v3369 = vadd.s32 %v3365, 1
    %v3370 = vsel %vm3368, %v3369, %v3365
    %v3371 = vadd.s32 %v3366, %v3370
    %v3372 = vadd.s32 %v3371, 536870912
    %v3373 = vshrl.u32 %v3372, 30
    %v3374 = vshll.u32 %v3373, 30
    %v3375 = vsub.s32 %v3371, %v3374
    %vm3376 = vcmp.lt.s32.totalorder %v3375, 0
    %v3377 = vsub.s32 0, %v3375
    %v3378 = vsel %vm3376, %v3377, %v3375
    %v3379 = vclz %v3378
    %v3380 = vsub.s32 %v3379, 2
    %vm3381 = vcmp.gt.s32.totalorder 0, %v3380
    %v3382 = vsel %vm3381, 0, %v3380
    %v3383 = vsub.s32 32, %v3382
    %v3384 = vshll.u32 %v3375, %v3382
    %v3385 = vshrl.u32 %v3367, %v3383
    %v3386 = vor.u32 %v3384, %v3385
    %v3387 = vsub.s32 4294967266, %v3382
    %v3388 = vadd.s32 %v3387, 127
    %v3389 = vshll.u32 %v3388, 23
    %v3390 = vor.u32 4788187, %v3389
    %v3391 = vand.u32 2147483647, %v3390
    %v3393 = vcvt.s32.f32 %v3386
    %v3394 = vmul.f32 %v3393, %v3391
    %v3395 = vxor.u32 %v3394, 2147483648
    %v3396 = vsel %vm3313, %v3395, %v3394
    %v3397 = vsub.s32 4, %v3373
    %v3398 = vsel %vm3313, %v3397, %v3373
    %v3399 = vsel %vm3312, %v672, %v3396
    %v3400 = vsel %vm3312, 0, %v3398
    %v3401 = vcosq.f32.pop %v3399
    %v3402 = vsinq.f32.pop %v3399
    %vm3403 = vweird.f32 %v672
    %v3404 = vadd.s32 %v3400, 3
    %v3405 = vand.u32 %v3404, 3
    %vm3406 = vcmp.lt.s32.totalorder %v3405, 2
    %vm3407 = vcmp.eq.s32.totalorder %v3405, 0
    %v3408 = vxor.u32 %v3402, 2147483648
    %v3409 = vsel %vm3407, %v3401, %v3408
    %vm3410 = vcmp.eq.s32.totalorder %v3405, 2
    %v3411 = vxor.u32 %v3401, 2147483648
    %v3412 = vsel %vm3410, %v3411, %v3402
    %v3413 = vsel %vm3406, %v3409, %v3412
    %v3414 = vsel %vm3403, nan, %v3413
    %v3415 = vand.u32 2147483647, %v673
    %vm3416 = vcmp.le.f32.partialorder %v3415, 0.7853982
    %vm3417 = vcmp.lt.s32.totalorder %v673, 0
    %v3418 = vand.u32 %v673, 2139095040
    %v3419 = vshrl.u32 %v3418, 23
    %v3420 = vsub.s32 %v3419, 127
    %v3421 = vand.u32 2147483647, %v673
    %v3422 = vand.u32 %v3421, 8388607
    %v3423 = vor.u32 %v3422, 8388608
    %v3424 = vsub.s32 0, %v3423
    %v3425 = vadd.s32 %v3420, 1
    %vm3426 = vcmp.gt.s32.totalorder %v3425, 0
    %v3427 = vsel %vm3426, %v3425, 0
    %v3428 = vshrl.u32 %v3427, 5
    %v3429 = vand.u32 %v3427, 31
    %v3430 = vsub.s32 32, %v3429
    %v3431 = vshrl.u32 683565275, %v3430
    %v3432 = vshll.u32 683565275, %v3429
    %v3433 = vshrl.u32 2475754826, %v3430
    %v3434 = vor.u32 %v3432, %v3433
    %v3435 = vshll.u32 2475754826, %v3429
    %v3436 = vshrl.u32 2131351028, %v3430
    %v3437 = vor.u32 %v3435, %v3436
    %v3438 = vshll.u32 2131351028, %v3429
    %v3439 = vshrl.u32 2102212464, %v3430
    %v3440 = vor.u32 %v3438, %v3439
    %v3441 = vshll.u32 2102212464, %v3429
    %v3442 = vshrl.u32 920167782, %v3430
    %v3443 = vor.u32 %v3441, %v3442
    %v3444 = vshll.u32 920167782, %v3429
    %v3445 = vshrl.u32 1326507024, %v3430
    %v3446 = vor.u32 %v3444, %v3445
    %vm3447 = vcmp.lt.s32.totalorder %v3428, 1
    %vm3448 = vcmp.lt.s32.totalorder %v3428, 2
    %vm3449 = vcmp.lt.s32.totalorder %v3428, 3
    %vm3450 = vcmp.lt.s32.totalorder %v3428, 4
    %v3451 = vsel %vm3447, %v3431, %v3434
    %v3452 = vsel %vm3450, %v3440, 2102212464
    %v3453 = vsel %vm3449, %v3437, %v3452
    %v3454 = vsel %vm3448, %v3451, %v3453
    %v3455 = vsel %vm3447, %v3434, %v3437
    %v3456 = vsel %vm3450, %v3443, 920167782
    %v3457 = vsel %vm3449, %v3440, %v3456
    %v3458 = vsel %vm3448, %v3455, %v3457
    %v3459 = vsel %vm3447, %v3437, %v3440
    %v3460 = vsel %vm3450, %v3446, 1326507024
    %v3461 = vsel %vm3449, %v3443, %v3460
    %v3462 = vsel %vm3448, %v3459, %v3461
    %v3463 = vshll.u32 %v3423, 8
    %v3464 = vmul.u32.u64.compose %v3463, %v3462
    %v3465 = vextract.low.u32 %v3464
    %v3466 = vextract.high.u32 %v3464
    %v3467 = vmul.u32.u64.compose %v3463, %v3458
    %v3468 = vextract.low.u32 %v3467
    %v3469 = vextract.high.u32 %v3467
    %v3470 = vmul.u32 %v3463, %v3454
    %v3471 = vadd.s32 %v3466, %v3468
    %vm3472 = vc.u32 %v3466, %v3468
    %v3473 = vadd.s32 %v3469, 1
    %v3474 = vsel %vm3472, %v3473, %v3469
    %v3475 = vadd.s32 %v3470, %v3474
    %v3476 = vadd.s32 %v3475, 536870912
    %v3477 = vshrl.u32 %v3476, 30
    %v3478 = vshll.u32 %v3477, 30
    %v3479 = vsub.s32 %v3475, %v3478
    %vm3480 = vcmp.lt.s32.totalorder %v3479, 0
    %v3481 = vsub.s32 0, %v3479
    %v3482 = vsel %vm3480, %v3481, %v3479
    %v3483 = vclz %v3482
    %v3484 = vsub.s32 %v3483, 2
    %vm3485 = vcmp.gt.s32.totalorder 0, %v3484
    %v3486 = vsel %vm3485, 0, %v3484
    %v3487 = vsub.s32 32, %v3486
    %v3488 = vshll.u32 %v3479, %v3486
    %v3489 = vshrl.u32 %v3471, %v3487
    %v3490 = vor.u32 %v3488, %v3489
    %v3491 = vsub.s32 4294967266, %v3486
    %v3492 = vadd.s32 %v3491, 127
    %v3493 = vshll.u32 %v3492, 23
    %v3494 = vor.u32 4788187, %v3493
    %v3495 = vand.u32 2147483647, %v3494
    %v3497 = vcvt.s32.f32 %v3490
    %v3498 = vmul.f32 %v3497, %v3495
    %v3499 = vxor.u32 %v3498, 2147483648
    %v3500 = vsel %vm3417, %v3499, %v3498
    %v3501 = vsub.s32 4, %v3477
    %v3502 = vsel %vm3417, %v3501, %v3477
    %v3503 = vsel %vm3416, %v673, %v3500
    %v3504 = vsel %vm3416, 0, %v3502
    %v3505 = vcosq.f32.pop %v3503
    %v3506 = vsinq.f32.pop %v3503
    %vm3507 = vweird.f32 %v673
    %v3508 = vadd.s32 %v3504, 3
    %v3509 = vand.u32 %v3508, 3
    %vm3510 = vcmp.lt.s32.totalorder %v3509, 2
    %vm3511 = vcmp.eq.s32.totalorder %v3509, 0
    %v3512 = vxor.u32 %v3506, 2147483648
    %v3513 = vsel %vm3511, %v3505, %v3512
    %vm3514 = vcmp.eq.s32.totalorder %v3509, 2
    %v3515 = vxor.u32 %v3505, 2147483648
    %v3516 = vsel %vm3514, %v3515, %v3506
    %v3517 = vsel %vm3510, %v3513, %v3516
    %v3518 = vsel %vm3507, nan, %v3517
    %v3519 = vand.u32 2147483647, %v674
    %vm3520 = vcmp.le.f32.partialorder %v3519, 0.7853982
    %vm3521 = vcmp.lt.s32.totalorder %v674, 0
    %v3522 = vand.u32 %v674, 2139095040
    %v3523 = vshrl.u32 %v3522, 23
    %v3524 = vsub.s32 %v3523, 127
    %v3525 = vand.u32 2147483647, %v674
    %v3526 = vand.u32 %v3525, 8388607
    %v3527 = vor.u32 %v3526, 8388608
    %v3528 = vsub.s32 0, %v3527
    %v3529 = vadd.s32 %v3524, 1
    %vm3530 = vcmp.gt.s32.totalorder %v3529, 0
    %v3531 = vsel %vm3530, %v3529, 0
    %v3532 = vshrl.u32 %v3531, 5
    %v3533 = vand.u32 %v3531, 31
    %v3534 = vsub.s32 32, %v3533
    %v3535 = vshrl.u32 683565275, %v3534
    %v3536 = vshll.u32 683565275, %v3533
    %v3537 = vshrl.u32 2475754826, %v3534
    %v3538 = vor.u32 %v3536, %v3537
    %v3539 = vshll.u32 2475754826, %v3533
    %v3540 = vshrl.u32 2131351028, %v3534
    %v3541 = vor.u32 %v3539, %v3540
    %v3542 = vshll.u32 2131351028, %v3533
    %v3543 = vshrl.u32 2102212464, %v3534
    %v3544 = vor.u32 %v3542, %v3543
    %v3545 = vshll.u32 2102212464, %v3533
    %v3546 = vshrl.u32 920167782, %v3534
    %v3547 = vor.u32 %v3545, %v3546
    %v3548 = vshll.u32 920167782, %v3533
    %v3549 = vshrl.u32 1326507024, %v3534
    %v3550 = vor.u32 %v3548, %v3549
    %vm3551 = vcmp.lt.s32.totalorder %v3532, 1
    %vm3552 = vcmp.lt.s32.totalorder %v3532, 2
    %vm3553 = vcmp.lt.s32.totalorder %v3532, 3
    %vm3554 = vcmp.lt.s32.totalorder %v3532, 4
    %v3555 = vsel %vm3551, %v3535, %v3538
    %v3556 = vsel %vm3554, %v3544, 2102212464
    %v3557 = vsel %vm3553, %v3541, %v3556
    %v3558 = vsel %vm3552, %v3555, %v3557
    %v3559 = vsel %vm3551, %v3538, %v3541
    %v3560 = vsel %vm3554, %v3547, 920167782
    %v3561 = vsel %vm3553, %v3544, %v3560
    %v3562 = vsel %vm3552, %v3559, %v3561
    %v3563 = vsel %vm3551, %v3541, %v3544
    %v3564 = vsel %vm3554, %v3550, 1326507024
    %v3565 = vsel %vm3553, %v3547, %v3564
    %v3566 = vsel %vm3552, %v3563, %v3565
    %v3567 = vshll.u32 %v3527, 8
    %v3568 = vmul.u32.u64.compose %v3567, %v3566
    %v3569 = vextract.low.u32 %v3568
    %v3570 = vextract.high.u32 %v3568
    %v3571 = vmul.u32.u64.compose %v3567, %v3562
    %v3572 = vextract.low.u32 %v3571
    %v3573 = vextract.high.u32 %v3571
    %v3574 = vmul.u32 %v3567, %v3558
    %v3575 = vadd.s32 %v3570, %v3572
    %vm3576 = vc.u32 %v3570, %v3572
    %v3577 = vadd.s32 %v3573, 1
    %v3578 = vsel %vm3576, %v3577, %v3573
    %v3579 = vadd.s32 %v3574, %v3578
    %v3580 = vadd.s32 %v3579, 536870912
    %v3581 = vshrl.u32 %v3580, 30
    %v3582 = vshll.u32 %v3581, 30
    %v3583 = vsub.s32 %v3579, %v3582
    %vm3584 = vcmp.lt.s32.totalorder %v3583, 0
    %v3585 = vsub.s32 0, %v3583
    %v3586 = vsel %vm3584, %v3585, %v3583
    %v3587 = vclz %v3586
    %v3588 = vsub.s32 %v3587, 2
    %vm3589 = vcmp.gt.s32.totalorder 0, %v3588
    %v3590 = vsel %vm3589, 0, %v3588
    %v3591 = vsub.s32 32, %v3590
    %v3592 = vshll.u32 %v3583, %v3590
    %v3593 = vshrl.u32 %v3575, %v3591
    %v3594 = vor.u32 %v3592, %v3593
    %v3595 = vsub.s32 4294967266, %v3590
    %v3596 = vadd.s32 %v3595, 127
    %v3597 = vshll.u32 %v3596, 23
    %v3598 = vor.u32 4788187, %v3597
    %v3599 = vand.u32 2147483647, %v3598
    %v3601 = vcvt.s32.f32 %v3594
    %v3602 = vmul.f32 %v3601, %v3599
    %v3603 = vxor.u32 %v3602, 2147483648
    %v3604 = vsel %vm3521, %v3603, %v3602
    %v3605 = vsub.s32 4, %v3581
    %v3606 = vsel %vm3521, %v3605, %v3581
    %v3607 = vsel %vm3520, %v674, %v3604
    %v3608 = vsel %vm3520, 0, %v3606
    %v3609 = vcosq.f32.pop %v3607
    %v3610 = vsinq.f32.pop %v3607
    %vm3611 = vweird.f32 %v674
    %v3612 = vadd.s32 %v3608, 3
    %v3613 = vand.u32 %v3612, 3
    %vm3614 = vcmp.lt.s32.totalorder %v3613, 2
    %vm3615 = vcmp.eq.s32.totalorder %v3613, 0
    %v3616 = vxor.u32 %v3610, 2147483648
    %v3617 = vsel %vm3615, %v3609, %v3616
    %vm3618 = vcmp.eq.s32.totalorder %v3613, 2
    %v3619 = vxor.u32 %v3609, 2147483648
    %v3620 = vsel %vm3618, %v3619, %v3610
    %v3621 = vsel %vm3614, %v3617, %v3620
    %v3622 = vsel %vm3611, nan, %v3621
    %v3623 = vand.u32 2147483647, %v675
    %vm3624 = vcmp.le.f32.partialorder %v3623, 0.7853982
    %vm3625 = vcmp.lt.s32.totalorder %v675, 0
    %v3626 = vand.u32 %v675, 2139095040
    %v3627 = vshrl.u32 %v3626, 23
    %v3628 = vsub.s32 %v3627, 127
    %v3629 = vand.u32 2147483647, %v675
    %v3630 = vand.u32 %v3629, 8388607
    %v3631 = vor.u32 %v3630, 8388608
    %v3632 = vsub.s32 0, %v3631
    %v3633 = vadd.s32 %v3628, 1
    %vm3634 = vcmp.gt.s32.totalorder %v3633, 0
    %v3635 = vsel %vm3634, %v3633, 0
    %v3636 = vshrl.u32 %v3635, 5
    %v3637 = vand.u32 %v3635, 31
    %v3638 = vsub.s32 32, %v3637
    %v3639 = vshrl.u32 683565275, %v3638
    %v3640 = vshll.u32 683565275, %v3637
    %v3641 = vshrl.u32 2475754826, %v3638
    %v3642 = vor.u32 %v3640, %v3641
    %v3643 = vshll.u32 2475754826, %v3637
    %v3644 = vshrl.u32 2131351028, %v3638
    %v3645 = vor.u32 %v3643, %v3644
    %v3646 = vshll.u32 2131351028, %v3637
    %v3647 = vshrl.u32 2102212464, %v3638
    %v3648 = vor.u32 %v3646, %v3647
    %v3649 = vshll.u32 2102212464, %v3637
    %v3650 = vshrl.u32 920167782, %v3638
    %v3651 = vor.u32 %v3649, %v3650
    %v3652 = vshll.u32 920167782, %v3637
    %v3653 = vshrl.u32 1326507024, %v3638
    %v3654 = vor.u32 %v3652, %v3653
    %vm3655 = vcmp.lt.s32.totalorder %v3636, 1
    %vm3656 = vcmp.lt.s32.totalorder %v3636, 2
    %vm3657 = vcmp.lt.s32.totalorder %v3636, 3
    %vm3658 = vcmp.lt.s32.totalorder %v3636, 4
    %v3659 = vsel %vm3655, %v3639, %v3642
    %v3660 = vsel %vm3658, %v3648, 2102212464
    %v3661 = vsel %vm3657, %v3645, %v3660
    %v3662 = vsel %vm3656, %v3659, %v3661
    %v3663 = vsel %vm3655, %v3642, %v3645
    %v3664 = vsel %vm3658, %v3651, 920167782
    %v3665 = vsel %vm3657, %v3648, %v3664
    %v3666 = vsel %vm3656, %v3663, %v3665
    %v3667 = vsel %vm3655, %v3645, %v3648
    %v3668 = vsel %vm3658, %v3654, 1326507024
    %v3669 = vsel %vm3657, %v3651, %v3668
    %v3670 = vsel %vm3656, %v3667, %v3669
    %v3671 = vshll.u32 %v3631, 8
    %v3672 = vmul.u32.u64.compose %v3671, %v3670
    %v3673 = vextract.low.u32 %v3672
    %v3674 = vextract.high.u32 %v3672
    %v3675 = vmul.u32.u64.compose %v3671, %v3666
    %v3676 = vextract.low.u32 %v3675
    %v3677 = vextract.high.u32 %v3675
    %v3678 = vmul.u32 %v3671, %v3662
    %v3679 = vadd.s32 %v3674, %v3676
    %vm3680 = vc.u32 %v3674, %v3676
    %v3681 = vadd.s32 %v3677, 1
    %v3682 = vsel %vm3680, %v3681, %v3677
    %v3683 = vadd.s32 %v3678, %v3682
    %v3684 = vadd.s32 %v3683, 536870912
    %v3685 = vshrl.u32 %v3684, 30
    %v3686 = vshll.u32 %v3685, 30
    %v3687 = vsub.s32 %v3683, %v3686
    %vm3688 = vcmp.lt.s32.totalorder %v3687, 0
    %v3689 = vsub.s32 0, %v3687
    %v3690 = vsel %vm3688, %v3689, %v3687
    %v3691 = vclz %v3690
    %v3692 = vsub.s32 %v3691, 2
    %vm3693 = vcmp.gt.s32.totalorder 0, %v3692
    %v3694 = vsel %vm3693, 0, %v3692
    %v3695 = vsub.s32 32, %v3694
    %v3696 = vshll.u32 %v3687, %v3694
    %v3697 = vshrl.u32 %v3679, %v3695
    %v3698 = vor.u32 %v3696, %v3697
    %v3699 = vsub.s32 4294967266, %v3694
    %v3700 = vadd.s32 %v3699, 127
    %v3701 = vshll.u32 %v3700, 23
    %v3702 = vor.u32 4788187, %v3701
    %v3703 = vand.u32 2147483647, %v3702
    %v3705 = vcvt.s32.f32 %v3698
    %v3706 = vmul.f32 %v3705, %v3703
    %v3707 = vxor.u32 %v3706, 2147483648
    %v3708 = vsel %vm3625, %v3707, %v3706
    %v3709 = vsub.s32 4, %v3685
    %v3710 = vsel %vm3625, %v3709, %v3685
    %v3711 = vsel %vm3624, %v675, %v3708
    %v3712 = vsel %vm3624, 0, %v3710
    %v3713 = vcosq.f32.pop %v3711
    %v3714 = vsinq.f32.pop %v3711
    %vm3715 = vweird.f32 %v675
    %v3716 = vadd.s32 %v3712, 3
    %v3717 = vand.u32 %v3716, 3
    %vm3718 = vcmp.lt.s32.totalorder %v3717, 2
    %vm3719 = vcmp.eq.s32.totalorder %v3717, 0
    %v3720 = vxor.u32 %v3714, 2147483648
    %v3721 = vsel %vm3719, %v3713, %v3720
    %vm3722 = vcmp.eq.s32.totalorder %v3717, 2
    %v3723 = vxor.u32 %v3713, 2147483648
    %v3724 = vsel %vm3722, %v3723, %v3714
    %v3725 = vsel %vm3718, %v3721, %v3724
    %v3726 = vsel %vm3715, nan, %v3725
    %v3727 = vand.u32 2147483647, %v676
    %vm3728 = vcmp.le.f32.partialorder %v3727, 0.7853982
    %vm3729 = vcmp.lt.s32.totalorder %v676, 0
    %v3730 = vand.u32 %v676, 2139095040
    %v3731 = vshrl.u32 %v3730, 23
    %v3732 = vsub.s32 %v3731, 127
    %v3733 = vand.u32 2147483647, %v676
    %v3734 = vand.u32 %v3733, 8388607
    %v3735 = vor.u32 %v3734, 8388608
    %v3736 = vsub.s32 0, %v3735
    %v3737 = vadd.s32 %v3732, 1
    %vm3738 = vcmp.gt.s32.totalorder %v3737, 0
    %v3739 = vsel %vm3738, %v3737, 0
    %v3740 = vshrl.u32 %v3739, 5
    %v3741 = vand.u32 %v3739, 31
    %v3742 = vsub.s32 32, %v3741
    %v3743 = vshrl.u32 683565275, %v3742
    %v3744 = vshll.u32 683565275, %v3741
    %v3745 = vshrl.u32 2475754826, %v3742
    %v3746 = vor.u32 %v3744, %v3745
    %v3747 = vshll.u32 2475754826, %v3741
    %v3748 = vshrl.u32 2131351028, %v3742
    %v3749 = vor.u32 %v3747, %v3748
    %v3750 = vshll.u32 2131351028, %v3741
    %v3751 = vshrl.u32 2102212464, %v3742
    %v3752 = vor.u32 %v3750, %v3751
    %v3753 = vshll.u32 2102212464, %v3741
    %v3754 = vshrl.u32 920167782, %v3742
    %v3755 = vor.u32 %v3753, %v3754
    %v3756 = vshll.u32 920167782, %v3741
    %v3757 = vshrl.u32 1326507024, %v3742
    %v3758 = vor.u32 %v3756, %v3757
    %vm3759 = vcmp.lt.s32.totalorder %v3740, 1
    %vm3760 = vcmp.lt.s32.totalorder %v3740, 2
    %vm3761 = vcmp.lt.s32.totalorder %v3740, 3
    %vm3762 = vcmp.lt.s32.totalorder %v3740, 4
    %v3763 = vsel %vm3759, %v3743, %v3746
    %v3764 = vsel %vm3762, %v3752, 2102212464
    %v3765 = vsel %vm3761, %v3749, %v3764
    %v3766 = vsel %vm3760, %v3763, %v3765
    %v3767 = vsel %vm3759, %v3746, %v3749
    %v3768 = vsel %vm3762, %v3755, 920167782
    %v3769 = vsel %vm3761, %v3752, %v3768
    %v3770 = vsel %vm3760, %v3767, %v3769
    %v3771 = vsel %vm3759, %v3749, %v3752
    %v3772 = vsel %vm3762, %v3758, 1326507024
    %v3773 = vsel %vm3761, %v3755, %v3772
    %v3774 = vsel %vm3760, %v3771, %v3773
    %v3775 = vshll.u32 %v3735, 8
    %v3776 = vmul.u32.u64.compose %v3775, %v3774
    %v3777 = vextract.low.u32 %v3776
    %v3778 = vextract.high.u32 %v3776
    %v3779 = vmul.u32.u64.compose %v3775, %v3770
    %v3780 = vextract.low.u32 %v3779
    %v3781 = vextract.high.u32 %v3779
    %v3782 = vmul.u32 %v3775, %v3766
    %v3783 = vadd.s32 %v3778, %v3780
    %vm3784 = vc.u32 %v3778, %v3780
    %v3785 = vadd.s32 %v3781, 1
    %v3786 = vsel %vm3784, %v3785, %v3781
    %v3787 = vadd.s32 %v3782, %v3786
    %v3788 = vadd.s32 %v3787, 536870912
    %v3789 = vshrl.u32 %v3788, 30
    %v3790 = vshll.u32 %v3789, 30
    %v3791 = vsub.s32 %v3787, %v3790
    %vm3792 = vcmp.lt.s32.totalorder %v3791, 0
    %v3793 = vsub.s32 0, %v3791
    %v3794 = vsel %vm3792, %v3793, %v3791
    %v3795 = vclz %v3794
    %v3796 = vsub.s32 %v3795, 2
    %vm3797 = vcmp.gt.s32.totalorder 0, %v3796
    %v3798 = vsel %vm3797, 0, %v3796
    %v3799 = vsub.s32 32, %v3798
    %v3800 = vshll.u32 %v3791, %v3798
    %v3801 = vshrl.u32 %v3783, %v3799
    %v3802 = vor.u32 %v3800, %v3801
    %v3803 = vsub.s32 4294967266, %v3798
    %v3804 = vadd.s32 %v3803, 127
    %v3805 = vshll.u32 %v3804, 23
    %v3806 = vor.u32 4788187, %v3805
    %v3807 = vand.u32 2147483647, %v3806
    %v3809 = vcvt.s32.f32 %v3802
    %v3810 = vmul.f32 %v3809, %v3807
    %v3811 = vxor.u32 %v3810, 2147483648
    %v3812 = vsel %vm3729, %v3811, %v3810
    %v3813 = vsub.s32 4, %v3789
    %v3814 = vsel %vm3729, %v3813, %v3789
    %v3815 = vsel %vm3728, %v676, %v3812
    %v3816 = vsel %vm3728, 0, %v3814
    %v3817 = vcosq.f32.pop %v3815
    %v3818 = vsinq.f32.pop %v3815
    %vm3819 = vweird.f32 %v676
    %v3820 = vadd.s32 %v3816, 3
    %v3821 = vand.u32 %v3820, 3
    %vm3822 = vcmp.lt.s32.totalorder %v3821, 2
    %vm3823 = vcmp.eq.s32.totalorder %v3821, 0
    %v3824 = vxor.u32 %v3818, 2147483648
    %v3825 = vsel %vm3823, %v3817, %v3824
    %vm3826 = vcmp.eq.s32.totalorder %v3821, 2
    %v3827 = vxor.u32 %v3817, 2147483648
    %v3828 = vsel %vm3826, %v3827, %v3818
    %v3829 = vsel %vm3822, %v3825, %v3828
    %v3830 = vsel %vm3819, nan, %v3829
    %v3831 = vand.u32 2147483647, %v677
    %vm3832 = vcmp.le.f32.partialorder %v3831, 0.7853982
    %vm3833 = vcmp.lt.s32.totalorder %v677, 0
    %v3834 = vand.u32 %v677, 2139095040
    %v3835 = vshrl.u32 %v3834, 23
    %v3836 = vsub.s32 %v3835, 127
    %v3837 = vand.u32 2147483647, %v677
    %v3838 = vand.u32 %v3837, 8388607
    %v3839 = vor.u32 %v3838, 8388608
    %v3840 = vsub.s32 0, %v3839
    %v3841 = vadd.s32 %v3836, 1
    %vm3842 = vcmp.gt.s32.totalorder %v3841, 0
    %v3843 = vsel %vm3842, %v3841, 0
    %v3844 = vshrl.u32 %v3843, 5
    %v3845 = vand.u32 %v3843, 31
    %v3846 = vsub.s32 32, %v3845
    %v3847 = vshrl.u32 683565275, %v3846
    %v3848 = vshll.u32 683565275, %v3845
    %v3849 = vshrl.u32 2475754826, %v3846
    %v3850 = vor.u32 %v3848, %v3849
    %v3851 = vshll.u32 2475754826, %v3845
    %v3852 = vshrl.u32 2131351028, %v3846
    %v3853 = vor.u32 %v3851, %v3852
    %v3854 = vshll.u32 2131351028, %v3845
    %v3855 = vshrl.u32 2102212464, %v3846
    %v3856 = vor.u32 %v3854, %v3855
    %v3857 = vshll.u32 2102212464, %v3845
    %v3858 = vshrl.u32 920167782, %v3846
    %v3859 = vor.u32 %v3857, %v3858
    %v3860 = vshll.u32 920167782, %v3845
    %v3861 = vshrl.u32 1326507024, %v3846
    %v3862 = vor.u32 %v3860, %v3861
    %vm3863 = vcmp.lt.s32.totalorder %v3844, 1
    %vm3864 = vcmp.lt.s32.totalorder %v3844, 2
    %vm3865 = vcmp.lt.s32.totalorder %v3844, 3
    %vm3866 = vcmp.lt.s32.totalorder %v3844, 4
    %v3867 = vsel %vm3863, %v3847, %v3850
    %v3868 = vsel %vm3866, %v3856, 2102212464
    %v3869 = vsel %vm3865, %v3853, %v3868
    %v3870 = vsel %vm3864, %v3867, %v3869
    %v3871 = vsel %vm3863, %v3850, %v3853
    %v3872 = vsel %vm3866, %v3859, 920167782
    %v3873 = vsel %vm3865, %v3856, %v3872
    %v3874 = vsel %vm3864, %v3871, %v3873
    %v3875 = vsel %vm3863, %v3853, %v3856
    %v3876 = vsel %vm3866, %v3862, 1326507024
    %v3877 = vsel %vm3865, %v3859, %v3876
    %v3878 = vsel %vm3864, %v3875, %v3877
    %v3879 = vshll.u32 %v3839, 8
    %v3880 = vmul.u32.u64.compose %v3879, %v3878
    %v3881 = vextract.low.u32 %v3880
    %v3882 = vextract.high.u32 %v3880
    %v3883 = vmul.u32.u64.compose %v3879, %v3874
    %v3884 = vextract.low.u32 %v3883
    %v3885 = vextract.high.u32 %v3883
    %v3886 = vmul.u32 %v3879, %v3870
    %v3887 = vadd.s32 %v3882, %v3884
    %vm3888 = vc.u32 %v3882, %v3884
    %v3889 = vadd.s32 %v3885, 1
    %v3890 = vsel %vm3888, %v3889, %v3885
    %v3891 = vadd.s32 %v3886, %v3890
    %v3892 = vadd.s32 %v3891, 536870912
    %v3893 = vshrl.u32 %v3892, 30
    %v3894 = vshll.u32 %v3893, 30
    %v3895 = vsub.s32 %v3891, %v3894
    %vm3896 = vcmp.lt.s32.totalorder %v3895, 0
    %v3897 = vsub.s32 0, %v3895
    %v3898 = vsel %vm3896, %v3897, %v3895
    %v3899 = vclz %v3898
    %v3900 = vsub.s32 %v3899, 2
    %vm3901 = vcmp.gt.s32.totalorder 0, %v3900
    %v3902 = vsel %vm3901, 0, %v3900
    %v3903 = vsub.s32 32, %v3902
    %v3904 = vshll.u32 %v3895, %v3902
    %v3905 = vshrl.u32 %v3887, %v3903
    %v3906 = vor.u32 %v3904, %v3905
    %v3907 = vsub.s32 4294967266, %v3902
    %v3908 = vadd.s32 %v3907, 127
    %v3909 = vshll.u32 %v3908, 23
    %v3910 = vor.u32 4788187, %v3909
    %v3911 = vand.u32 2147483647, %v3910
    %v3913 = vcvt.s32.f32 %v3906
    %v3914 = vmul.f32 %v3913, %v3911
    %v3915 = vxor.u32 %v3914, 2147483648
    %v3916 = vsel %vm3833, %v3915, %v3914
    %v3917 = vsub.s32 4, %v3893
    %v3918 = vsel %vm3833, %v3917, %v3893
    %v3919 = vsel %vm3832, %v677, %v3916
    %v3920 = vsel %vm3832, 0, %v3918
    %v3921 = vcosq.f32.pop %v3919
    %v3922 = vsinq.f32.pop %v3919
    %vm3923 = vweird.f32 %v677
    %v3924 = vadd.s32 %v3920, 3
    %v3925 = vand.u32 %v3924, 3
    %vm3926 = vcmp.lt.s32.totalorder %v3925, 2
    %vm3927 = vcmp.eq.s32.totalorder %v3925, 0
    %v3928 = vxor.u32 %v3922, 2147483648
    %v3929 = vsel %vm3927, %v3921, %v3928
    %vm3930 = vcmp.eq.s32.totalorder %v3925, 2
    %v3931 = vxor.u32 %v3921, 2147483648
    %v3932 = vsel %vm3930, %v3931, %v3922
    %v3933 = vsel %vm3926, %v3929, %v3932
    %v3934 = vsel %vm3923, nan, %v3933
    %v3935 = vand.u32 2147483647, %v678
    %vm3936 = vcmp.le.f32.partialorder %v3935, 0.7853982
    %vm3937 = vcmp.lt.s32.totalorder %v678, 0
    %v3938 = vand.u32 %v678, 2139095040
    %v3939 = vshrl.u32 %v3938, 23
    %v3940 = vsub.s32 %v3939, 127
    %v3941 = vand.u32 2147483647, %v678
    %v3942 = vand.u32 %v3941, 8388607
    %v3943 = vor.u32 %v3942, 8388608
    %v3944 = vsub.s32 0, %v3943
    %v3945 = vadd.s32 %v3940, 1
    %vm3946 = vcmp.gt.s32.totalorder %v3945, 0
    %v3947 = vsel %vm3946, %v3945, 0
    %v3948 = vshrl.u32 %v3947, 5
    %v3949 = vand.u32 %v3947, 31
    %v3950 = vsub.s32 32, %v3949
    %v3951 = vshrl.u32 683565275, %v3950
    %v3952 = vshll.u32 683565275, %v3949
    %v3953 = vshrl.u32 2475754826, %v3950
    %v3954 = vor.u32 %v3952, %v3953
    %v3955 = vshll.u32 2475754826, %v3949
    %v3956 = vshrl.u32 2131351028, %v3950
    %v3957 = vor.u32 %v3955, %v3956
    %v3958 = vshll.u32 2131351028, %v3949
    %v3959 = vshrl.u32 2102212464, %v3950
    %v3960 = vor.u32 %v3958, %v3959
    %v3961 = vshll.u32 2102212464, %v3949
    %v3962 = vshrl.u32 920167782, %v3950
    %v3963 = vor.u32 %v3961, %v3962
    %v3964 = vshll.u32 920167782, %v3949
    %v3965 = vshrl.u32 1326507024, %v3950
    %v3966 = vor.u32 %v3964, %v3965
    %vm3967 = vcmp.lt.s32.totalorder %v3948, 1
    %vm3968 = vcmp.lt.s32.totalorder %v3948, 2
    %vm3969 = vcmp.lt.s32.totalorder %v3948, 3
    %vm3970 = vcmp.lt.s32.totalorder %v3948, 4
    %v3971 = vsel %vm3967, %v3951, %v3954
    %v3972 = vsel %vm3970, %v3960, 2102212464
    %v3973 = vsel %vm3969, %v3957, %v3972
    %v3974 = vsel %vm3968, %v3971, %v3973
    %v3975 = vsel %vm3967, %v3954, %v3957
    %v3976 = vsel %vm3970, %v3963, 920167782
    %v3977 = vsel %vm3969, %v3960, %v3976
    %v3978 = vsel %vm3968, %v3975, %v3977
    %v3979 = vsel %vm3967, %v3957, %v3960
    %v3980 = vsel %vm3970, %v3966, 1326507024
    %v3981 = vsel %vm3969, %v3963, %v3980
    %v3982 = vsel %vm3968, %v3979, %v3981
    %v3983 = vshll.u32 %v3943, 8
    %v3984 = vmul.u32.u64.compose %v3983, %v3982
    %v3985 = vextract.low.u32 %v3984
    %v3986 = vextract.high.u32 %v3984
    %v3987 = vmul.u32.u64.compose %v3983, %v3978
    %v3988 = vextract.low.u32 %v3987
    %v3989 = vextract.high.u32 %v3987
    %v3990 = vmul.u32 %v3983, %v3974
    %v3991 = vadd.s32 %v3986, %v3988
    %vm3992 = vc.u32 %v3986, %v3988
    %v3993 = vadd.s32 %v3989, 1
    %v3994 = vsel %vm3992, %v3993, %v3989
    %v3995 = vadd.s32 %v3990, %v3994
    %v3996 = vadd.s32 %v3995, 536870912
    %v3997 = vshrl.u32 %v3996, 30
    %v3998 = vshll.u32 %v3997, 30
    %v3999 = vsub.s32 %v3995, %v3998
    %vm4000 = vcmp.lt.s32.totalorder %v3999, 0
    %v4001 = vsub.s32 0, %v3999
    %v4002 = vsel %vm4000, %v4001, %v3999
    %v4003 = vclz %v4002
    %v4004 = vsub.s32 %v4003, 2
    %vm4005 = vcmp.gt.s32.totalorder 0, %v4004
    %v4006 = vsel %vm4005, 0, %v4004
    %v4007 = vsub.s32 32, %v4006
    %v4008 = vshll.u32 %v3999, %v4006
    %v4009 = vshrl.u32 %v3991, %v4007
    %v4010 = vor.u32 %v4008, %v4009
    %v4011 = vsub.s32 4294967266, %v4006
    %v4012 = vadd.s32 %v4011, 127
    %v4013 = vshll.u32 %v4012, 23
    %v4014 = vor.u32 4788187, %v4013
    %v4015 = vand.u32 2147483647, %v4014
    %v4017 = vcvt.s32.f32 %v4010
    %v4018 = vmul.f32 %v4017, %v4015
    %v4019 = vxor.u32 %v4018, 2147483648
    %v4020 = vsel %vm3937, %v4019, %v4018
    %v4021 = vsub.s32 4, %v3997
    %v4022 = vsel %vm3937, %v4021, %v3997
    %v4023 = vsel %vm3936, %v678, %v4020
    %v4024 = vsel %vm3936, 0, %v4022
    %v4025 = vcosq.f32.pop %v4023
    %v4026 = vsinq.f32.pop %v4023
    %vm4027 = vweird.f32 %v678
    %v4028 = vadd.s32 %v4024, 3
    %v4029 = vand.u32 %v4028, 3
    %vm4030 = vcmp.lt.s32.totalorder %v4029, 2
    %vm4031 = vcmp.eq.s32.totalorder %v4029, 0
    %v4032 = vxor.u32 %v4026, 2147483648
    %v4033 = vsel %vm4031, %v4025, %v4032
    %vm4034 = vcmp.eq.s32.totalorder %v4029, 2
    %v4035 = vxor.u32 %v4025, 2147483648
    %v4036 = vsel %vm4034, %v4035, %v4026
    %v4037 = vsel %vm4030, %v4033, %v4036
    %v4038 = vsel %vm4027, nan, %v4037
    %v4039 = vpack.c.bf16 %v1646, %v814
    %v4040 = vpack.c.bf16 %v1750, %v918
    %v4041 = vpack.c.bf16 %v1854, %v1022
    %v4042 = vpack.c.bf16 %v1958, %v1126
    %v4043 = vpack.c.bf16 %v2062, %v1230
    %v4044 = vpack.c.bf16 %v2166, %v1334
    %v4045 = vpack.c.bf16 %v2270, %v1438
    %v4046 = vpack.c.bf16 %v2374, %v1542
    %v4047 = vpack.c.bf16 %v3310, %v2478
    %v4048 = vpack.c.bf16 %v3414, %v2582
    %v4049 = vpack.c.bf16 %v3518, %v2686
    %v4050 = vpack.c.bf16 %v3622, %v2790
    %v4051 = vpack.c.bf16 %v3726, %v2894
    %v4052 = vpack.c.bf16 %v3830, %v2998
    %v4053 = vpack.c.bf16 %v3934, %v3102
    %v4054 = vpack.c.bf16 %v4038, %v3206
    %4055 = vst [vmem:[#allocation2] sm:$0xff] %v4039
    %4056 = vst [vmem:[#allocation2 + $0x8] sm:$0xff] %v4040
    %4057 = vst [vmem:[#allocation2 + $0x10] sm:$0xff] %v4041
    %4058 = vst [vmem:[#allocation2 + $0x18] sm:$0xff] %v4042
    %4059 = vst [vmem:[#allocation2 + $0x20] sm:$0xff] %v4043
    %4060 = vst [vmem:[#allocation2 + $0x28] sm:$0xff] %v4044
    %4061 = vst [vmem:[#allocation2 + $0x30] sm:$0xff] %v4045
    %4062 = vst [vmem:[#allocation2 + $0x38] sm:$0xff] %v4046
    %4063 = vst [vmem:[#allocation2 + $0x40] sm:$0xff] %v4047
    %4064 = vst [vmem:[#allocation2 + $0x48] sm:$0xff] %v4048
    %4065 = vst [vmem:[#allocation2 + $0x50] sm:$0xff] %v4049
    %4066 = vst [vmem:[#allocation2 + $0x58] sm:$0xff] %v4050
    %4067 = vst [vmem:[#allocation2 + $0x60] sm:$0xff] %v4051
    %4068 = vst [vmem:[#allocation2 + $0x68] sm:$0xff] %v4052
    %4069 = vst [vmem:[#allocation2 + $0x70] sm:$0xff] %v4053
    %4070 = vst [vmem:[#allocation2 + $0x78] sm:$0xff] %v4054
    %v4071 = vand.u32 2147483647, %v647
    %vm4072 = vcmp.le.f32.partialorder %v4071, 0.7853982
    %vm4073 = vcmp.lt.s32.totalorder %v647, 0
    %v4074 = vand.u32 %v647, 2139095040
    %v4075 = vshrl.u32 %v4074, 23
    %v4076 = vsub.s32 %v4075, 127
    %v4077 = vand.u32 2147483647, %v647
    %v4078 = vand.u32 %v4077, 8388607
    %v4079 = vor.u32 %v4078, 8388608
    %v4080 = vsub.s32 0, %v4079
    %v4081 = vadd.s32 %v4076, 1
    %vm4082 = vcmp.gt.s32.totalorder %v4081, 0
    %v4083 = vsel %vm4082, %v4081, 0
    %v4084 = vshrl.u32 %v4083, 5
    %v4085 = vand.u32 %v4083, 31
    %v4086 = vsub.s32 32, %v4085
    %v4087 = vshrl.u32 683565275, %v4086
    %v4088 = vshll.u32 683565275, %v4085
    %v4089 = vshrl.u32 2475754826, %v4086
    %v4090 = vor.u32 %v4088, %v4089
    %v4091 = vshll.u32 2475754826, %v4085
    %v4092 = vshrl.u32 2131351028, %v4086
    %v4093 = vor.u32 %v4091, %v4092
    %v4094 = vshll.u32 2131351028, %v4085
    %v4095 = vshrl.u32 2102212464, %v4086
    %v4096 = vor.u32 %v4094, %v4095
    %v4097 = vshll.u32 2102212464, %v4085
    %v4098 = vshrl.u32 920167782, %v4086
    %v4099 = vor.u32 %v4097, %v4098
    %v4100 = vshll.u32 920167782, %v4085
    %v4101 = vshrl.u32 1326507024, %v4086
    %v4102 = vor.u32 %v4100, %v4101
    %vm4103 = vcmp.lt.s32.totalorder %v4084, 1
    %vm4104 = vcmp.lt.s32.totalorder %v4084, 2
    %vm4105 = vcmp.lt.s32.totalorder %v4084, 3
    %vm4106 = vcmp.lt.s32.totalorder %v4084, 4
    %v4107 = vsel %vm4103, %v4087, %v4090
    %v4108 = vsel %vm4106, %v4096, 2102212464
    %v4109 = vsel %vm4105, %v4093, %v4108
    %v4110 = vsel %vm4104, %v4107, %v4109
    %v4111 = vsel %vm4103, %v4090, %v4093
    %v4112 = vsel %vm4106, %v4099, 920167782
    %v4113 = vsel %vm4105, %v4096, %v4112
    %v4114 = vsel %vm4104, %v4111, %v4113
    %v4115 = vsel %vm4103, %v4093, %v4096
    %v4116 = vsel %vm4106, %v4102, 1326507024
    %v4117 = vsel %vm4105, %v4099, %v4116
    %v4118 = vsel %vm4104, %v4115, %v4117
    %v4119 = vshll.u32 %v4079, 8
    %v4120 = vmul.u32.u64.compose %v4119, %v4118
    %v4121 = vextract.low.u32 %v4120
    %v4122 = vextract.high.u32 %v4120
    %v4123 = vmul.u32.u64.compose %v4119, %v4114
    %v4124 = vextract.low.u32 %v4123
    %v4125 = vextract.high.u32 %v4123
    %v4126 = vmul.u32 %v4119, %v4110
    %v4127 = vadd.s32 %v4122, %v4124
    %vm4128 = vc.u32 %v4122, %v4124
    %v4129 = vadd.s32 %v4125, 1
    %v4130 = vsel %vm4128, %v4129, %v4125
    %v4131 = vadd.s32 %v4126, %v4130
    %v4132 = vadd.s32 %v4131, 536870912
    %v4133 = vshrl.u32 %v4132, 30
    %v4134 = vshll.u32 %v4133, 30
    %v4135 = vsub.s32 %v4131, %v4134
    %vm4136 = vcmp.lt.s32.totalorder %v4135, 0
    %v4137 = vsub.s32 0, %v4135
    %v4138 = vsel %vm4136, %v4137, %v4135
    %v4139 = vclz %v4138
    %v4140 = vsub.s32 %v4139, 2
    %vm4141 = vcmp.gt.s32.totalorder 0, %v4140
    %v4142 = vsel %vm4141, 0, %v4140
    %v4143 = vsub.s32 32, %v4142
    %v4144 = vshll.u32 %v4135, %v4142
    %v4145 = vshrl.u32 %v4127, %v4143
    %v4146 = vor.u32 %v4144, %v4145
    %v4147 = vsub.s32 4294967266, %v4142
    %v4148 = vadd.s32 %v4147, 127
    %v4149 = vshll.u32 %v4148, 23
    %v4150 = vor.u32 4788187, %v4149
    %v4151 = vand.u32 2147483647, %v4150
    %v4153 = vcvt.s32.f32 %v4146
    %v4154 = vmul.f32 %v4153, %v4151
    %v4155 = vxor.u32 %v4154, 2147483648
    %v4156 = vsel %vm4073, %v4155, %v4154
    %v4157 = vsub.s32 4, %v4133
    %v4158 = vsel %vm4073, %v4157, %v4133
    %v4159 = vsel %vm4072, %v647, %v4156
    %v4160 = vsel %vm4072, 0, %v4158
    %v4161 = vcosq.f32.pop %v4159
    %v4162 = vsinq.f32.pop %v4159
    %vm4163 = vweird.f32 %v647
    %v4164 = vand.u32 %v4160, 3
    %vm4165 = vcmp.lt.s32.totalorder %v4164, 2
    %vm4166 = vcmp.eq.s32.totalorder %v4164, 0
    %v4167 = vxor.u32 %v4162, 2147483648
    %v4168 = vsel %vm4166, %v4161, %v4167
    %vm4169 = vcmp.eq.s32.totalorder %v4164, 2
    %v4170 = vxor.u32 %v4161, 2147483648
    %v4171 = vsel %vm4169, %v4170, %v4162
    %v4172 = vsel %vm4165, %v4168, %v4171
    %v4173 = vsel %vm4163, nan, %v4172
    %v4174 = vand.u32 2147483647, %v648
    %vm4175 = vcmp.le.f32.partialorder %v4174, 0.7853982
    %vm4176 = vcmp.lt.s32.totalorder %v648, 0
    %v4177 = vand.u32 %v648, 2139095040
    %v4178 = vshrl.u32 %v4177, 23
    %v4179 = vsub.s32 %v4178, 127
    %v4180 = vand.u32 2147483647, %v648
    %v4181 = vand.u32 %v4180, 8388607
    %v4182 = vor.u32 %v4181, 8388608
    %v4183 = vsub.s32 0, %v4182
    %v4184 = vadd.s32 %v4179, 1
    %vm4185 = vcmp.gt.s32.totalorder %v4184, 0
    %v4186 = vsel %vm4185, %v4184, 0
    %v4187 = vshrl.u32 %v4186, 5
    %v4188 = vand.u32 %v4186, 31
    %v4189 = vsub.s32 32, %v4188
    %v4190 = vshrl.u32 683565275, %v4189
    %v4191 = vshll.u32 683565275, %v4188
    %v4192 = vshrl.u32 2475754826, %v4189
    %v4193 = vor.u32 %v4191, %v4192
    %v4194 = vshll.u32 2475754826, %v4188
    %v4195 = vshrl.u32 2131351028, %v4189
    %v4196 = vor.u32 %v4194, %v4195
    %v4197 = vshll.u32 2131351028, %v4188
    %v4198 = vshrl.u32 2102212464, %v4189
    %v4199 = vor.u32 %v4197, %v4198
    %v4200 = vshll.u32 2102212464, %v4188
    %v4201 = vshrl.u32 920167782, %v4189
    %v4202 = vor.u32 %v4200, %v4201
    %v4203 = vshll.u32 920167782, %v4188
    %v4204 = vshrl.u32 1326507024, %v4189
    %v4205 = vor.u32 %v4203, %v4204
    %vm4206 = vcmp.lt.s32.totalorder %v4187, 1
    %vm4207 = vcmp.lt.s32.totalorder %v4187, 2
    %vm4208 = vcmp.lt.s32.totalorder %v4187, 3
    %vm4209 = vcmp.lt.s32.totalorder %v4187, 4
    %v4210 = vsel %vm4206, %v4190, %v4193
    %v4211 = vsel %vm4209, %v4199, 2102212464
    %v4212 = vsel %vm4208, %v4196, %v4211
    %v4213 = vsel %vm4207, %v4210, %v4212
    %v4214 = vsel %vm4206, %v4193, %v4196
    %v4215 = vsel %vm4209, %v4202, 920167782
    %v4216 = vsel %vm4208, %v4199, %v4215
    %v4217 = vsel %vm4207, %v4214, %v4216
    %v4218 = vsel %vm4206, %v4196, %v4199
    %v4219 = vsel %vm4209, %v4205, 1326507024
    %v4220 = vsel %vm4208, %v4202, %v4219
    %v4221 = vsel %vm4207, %v4218, %v4220
    %v4222 = vshll.u32 %v4182, 8
    %v4223 = vmul.u32.u64.compose %v4222, %v4221
    %v4224 = vextract.low.u32 %v4223
    %v4225 = vextract.high.u32 %v4223
    %v4226 = vmul.u32.u64.compose %v4222, %v4217
    %v4227 = vextract.low.u32 %v4226
    %v4228 = vextract.high.u32 %v4226
    %v4229 = vmul.u32 %v4222, %v4213
    %v4230 = vadd.s32 %v4225, %v4227
    %vm4231 = vc.u32 %v4225, %v4227
    %v4232 = vadd.s32 %v4228, 1
    %v4233 = vsel %vm4231, %v4232, %v4228
    %v4234 = vadd.s32 %v4229, %v4233
    %v4235 = vadd.s32 %v4234, 536870912
    %v4236 = vshrl.u32 %v4235, 30
    %v4237 = vshll.u32 %v4236, 30
    %v4238 = vsub.s32 %v4234, %v4237
    %vm4239 = vcmp.lt.s32.totalorder %v4238, 0
    %v4240 = vsub.s32 0, %v4238
    %v4241 = vsel %vm4239, %v4240, %v4238
    %v4242 = vclz %v4241
    %v4243 = vsub.s32 %v4242, 2
    %vm4244 = vcmp.gt.s32.totalorder 0, %v4243
    %v4245 = vsel %vm4244, 0, %v4243
    %v4246 = vsub.s32 32, %v4245
    %v4247 = vshll.u32 %v4238, %v4245
    %v4248 = vshrl.u32 %v4230, %v4246
    %v4249 = vor.u32 %v4247, %v4248
    %v4250 = vsub.s32 4294967266, %v4245
    %v4251 = vadd.s32 %v4250, 127
    %v4252 = vshll.u32 %v4251, 23
    %v4253 = vor.u32 4788187, %v4252
    %v4254 = vand.u32 2147483647, %v4253
    %v4256 = vcvt.s32.f32 %v4249
    %v4257 = vmul.f32 %v4256, %v4254
    %v4258 = vxor.u32 %v4257, 2147483648
    %v4259 = vsel %vm4176, %v4258, %v4257
    %v4260 = vsub.s32 4, %v4236
    %v4261 = vsel %vm4176, %v4260, %v4236
    %v4262 = vsel %vm4175, %v648, %v4259
    %v4263 = vsel %vm4175, 0, %v4261
    %v4264 = vcosq.f32.pop %v4262
    %v4265 = vsinq.f32.pop %v4262
    %vm4266 = vweird.f32 %v648
    %v4267 = vand.u32 %v4263, 3
    %vm4268 = vcmp.lt.s32.totalorder %v4267, 2
    %vm4269 = vcmp.eq.s32.totalorder %v4267, 0
    %v4270 = vxor.u32 %v4265, 2147483648
    %v4271 = vsel %vm4269, %v4264, %v4270
    %vm4272 = vcmp.eq.s32.totalorder %v4267, 2
    %v4273 = vxor.u32 %v4264, 2147483648
    %v4274 = vsel %vm4272, %v4273, %v4265
    %v4275 = vsel %vm4268, %v4271, %v4274
    %v4276 = vsel %vm4266, nan, %v4275
    %v4277 = vand.u32 2147483647, %v649
    %vm4278 = vcmp.le.f32.partialorder %v4277, 0.7853982
    %vm4279 = vcmp.lt.s32.totalorder %v649, 0
    %v4280 = vand.u32 %v649, 2139095040
    %v4281 = vshrl.u32 %v4280, 23
    %v4282 = vsub.s32 %v4281, 127
    %v4283 = vand.u32 2147483647, %v649
    %v4284 = vand.u32 %v4283, 8388607
    %v4285 = vor.u32 %v4284, 8388608
    %v4286 = vsub.s32 0, %v4285
    %v4287 = vadd.s32 %v4282, 1
    %vm4288 = vcmp.gt.s32.totalorder %v4287, 0
    %v4289 = vsel %vm4288, %v4287, 0
    %v4290 = vshrl.u32 %v4289, 5
    %v4291 = vand.u32 %v4289, 31
    %v4292 = vsub.s32 32, %v4291
    %v4293 = vshrl.u32 683565275, %v4292
    %v4294 = vshll.u32 683565275, %v4291
    %v4295 = vshrl.u32 2475754826, %v4292
    %v4296 = vor.u32 %v4294, %v4295
    %v4297 = vshll.u32 2475754826, %v4291
    %v4298 = vshrl.u32 2131351028, %v4292
    %v4299 = vor.u32 %v4297, %v4298
    %v4300 = vshll.u32 2131351028, %v4291
    %v4301 = vshrl.u32 2102212464, %v4292
    %v4302 = vor.u32 %v4300, %v4301
    %v4303 = vshll.u32 2102212464, %v4291
    %v4304 = vshrl.u32 920167782, %v4292
    %v4305 = vor.u32 %v4303, %v4304
    %v4306 = vshll.u32 920167782, %v4291
    %v4307 = vshrl.u32 1326507024, %v4292
    %v4308 = vor.u32 %v4306, %v4307
    %vm4309 = vcmp.lt.s32.totalorder %v4290, 1
    %vm4310 = vcmp.lt.s32.totalorder %v4290, 2
    %vm4311 = vcmp.lt.s32.totalorder %v4290, 3
    %vm4312 = vcmp.lt.s32.totalorder %v4290, 4
    %v4313 = vsel %vm4309, %v4293, %v4296
    %v4314 = vsel %vm4312, %v4302, 2102212464
    %v4315 = vsel %vm4311, %v4299, %v4314
    %v4316 = vsel %vm4310, %v4313, %v4315
    %v4317 = vsel %vm4309, %v4296, %v4299
    %v4318 = vsel %vm4312, %v4305, 920167782
    %v4319 = vsel %vm4311, %v4302, %v4318
    %v4320 = vsel %vm4310, %v4317, %v4319
    %v4321 = vsel %vm4309, %v4299, %v4302
    %v4322 = vsel %vm4312, %v4308, 1326507024
    %v4323 = vsel %vm4311, %v4305, %v4322
    %v4324 = vsel %vm4310, %v4321, %v4323
    %v4325 = vshll.u32 %v4285, 8
    %v4326 = vmul.u32.u64.compose %v4325, %v4324
    %v4327 = vextract.low.u32 %v4326
    %v4328 = vextract.high.u32 %v4326
    %v4329 = vmul.u32.u64.compose %v4325, %v4320
    %v4330 = vextract.low.u32 %v4329
    %v4331 = vextract.high.u32 %v4329
    %v4332 = vmul.u32 %v4325, %v4316
    %v4333 = vadd.s32 %v4328, %v4330
    %vm4334 = vc.u32 %v4328, %v4330
    %v4335 = vadd.s32 %v4331, 1
    %v4336 = vsel %vm4334, %v4335, %v4331
    %v4337 = vadd.s32 %v4332, %v4336
    %v4338 = vadd.s32 %v4337, 536870912
    %v4339 = vshrl.u32 %v4338, 30
    %v4340 = vshll.u32 %v4339, 30
    %v4341 = vsub.s32 %v4337, %v4340
    %vm4342 = vcmp.lt.s32.totalorder %v4341, 0
    %v4343 = vsub.s32 0, %v4341
    %v4344 = vsel %vm4342, %v4343, %v4341
    %v4345 = vclz %v4344
    %v4346 = vsub.s32 %v4345, 2
    %vm4347 = vcmp.gt.s32.totalorder 0, %v4346
    %v4348 = vsel %vm4347, 0, %v4346
    %v4349 = vsub.s32 32, %v4348
    %v4350 = vshll.u32 %v4341, %v4348
    %v4351 = vshrl.u32 %v4333, %v4349
    %v4352 = vor.u32 %v4350, %v4351
    %v4353 = vsub.s32 4294967266, %v4348
    %v4354 = vadd.s32 %v4353, 127
    %v4355 = vshll.u32 %v4354, 23
    %v4356 = vor.u32 4788187, %v4355
    %v4357 = vand.u32 2147483647, %v4356
    %v4359 = vcvt.s32.f32 %v4352
    %v4360 = vmul.f32 %v4359, %v4357
    %v4361 = vxor.u32 %v4360, 2147483648
    %v4362 = vsel %vm4279, %v4361, %v4360
    %v4363 = vsub.s32 4, %v4339
    %v4364 = vsel %vm4279, %v4363, %v4339
    %v4365 = vsel %vm4278, %v649, %v4362
    %v4366 = vsel %vm4278, 0, %v4364
    %v4367 = vcosq.f32.pop %v4365
    %v4368 = vsinq.f32.pop %v4365
    %vm4369 = vweird.f32 %v649
    %v4370 = vand.u32 %v4366, 3
    %vm4371 = vcmp.lt.s32.totalorder %v4370, 2
    %vm4372 = vcmp.eq.s32.totalorder %v4370, 0
    %v4373 = vxor.u32 %v4368, 2147483648
    %v4374 = vsel %vm4372, %v4367, %v4373
    %vm4375 = vcmp.eq.s32.totalorder %v4370, 2
    %v4376 = vxor.u32 %v4367, 2147483648
    %v4377 = vsel %vm4375, %v4376, %v4368
    %v4378 = vsel %vm4371, %v4374, %v4377
    %v4379 = vsel %vm4369, nan, %v4378
    %v4380 = vand.u32 2147483647, %v650
    %vm4381 = vcmp.le.f32.partialorder %v4380, 0.7853982
    %vm4382 = vcmp.lt.s32.totalorder %v650, 0
    %v4383 = vand.u32 %v650, 2139095040
    %v4384 = vshrl.u32 %v4383, 23
    %v4385 = vsub.s32 %v4384, 127
    %v4386 = vand.u32 2147483647, %v650
    %v4387 = vand.u32 %v4386, 8388607
    %v4388 = vor.u32 %v4387, 8388608
    %v4389 = vsub.s32 0, %v4388
    %v4390 = vadd.s32 %v4385, 1
    %vm4391 = vcmp.gt.s32.totalorder %v4390, 0
    %v4392 = vsel %vm4391, %v4390, 0
    %v4393 = vshrl.u32 %v4392, 5
    %v4394 = vand.u32 %v4392, 31
    %v4395 = vsub.s32 32, %v4394
    %v4396 = vshrl.u32 683565275, %v4395
    %v4397 = vshll.u32 683565275, %v4394
    %v4398 = vshrl.u32 2475754826, %v4395
    %v4399 = vor.u32 %v4397, %v4398
    %v4400 = vshll.u32 2475754826, %v4394
    %v4401 = vshrl.u32 2131351028, %v4395
    %v4402 = vor.u32 %v4400, %v4401
    %v4403 = vshll.u32 2131351028, %v4394
    %v4404 = vshrl.u32 2102212464, %v4395
    %v4405 = vor.u32 %v4403, %v4404
    %v4406 = vshll.u32 2102212464, %v4394
    %v4407 = vshrl.u32 920167782, %v4395
    %v4408 = vor.u32 %v4406, %v4407
    %v4409 = vshll.u32 920167782, %v4394
    %v4410 = vshrl.u32 1326507024, %v4395
    %v4411 = vor.u32 %v4409, %v4410
    %vm4412 = vcmp.lt.s32.totalorder %v4393, 1
    %vm4413 = vcmp.lt.s32.totalorder %v4393, 2
    %vm4414 = vcmp.lt.s32.totalorder %v4393, 3
    %vm4415 = vcmp.lt.s32.totalorder %v4393, 4
    %v4416 = vsel %vm4412, %v4396, %v4399
    %v4417 = vsel %vm4415, %v4405, 2102212464
    %v4418 = vsel %vm4414, %v4402, %v4417
    %v4419 = vsel %vm4413, %v4416, %v4418
    %v4420 = vsel %vm4412, %v4399, %v4402
    %v4421 = vsel %vm4415, %v4408, 920167782
    %v4422 = vsel %vm4414, %v4405, %v4421
    %v4423 = vsel %vm4413, %v4420, %v4422
    %v4424 = vsel %vm4412, %v4402, %v4405
    %v4425 = vsel %vm4415, %v4411, 1326507024
    %v4426 = vsel %vm4414, %v4408, %v4425
    %v4427 = vsel %vm4413, %v4424, %v4426
    %v4428 = vshll.u32 %v4388, 8
    %v4429 = vmul.u32.u64.compose %v4428, %v4427
    %v4430 = vextract.low.u32 %v4429
    %v4431 = vextract.high.u32 %v4429
    %v4432 = vmul.u32.u64.compose %v4428, %v4423
    %v4433 = vextract.low.u32 %v4432
    %v4434 = vextract.high.u32 %v4432
    %v4435 = vmul.u32 %v4428, %v4419
    %v4436 = vadd.s32 %v4431, %v4433
    %vm4437 = vc.u32 %v4431, %v4433
    %v4438 = vadd.s32 %v4434, 1
    %v4439 = vsel %vm4437, %v4438, %v4434
    %v4440 = vadd.s32 %v4435, %v4439
    %v4441 = vadd.s32 %v4440, 536870912
    %v4442 = vshrl.u32 %v4441, 30
    %v4443 = vshll.u32 %v4442, 30
    %v4444 = vsub.s32 %v4440, %v4443
    %vm4445 = vcmp.lt.s32.totalorder %v4444, 0
    %v4446 = vsub.s32 0, %v4444
    %v4447 = vsel %vm4445, %v4446, %v4444
    %v4448 = vclz %v4447
    %v4449 = vsub.s32 %v4448, 2
    %vm4450 = vcmp.gt.s32.totalorder 0, %v4449
    %v4451 = vsel %vm4450, 0, %v4449
    %v4452 = vsub.s32 32, %v4451
    %v4453 = vshll.u32 %v4444, %v4451
    %v4454 = vshrl.u32 %v4436, %v4452
    %v4455 = vor.u32 %v4453, %v4454
    %v4456 = vsub.s32 4294967266, %v4451
    %v4457 = vadd.s32 %v4456, 127
    %v4458 = vshll.u32 %v4457, 23
    %v4459 = vor.u32 4788187, %v4458
    %v4460 = vand.u32 2147483647, %v4459
    %v4462 = vcvt.s32.f32 %v4455
    %v4463 = vmul.f32 %v4462, %v4460
    %v4464 = vxor.u32 %v4463, 2147483648
    %v4465 = vsel %vm4382, %v4464, %v4463
    %v4466 = vsub.s32 4, %v4442
    %v4467 = vsel %vm4382, %v4466, %v4442
    %v4468 = vsel %vm4381, %v650, %v4465
    %v4469 = vsel %vm4381, 0, %v4467
    %v4470 = vcosq.f32.pop %v4468
    %v4471 = vsinq.f32.pop %v4468
    %vm4472 = vweird.f32 %v650
    %v4473 = vand.u32 %v4469, 3
    %vm4474 = vcmp.lt.s32.totalorder %v4473, 2
    %vm4475 = vcmp.eq.s32.totalorder %v4473, 0
    %v4476 = vxor.u32 %v4471, 2147483648
    %v4477 = vsel %vm4475, %v4470, %v4476
    %vm4478 = vcmp.eq.s32.totalorder %v4473, 2
    %v4479 = vxor.u32 %v4470, 2147483648
    %v4480 = vsel %vm4478, %v4479, %v4471
    %v4481 = vsel %vm4474, %v4477, %v4480
    %v4482 = vsel %vm4472, nan, %v4481
    %v4483 = vand.u32 2147483647, %v651
    %vm4484 = vcmp.le.f32.partialorder %v4483, 0.7853982
    %vm4485 = vcmp.lt.s32.totalorder %v651, 0
    %v4486 = vand.u32 %v651, 2139095040
    %v4487 = vshrl.u32 %v4486, 23
    %v4488 = vsub.s32 %v4487, 127
    %v4489 = vand.u32 2147483647, %v651
    %v4490 = vand.u32 %v4489, 8388607
    %v4491 = vor.u32 %v4490, 8388608
    %v4492 = vsub.s32 0, %v4491
    %v4493 = vadd.s32 %v4488, 1
    %vm4494 = vcmp.gt.s32.totalorder %v4493, 0
    %v4495 = vsel %vm4494, %v4493, 0
    %v4496 = vshrl.u32 %v4495, 5
    %v4497 = vand.u32 %v4495, 31
    %v4498 = vsub.s32 32, %v4497
    %v4499 = vshrl.u32 683565275, %v4498
    %v4500 = vshll.u32 683565275, %v4497
    %v4501 = vshrl.u32 2475754826, %v4498
    %v4502 = vor.u32 %v4500, %v4501
    %v4503 = vshll.u32 2475754826, %v4497
    %v4504 = vshrl.u32 2131351028, %v4498
    %v4505 = vor.u32 %v4503, %v4504
    %v4506 = vshll.u32 2131351028, %v4497
    %v4507 = vshrl.u32 2102212464, %v4498
    %v4508 = vor.u32 %v4506, %v4507
    %v4509 = vshll.u32 2102212464, %v4497
    %v4510 = vshrl.u32 920167782, %v4498
    %v4511 = vor.u32 %v4509, %v4510
    %v4512 = vshll.u32 920167782, %v4497
    %v4513 = vshrl.u32 1326507024, %v4498
    %v4514 = vor.u32 %v4512, %v4513
    %vm4515 = vcmp.lt.s32.totalorder %v4496, 1
    %vm4516 = vcmp.lt.s32.totalorder %v4496, 2
    %vm4517 = vcmp.lt.s32.totalorder %v4496, 3
    %vm4518 = vcmp.lt.s32.totalorder %v4496, 4
    %v4519 = vsel %vm4515, %v4499, %v4502
    %v4520 = vsel %vm4518, %v4508, 2102212464
    %v4521 = vsel %vm4517, %v4505, %v4520
    %v4522 = vsel %vm4516, %v4519, %v4521
    %v4523 = vsel %vm4515, %v4502, %v4505
    %v4524 = vsel %vm4518, %v4511, 920167782
    %v4525 = vsel %vm4517, %v4508, %v4524
    %v4526 = vsel %vm4516, %v4523, %v4525
    %v4527 = vsel %vm4515, %v4505, %v4508
    %v4528 = vsel %vm4518, %v4514, 1326507024
    %v4529 = vsel %vm4517, %v4511, %v4528
    %v4530 = vsel %vm4516, %v4527, %v4529
    %v4531 = vshll.u32 %v4491, 8
    %v4532 = vmul.u32.u64.compose %v4531, %v4530
    %v4533 = vextract.low.u32 %v4532
    %v4534 = vextract.high.u32 %v4532
    %v4535 = vmul.u32.u64.compose %v4531, %v4526
    %v4536 = vextract.low.u32 %v4535
    %v4537 = vextract.high.u32 %v4535
    %v4538 = vmul.u32 %v4531, %v4522
    %v4539 = vadd.s32 %v4534, %v4536
    %vm4540 = vc.u32 %v4534, %v4536
    %v4541 = vadd.s32 %v4537, 1
    %v4542 = vsel %vm4540, %v4541, %v4537
    %v4543 = vadd.s32 %v4538, %v4542
    %v4544 = vadd.s32 %v4543, 536870912
    %v4545 = vshrl.u32 %v4544, 30
    %v4546 = vshll.u32 %v4545, 30
    %v4547 = vsub.s32 %v4543, %v4546
    %vm4548 = vcmp.lt.s32.totalorder %v4547, 0
    %v4549 = vsub.s32 0, %v4547
    %v4550 = vsel %vm4548, %v4549, %v4547
    %v4551 = vclz %v4550
    %v4552 = vsub.s32 %v4551, 2
    %vm4553 = vcmp.gt.s32.totalorder 0, %v4552
    %v4554 = vsel %vm4553, 0, %v4552
    %v4555 = vsub.s32 32, %v4554
    %v4556 = vshll.u32 %v4547, %v4554
    %v4557 = vshrl.u32 %v4539, %v4555
    %v4558 = vor.u32 %v4556, %v4557
    %v4559 = vsub.s32 4294967266, %v4554
    %v4560 = vadd.s32 %v4559, 127
    %v4561 = vshll.u32 %v4560, 23
    %v4562 = vor.u32 4788187, %v4561
    %v4563 = vand.u32 2147483647, %v4562
    %v4565 = vcvt.s32.f32 %v4558
    %v4566 = vmul.f32 %v4565, %v4563
    %v4567 = vxor.u32 %v4566, 2147483648
    %v4568 = vsel %vm4485, %v4567, %v4566
    %v4569 = vsub.s32 4, %v4545
    %v4570 = vsel %vm4485, %v4569, %v4545
    %v4571 = vsel %vm4484, %v651, %v4568
    %v4572 = vsel %vm4484, 0, %v4570
    %v4573 = vcosq.f32.pop %v4571
    %v4574 = vsinq.f32.pop %v4571
    %vm4575 = vweird.f32 %v651
    %v4576 = vand.u32 %v4572, 3
    %vm4577 = vcmp.lt.s32.totalorder %v4576, 2
    %vm4578 = vcmp.eq.s32.totalorder %v4576, 0
    %v4579 = vxor.u32 %v4574, 2147483648
    %v4580 = vsel %vm4578, %v4573, %v4579
    %vm4581 = vcmp.eq.s32.totalorder %v4576, 2
    %v4582 = vxor.u32 %v4573, 2147483648
    %v4583 = vsel %vm4581, %v4582, %v4574
    %v4584 = vsel %vm4577, %v4580, %v4583
    %v4585 = vsel %vm4575, nan, %v4584
    %v4586 = vand.u32 2147483647, %v652
    %vm4587 = vcmp.le.f32.partialorder %v4586, 0.7853982
    %vm4588 = vcmp.lt.s32.totalorder %v652, 0
    %v4589 = vand.u32 %v652, 2139095040
    %v4590 = vshrl.u32 %v4589, 23
    %v4591 = vsub.s32 %v4590, 127
    %v4592 = vand.u32 2147483647, %v652
    %v4593 = vand.u32 %v4592, 8388607
    %v4594 = vor.u32 %v4593, 8388608
    %v4595 = vsub.s32 0, %v4594
    %v4596 = vadd.s32 %v4591, 1
    %vm4597 = vcmp.gt.s32.totalorder %v4596, 0
    %v4598 = vsel %vm4597, %v4596, 0
    %v4599 = vshrl.u32 %v4598, 5
    %v4600 = vand.u32 %v4598, 31
    %v4601 = vsub.s32 32, %v4600
    %v4602 = vshrl.u32 683565275, %v4601
    %v4603 = vshll.u32 683565275, %v4600
    %v4604 = vshrl.u32 2475754826, %v4601
    %v4605 = vor.u32 %v4603, %v4604
    %v4606 = vshll.u32 2475754826, %v4600
    %v4607 = vshrl.u32 2131351028, %v4601
    %v4608 = vor.u32 %v4606, %v4607
    %v4609 = vshll.u32 2131351028, %v4600
    %v4610 = vshrl.u32 2102212464, %v4601
    %v4611 = vor.u32 %v4609, %v4610
    %v4612 = vshll.u32 2102212464, %v4600
    %v4613 = vshrl.u32 920167782, %v4601
    %v4614 = vor.u32 %v4612, %v4613
    %v4615 = vshll.u32 920167782, %v4600
    %v4616 = vshrl.u32 1326507024, %v4601
    %v4617 = vor.u32 %v4615, %v4616
    %vm4618 = vcmp.lt.s32.totalorder %v4599, 1
    %vm4619 = vcmp.lt.s32.totalorder %v4599, 2
    %vm4620 = vcmp.lt.s32.totalorder %v4599, 3
    %vm4621 = vcmp.lt.s32.totalorder %v4599, 4
    %v4622 = vsel %vm4618, %v4602, %v4605
    %v4623 = vsel %vm4621, %v4611, 2102212464
    %v4624 = vsel %vm4620, %v4608, %v4623
    %v4625 = vsel %vm4619, %v4622, %v4624
    %v4626 = vsel %vm4618, %v4605, %v4608
    %v4627 = vsel %vm4621, %v4614, 920167782
    %v4628 = vsel %vm4620, %v4611, %v4627
    %v4629 = vsel %vm4619, %v4626, %v4628
    %v4630 = vsel %vm4618, %v4608, %v4611
    %v4631 = vsel %vm4621, %v4617, 1326507024
    %v4632 = vsel %vm4620, %v4614, %v4631
    %v4633 = vsel %vm4619, %v4630, %v4632
    %v4634 = vshll.u32 %v4594, 8
    %v4635 = vmul.u32.u64.compose %v4634, %v4633
    %v4636 = vextract.low.u32 %v4635
    %v4637 = vextract.high.u32 %v4635
    %v4638 = vmul.u32.u64.compose %v4634, %v4629
    %v4639 = vextract.low.u32 %v4638
    %v4640 = vextract.high.u32 %v4638
    %v4641 = vmul.u32 %v4634, %v4625
    %v4642 = vadd.s32 %v4637, %v4639
    %vm4643 = vc.u32 %v4637, %v4639
    %v4644 = vadd.s32 %v4640, 1
    %v4645 = vsel %vm4643, %v4644, %v4640
    %v4646 = vadd.s32 %v4641, %v4645
    %v4647 = vadd.s32 %v4646, 536870912
    %v4648 = vshrl.u32 %v4647, 30
    %v4649 = vshll.u32 %v4648, 30
    %v4650 = vsub.s32 %v4646, %v4649
    %vm4651 = vcmp.lt.s32.totalorder %v4650, 0
    %v4652 = vsub.s32 0, %v4650
    %v4653 = vsel %vm4651, %v4652, %v4650
    %v4654 = vclz %v4653
    %v4655 = vsub.s32 %v4654, 2
    %vm4656 = vcmp.gt.s32.totalorder 0, %v4655
    %v4657 = vsel %vm4656, 0, %v4655
    %v4658 = vsub.s32 32, %v4657
    %v4659 = vshll.u32 %v4650, %v4657
    %v4660 = vshrl.u32 %v4642, %v4658
    %v4661 = vor.u32 %v4659, %v4660
    %v4662 = vsub.s32 4294967266, %v4657
    %v4663 = vadd.s32 %v4662, 127
    %v4664 = vshll.u32 %v4663, 23
    %v4665 = vor.u32 4788187, %v4664
    %v4666 = vand.u32 2147483647, %v4665
    %v4668 = vcvt.s32.f32 %v4661
    %v4669 = vmul.f32 %v4668, %v4666
    %v4670 = vxor.u32 %v4669, 2147483648
    %v4671 = vsel %vm4588, %v4670, %v4669
    %v4672 = vsub.s32 4, %v4648
    %v4673 = vsel %vm4588, %v4672, %v4648
    %v4674 = vsel %vm4587, %v652, %v4671
    %v4675 = vsel %vm4587, 0, %v4673
    %v4676 = vcosq.f32.pop %v4674
    %v4677 = vsinq.f32.pop %v4674
    %vm4678 = vweird.f32 %v652
    %v4679 = vand.u32 %v4675, 3
    %vm4680 = vcmp.lt.s32.totalorder %v4679, 2
    %vm4681 = vcmp.eq.s32.totalorder %v4679, 0
    %v4682 = vxor.u32 %v4677, 2147483648
    %v4683 = vsel %vm4681, %v4676, %v4682
    %vm4684 = vcmp.eq.s32.totalorder %v4679, 2
    %v4685 = vxor.u32 %v4676, 2147483648
    %v4686 = vsel %vm4684, %v4685, %v4677
    %v4687 = vsel %vm4680, %v4683, %v4686
    %v4688 = vsel %vm4678, nan, %v4687
    %v4689 = vand.u32 2147483647, %v653
    %vm4690 = vcmp.le.f32.partialorder %v4689, 0.7853982
    %vm4691 = vcmp.lt.s32.totalorder %v653, 0
    %v4692 = vand.u32 %v653, 2139095040
    %v4693 = vshrl.u32 %v4692, 23
    %v4694 = vsub.s32 %v4693, 127
    %v4695 = vand.u32 2147483647, %v653
    %v4696 = vand.u32 %v4695, 8388607
    %v4697 = vor.u32 %v4696, 8388608
    %v4698 = vsub.s32 0, %v4697
    %v4699 = vadd.s32 %v4694, 1
    %vm4700 = vcmp.gt.s32.totalorder %v4699, 0
    %v4701 = vsel %vm4700, %v4699, 0
    %v4702 = vshrl.u32 %v4701, 5
    %v4703 = vand.u32 %v4701, 31
    %v4704 = vsub.s32 32, %v4703
    %v4705 = vshrl.u32 683565275, %v4704
    %v4706 = vshll.u32 683565275, %v4703
    %v4707 = vshrl.u32 2475754826, %v4704
    %v4708 = vor.u32 %v4706, %v4707
    %v4709 = vshll.u32 2475754826, %v4703
    %v4710 = vshrl.u32 2131351028, %v4704
    %v4711 = vor.u32 %v4709, %v4710
    %v4712 = vshll.u32 2131351028, %v4703
    %v4713 = vshrl.u32 2102212464, %v4704
    %v4714 = vor.u32 %v4712, %v4713
    %v4715 = vshll.u32 2102212464, %v4703
    %v4716 = vshrl.u32 920167782, %v4704
    %v4717 = vor.u32 %v4715, %v4716
    %v4718 = vshll.u32 920167782, %v4703
    %v4719 = vshrl.u32 1326507024, %v4704
    %v4720 = vor.u32 %v4718, %v4719
    %vm4721 = vcmp.lt.s32.totalorder %v4702, 1
    %vm4722 = vcmp.lt.s32.totalorder %v4702, 2
    %vm4723 = vcmp.lt.s32.totalorder %v4702, 3
    %vm4724 = vcmp.lt.s32.totalorder %v4702, 4
    %v4725 = vsel %vm4721, %v4705, %v4708
    %v4726 = vsel %vm4724, %v4714, 2102212464
    %v4727 = vsel %vm4723, %v4711, %v4726
    %v4728 = vsel %vm4722, %v4725, %v4727
    %v4729 = vsel %vm4721, %v4708, %v4711
    %v4730 = vsel %vm4724, %v4717, 920167782
    %v4731 = vsel %vm4723, %v4714, %v4730
    %v4732 = vsel %vm4722, %v4729, %v4731
    %v4733 = vsel %vm4721, %v4711, %v4714
    %v4734 = vsel %vm4724, %v4720, 1326507024
    %v4735 = vsel %vm4723, %v4717, %v4734
    %v4736 = vsel %vm4722, %v4733, %v4735
    %v4737 = vshll.u32 %v4697, 8
    %v4738 = vmul.u32.u64.compose %v4737, %v4736
    %v4739 = vextract.low.u32 %v4738
    %v4740 = vextract.high.u32 %v4738
    %v4741 = vmul.u32.u64.compose %v4737, %v4732
    %v4742 = vextract.low.u32 %v4741
    %v4743 = vextract.high.u32 %v4741
    %v4744 = vmul.u32 %v4737, %v4728
    %v4745 = vadd.s32 %v4740, %v4742
    %vm4746 = vc.u32 %v4740, %v4742
    %v4747 = vadd.s32 %v4743, 1
    %v4748 = vsel %vm4746, %v4747, %v4743
    %v4749 = vadd.s32 %v4744, %v4748
    %v4750 = vadd.s32 %v4749, 536870912
    %v4751 = vshrl.u32 %v4750, 30
    %v4752 = vshll.u32 %v4751, 30
    %v4753 = vsub.s32 %v4749, %v4752
    %vm4754 = vcmp.lt.s32.totalorder %v4753, 0
    %v4755 = vsub.s32 0, %v4753
    %v4756 = vsel %vm4754, %v4755, %v4753
    %v4757 = vclz %v4756
    %v4758 = vsub.s32 %v4757, 2
    %vm4759 = vcmp.gt.s32.totalorder 0, %v4758
    %v4760 = vsel %vm4759, 0, %v4758
    %v4761 = vsub.s32 32, %v4760
    %v4762 = vshll.u32 %v4753, %v4760
    %v4763 = vshrl.u32 %v4745, %v4761
    %v4764 = vor.u32 %v4762, %v4763
    %v4765 = vsub.s32 4294967266, %v4760
    %v4766 = vadd.s32 %v4765, 127
    %v4767 = vshll.u32 %v4766, 23
    %v4768 = vor.u32 4788187, %v4767
    %v4769 = vand.u32 2147483647, %v4768
    %v4771 = vcvt.s32.f32 %v4764
    %v4772 = vmul.f32 %v4771, %v4769
    %v4773 = vxor.u32 %v4772, 2147483648
    %v4774 = vsel %vm4691, %v4773, %v4772
    %v4775 = vsub.s32 4, %v4751
    %v4776 = vsel %vm4691, %v4775, %v4751
    %v4777 = vsel %vm4690, %v653, %v4774
    %v4778 = vsel %vm4690, 0, %v4776
    %v4779 = vcosq.f32.pop %v4777
    %v4780 = vsinq.f32.pop %v4777
    %vm4781 = vweird.f32 %v653
    %v4782 = vand.u32 %v4778, 3
    %vm4783 = vcmp.lt.s32.totalorder %v4782, 2
    %vm4784 = vcmp.eq.s32.totalorder %v4782, 0
    %v4785 = vxor.u32 %v4780, 2147483648
    %v4786 = vsel %vm4784, %v4779, %v4785
    %vm4787 = vcmp.eq.s32.totalorder %v4782, 2
    %v4788 = vxor.u32 %v4779, 2147483648
    %v4789 = vsel %vm4787, %v4788, %v4780
    %v4790 = vsel %vm4783, %v4786, %v4789
    %v4791 = vsel %vm4781, nan, %v4790
    %v4792 = vand.u32 2147483647, %v654
    %vm4793 = vcmp.le.f32.partialorder %v4792, 0.7853982
    %vm4794 = vcmp.lt.s32.totalorder %v654, 0
    %v4795 = vand.u32 %v654, 2139095040
    %v4796 = vshrl.u32 %v4795, 23
    %v4797 = vsub.s32 %v4796, 127
    %v4798 = vand.u32 2147483647, %v654
    %v4799 = vand.u32 %v4798, 8388607
    %v4800 = vor.u32 %v4799, 8388608
    %v4801 = vsub.s32 0, %v4800
    %v4802 = vadd.s32 %v4797, 1
    %vm4803 = vcmp.gt.s32.totalorder %v4802, 0
    %v4804 = vsel %vm4803, %v4802, 0
    %v4805 = vshrl.u32 %v4804, 5
    %v4806 = vand.u32 %v4804, 31
    %v4807 = vsub.s32 32, %v4806
    %v4808 = vshrl.u32 683565275, %v4807
    %v4809 = vshll.u32 683565275, %v4806
    %v4810 = vshrl.u32 2475754826, %v4807
    %v4811 = vor.u32 %v4809, %v4810
    %v4812 = vshll.u32 2475754826, %v4806
    %v4813 = vshrl.u32 2131351028, %v4807
    %v4814 = vor.u32 %v4812, %v4813
    %v4815 = vshll.u32 2131351028, %v4806
    %v4816 = vshrl.u32 2102212464, %v4807
    %v4817 = vor.u32 %v4815, %v4816
    %v4818 = vshll.u32 2102212464, %v4806
    %v4819 = vshrl.u32 920167782, %v4807
    %v4820 = vor.u32 %v4818, %v4819
    %v4821 = vshll.u32 920167782, %v4806
    %v4822 = vshrl.u32 1326507024, %v4807
    %v4823 = vor.u32 %v4821, %v4822
    %vm4824 = vcmp.lt.s32.totalorder %v4805, 1
    %vm4825 = vcmp.lt.s32.totalorder %v4805, 2
    %vm4826 = vcmp.lt.s32.totalorder %v4805, 3
    %vm4827 = vcmp.lt.s32.totalorder %v4805, 4
    %v4828 = vsel %vm4824, %v4808, %v4811
    %v4829 = vsel %vm4827, %v4817, 2102212464
    %v4830 = vsel %vm4826, %v4814, %v4829
    %v4831 = vsel %vm4825, %v4828, %v4830
    %v4832 = vsel %vm4824, %v4811, %v4814
    %v4833 = vsel %vm4827, %v4820, 920167782
    %v4834 = vsel %vm4826, %v4817, %v4833
    %v4835 = vsel %vm4825, %v4832, %v4834
    %v4836 = vsel %vm4824, %v4814, %v4817
    %v4837 = vsel %vm4827, %v4823, 1326507024
    %v4838 = vsel %vm4826, %v4820, %v4837
    %v4839 = vsel %vm4825, %v4836, %v4838
    %v4840 = vshll.u32 %v4800, 8
    %v4841 = vmul.u32.u64.compose %v4840, %v4839
    %v4842 = vextract.low.u32 %v4841
    %v4843 = vextract.high.u32 %v4841
    %v4844 = vmul.u32.u64.compose %v4840, %v4835
    %v4845 = vextract.low.u32 %v4844
    %v4846 = vextract.high.u32 %v4844
    %v4847 = vmul.u32 %v4840, %v4831
    %v4848 = vadd.s32 %v4843, %v4845
    %vm4849 = vc.u32 %v4843, %v4845
    %v4850 = vadd.s32 %v4846, 1
    %v4851 = vsel %vm4849, %v4850, %v4846
    %v4852 = vadd.s32 %v4847, %v4851
    %v4853 = vadd.s32 %v4852, 536870912
    %v4854 = vshrl.u32 %v4853, 30
    %v4855 = vshll.u32 %v4854, 30
    %v4856 = vsub.s32 %v4852, %v4855
    %vm4857 = vcmp.lt.s32.totalorder %v4856, 0
    %v4858 = vsub.s32 0, %v4856
    %v4859 = vsel %vm4857, %v4858, %v4856
    %v4860 = vclz %v4859
    %v4861 = vsub.s32 %v4860, 2
    %vm4862 = vcmp.gt.s32.totalorder 0, %v4861
    %v4863 = vsel %vm4862, 0, %v4861
    %v4864 = vsub.s32 32, %v4863
    %v4865 = vshll.u32 %v4856, %v4863
    %v4866 = vshrl.u32 %v4848, %v4864
    %v4867 = vor.u32 %v4865, %v4866
    %v4868 = vsub.s32 4294967266, %v4863
    %v4869 = vadd.s32 %v4868, 127
    %v4870 = vshll.u32 %v4869, 23
    %v4871 = vor.u32 4788187, %v4870
    %v4872 = vand.u32 2147483647, %v4871
    %v4874 = vcvt.s32.f32 %v4867
    %v4875 = vmul.f32 %v4874, %v4872
    %v4876 = vxor.u32 %v4875, 2147483648
    %v4877 = vsel %vm4794, %v4876, %v4875
    %v4878 = vsub.s32 4, %v4854
    %v4879 = vsel %vm4794, %v4878, %v4854
    %v4880 = vsel %vm4793, %v654, %v4877
    %v4881 = vsel %vm4793, 0, %v4879
    %v4882 = vcosq.f32.pop %v4880
    %v4883 = vsinq.f32.pop %v4880
    %vm4884 = vweird.f32 %v654
    %v4885 = vand.u32 %v4881, 3
    %vm4886 = vcmp.lt.s32.totalorder %v4885, 2
    %vm4887 = vcmp.eq.s32.totalorder %v4885, 0
    %v4888 = vxor.u32 %v4883, 2147483648
    %v4889 = vsel %vm4887, %v4882, %v4888
    %vm4890 = vcmp.eq.s32.totalorder %v4885, 2
    %v4891 = vxor.u32 %v4882, 2147483648
    %v4892 = vsel %vm4890, %v4891, %v4883
    %v4893 = vsel %vm4886, %v4889, %v4892
    %v4894 = vsel %vm4884, nan, %v4893
    %v4895 = vand.u32 2147483647, %v655
    %vm4896 = vcmp.le.f32.partialorder %v4895, 0.7853982
    %vm4897 = vcmp.lt.s32.totalorder %v655, 0
    %v4898 = vand.u32 %v655, 2139095040
    %v4899 = vshrl.u32 %v4898, 23
    %v4900 = vsub.s32 %v4899, 127
    %v4901 = vand.u32 2147483647, %v655
    %v4902 = vand.u32 %v4901, 8388607
    %v4903 = vor.u32 %v4902, 8388608
    %v4904 = vsub.s32 0, %v4903
    %v4905 = vadd.s32 %v4900, 1
    %vm4906 = vcmp.gt.s32.totalorder %v4905, 0
    %v4907 = vsel %vm4906, %v4905, 0
    %v4908 = vshrl.u32 %v4907, 5
    %v4909 = vand.u32 %v4907, 31
    %v4910 = vsub.s32 32, %v4909
    %v4911 = vshrl.u32 683565275, %v4910
    %v4912 = vshll.u32 683565275, %v4909
    %v4913 = vshrl.u32 2475754826, %v4910
    %v4914 = vor.u32 %v4912, %v4913
    %v4915 = vshll.u32 2475754826, %v4909
    %v4916 = vshrl.u32 2131351028, %v4910
    %v4917 = vor.u32 %v4915, %v4916
    %v4918 = vshll.u32 2131351028, %v4909
    %v4919 = vshrl.u32 2102212464, %v4910
    %v4920 = vor.u32 %v4918, %v4919
    %v4921 = vshll.u32 2102212464, %v4909
    %v4922 = vshrl.u32 920167782, %v4910
    %v4923 = vor.u32 %v4921, %v4922
    %v4924 = vshll.u32 920167782, %v4909
    %v4925 = vshrl.u32 1326507024, %v4910
    %v4926 = vor.u32 %v4924, %v4925
    %vm4927 = vcmp.lt.s32.totalorder %v4908, 1
    %vm4928 = vcmp.lt.s32.totalorder %v4908, 2
    %vm4929 = vcmp.lt.s32.totalorder %v4908, 3
    %vm4930 = vcmp.lt.s32.totalorder %v4908, 4
    %v4931 = vsel %vm4927, %v4911, %v4914
    %v4932 = vsel %vm4930, %v4920, 2102212464
    %v4933 = vsel %vm4929, %v4917, %v4932
    %v4934 = vsel %vm4928, %v4931, %v4933
    %v4935 = vsel %vm4927, %v4914, %v4917
    %v4936 = vsel %vm4930, %v4923, 920167782
    %v4937 = vsel %vm4929, %v4920, %v4936
    %v4938 = vsel %vm4928, %v4935, %v4937
    %v4939 = vsel %vm4927, %v4917, %v4920
    %v4940 = vsel %vm4930, %v4926, 1326507024
    %v4941 = vsel %vm4929, %v4923, %v4940
    %v4942 = vsel %vm4928, %v4939, %v4941
    %v4943 = vshll.u32 %v4903, 8
    %v4944 = vmul.u32.u64.compose %v4943, %v4942
    %v4945 = vextract.low.u32 %v4944
    %v4946 = vextract.high.u32 %v4944
    %v4947 = vmul.u32.u64.compose %v4943, %v4938
    %v4948 = vextract.low.u32 %v4947
    %v4949 = vextract.high.u32 %v4947
    %v4950 = vmul.u32 %v4943, %v4934
    %v4951 = vadd.s32 %v4946, %v4948
    %vm4952 = vc.u32 %v4946, %v4948
    %v4953 = vadd.s32 %v4949, 1
    %v4954 = vsel %vm4952, %v4953, %v4949
    %v4955 = vadd.s32 %v4950, %v4954
    %v4956 = vadd.s32 %v4955, 536870912
    %v4957 = vshrl.u32 %v4956, 30
    %v4958 = vshll.u32 %v4957, 30
    %v4959 = vsub.s32 %v4955, %v4958
    %vm4960 = vcmp.lt.s32.totalorder %v4959, 0
    %v4961 = vsub.s32 0, %v4959
    %v4962 = vsel %vm4960, %v4961, %v4959
    %v4963 = vclz %v4962
    %v4964 = vsub.s32 %v4963, 2
    %vm4965 = vcmp.gt.s32.totalorder 0, %v4964
    %v4966 = vsel %vm4965, 0, %v4964
    %v4967 = vsub.s32 32, %v4966
    %v4968 = vshll.u32 %v4959, %v4966
    %v4969 = vshrl.u32 %v4951, %v4967
    %v4970 = vor.u32 %v4968, %v4969
    %v4971 = vsub.s32 4294967266, %v4966
    %v4972 = vadd.s32 %v4971, 127
    %v4973 = vshll.u32 %v4972, 23
    %v4974 = vor.u32 4788187, %v4973
    %v4975 = vand.u32 2147483647, %v4974
    %v4977 = vcvt.s32.f32 %v4970
    %v4978 = vmul.f32 %v4977, %v4975
    %v4979 = vxor.u32 %v4978, 2147483648
    %v4980 = vsel %vm4897, %v4979, %v4978
    %v4981 = vsub.s32 4, %v4957
    %v4982 = vsel %vm4897, %v4981, %v4957
    %v4983 = vsel %vm4896, %v655, %v4980
    %v4984 = vsel %vm4896, 0, %v4982
    %v4985 = vcosq.f32.pop %v4983
    %v4986 = vsinq.f32.pop %v4983
    %vm4987 = vweird.f32 %v655
    %v4988 = vand.u32 %v4984, 3
    %vm4989 = vcmp.lt.s32.totalorder %v4988, 2
    %vm4990 = vcmp.eq.s32.totalorder %v4988, 0
    %v4991 = vxor.u32 %v4986, 2147483648
    %v4992 = vsel %vm4990, %v4985, %v4991
    %vm4993 = vcmp.eq.s32.totalorder %v4988, 2
    %v4994 = vxor.u32 %v4985, 2147483648
    %v4995 = vsel %vm4993, %v4994, %v4986
    %v4996 = vsel %vm4989, %v4992, %v4995
    %v4997 = vsel %vm4987, nan, %v4996
    %v4998 = vand.u32 2147483647, %v656
    %vm4999 = vcmp.le.f32.partialorder %v4998, 0.7853982
    %vm5000 = vcmp.lt.s32.totalorder %v656, 0
    %v5001 = vand.u32 %v656, 2139095040
    %v5002 = vshrl.u32 %v5001, 23
    %v5003 = vsub.s32 %v5002, 127
    %v5004 = vand.u32 2147483647, %v656
    %v5005 = vand.u32 %v5004, 8388607
    %v5006 = vor.u32 %v5005, 8388608
    %v5007 = vsub.s32 0, %v5006
    %v5008 = vadd.s32 %v5003, 1
    %vm5009 = vcmp.gt.s32.totalorder %v5008, 0
    %v5010 = vsel %vm5009, %v5008, 0
    %v5011 = vshrl.u32 %v5010, 5
    %v5012 = vand.u32 %v5010, 31
    %v5013 = vsub.s32 32, %v5012
    %v5014 = vshrl.u32 683565275, %v5013
    %v5015 = vshll.u32 683565275, %v5012
    %v5016 = vshrl.u32 2475754826, %v5013
    %v5017 = vor.u32 %v5015, %v5016
    %v5018 = vshll.u32 2475754826, %v5012
    %v5019 = vshrl.u32 2131351028, %v5013
    %v5020 = vor.u32 %v5018, %v5019
    %v5021 = vshll.u32 2131351028, %v5012
    %v5022 = vshrl.u32 2102212464, %v5013
    %v5023 = vor.u32 %v5021, %v5022
    %v5024 = vshll.u32 2102212464, %v5012
    %v5025 = vshrl.u32 920167782, %v5013
    %v5026 = vor.u32 %v5024, %v5025
    %v5027 = vshll.u32 920167782, %v5012
    %v5028 = vshrl.u32 1326507024, %v5013
    %v5029 = vor.u32 %v5027, %v5028
    %vm5030 = vcmp.lt.s32.totalorder %v5011, 1
    %vm5031 = vcmp.lt.s32.totalorder %v5011, 2
    %vm5032 = vcmp.lt.s32.totalorder %v5011, 3
    %vm5033 = vcmp.lt.s32.totalorder %v5011, 4
    %v5034 = vsel %vm5030, %v5014, %v5017
    %v5035 = vsel %vm5033, %v5023, 2102212464
    %v5036 = vsel %vm5032, %v5020, %v5035
    %v5037 = vsel %vm5031, %v5034, %v5036
    %v5038 = vsel %vm5030, %v5017, %v5020
    %v5039 = vsel %vm5033, %v5026, 920167782
    %v5040 = vsel %vm5032, %v5023, %v5039
    %v5041 = vsel %vm5031, %v5038, %v5040
    %v5042 = vsel %vm5030, %v5020, %v5023
    %v5043 = vsel %vm5033, %v5029, 1326507024
    %v5044 = vsel %vm5032, %v5026, %v5043
    %v5045 = vsel %vm5031, %v5042, %v5044
    %v5046 = vshll.u32 %v5006, 8
    %v5047 = vmul.u32.u64.compose %v5046, %v5045
    %v5048 = vextract.low.u32 %v5047
    %v5049 = vextract.high.u32 %v5047
    %v5050 = vmul.u32.u64.compose %v5046, %v5041
    %v5051 = vextract.low.u32 %v5050
    %v5052 = vextract.high.u32 %v5050
    %v5053 = vmul.u32 %v5046, %v5037
    %v5054 = vadd.s32 %v5049, %v5051
    %vm5055 = vc.u32 %v5049, %v5051
    %v5056 = vadd.s32 %v5052, 1
    %v5057 = vsel %vm5055, %v5056, %v5052
    %v5058 = vadd.s32 %v5053, %v5057
    %v5059 = vadd.s32 %v5058, 536870912
    %v5060 = vshrl.u32 %v5059, 30
    %v5061 = vshll.u32 %v5060, 30
    %v5062 = vsub.s32 %v5058, %v5061
    %vm5063 = vcmp.lt.s32.totalorder %v5062, 0
    %v5064 = vsub.s32 0, %v5062
    %v5065 = vsel %vm5063, %v5064, %v5062
    %v5066 = vclz %v5065
    %v5067 = vsub.s32 %v5066, 2
    %vm5068 = vcmp.gt.s32.totalorder 0, %v5067
    %v5069 = vsel %vm5068, 0, %v5067
    %v5070 = vsub.s32 32, %v5069
    %v5071 = vshll.u32 %v5062, %v5069
    %v5072 = vshrl.u32 %v5054, %v5070
    %v5073 = vor.u32 %v5071, %v5072
    %v5074 = vsub.s32 4294967266, %v5069
    %v5075 = vadd.s32 %v5074, 127
    %v5076 = vshll.u32 %v5075, 23
    %v5077 = vor.u32 4788187, %v5076
    %v5078 = vand.u32 2147483647, %v5077
    %v5080 = vcvt.s32.f32 %v5073
    %v5081 = vmul.f32 %v5080, %v5078
    %v5082 = vxor.u32 %v5081, 2147483648
    %v5083 = vsel %vm5000, %v5082, %v5081
    %v5084 = vsub.s32 4, %v5060
    %v5085 = vsel %vm5000, %v5084, %v5060
    %v5086 = vsel %vm4999, %v656, %v5083
    %v5087 = vsel %vm4999, 0, %v5085
    %v5088 = vcosq.f32.pop %v5086
    %v5089 = vsinq.f32.pop %v5086
    %vm5090 = vweird.f32 %v656
    %v5091 = vand.u32 %v5087, 3
    %vm5092 = vcmp.lt.s32.totalorder %v5091, 2
    %vm5093 = vcmp.eq.s32.totalorder %v5091, 0
    %v5094 = vxor.u32 %v5089, 2147483648
    %v5095 = vsel %vm5093, %v5088, %v5094
    %vm5096 = vcmp.eq.s32.totalorder %v5091, 2
    %v5097 = vxor.u32 %v5088, 2147483648
    %v5098 = vsel %vm5096, %v5097, %v5089
    %v5099 = vsel %vm5092, %v5095, %v5098
    %v5100 = vsel %vm5090, nan, %v5099
    %v5101 = vand.u32 2147483647, %v657
    %vm5102 = vcmp.le.f32.partialorder %v5101, 0.7853982
    %vm5103 = vcmp.lt.s32.totalorder %v657, 0
    %v5104 = vand.u32 %v657, 2139095040
    %v5105 = vshrl.u32 %v5104, 23
    %v5106 = vsub.s32 %v5105, 127
    %v5107 = vand.u32 2147483647, %v657
    %v5108 = vand.u32 %v5107, 8388607
    %v5109 = vor.u32 %v5108, 8388608
    %v5110 = vsub.s32 0, %v5109
    %v5111 = vadd.s32 %v5106, 1
    %vm5112 = vcmp.gt.s32.totalorder %v5111, 0
    %v5113 = vsel %vm5112, %v5111, 0
    %v5114 = vshrl.u32 %v5113, 5
    %v5115 = vand.u32 %v5113, 31
    %v5116 = vsub.s32 32, %v5115
    %v5117 = vshrl.u32 683565275, %v5116
    %v5118 = vshll.u32 683565275, %v5115
    %v5119 = vshrl.u32 2475754826, %v5116
    %v5120 = vor.u32 %v5118, %v5119
    %v5121 = vshll.u32 2475754826, %v5115
    %v5122 = vshrl.u32 2131351028, %v5116
    %v5123 = vor.u32 %v5121, %v5122
    %v5124 = vshll.u32 2131351028, %v5115
    %v5125 = vshrl.u32 2102212464, %v5116
    %v5126 = vor.u32 %v5124, %v5125
    %v5127 = vshll.u32 2102212464, %v5115
    %v5128 = vshrl.u32 920167782, %v5116
    %v5129 = vor.u32 %v5127, %v5128
    %v5130 = vshll.u32 920167782, %v5115
    %v5131 = vshrl.u32 1326507024, %v5116
    %v5132 = vor.u32 %v5130, %v5131
    %vm5133 = vcmp.lt.s32.totalorder %v5114, 1
    %vm5134 = vcmp.lt.s32.totalorder %v5114, 2
    %vm5135 = vcmp.lt.s32.totalorder %v5114, 3
    %vm5136 = vcmp.lt.s32.totalorder %v5114, 4
    %v5137 = vsel %vm5133, %v5117, %v5120
    %v5138 = vsel %vm5136, %v5126, 2102212464
    %v5139 = vsel %vm5135, %v5123, %v5138
    %v5140 = vsel %vm5134, %v5137, %v5139
    %v5141 = vsel %vm5133, %v5120, %v5123
    %v5142 = vsel %vm5136, %v5129, 920167782
    %v5143 = vsel %vm5135, %v5126, %v5142
    %v5144 = vsel %vm5134, %v5141, %v5143
    %v5145 = vsel %vm5133, %v5123, %v5126
    %v5146 = vsel %vm5136, %v5132, 1326507024
    %v5147 = vsel %vm5135, %v5129, %v5146
    %v5148 = vsel %vm5134, %v5145, %v5147
    %v5149 = vshll.u32 %v5109, 8
    %v5150 = vmul.u32.u64.compose %v5149, %v5148
    %v5151 = vextract.low.u32 %v5150
    %v5152 = vextract.high.u32 %v5150
    %v5153 = vmul.u32.u64.compose %v5149, %v5144
    %v5154 = vextract.low.u32 %v5153
    %v5155 = vextract.high.u32 %v5153
    %v5156 = vmul.u32 %v5149, %v5140
    %v5157 = vadd.s32 %v5152, %v5154
    %vm5158 = vc.u32 %v5152, %v5154
    %v5159 = vadd.s32 %v5155, 1
    %v5160 = vsel %vm5158, %v5159, %v5155
    %v5161 = vadd.s32 %v5156, %v5160
    %v5162 = vadd.s32 %v5161, 536870912
    %v5163 = vshrl.u32 %v5162, 30
    %v5164 = vshll.u32 %v5163, 30
    %v5165 = vsub.s32 %v5161, %v5164
    %vm5166 = vcmp.lt.s32.totalorder %v5165, 0
    %v5167 = vsub.s32 0, %v5165
    %v5168 = vsel %vm5166, %v5167, %v5165
    %v5169 = vclz %v5168
    %v5170 = vsub.s32 %v5169, 2
    %vm5171 = vcmp.gt.s32.totalorder 0, %v5170
    %v5172 = vsel %vm5171, 0, %v5170
    %v5173 = vsub.s32 32, %v5172
    %v5174 = vshll.u32 %v5165, %v5172
    %v5175 = vshrl.u32 %v5157, %v5173
    %v5176 = vor.u32 %v5174, %v5175
    %v5177 = vsub.s32 4294967266, %v5172
    %v5178 = vadd.s32 %v5177, 127
    %v5179 = vshll.u32 %v5178, 23
    %v5180 = vor.u32 4788187, %v5179
    %v5181 = vand.u32 2147483647, %v5180
    %v5183 = vcvt.s32.f32 %v5176
    %v5184 = vmul.f32 %v5183, %v5181
    %v5185 = vxor.u32 %v5184, 2147483648
    %v5186 = vsel %vm5103, %v5185, %v5184
    %v5187 = vsub.s32 4, %v5163
    %v5188 = vsel %vm5103, %v5187, %v5163
    %v5189 = vsel %vm5102, %v657, %v5186
    %v5190 = vsel %vm5102, 0, %v5188
    %v5191 = vcosq.f32.pop %v5189
    %v5192 = vsinq.f32.pop %v5189
    %vm5193 = vweird.f32 %v657
    %v5194 = vand.u32 %v5190, 3
    %vm5195 = vcmp.lt.s32.totalorder %v5194, 2
    %vm5196 = vcmp.eq.s32.totalorder %v5194, 0
    %v5197 = vxor.u32 %v5192, 2147483648
    %v5198 = vsel %vm5196, %v5191, %v5197
    %vm5199 = vcmp.eq.s32.totalorder %v5194, 2
    %v5200 = vxor.u32 %v5191, 2147483648
    %v5201 = vsel %vm5199, %v5200, %v5192
    %v5202 = vsel %vm5195, %v5198, %v5201
    %v5203 = vsel %vm5193, nan, %v5202
    %v5204 = vand.u32 2147483647, %v658
    %vm5205 = vcmp.le.f32.partialorder %v5204, 0.7853982
    %vm5206 = vcmp.lt.s32.totalorder %v658, 0
    %v5207 = vand.u32 %v658, 2139095040
    %v5208 = vshrl.u32 %v5207, 23
    %v5209 = vsub.s32 %v5208, 127
    %v5210 = vand.u32 2147483647, %v658
    %v5211 = vand.u32 %v5210, 8388607
    %v5212 = vor.u32 %v5211, 8388608
    %v5213 = vsub.s32 0, %v5212
    %v5214 = vadd.s32 %v5209, 1
    %vm5215 = vcmp.gt.s32.totalorder %v5214, 0
    %v5216 = vsel %vm5215, %v5214, 0
    %v5217 = vshrl.u32 %v5216, 5
    %v5218 = vand.u32 %v5216, 31
    %v5219 = vsub.s32 32, %v5218
    %v5220 = vshrl.u32 683565275, %v5219
    %v5221 = vshll.u32 683565275, %v5218
    %v5222 = vshrl.u32 2475754826, %v5219
    %v5223 = vor.u32 %v5221, %v5222
    %v5224 = vshll.u32 2475754826, %v5218
    %v5225 = vshrl.u32 2131351028, %v5219
    %v5226 = vor.u32 %v5224, %v5225
    %v5227 = vshll.u32 2131351028, %v5218
    %v5228 = vshrl.u32 2102212464, %v5219
    %v5229 = vor.u32 %v5227, %v5228
    %v5230 = vshll.u32 2102212464, %v5218
    %v5231 = vshrl.u32 920167782, %v5219
    %v5232 = vor.u32 %v5230, %v5231
    %v5233 = vshll.u32 920167782, %v5218
    %v5234 = vshrl.u32 1326507024, %v5219
    %v5235 = vor.u32 %v5233, %v5234
    %vm5236 = vcmp.lt.s32.totalorder %v5217, 1
    %vm5237 = vcmp.lt.s32.totalorder %v5217, 2
    %vm5238 = vcmp.lt.s32.totalorder %v5217, 3
    %vm5239 = vcmp.lt.s32.totalorder %v5217, 4
    %v5240 = vsel %vm5236, %v5220, %v5223
    %v5241 = vsel %vm5239, %v5229, 2102212464
    %v5242 = vsel %vm5238, %v5226, %v5241
    %v5243 = vsel %vm5237, %v5240, %v5242
    %v5244 = vsel %vm5236, %v5223, %v5226
    %v5245 = vsel %vm5239, %v5232, 920167782
    %v5246 = vsel %vm5238, %v5229, %v5245
    %v5247 = vsel %vm5237, %v5244, %v5246
    %v5248 = vsel %vm5236, %v5226, %v5229
    %v5249 = vsel %vm5239, %v5235, 1326507024
    %v5250 = vsel %vm5238, %v5232, %v5249
    %v5251 = vsel %vm5237, %v5248, %v5250
    %v5252 = vshll.u32 %v5212, 8
    %v5253 = vmul.u32.u64.compose %v5252, %v5251
    %v5254 = vextract.low.u32 %v5253
    %v5255 = vextract.high.u32 %v5253
    %v5256 = vmul.u32.u64.compose %v5252, %v5247
    %v5257 = vextract.low.u32 %v5256
    %v5258 = vextract.high.u32 %v5256
    %v5259 = vmul.u32 %v5252, %v5243
    %v5260 = vadd.s32 %v5255, %v5257
    %vm5261 = vc.u32 %v5255, %v5257
    %v5262 = vadd.s32 %v5258, 1
    %v5263 = vsel %vm5261, %v5262, %v5258
    %v5264 = vadd.s32 %v5259, %v5263
    %v5265 = vadd.s32 %v5264, 536870912
    %v5266 = vshrl.u32 %v5265, 30
    %v5267 = vshll.u32 %v5266, 30
    %v5268 = vsub.s32 %v5264, %v5267
    %vm5269 = vcmp.lt.s32.totalorder %v5268, 0
    %v5270 = vsub.s32 0, %v5268
    %v5271 = vsel %vm5269, %v5270, %v5268
    %v5272 = vclz %v5271
    %v5273 = vsub.s32 %v5272, 2
    %vm5274 = vcmp.gt.s32.totalorder 0, %v5273
    %v5275 = vsel %vm5274, 0, %v5273
    %v5276 = vsub.s32 32, %v5275
    %v5277 = vshll.u32 %v5268, %v5275
    %v5278 = vshrl.u32 %v5260, %v5276
    %v5279 = vor.u32 %v5277, %v5278
    %v5280 = vsub.s32 4294967266, %v5275
    %v5281 = vadd.s32 %v5280, 127
    %v5282 = vshll.u32 %v5281, 23
    %v5283 = vor.u32 4788187, %v5282
    %v5284 = vand.u32 2147483647, %v5283
    %v5286 = vcvt.s32.f32 %v5279
    %v5287 = vmul.f32 %v5286, %v5284
    %v5288 = vxor.u32 %v5287, 2147483648
    %v5289 = vsel %vm5206, %v5288, %v5287
    %v5290 = vsub.s32 4, %v5266
    %v5291 = vsel %vm5206, %v5290, %v5266
    %v5292 = vsel %vm5205, %v658, %v5289
    %v5293 = vsel %vm5205, 0, %v5291
    %v5294 = vcosq.f32.pop %v5292
    %v5295 = vsinq.f32.pop %v5292
    %vm5296 = vweird.f32 %v658
    %v5297 = vand.u32 %v5293, 3
    %vm5298 = vcmp.lt.s32.totalorder %v5297, 2
    %vm5299 = vcmp.eq.s32.totalorder %v5297, 0
    %v5300 = vxor.u32 %v5295, 2147483648
    %v5301 = vsel %vm5299, %v5294, %v5300
    %vm5302 = vcmp.eq.s32.totalorder %v5297, 2
    %v5303 = vxor.u32 %v5294, 2147483648
    %v5304 = vsel %vm5302, %v5303, %v5295
    %v5305 = vsel %vm5298, %v5301, %v5304
    %v5306 = vsel %vm5296, nan, %v5305
    %v5307 = vand.u32 2147483647, %v659
    %vm5308 = vcmp.le.f32.partialorder %v5307, 0.7853982
    %vm5309 = vcmp.lt.s32.totalorder %v659, 0
    %v5310 = vand.u32 %v659, 2139095040
    %v5311 = vshrl.u32 %v5310, 23
    %v5312 = vsub.s32 %v5311, 127
    %v5313 = vand.u32 2147483647, %v659
    %v5314 = vand.u32 %v5313, 8388607
    %v5315 = vor.u32 %v5314, 8388608
    %v5316 = vsub.s32 0, %v5315
    %v5317 = vadd.s32 %v5312, 1
    %vm5318 = vcmp.gt.s32.totalorder %v5317, 0
    %v5319 = vsel %vm5318, %v5317, 0
    %v5320 = vshrl.u32 %v5319, 5
    %v5321 = vand.u32 %v5319, 31
    %v5322 = vsub.s32 32, %v5321
    %v5323 = vshrl.u32 683565275, %v5322
    %v5324 = vshll.u32 683565275, %v5321
    %v5325 = vshrl.u32 2475754826, %v5322
    %v5326 = vor.u32 %v5324, %v5325
    %v5327 = vshll.u32 2475754826, %v5321
    %v5328 = vshrl.u32 2131351028, %v5322
    %v5329 = vor.u32 %v5327, %v5328
    %v5330 = vshll.u32 2131351028, %v5321
    %v5331 = vshrl.u32 2102212464, %v5322
    %v5332 = vor.u32 %v5330, %v5331
    %v5333 = vshll.u32 2102212464, %v5321
    %v5334 = vshrl.u32 920167782, %v5322
    %v5335 = vor.u32 %v5333, %v5334
    %v5336 = vshll.u32 920167782, %v5321
    %v5337 = vshrl.u32 1326507024, %v5322
    %v5338 = vor.u32 %v5336, %v5337
    %vm5339 = vcmp.lt.s32.totalorder %v5320, 1
    %vm5340 = vcmp.lt.s32.totalorder %v5320, 2
    %vm5341 = vcmp.lt.s32.totalorder %v5320, 3
    %vm5342 = vcmp.lt.s32.totalorder %v5320, 4
    %v5343 = vsel %vm5339, %v5323, %v5326
    %v5344 = vsel %vm5342, %v5332, 2102212464
    %v5345 = vsel %vm5341, %v5329, %v5344
    %v5346 = vsel %vm5340, %v5343, %v5345
    %v5347 = vsel %vm5339, %v5326, %v5329
    %v5348 = vsel %vm5342, %v5335, 920167782
    %v5349 = vsel %vm5341, %v5332, %v5348
    %v5350 = vsel %vm5340, %v5347, %v5349
    %v5351 = vsel %vm5339, %v5329, %v5332
    %v5352 = vsel %vm5342, %v5338, 1326507024
    %v5353 = vsel %vm5341, %v5335, %v5352
    %v5354 = vsel %vm5340, %v5351, %v5353
    %v5355 = vshll.u32 %v5315, 8
    %v5356 = vmul.u32.u64.compose %v5355, %v5354
    %v5357 = vextract.low.u32 %v5356
    %v5358 = vextract.high.u32 %v5356
    %v5359 = vmul.u32.u64.compose %v5355, %v5350
    %v5360 = vextract.low.u32 %v5359
    %v5361 = vextract.high.u32 %v5359
    %v5362 = vmul.u32 %v5355, %v5346
    %v5363 = vadd.s32 %v5358, %v5360
    %vm5364 = vc.u32 %v5358, %v5360
    %v5365 = vadd.s32 %v5361, 1
    %v5366 = vsel %vm5364, %v5365, %v5361
    %v5367 = vadd.s32 %v5362, %v5366
    %v5368 = vadd.s32 %v5367, 536870912
    %v5369 = vshrl.u32 %v5368, 30
    %v5370 = vshll.u32 %v5369, 30
    %v5371 = vsub.s32 %v5367, %v5370
    %vm5372 = vcmp.lt.s32.totalorder %v5371, 0
    %v5373 = vsub.s32 0, %v5371
    %v5374 = vsel %vm5372, %v5373, %v5371
    %v5375 = vclz %v5374
    %v5376 = vsub.s32 %v5375, 2
    %vm5377 = vcmp.gt.s32.totalorder 0, %v5376
    %v5378 = vsel %vm5377, 0, %v5376
    %v5379 = vsub.s32 32, %v5378
    %v5380 = vshll.u32 %v5371, %v5378
    %v5381 = vshrl.u32 %v5363, %v5379
    %v5382 = vor.u32 %v5380, %v5381
    %v5383 = vsub.s32 4294967266, %v5378
    %v5384 = vadd.s32 %v5383, 127
    %v5385 = vshll.u32 %v5384, 23
    %v5386 = vor.u32 4788187, %v5385
    %v5387 = vand.u32 2147483647, %v5386
    %v5389 = vcvt.s32.f32 %v5382
    %v5390 = vmul.f32 %v5389, %v5387
    %v5391 = vxor.u32 %v5390, 2147483648
    %v5392 = vsel %vm5309, %v5391, %v5390
    %v5393 = vsub.s32 4, %v5369
    %v5394 = vsel %vm5309, %v5393, %v5369
    %v5395 = vsel %vm5308, %v659, %v5392
    %v5396 = vsel %vm5308, 0, %v5394
    %v5397 = vcosq.f32.pop %v5395
    %v5398 = vsinq.f32.pop %v5395
    %vm5399 = vweird.f32 %v659
    %v5400 = vand.u32 %v5396, 3
    %vm5401 = vcmp.lt.s32.totalorder %v5400, 2
    %vm5402 = vcmp.eq.s32.totalorder %v5400, 0
    %v5403 = vxor.u32 %v5398, 2147483648
    %v5404 = vsel %vm5402, %v5397, %v5403
    %vm5405 = vcmp.eq.s32.totalorder %v5400, 2
    %v5406 = vxor.u32 %v5397, 2147483648
    %v5407 = vsel %vm5405, %v5406, %v5398
    %v5408 = vsel %vm5401, %v5404, %v5407
    %v5409 = vsel %vm5399, nan, %v5408
    %v5410 = vand.u32 2147483647, %v660
    %vm5411 = vcmp.le.f32.partialorder %v5410, 0.7853982
    %vm5412 = vcmp.lt.s32.totalorder %v660, 0
    %v5413 = vand.u32 %v660, 2139095040
    %v5414 = vshrl.u32 %v5413, 23
    %v5415 = vsub.s32 %v5414, 127
    %v5416 = vand.u32 2147483647, %v660
    %v5417 = vand.u32 %v5416, 8388607
    %v5418 = vor.u32 %v5417, 8388608
    %v5419 = vsub.s32 0, %v5418
    %v5420 = vadd.s32 %v5415, 1
    %vm5421 = vcmp.gt.s32.totalorder %v5420, 0
    %v5422 = vsel %vm5421, %v5420, 0
    %v5423 = vshrl.u32 %v5422, 5
    %v5424 = vand.u32 %v5422, 31
    %v5425 = vsub.s32 32, %v5424
    %v5426 = vshrl.u32 683565275, %v5425
    %v5427 = vshll.u32 683565275, %v5424
    %v5428 = vshrl.u32 2475754826, %v5425
    %v5429 = vor.u32 %v5427, %v5428
    %v5430 = vshll.u32 2475754826, %v5424
    %v5431 = vshrl.u32 2131351028, %v5425
    %v5432 = vor.u32 %v5430, %v5431
    %v5433 = vshll.u32 2131351028, %v5424
    %v5434 = vshrl.u32 2102212464, %v5425
    %v5435 = vor.u32 %v5433, %v5434
    %v5436 = vshll.u32 2102212464, %v5424
    %v5437 = vshrl.u32 920167782, %v5425
    %v5438 = vor.u32 %v5436, %v5437
    %v5439 = vshll.u32 920167782, %v5424
    %v5440 = vshrl.u32 1326507024, %v5425
    %v5441 = vor.u32 %v5439, %v5440
    %vm5442 = vcmp.lt.s32.totalorder %v5423, 1
    %vm5443 = vcmp.lt.s32.totalorder %v5423, 2
    %vm5444 = vcmp.lt.s32.totalorder %v5423, 3
    %vm5445 = vcmp.lt.s32.totalorder %v5423, 4
    %v5446 = vsel %vm5442, %v5426, %v5429
    %v5447 = vsel %vm5445, %v5435, 2102212464
    %v5448 = vsel %vm5444, %v5432, %v5447
    %v5449 = vsel %vm5443, %v5446, %v5448
    %v5450 = vsel %vm5442, %v5429, %v5432
    %v5451 = vsel %vm5445, %v5438, 920167782
    %v5452 = vsel %vm5444, %v5435, %v5451
    %v5453 = vsel %vm5443, %v5450, %v5452
    %v5454 = vsel %vm5442, %v5432, %v5435
    %v5455 = vsel %vm5445, %v5441, 1326507024
    %v5456 = vsel %vm5444, %v5438, %v5455
    %v5457 = vsel %vm5443, %v5454, %v5456
    %v5458 = vshll.u32 %v5418, 8
    %v5459 = vmul.u32.u64.compose %v5458, %v5457
    %v5460 = vextract.low.u32 %v5459
    %v5461 = vextract.high.u32 %v5459
    %v5462 = vmul.u32.u64.compose %v5458, %v5453
    %v5463 = vextract.low.u32 %v5462
    %v5464 = vextract.high.u32 %v5462
    %v5465 = vmul.u32 %v5458, %v5449
    %v5466 = vadd.s32 %v5461, %v5463
    %vm5467 = vc.u32 %v5461, %v5463
    %v5468 = vadd.s32 %v5464, 1
    %v5469 = vsel %vm5467, %v5468, %v5464
    %v5470 = vadd.s32 %v5465, %v5469
    %v5471 = vadd.s32 %v5470, 536870912
    %v5472 = vshrl.u32 %v5471, 30
    %v5473 = vshll.u32 %v5472, 30
    %v5474 = vsub.s32 %v5470, %v5473
    %vm5475 = vcmp.lt.s32.totalorder %v5474, 0
    %v5476 = vsub.s32 0, %v5474
    %v5477 = vsel %vm5475, %v5476, %v5474
    %v5478 = vclz %v5477
    %v5479 = vsub.s32 %v5478, 2
    %vm5480 = vcmp.gt.s32.totalorder 0, %v5479
    %v5481 = vsel %vm5480, 0, %v5479
    %v5482 = vsub.s32 32, %v5481
    %v5483 = vshll.u32 %v5474, %v5481
    %v5484 = vshrl.u32 %v5466, %v5482
    %v5485 = vor.u32 %v5483, %v5484
    %v5486 = vsub.s32 4294967266, %v5481
    %v5487 = vadd.s32 %v5486, 127
    %v5488 = vshll.u32 %v5487, 23
    %v5489 = vor.u32 4788187, %v5488
    %v5490 = vand.u32 2147483647, %v5489
    %v5492 = vcvt.s32.f32 %v5485
    %v5493 = vmul.f32 %v5492, %v5490
    %v5494 = vxor.u32 %v5493, 2147483648
    %v5495 = vsel %vm5412, %v5494, %v5493
    %v5496 = vsub.s32 4, %v5472
    %v5497 = vsel %vm5412, %v5496, %v5472
    %v5498 = vsel %vm5411, %v660, %v5495
    %v5499 = vsel %vm5411, 0, %v5497
    %v5500 = vcosq.f32.pop %v5498
    %v5501 = vsinq.f32.pop %v5498
    %vm5502 = vweird.f32 %v660
    %v5503 = vand.u32 %v5499, 3
    %vm5504 = vcmp.lt.s32.totalorder %v5503, 2
    %vm5505 = vcmp.eq.s32.totalorder %v5503, 0
    %v5506 = vxor.u32 %v5501, 2147483648
    %v5507 = vsel %vm5505, %v5500, %v5506
    %vm5508 = vcmp.eq.s32.totalorder %v5503, 2
    %v5509 = vxor.u32 %v5500, 2147483648
    %v5510 = vsel %vm5508, %v5509, %v5501
    %v5511 = vsel %vm5504, %v5507, %v5510
    %v5512 = vsel %vm5502, nan, %v5511
    %v5513 = vand.u32 2147483647, %v661
    %vm5514 = vcmp.le.f32.partialorder %v5513, 0.7853982
    %vm5515 = vcmp.lt.s32.totalorder %v661, 0
    %v5516 = vand.u32 %v661, 2139095040
    %v5517 = vshrl.u32 %v5516, 23
    %v5518 = vsub.s32 %v5517, 127
    %v5519 = vand.u32 2147483647, %v661
    %v5520 = vand.u32 %v5519, 8388607
    %v5521 = vor.u32 %v5520, 8388608
    %v5522 = vsub.s32 0, %v5521
    %v5523 = vadd.s32 %v5518, 1
    %vm5524 = vcmp.gt.s32.totalorder %v5523, 0
    %v5525 = vsel %vm5524, %v5523, 0
    %v5526 = vshrl.u32 %v5525, 5
    %v5527 = vand.u32 %v5525, 31
    %v5528 = vsub.s32 32, %v5527
    %v5529 = vshrl.u32 683565275, %v5528
    %v5530 = vshll.u32 683565275, %v5527
    %v5531 = vshrl.u32 2475754826, %v5528
    %v5532 = vor.u32 %v5530, %v5531
    %v5533 = vshll.u32 2475754826, %v5527
    %v5534 = vshrl.u32 2131351028, %v5528
    %v5535 = vor.u32 %v5533, %v5534
    %v5536 = vshll.u32 2131351028, %v5527
    %v5537 = vshrl.u32 2102212464, %v5528
    %v5538 = vor.u32 %v5536, %v5537
    %v5539 = vshll.u32 2102212464, %v5527
    %v5540 = vshrl.u32 920167782, %v5528
    %v5541 = vor.u32 %v5539, %v5540
    %v5542 = vshll.u32 920167782, %v5527
    %v5543 = vshrl.u32 1326507024, %v5528
    %v5544 = vor.u32 %v5542, %v5543
    %vm5545 = vcmp.lt.s32.totalorder %v5526, 1
    %vm5546 = vcmp.lt.s32.totalorder %v5526, 2
    %vm5547 = vcmp.lt.s32.totalorder %v5526, 3
    %vm5548 = vcmp.lt.s32.totalorder %v5526, 4
    %v5549 = vsel %vm5545, %v5529, %v5532
    %v5550 = vsel %vm5548, %v5538, 2102212464
    %v5551 = vsel %vm5547, %v5535, %v5550
    %v5552 = vsel %vm5546, %v5549, %v5551
    %v5553 = vsel %vm5545, %v5532, %v5535
    %v5554 = vsel %vm5548, %v5541, 920167782
    %v5555 = vsel %vm5547, %v5538, %v5554
    %v5556 = vsel %vm5546, %v5553, %v5555
    %v5557 = vsel %vm5545, %v5535, %v5538
    %v5558 = vsel %vm5548, %v5544, 1326507024
    %v5559 = vsel %vm5547, %v5541, %v5558
    %v5560 = vsel %vm5546, %v5557, %v5559
    %v5561 = vshll.u32 %v5521, 8
    %v5562 = vmul.u32.u64.compose %v5561, %v5560
    %v5563 = vextract.low.u32 %v5562
    %v5564 = vextract.high.u32 %v5562
    %v5565 = vmul.u32.u64.compose %v5561, %v5556
    %v5566 = vextract.low.u32 %v5565
    %v5567 = vextract.high.u32 %v5565
    %v5568 = vmul.u32 %v5561, %v5552
    %v5569 = vadd.s32 %v5564, %v5566
    %vm5570 = vc.u32 %v5564, %v5566
    %v5571 = vadd.s32 %v5567, 1
    %v5572 = vsel %vm5570, %v5571, %v5567
    %v5573 = vadd.s32 %v5568, %v5572
    %v5574 = vadd.s32 %v5573, 536870912
    %v5575 = vshrl.u32 %v5574, 30
    %v5576 = vshll.u32 %v5575, 30
    %v5577 = vsub.s32 %v5573, %v5576
    %vm5578 = vcmp.lt.s32.totalorder %v5577, 0
    %v5579 = vsub.s32 0, %v5577
    %v5580 = vsel %vm5578, %v5579, %v5577
    %v5581 = vclz %v5580
    %v5582 = vsub.s32 %v5581, 2
    %vm5583 = vcmp.gt.s32.totalorder 0, %v5582
    %v5584 = vsel %vm5583, 0, %v5582
    %v5585 = vsub.s32 32, %v5584
    %v5586 = vshll.u32 %v5577, %v5584
    %v5587 = vshrl.u32 %v5569, %v5585
    %v5588 = vor.u32 %v5586, %v5587
    %v5589 = vsub.s32 4294967266, %v5584
    %v5590 = vadd.s32 %v5589, 127
    %v5591 = vshll.u32 %v5590, 23
    %v5592 = vor.u32 4788187, %v5591
    %v5593 = vand.u32 2147483647, %v5592
    %v5595 = vcvt.s32.f32 %v5588
    %v5596 = vmul.f32 %v5595, %v5593
    %v5597 = vxor.u32 %v5596, 2147483648
    %v5598 = vsel %vm5515, %v5597, %v5596
    %v5599 = vsub.s32 4, %v5575
    %v5600 = vsel %vm5515, %v5599, %v5575
    %v5601 = vsel %vm5514, %v661, %v5598
    %v5602 = vsel %vm5514, 0, %v5600
    %v5603 = vcosq.f32.pop %v5601
    %v5604 = vsinq.f32.pop %v5601
    %vm5605 = vweird.f32 %v661
    %v5606 = vand.u32 %v5602, 3
    %vm5607 = vcmp.lt.s32.totalorder %v5606, 2
    %vm5608 = vcmp.eq.s32.totalorder %v5606, 0
    %v5609 = vxor.u32 %v5604, 2147483648
    %v5610 = vsel %vm5608, %v5603, %v5609
    %vm5611 = vcmp.eq.s32.totalorder %v5606, 2
    %v5612 = vxor.u32 %v5603, 2147483648
    %v5613 = vsel %vm5611, %v5612, %v5604
    %v5614 = vsel %vm5607, %v5610, %v5613
    %v5615 = vsel %vm5605, nan, %v5614
    %v5616 = vand.u32 2147483647, %v662
    %vm5617 = vcmp.le.f32.partialorder %v5616, 0.7853982
    %vm5618 = vcmp.lt.s32.totalorder %v662, 0
    %v5619 = vand.u32 %v662, 2139095040
    %v5620 = vshrl.u32 %v5619, 23
    %v5621 = vsub.s32 %v5620, 127
    %v5622 = vand.u32 2147483647, %v662
    %v5623 = vand.u32 %v5622, 8388607
    %v5624 = vor.u32 %v5623, 8388608
    %v5625 = vsub.s32 0, %v5624
    %v5626 = vadd.s32 %v5621, 1
    %vm5627 = vcmp.gt.s32.totalorder %v5626, 0
    %v5628 = vsel %vm5627, %v5626, 0
    %v5629 = vshrl.u32 %v5628, 5
    %v5630 = vand.u32 %v5628, 31
    %v5631 = vsub.s32 32, %v5630
    %v5632 = vshrl.u32 683565275, %v5631
    %v5633 = vshll.u32 683565275, %v5630
    %v5634 = vshrl.u32 2475754826, %v5631
    %v5635 = vor.u32 %v5633, %v5634
    %v5636 = vshll.u32 2475754826, %v5630
    %v5637 = vshrl.u32 2131351028, %v5631
    %v5638 = vor.u32 %v5636, %v5637
    %v5639 = vshll.u32 2131351028, %v5630
    %v5640 = vshrl.u32 2102212464, %v5631
    %v5641 = vor.u32 %v5639, %v5640
    %v5642 = vshll.u32 2102212464, %v5630
    %v5643 = vshrl.u32 920167782, %v5631
    %v5644 = vor.u32 %v5642, %v5643
    %v5645 = vshll.u32 920167782, %v5630
    %v5646 = vshrl.u32 1326507024, %v5631
    %v5647 = vor.u32 %v5645, %v5646
    %vm5648 = vcmp.lt.s32.totalorder %v5629, 1
    %vm5649 = vcmp.lt.s32.totalorder %v5629, 2
    %vm5650 = vcmp.lt.s32.totalorder %v5629, 3
    %vm5651 = vcmp.lt.s32.totalorder %v5629, 4
    %v5652 = vsel %vm5648, %v5632, %v5635
    %v5653 = vsel %vm5651, %v5641, 2102212464
    %v5654 = vsel %vm5650, %v5638, %v5653
    %v5655 = vsel %vm5649, %v5652, %v5654
    %v5656 = vsel %vm5648, %v5635, %v5638
    %v5657 = vsel %vm5651, %v5644, 920167782
    %v5658 = vsel %vm5650, %v5641, %v5657
    %v5659 = vsel %vm5649, %v5656, %v5658
    %v5660 = vsel %vm5648, %v5638, %v5641
    %v5661 = vsel %vm5651, %v5647, 1326507024
    %v5662 = vsel %vm5650, %v5644, %v5661
    %v5663 = vsel %vm5649, %v5660, %v5662
    %v5664 = vshll.u32 %v5624, 8
    %v5665 = vmul.u32.u64.compose %v5664, %v5663
    %v5666 = vextract.low.u32 %v5665
    %v5667 = vextract.high.u32 %v5665
    %v5668 = vmul.u32.u64.compose %v5664, %v5659
    %v5669 = vextract.low.u32 %v5668
    %v5670 = vextract.high.u32 %v5668
    %v5671 = vmul.u32 %v5664, %v5655
    %v5672 = vadd.s32 %v5667, %v5669
    %vm5673 = vc.u32 %v5667, %v5669
    %v5674 = vadd.s32 %v5670, 1
    %v5675 = vsel %vm5673, %v5674, %v5670
    %v5676 = vadd.s32 %v5671, %v5675
    %v5677 = vadd.s32 %v5676, 536870912
    %v5678 = vshrl.u32 %v5677, 30
    %v5679 = vshll.u32 %v5678, 30
    %v5680 = vsub.s32 %v5676, %v5679
    %vm5681 = vcmp.lt.s32.totalorder %v5680, 0
    %v5682 = vsub.s32 0, %v5680
    %v5683 = vsel %vm5681, %v5682, %v5680
    %v5684 = vclz %v5683
    %v5685 = vsub.s32 %v5684, 2
    %vm5686 = vcmp.gt.s32.totalorder 0, %v5685
    %v5687 = vsel %vm5686, 0, %v5685
    %v5688 = vsub.s32 32, %v5687
    %v5689 = vshll.u32 %v5680, %v5687
    %v5690 = vshrl.u32 %v5672, %v5688
    %v5691 = vor.u32 %v5689, %v5690
    %v5692 = vsub.s32 4294967266, %v5687
    %v5693 = vadd.s32 %v5692, 127
    %v5694 = vshll.u32 %v5693, 23
    %v5695 = vor.u32 4788187, %v5694
    %v5696 = vand.u32 2147483647, %v5695
    %v5698 = vcvt.s32.f32 %v5691
    %v5699 = vmul.f32 %v5698, %v5696
    %v5700 = vxor.u32 %v5699, 2147483648
    %v5701 = vsel %vm5618, %v5700, %v5699
    %v5702 = vsub.s32 4, %v5678
    %v5703 = vsel %vm5618, %v5702, %v5678
    %v5704 = vsel %vm5617, %v662, %v5701
    %v5705 = vsel %vm5617, 0, %v5703
    %v5706 = vcosq.f32.pop %v5704
    %v5707 = vsinq.f32.pop %v5704
    %vm5708 = vweird.f32 %v662
    %v5709 = vand.u32 %v5705, 3
    %vm5710 = vcmp.lt.s32.totalorder %v5709, 2
    %vm5711 = vcmp.eq.s32.totalorder %v5709, 0
    %v5712 = vxor.u32 %v5707, 2147483648
    %v5713 = vsel %vm5711, %v5706, %v5712
    %vm5714 = vcmp.eq.s32.totalorder %v5709, 2
    %v5715 = vxor.u32 %v5706, 2147483648
    %v5716 = vsel %vm5714, %v5715, %v5707
    %v5717 = vsel %vm5710, %v5713, %v5716
    %v5718 = vsel %vm5708, nan, %v5717
    %v5719 = vand.u32 2147483647, %v663
    %vm5720 = vcmp.le.f32.partialorder %v5719, 0.7853982
    %vm5721 = vcmp.lt.s32.totalorder %v663, 0
    %v5722 = vand.u32 %v663, 2139095040
    %v5723 = vshrl.u32 %v5722, 23
    %v5724 = vsub.s32 %v5723, 127
    %v5725 = vand.u32 2147483647, %v663
    %v5726 = vand.u32 %v5725, 8388607
    %v5727 = vor.u32 %v5726, 8388608
    %v5728 = vsub.s32 0, %v5727
    %v5729 = vadd.s32 %v5724, 1
    %vm5730 = vcmp.gt.s32.totalorder %v5729, 0
    %v5731 = vsel %vm5730, %v5729, 0
    %v5732 = vshrl.u32 %v5731, 5
    %v5733 = vand.u32 %v5731, 31
    %v5734 = vsub.s32 32, %v5733
    %v5735 = vshrl.u32 683565275, %v5734
    %v5736 = vshll.u32 683565275, %v5733
    %v5737 = vshrl.u32 2475754826, %v5734
    %v5738 = vor.u32 %v5736, %v5737
    %v5739 = vshll.u32 2475754826, %v5733
    %v5740 = vshrl.u32 2131351028, %v5734
    %v5741 = vor.u32 %v5739, %v5740
    %v5742 = vshll.u32 2131351028, %v5733
    %v5743 = vshrl.u32 2102212464, %v5734
    %v5744 = vor.u32 %v5742, %v5743
    %v5745 = vshll.u32 2102212464, %v5733
    %v5746 = vshrl.u32 920167782, %v5734
    %v5747 = vor.u32 %v5745, %v5746
    %v5748 = vshll.u32 920167782, %v5733
    %v5749 = vshrl.u32 1326507024, %v5734
    %v5750 = vor.u32 %v5748, %v5749
    %vm5751 = vcmp.lt.s32.totalorder %v5732, 1
    %vm5752 = vcmp.lt.s32.totalorder %v5732, 2
    %vm5753 = vcmp.lt.s32.totalorder %v5732, 3
    %vm5754 = vcmp.lt.s32.totalorder %v5732, 4
    %v5755 = vsel %vm5751, %v5735, %v5738
    %v5756 = vsel %vm5754, %v5744, 2102212464
    %v5757 = vsel %vm5753, %v5741, %v5756
    %v5758 = vsel %vm5752, %v5755, %v5757
    %v5759 = vsel %vm5751, %v5738, %v5741
    %v5760 = vsel %vm5754, %v5747, 920167782
    %v5761 = vsel %vm5753, %v5744, %v5760
    %v5762 = vsel %vm5752, %v5759, %v5761
    %v5763 = vsel %vm5751, %v5741, %v5744
    %v5764 = vsel %vm5754, %v5750, 1326507024
    %v5765 = vsel %vm5753, %v5747, %v5764
    %v5766 = vsel %vm5752, %v5763, %v5765
    %v5767 = vshll.u32 %v5727, 8
    %v5768 = vmul.u32.u64.compose %v5767, %v5766
    %v5769 = vextract.low.u32 %v5768
    %v5770 = vextract.high.u32 %v5768
    %v5771 = vmul.u32.u64.compose %v5767, %v5762
    %v5772 = vextract.low.u32 %v5771
    %v5773 = vextract.high.u32 %v5771
    %v5774 = vmul.u32 %v5767, %v5758
    %v5775 = vadd.s32 %v5770, %v5772
    %vm5776 = vc.u32 %v5770, %v5772
    %v5777 = vadd.s32 %v5773, 1
    %v5778 = vsel %vm5776, %v5777, %v5773
    %v5779 = vadd.s32 %v5774, %v5778
    %v5780 = vadd.s32 %v5779, 536870912
    %v5781 = vshrl.u32 %v5780, 30
    %v5782 = vshll.u32 %v5781, 30
    %v5783 = vsub.s32 %v5779, %v5782
    %vm5784 = vcmp.lt.s32.totalorder %v5783, 0
    %v5785 = vsub.s32 0, %v5783
    %v5786 = vsel %vm5784, %v5785, %v5783
    %v5787 = vclz %v5786
    %v5788 = vsub.s32 %v5787, 2
    %vm5789 = vcmp.gt.s32.totalorder 0, %v5788
    %v5790 = vsel %vm5789, 0, %v5788
    %v5791 = vsub.s32 32, %v5790
    %v5792 = vshll.u32 %v5783, %v5790
    %v5793 = vshrl.u32 %v5775, %v5791
    %v5794 = vor.u32 %v5792, %v5793
    %v5795 = vsub.s32 4294967266, %v5790
    %v5796 = vadd.s32 %v5795, 127
    %v5797 = vshll.u32 %v5796, 23
    %v5798 = vor.u32 4788187, %v5797
    %v5799 = vand.u32 2147483647, %v5798
    %v5801 = vcvt.s32.f32 %v5794
    %v5802 = vmul.f32 %v5801, %v5799
    %v5803 = vxor.u32 %v5802, 2147483648
    %v5804 = vsel %vm5721, %v5803, %v5802
    %v5805 = vsub.s32 4, %v5781
    %v5806 = vsel %vm5721, %v5805, %v5781
    %v5807 = vsel %vm5720, %v663, %v5804
    %v5808 = vsel %vm5720, 0, %v5806
    %v5809 = vcosq.f32.pop %v5807
    %v5810 = vsinq.f32.pop %v5807
    %vm5811 = vweird.f32 %v663
    %v5812 = vand.u32 %v5808, 3
    %vm5813 = vcmp.lt.s32.totalorder %v5812, 2
    %vm5814 = vcmp.eq.s32.totalorder %v5812, 0
    %v5815 = vxor.u32 %v5810, 2147483648
    %v5816 = vsel %vm5814, %v5809, %v5815
    %vm5817 = vcmp.eq.s32.totalorder %v5812, 2
    %v5818 = vxor.u32 %v5809, 2147483648
    %v5819 = vsel %vm5817, %v5818, %v5810
    %v5820 = vsel %vm5813, %v5816, %v5819
    %v5821 = vsel %vm5811, nan, %v5820
    %v5822 = vand.u32 2147483647, %v664
    %vm5823 = vcmp.le.f32.partialorder %v5822, 0.7853982
    %vm5824 = vcmp.lt.s32.totalorder %v664, 0
    %v5825 = vand.u32 %v664, 2139095040
    %v5826 = vshrl.u32 %v5825, 23
    %v5827 = vsub.s32 %v5826, 127
    %v5828 = vand.u32 2147483647, %v664
    %v5829 = vand.u32 %v5828, 8388607
    %v5830 = vor.u32 %v5829, 8388608
    %v5831 = vsub.s32 0, %v5830
    %v5832 = vadd.s32 %v5827, 1
    %vm5833 = vcmp.gt.s32.totalorder %v5832, 0
    %v5834 = vsel %vm5833, %v5832, 0
    %v5835 = vshrl.u32 %v5834, 5
    %v5836 = vand.u32 %v5834, 31
    %v5837 = vsub.s32 32, %v5836
    %v5838 = vshrl.u32 683565275, %v5837
    %v5839 = vshll.u32 683565275, %v5836
    %v5840 = vshrl.u32 2475754826, %v5837
    %v5841 = vor.u32 %v5839, %v5840
    %v5842 = vshll.u32 2475754826, %v5836
    %v5843 = vshrl.u32 2131351028, %v5837
    %v5844 = vor.u32 %v5842, %v5843
    %v5845 = vshll.u32 2131351028, %v5836
    %v5846 = vshrl.u32 2102212464, %v5837
    %v5847 = vor.u32 %v5845, %v5846
    %v5848 = vshll.u32 2102212464, %v5836
    %v5849 = vshrl.u32 920167782, %v5837
    %v5850 = vor.u32 %v5848, %v5849
    %v5851 = vshll.u32 920167782, %v5836
    %v5852 = vshrl.u32 1326507024, %v5837
    %v5853 = vor.u32 %v5851, %v5852
    %vm5854 = vcmp.lt.s32.totalorder %v5835, 1
    %vm5855 = vcmp.lt.s32.totalorder %v5835, 2
    %vm5856 = vcmp.lt.s32.totalorder %v5835, 3
    %vm5857 = vcmp.lt.s32.totalorder %v5835, 4
    %v5858 = vsel %vm5854, %v5838, %v5841
    %v5859 = vsel %vm5857, %v5847, 2102212464
    %v5860 = vsel %vm5856, %v5844, %v5859
    %v5861 = vsel %vm5855, %v5858, %v5860
    %v5862 = vsel %vm5854, %v5841, %v5844
    %v5863 = vsel %vm5857, %v5850, 920167782
    %v5864 = vsel %vm5856, %v5847, %v5863
    %v5865 = vsel %vm5855, %v5862, %v5864
    %v5866 = vsel %vm5854, %v5844, %v5847
    %v5867 = vsel %vm5857, %v5853, 1326507024
    %v5868 = vsel %vm5856, %v5850, %v5867
    %v5869 = vsel %vm5855, %v5866, %v5868
    %v5870 = vshll.u32 %v5830, 8
    %v5871 = vmul.u32.u64.compose %v5870, %v5869
    %v5872 = vextract.low.u32 %v5871
    %v5873 = vextract.high.u32 %v5871
    %v5874 = vmul.u32.u64.compose %v5870, %v5865
    %v5875 = vextract.low.u32 %v5874
    %v5876 = vextract.high.u32 %v5874
    %v5877 = vmul.u32 %v5870, %v5861
    %v5878 = vadd.s32 %v5873, %v5875
    %vm5879 = vc.u32 %v5873, %v5875
    %v5880 = vadd.s32 %v5876, 1
    %v5881 = vsel %vm5879, %v5880, %v5876
    %v5882 = vadd.s32 %v5877, %v5881
    %v5883 = vadd.s32 %v5882, 536870912
    %v5884 = vshrl.u32 %v5883, 30
    %v5885 = vshll.u32 %v5884, 30
    %v5886 = vsub.s32 %v5882, %v5885
    %vm5887 = vcmp.lt.s32.totalorder %v5886, 0
    %v5888 = vsub.s32 0, %v5886
    %v5889 = vsel %vm5887, %v5888, %v5886
    %v5890 = vclz %v5889
    %v5891 = vsub.s32 %v5890, 2
    %vm5892 = vcmp.gt.s32.totalorder 0, %v5891
    %v5893 = vsel %vm5892, 0, %v5891
    %v5894 = vsub.s32 32, %v5893
    %v5895 = vshll.u32 %v5886, %v5893
    %v5896 = vshrl.u32 %v5878, %v5894
    %v5897 = vor.u32 %v5895, %v5896
    %v5898 = vsub.s32 4294967266, %v5893
    %v5899 = vadd.s32 %v5898, 127
    %v5900 = vshll.u32 %v5899, 23
    %v5901 = vor.u32 4788187, %v5900
    %v5902 = vand.u32 2147483647, %v5901
    %v5904 = vcvt.s32.f32 %v5897
    %v5905 = vmul.f32 %v5904, %v5902
    %v5906 = vxor.u32 %v5905, 2147483648
    %v5907 = vsel %vm5824, %v5906, %v5905
    %v5908 = vsub.s32 4, %v5884
    %v5909 = vsel %vm5824, %v5908, %v5884
    %v5910 = vsel %vm5823, %v664, %v5907
    %v5911 = vsel %vm5823, 0, %v5909
    %v5912 = vcosq.f32.pop %v5910
    %v5913 = vsinq.f32.pop %v5910
    %vm5914 = vweird.f32 %v664
    %v5915 = vand.u32 %v5911, 3
    %vm5916 = vcmp.lt.s32.totalorder %v5915, 2
    %vm5917 = vcmp.eq.s32.totalorder %v5915, 0
    %v5918 = vxor.u32 %v5913, 2147483648
    %v5919 = vsel %vm5917, %v5912, %v5918
    %vm5920 = vcmp.eq.s32.totalorder %v5915, 2
    %v5921 = vxor.u32 %v5912, 2147483648
    %v5922 = vsel %vm5920, %v5921, %v5913
    %v5923 = vsel %vm5916, %v5919, %v5922
    %v5924 = vsel %vm5914, nan, %v5923
    %v5925 = vand.u32 2147483647, %v665
    %vm5926 = vcmp.le.f32.partialorder %v5925, 0.7853982
    %vm5927 = vcmp.lt.s32.totalorder %v665, 0
    %v5928 = vand.u32 %v665, 2139095040
    %v5929 = vshrl.u32 %v5928, 23
    %v5930 = vsub.s32 %v5929, 127
    %v5931 = vand.u32 2147483647, %v665
    %v5932 = vand.u32 %v5931, 8388607
    %v5933 = vor.u32 %v5932, 8388608
    %v5934 = vsub.s32 0, %v5933
    %v5935 = vadd.s32 %v5930, 1
    %vm5936 = vcmp.gt.s32.totalorder %v5935, 0
    %v5937 = vsel %vm5936, %v5935, 0
    %v5938 = vshrl.u32 %v5937, 5
    %v5939 = vand.u32 %v5937, 31
    %v5940 = vsub.s32 32, %v5939
    %v5941 = vshrl.u32 683565275, %v5940
    %v5942 = vshll.u32 683565275, %v5939
    %v5943 = vshrl.u32 2475754826, %v5940
    %v5944 = vor.u32 %v5942, %v5943
    %v5945 = vshll.u32 2475754826, %v5939
    %v5946 = vshrl.u32 2131351028, %v5940
    %v5947 = vor.u32 %v5945, %v5946
    %v5948 = vshll.u32 2131351028, %v5939
    %v5949 = vshrl.u32 2102212464, %v5940
    %v5950 = vor.u32 %v5948, %v5949
    %v5951 = vshll.u32 2102212464, %v5939
    %v5952 = vshrl.u32 920167782, %v5940
    %v5953 = vor.u32 %v5951, %v5952
    %v5954 = vshll.u32 920167782, %v5939
    %v5955 = vshrl.u32 1326507024, %v5940
    %v5956 = vor.u32 %v5954, %v5955
    %vm5957 = vcmp.lt.s32.totalorder %v5938, 1
    %vm5958 = vcmp.lt.s32.totalorder %v5938, 2
    %vm5959 = vcmp.lt.s32.totalorder %v5938, 3
    %vm5960 = vcmp.lt.s32.totalorder %v5938, 4
    %v5961 = vsel %vm5957, %v5941, %v5944
    %v5962 = vsel %vm5960, %v5950, 2102212464
    %v5963 = vsel %vm5959, %v5947, %v5962
    %v5964 = vsel %vm5958, %v5961, %v5963
    %v5965 = vsel %vm5957, %v5944, %v5947
    %v5966 = vsel %vm5960, %v5953, 920167782
    %v5967 = vsel %vm5959, %v5950, %v5966
    %v5968 = vsel %vm5958, %v5965, %v5967
    %v5969 = vsel %vm5957, %v5947, %v5950
    %v5970 = vsel %vm5960, %v5956, 1326507024
    %v5971 = vsel %vm5959, %v5953, %v5970
    %v5972 = vsel %vm5958, %v5969, %v5971
    %v5973 = vshll.u32 %v5933, 8
    %v5974 = vmul.u32.u64.compose %v5973, %v5972
    %v5975 = vextract.low.u32 %v5974
    %v5976 = vextract.high.u32 %v5974
    %v5977 = vmul.u32.u64.compose %v5973, %v5968
    %v5978 = vextract.low.u32 %v5977
    %v5979 = vextract.high.u32 %v5977
    %v5980 = vmul.u32 %v5973, %v5964
    %v5981 = vadd.s32 %v5976, %v5978
    %vm5982 = vc.u32 %v5976, %v5978
    %v5983 = vadd.s32 %v5979, 1
    %v5984 = vsel %vm5982, %v5983, %v5979
    %v5985 = vadd.s32 %v5980, %v5984
    %v5986 = vadd.s32 %v5985, 536870912
    %v5987 = vshrl.u32 %v5986, 30
    %v5988 = vshll.u32 %v5987, 30
    %v5989 = vsub.s32 %v5985, %v5988
    %vm5990 = vcmp.lt.s32.totalorder %v5989, 0
    %v5991 = vsub.s32 0, %v5989
    %v5992 = vsel %vm5990, %v5991, %v5989
    %v5993 = vclz %v5992
    %v5994 = vsub.s32 %v5993, 2
    %vm5995 = vcmp.gt.s32.totalorder 0, %v5994
    %v5996 = vsel %vm5995, 0, %v5994
    %v5997 = vsub.s32 32, %v5996
    %v5998 = vshll.u32 %v5989, %v5996
    %v5999 = vshrl.u32 %v5981, %v5997
    %v6000 = vor.u32 %v5998, %v5999
    %v6001 = vsub.s32 4294967266, %v5996
    %v6002 = vadd.s32 %v6001, 127
    %v6003 = vshll.u32 %v6002, 23
    %v6004 = vor.u32 4788187, %v6003
    %v6005 = vand.u32 2147483647, %v6004
    %v6007 = vcvt.s32.f32 %v6000
    %v6008 = vmul.f32 %v6007, %v6005
    %v6009 = vxor.u32 %v6008, 2147483648
    %v6010 = vsel %vm5927, %v6009, %v6008
    %v6011 = vsub.s32 4, %v5987
    %v6012 = vsel %vm5927, %v6011, %v5987
    %v6013 = vsel %vm5926, %v665, %v6010
    %v6014 = vsel %vm5926, 0, %v6012
    %v6015 = vcosq.f32.pop %v6013
    %v6016 = vsinq.f32.pop %v6013
    %vm6017 = vweird.f32 %v665
    %v6018 = vand.u32 %v6014, 3
    %vm6019 = vcmp.lt.s32.totalorder %v6018, 2
    %vm6020 = vcmp.eq.s32.totalorder %v6018, 0
    %v6021 = vxor.u32 %v6016, 2147483648
    %v6022 = vsel %vm6020, %v6015, %v6021
    %vm6023 = vcmp.eq.s32.totalorder %v6018, 2
    %v6024 = vxor.u32 %v6015, 2147483648
    %v6025 = vsel %vm6023, %v6024, %v6016
    %v6026 = vsel %vm6019, %v6022, %v6025
    %v6027 = vsel %vm6017, nan, %v6026
    %v6028 = vand.u32 2147483647, %v666
    %vm6029 = vcmp.le.f32.partialorder %v6028, 0.7853982
    %vm6030 = vcmp.lt.s32.totalorder %v666, 0
    %v6031 = vand.u32 %v666, 2139095040
    %v6032 = vshrl.u32 %v6031, 23
    %v6033 = vsub.s32 %v6032, 127
    %v6034 = vand.u32 2147483647, %v666
    %v6035 = vand.u32 %v6034, 8388607
    %v6036 = vor.u32 %v6035, 8388608
    %v6037 = vsub.s32 0, %v6036
    %v6038 = vadd.s32 %v6033, 1
    %vm6039 = vcmp.gt.s32.totalorder %v6038, 0
    %v6040 = vsel %vm6039, %v6038, 0
    %v6041 = vshrl.u32 %v6040, 5
    %v6042 = vand.u32 %v6040, 31
    %v6043 = vsub.s32 32, %v6042
    %v6044 = vshrl.u32 683565275, %v6043
    %v6045 = vshll.u32 683565275, %v6042
    %v6046 = vshrl.u32 2475754826, %v6043
    %v6047 = vor.u32 %v6045, %v6046
    %v6048 = vshll.u32 2475754826, %v6042
    %v6049 = vshrl.u32 2131351028, %v6043
    %v6050 = vor.u32 %v6048, %v6049
    %v6051 = vshll.u32 2131351028, %v6042
    %v6052 = vshrl.u32 2102212464, %v6043
    %v6053 = vor.u32 %v6051, %v6052
    %v6054 = vshll.u32 2102212464, %v6042
    %v6055 = vshrl.u32 920167782, %v6043
    %v6056 = vor.u32 %v6054, %v6055
    %v6057 = vshll.u32 920167782, %v6042
    %v6058 = vshrl.u32 1326507024, %v6043
    %v6059 = vor.u32 %v6057, %v6058
    %vm6060 = vcmp.lt.s32.totalorder %v6041, 1
    %vm6061 = vcmp.lt.s32.totalorder %v6041, 2
    %vm6062 = vcmp.lt.s32.totalorder %v6041, 3
    %vm6063 = vcmp.lt.s32.totalorder %v6041, 4
    %v6064 = vsel %vm6060, %v6044, %v6047
    %v6065 = vsel %vm6063, %v6053, 2102212464
    %v6066 = vsel %vm6062, %v6050, %v6065
    %v6067 = vsel %vm6061, %v6064, %v6066
    %v6068 = vsel %vm6060, %v6047, %v6050
    %v6069 = vsel %vm6063, %v6056, 920167782
    %v6070 = vsel %vm6062, %v6053, %v6069
    %v6071 = vsel %vm6061, %v6068, %v6070
    %v6072 = vsel %vm6060, %v6050, %v6053
    %v6073 = vsel %vm6063, %v6059, 1326507024
    %v6074 = vsel %vm6062, %v6056, %v6073
    %v6075 = vsel %vm6061, %v6072, %v6074
    %v6076 = vshll.u32 %v6036, 8
    %v6077 = vmul.u32.u64.compose %v6076, %v6075
    %v6078 = vextract.low.u32 %v6077
    %v6079 = vextract.high.u32 %v6077
    %v6080 = vmul.u32.u64.compose %v6076, %v6071
    %v6081 = vextract.low.u32 %v6080
    %v6082 = vextract.high.u32 %v6080
    %v6083 = vmul.u32 %v6076, %v6067
    %v6084 = vadd.s32 %v6079, %v6081
    %vm6085 = vc.u32 %v6079, %v6081
    %v6086 = vadd.s32 %v6082, 1
    %v6087 = vsel %vm6085, %v6086, %v6082
    %v6088 = vadd.s32 %v6083, %v6087
    %v6089 = vadd.s32 %v6088, 536870912
    %v6090 = vshrl.u32 %v6089, 30
    %v6091 = vshll.u32 %v6090, 30
    %v6092 = vsub.s32 %v6088, %v6091
    %vm6093 = vcmp.lt.s32.totalorder %v6092, 0
    %v6094 = vsub.s32 0, %v6092
    %v6095 = vsel %vm6093, %v6094, %v6092
    %v6096 = vclz %v6095
    %v6097 = vsub.s32 %v6096, 2
    %vm6098 = vcmp.gt.s32.totalorder 0, %v6097
    %v6099 = vsel %vm6098, 0, %v6097
    %v6100 = vsub.s32 32, %v6099
    %v6101 = vshll.u32 %v6092, %v6099
    %v6102 = vshrl.u32 %v6084, %v6100
    %v6103 = vor.u32 %v6101, %v6102
    %v6104 = vsub.s32 4294967266, %v6099
    %v6105 = vadd.s32 %v6104, 127
    %v6106 = vshll.u32 %v6105, 23
    %v6107 = vor.u32 4788187, %v6106
    %v6108 = vand.u32 2147483647, %v6107
    %v6110 = vcvt.s32.f32 %v6103
    %v6111 = vmul.f32 %v6110, %v6108
    %v6112 = vxor.u32 %v6111, 2147483648
    %v6113 = vsel %vm6030, %v6112, %v6111
    %v6114 = vsub.s32 4, %v6090
    %v6115 = vsel %vm6030, %v6114, %v6090
    %v6116 = vsel %vm6029, %v666, %v6113
    %v6117 = vsel %vm6029, 0, %v6115
    %v6118 = vcosq.f32.pop %v6116
    %v6119 = vsinq.f32.pop %v6116
    %vm6120 = vweird.f32 %v666
    %v6121 = vand.u32 %v6117, 3
    %vm6122 = vcmp.lt.s32.totalorder %v6121, 2
    %vm6123 = vcmp.eq.s32.totalorder %v6121, 0
    %v6124 = vxor.u32 %v6119, 2147483648
    %v6125 = vsel %vm6123, %v6118, %v6124
    %vm6126 = vcmp.eq.s32.totalorder %v6121, 2
    %v6127 = vxor.u32 %v6118, 2147483648
    %v6128 = vsel %vm6126, %v6127, %v6119
    %v6129 = vsel %vm6122, %v6125, %v6128
    %v6130 = vsel %vm6120, nan, %v6129
    %v6131 = vand.u32 2147483647, %v667
    %vm6132 = vcmp.le.f32.partialorder %v6131, 0.7853982
    %vm6133 = vcmp.lt.s32.totalorder %v667, 0
    %v6134 = vand.u32 %v667, 2139095040
    %v6135 = vshrl.u32 %v6134, 23
    %v6136 = vsub.s32 %v6135, 127
    %v6137 = vand.u32 2147483647, %v667
    %v6138 = vand.u32 %v6137, 8388607
    %v6139 = vor.u32 %v6138, 8388608
    %v6140 = vsub.s32 0, %v6139
    %v6141 = vadd.s32 %v6136, 1
    %vm6142 = vcmp.gt.s32.totalorder %v6141, 0
    %v6143 = vsel %vm6142, %v6141, 0
    %v6144 = vshrl.u32 %v6143, 5
    %v6145 = vand.u32 %v6143, 31
    %v6146 = vsub.s32 32, %v6145
    %v6147 = vshrl.u32 683565275, %v6146
    %v6148 = vshll.u32 683565275, %v6145
    %v6149 = vshrl.u32 2475754826, %v6146
    %v6150 = vor.u32 %v6148, %v6149
    %v6151 = vshll.u32 2475754826, %v6145
    %v6152 = vshrl.u32 2131351028, %v6146
    %v6153 = vor.u32 %v6151, %v6152
    %v6154 = vshll.u32 2131351028, %v6145
    %v6155 = vshrl.u32 2102212464, %v6146
    %v6156 = vor.u32 %v6154, %v6155
    %v6157 = vshll.u32 2102212464, %v6145
    %v6158 = vshrl.u32 920167782, %v6146
    %v6159 = vor.u32 %v6157, %v6158
    %v6160 = vshll.u32 920167782, %v6145
    %v6161 = vshrl.u32 1326507024, %v6146
    %v6162 = vor.u32 %v6160, %v6161
    %vm6163 = vcmp.lt.s32.totalorder %v6144, 1
    %vm6164 = vcmp.lt.s32.totalorder %v6144, 2
    %vm6165 = vcmp.lt.s32.totalorder %v6144, 3
    %vm6166 = vcmp.lt.s32.totalorder %v6144, 4
    %v6167 = vsel %vm6163, %v6147, %v6150
    %v6168 = vsel %vm6166, %v6156, 2102212464
    %v6169 = vsel %vm6165, %v6153, %v6168
    %v6170 = vsel %vm6164, %v6167, %v6169
    %v6171 = vsel %vm6163, %v6150, %v6153
    %v6172 = vsel %vm6166, %v6159, 920167782
    %v6173 = vsel %vm6165, %v6156, %v6172
    %v6174 = vsel %vm6164, %v6171, %v6173
    %v6175 = vsel %vm6163, %v6153, %v6156
    %v6176 = vsel %vm6166, %v6162, 1326507024
    %v6177 = vsel %vm6165, %v6159, %v6176
    %v6178 = vsel %vm6164, %v6175, %v6177
    %v6179 = vshll.u32 %v6139, 8
    %v6180 = vmul.u32.u64.compose %v6179, %v6178
    %v6181 = vextract.low.u32 %v6180
    %v6182 = vextract.high.u32 %v6180
    %v6183 = vmul.u32.u64.compose %v6179, %v6174
    %v6184 = vextract.low.u32 %v6183
    %v6185 = vextract.high.u32 %v6183
    %v6186 = vmul.u32 %v6179, %v6170
    %v6187 = vadd.s32 %v6182, %v6184
    %vm6188 = vc.u32 %v6182, %v6184
    %v6189 = vadd.s32 %v6185, 1
    %v6190 = vsel %vm6188, %v6189, %v6185
    %v6191 = vadd.s32 %v6186, %v6190
    %v6192 = vadd.s32 %v6191, 536870912
    %v6193 = vshrl.u32 %v6192, 30
    %v6194 = vshll.u32 %v6193, 30
    %v6195 = vsub.s32 %v6191, %v6194
    %vm6196 = vcmp.lt.s32.totalorder %v6195, 0
    %v6197 = vsub.s32 0, %v6195
    %v6198 = vsel %vm6196, %v6197, %v6195
    %v6199 = vclz %v6198
    %v6200 = vsub.s32 %v6199, 2
    %vm6201 = vcmp.gt.s32.totalorder 0, %v6200
    %v6202 = vsel %vm6201, 0, %v6200
    %v6203 = vsub.s32 32, %v6202
    %v6204 = vshll.u32 %v6195, %v6202
    %v6205 = vshrl.u32 %v6187, %v6203
    %v6206 = vor.u32 %v6204, %v6205
    %v6207 = vsub.s32 4294967266, %v6202
    %v6208 = vadd.s32 %v6207, 127
    %v6209 = vshll.u32 %v6208, 23
    %v6210 = vor.u32 4788187, %v6209
    %v6211 = vand.u32 2147483647, %v6210
    %v6213 = vcvt.s32.f32 %v6206
    %v6214 = vmul.f32 %v6213, %v6211
    %v6215 = vxor.u32 %v6214, 2147483648
    %v6216 = vsel %vm6133, %v6215, %v6214
    %v6217 = vsub.s32 4, %v6193
    %v6218 = vsel %vm6133, %v6217, %v6193
    %v6219 = vsel %vm6132, %v667, %v6216
    %v6220 = vsel %vm6132, 0, %v6218
    %v6221 = vcosq.f32.pop %v6219
    %v6222 = vsinq.f32.pop %v6219
    %vm6223 = vweird.f32 %v667
    %v6224 = vand.u32 %v6220, 3
    %vm6225 = vcmp.lt.s32.totalorder %v6224, 2
    %vm6226 = vcmp.eq.s32.totalorder %v6224, 0
    %v6227 = vxor.u32 %v6222, 2147483648
    %v6228 = vsel %vm6226, %v6221, %v6227
    %vm6229 = vcmp.eq.s32.totalorder %v6224, 2
    %v6230 = vxor.u32 %v6221, 2147483648
    %v6231 = vsel %vm6229, %v6230, %v6222
    %v6232 = vsel %vm6225, %v6228, %v6231
    %v6233 = vsel %vm6223, nan, %v6232
    %v6234 = vand.u32 2147483647, %v668
    %vm6235 = vcmp.le.f32.partialorder %v6234, 0.7853982
    %vm6236 = vcmp.lt.s32.totalorder %v668, 0
    %v6237 = vand.u32 %v668, 2139095040
    %v6238 = vshrl.u32 %v6237, 23
    %v6239 = vsub.s32 %v6238, 127
    %v6240 = vand.u32 2147483647, %v668
    %v6241 = vand.u32 %v6240, 8388607
    %v6242 = vor.u32 %v6241, 8388608
    %v6243 = vsub.s32 0, %v6242
    %v6244 = vadd.s32 %v6239, 1
    %vm6245 = vcmp.gt.s32.totalorder %v6244, 0
    %v6246 = vsel %vm6245, %v6244, 0
    %v6247 = vshrl.u32 %v6246, 5
    %v6248 = vand.u32 %v6246, 31
    %v6249 = vsub.s32 32, %v6248
    %v6250 = vshrl.u32 683565275, %v6249
    %v6251 = vshll.u32 683565275, %v6248
    %v6252 = vshrl.u32 2475754826, %v6249
    %v6253 = vor.u32 %v6251, %v6252
    %v6254 = vshll.u32 2475754826, %v6248
    %v6255 = vshrl.u32 2131351028, %v6249
    %v6256 = vor.u32 %v6254, %v6255
    %v6257 = vshll.u32 2131351028, %v6248
    %v6258 = vshrl.u32 2102212464, %v6249
    %v6259 = vor.u32 %v6257, %v6258
    %v6260 = vshll.u32 2102212464, %v6248
    %v6261 = vshrl.u32 920167782, %v6249
    %v6262 = vor.u32 %v6260, %v6261
    %v6263 = vshll.u32 920167782, %v6248
    %v6264 = vshrl.u32 1326507024, %v6249
    %v6265 = vor.u32 %v6263, %v6264
    %vm6266 = vcmp.lt.s32.totalorder %v6247, 1
    %vm6267 = vcmp.lt.s32.totalorder %v6247, 2
    %vm6268 = vcmp.lt.s32.totalorder %v6247, 3
    %vm6269 = vcmp.lt.s32.totalorder %v6247, 4
    %v6270 = vsel %vm6266, %v6250, %v6253
    %v6271 = vsel %vm6269, %v6259, 2102212464
    %v6272 = vsel %vm6268, %v6256, %v6271
    %v6273 = vsel %vm6267, %v6270, %v6272
    %v6274 = vsel %vm6266, %v6253, %v6256
    %v6275 = vsel %vm6269, %v6262, 920167782
    %v6276 = vsel %vm6268, %v6259, %v6275
    %v6277 = vsel %vm6267, %v6274, %v6276
    %v6278 = vsel %vm6266, %v6256, %v6259
    %v6279 = vsel %vm6269, %v6265, 1326507024
    %v6280 = vsel %vm6268, %v6262, %v6279
    %v6281 = vsel %vm6267, %v6278, %v6280
    %v6282 = vshll.u32 %v6242, 8
    %v6283 = vmul.u32.u64.compose %v6282, %v6281
    %v6284 = vextract.low.u32 %v6283
    %v6285 = vextract.high.u32 %v6283
    %v6286 = vmul.u32.u64.compose %v6282, %v6277
    %v6287 = vextract.low.u32 %v6286
    %v6288 = vextract.high.u32 %v6286
    %v6289 = vmul.u32 %v6282, %v6273
    %v6290 = vadd.s32 %v6285, %v6287
    %vm6291 = vc.u32 %v6285, %v6287
    %v6292 = vadd.s32 %v6288, 1
    %v6293 = vsel %vm6291, %v6292, %v6288
    %v6294 = vadd.s32 %v6289, %v6293
    %v6295 = vadd.s32 %v6294, 536870912
    %v6296 = vshrl.u32 %v6295, 30
    %v6297 = vshll.u32 %v6296, 30
    %v6298 = vsub.s32 %v6294, %v6297
    %vm6299 = vcmp.lt.s32.totalorder %v6298, 0
    %v6300 = vsub.s32 0, %v6298
    %v6301 = vsel %vm6299, %v6300, %v6298
    %v6302 = vclz %v6301
    %v6303 = vsub.s32 %v6302, 2
    %vm6304 = vcmp.gt.s32.totalorder 0, %v6303
    %v6305 = vsel %vm6304, 0, %v6303
    %v6306 = vsub.s32 32, %v6305
    %v6307 = vshll.u32 %v6298, %v6305
    %v6308 = vshrl.u32 %v6290, %v6306
    %v6309 = vor.u32 %v6307, %v6308
    %v6310 = vsub.s32 4294967266, %v6305
    %v6311 = vadd.s32 %v6310, 127
    %v6312 = vshll.u32 %v6311, 23
    %v6313 = vor.u32 4788187, %v6312
    %v6314 = vand.u32 2147483647, %v6313
    %v6316 = vcvt.s32.f32 %v6309
    %v6317 = vmul.f32 %v6316, %v6314
    %v6318 = vxor.u32 %v6317, 2147483648
    %v6319 = vsel %vm6236, %v6318, %v6317
    %v6320 = vsub.s32 4, %v6296
    %v6321 = vsel %vm6236, %v6320, %v6296
    %v6322 = vsel %vm6235, %v668, %v6319
    %v6323 = vsel %vm6235, 0, %v6321
    %v6324 = vcosq.f32.pop %v6322
    %v6325 = vsinq.f32.pop %v6322
    %vm6326 = vweird.f32 %v668
    %v6327 = vand.u32 %v6323, 3
    %vm6328 = vcmp.lt.s32.totalorder %v6327, 2
    %vm6329 = vcmp.eq.s32.totalorder %v6327, 0
    %v6330 = vxor.u32 %v6325, 2147483648
    %v6331 = vsel %vm6329, %v6324, %v6330
    %vm6332 = vcmp.eq.s32.totalorder %v6327, 2
    %v6333 = vxor.u32 %v6324, 2147483648
    %v6334 = vsel %vm6332, %v6333, %v6325
    %v6335 = vsel %vm6328, %v6331, %v6334
    %v6336 = vsel %vm6326, nan, %v6335
    %v6337 = vand.u32 2147483647, %v669
    %vm6338 = vcmp.le.f32.partialorder %v6337, 0.7853982
    %vm6339 = vcmp.lt.s32.totalorder %v669, 0
    %v6340 = vand.u32 %v669, 2139095040
    %v6341 = vshrl.u32 %v6340, 23
    %v6342 = vsub.s32 %v6341, 127
    %v6343 = vand.u32 2147483647, %v669
    %v6344 = vand.u32 %v6343, 8388607
    %v6345 = vor.u32 %v6344, 8388608
    %v6346 = vsub.s32 0, %v6345
    %v6347 = vadd.s32 %v6342, 1
    %vm6348 = vcmp.gt.s32.totalorder %v6347, 0
    %v6349 = vsel %vm6348, %v6347, 0
    %v6350 = vshrl.u32 %v6349, 5
    %v6351 = vand.u32 %v6349, 31
    %v6352 = vsub.s32 32, %v6351
    %v6353 = vshrl.u32 683565275, %v6352
    %v6354 = vshll.u32 683565275, %v6351
    %v6355 = vshrl.u32 2475754826, %v6352
    %v6356 = vor.u32 %v6354, %v6355
    %v6357 = vshll.u32 2475754826, %v6351
    %v6358 = vshrl.u32 2131351028, %v6352
    %v6359 = vor.u32 %v6357, %v6358
    %v6360 = vshll.u32 2131351028, %v6351
    %v6361 = vshrl.u32 2102212464, %v6352
    %v6362 = vor.u32 %v6360, %v6361
    %v6363 = vshll.u32 2102212464, %v6351
    %v6364 = vshrl.u32 920167782, %v6352
    %v6365 = vor.u32 %v6363, %v6364
    %v6366 = vshll.u32 920167782, %v6351
    %v6367 = vshrl.u32 1326507024, %v6352
    %v6368 = vor.u32 %v6366, %v6367
    %vm6369 = vcmp.lt.s32.totalorder %v6350, 1
    %vm6370 = vcmp.lt.s32.totalorder %v6350, 2
    %vm6371 = vcmp.lt.s32.totalorder %v6350, 3
    %vm6372 = vcmp.lt.s32.totalorder %v6350, 4
    %v6373 = vsel %vm6369, %v6353, %v6356
    %v6374 = vsel %vm6372, %v6362, 2102212464
    %v6375 = vsel %vm6371, %v6359, %v6374
    %v6376 = vsel %vm6370, %v6373, %v6375
    %v6377 = vsel %vm6369, %v6356, %v6359
    %v6378 = vsel %vm6372, %v6365, 920167782
    %v6379 = vsel %vm6371, %v6362, %v6378
    %v6380 = vsel %vm6370, %v6377, %v6379
    %v6381 = vsel %vm6369, %v6359, %v6362
    %v6382 = vsel %vm6372, %v6368, 1326507024
    %v6383 = vsel %vm6371, %v6365, %v6382
    %v6384 = vsel %vm6370, %v6381, %v6383
    %v6385 = vshll.u32 %v6345, 8
    %v6386 = vmul.u32.u64.compose %v6385, %v6384
    %v6387 = vextract.low.u32 %v6386
    %v6388 = vextract.high.u32 %v6386
    %v6389 = vmul.u32.u64.compose %v6385, %v6380
    %v6390 = vextract.low.u32 %v6389
    %v6391 = vextract.high.u32 %v6389
    %v6392 = vmul.u32 %v6385, %v6376
    %v6393 = vadd.s32 %v6388, %v6390
    %vm6394 = vc.u32 %v6388, %v6390
    %v6395 = vadd.s32 %v6391, 1
    %v6396 = vsel %vm6394, %v6395, %v6391
    %v6397 = vadd.s32 %v6392, %v6396
    %v6398 = vadd.s32 %v6397, 536870912
    %v6399 = vshrl.u32 %v6398, 30
    %v6400 = vshll.u32 %v6399, 30
    %v6401 = vsub.s32 %v6397, %v6400
    %vm6402 = vcmp.lt.s32.totalorder %v6401, 0
    %v6403 = vsub.s32 0, %v6401
    %v6404 = vsel %vm6402, %v6403, %v6401
    %v6405 = vclz %v6404
    %v6406 = vsub.s32 %v6405, 2
    %vm6407 = vcmp.gt.s32.totalorder 0, %v6406
    %v6408 = vsel %vm6407, 0, %v6406
    %v6409 = vsub.s32 32, %v6408
    %v6410 = vshll.u32 %v6401, %v6408
    %v6411 = vshrl.u32 %v6393, %v6409
    %v6412 = vor.u32 %v6410, %v6411
    %v6413 = vsub.s32 4294967266, %v6408
    %v6414 = vadd.s32 %v6413, 127
    %v6415 = vshll.u32 %v6414, 23
    %v6416 = vor.u32 4788187, %v6415
    %v6417 = vand.u32 2147483647, %v6416
    %v6419 = vcvt.s32.f32 %v6412
    %v6420 = vmul.f32 %v6419, %v6417
    %v6421 = vxor.u32 %v6420, 2147483648
    %v6422 = vsel %vm6339, %v6421, %v6420
    %v6423 = vsub.s32 4, %v6399
    %v6424 = vsel %vm6339, %v6423, %v6399
    %v6425 = vsel %vm6338, %v669, %v6422
    %v6426 = vsel %vm6338, 0, %v6424
    %v6427 = vcosq.f32.pop %v6425
    %v6428 = vsinq.f32.pop %v6425
    %vm6429 = vweird.f32 %v669
    %v6430 = vand.u32 %v6426, 3
    %vm6431 = vcmp.lt.s32.totalorder %v6430, 2
    %vm6432 = vcmp.eq.s32.totalorder %v6430, 0
    %v6433 = vxor.u32 %v6428, 2147483648
    %v6434 = vsel %vm6432, %v6427, %v6433
    %vm6435 = vcmp.eq.s32.totalorder %v6430, 2
    %v6436 = vxor.u32 %v6427, 2147483648
    %v6437 = vsel %vm6435, %v6436, %v6428
    %v6438 = vsel %vm6431, %v6434, %v6437
    %v6439 = vsel %vm6429, nan, %v6438
    %v6440 = vand.u32 2147483647, %v670
    %vm6441 = vcmp.le.f32.partialorder %v6440, 0.7853982
    %vm6442 = vcmp.lt.s32.totalorder %v670, 0
    %v6443 = vand.u32 %v670, 2139095040
    %v6444 = vshrl.u32 %v6443, 23
    %v6445 = vsub.s32 %v6444, 127
    %v6446 = vand.u32 2147483647, %v670
    %v6447 = vand.u32 %v6446, 8388607
    %v6448 = vor.u32 %v6447, 8388608
    %v6449 = vsub.s32 0, %v6448
    %v6450 = vadd.s32 %v6445, 1
    %vm6451 = vcmp.gt.s32.totalorder %v6450, 0
    %v6452 = vsel %vm6451, %v6450, 0
    %v6453 = vshrl.u32 %v6452, 5
    %v6454 = vand.u32 %v6452, 31
    %v6455 = vsub.s32 32, %v6454
    %v6456 = vshrl.u32 683565275, %v6455
    %v6457 = vshll.u32 683565275, %v6454
    %v6458 = vshrl.u32 2475754826, %v6455
    %v6459 = vor.u32 %v6457, %v6458
    %v6460 = vshll.u32 2475754826, %v6454
    %v6461 = vshrl.u32 2131351028, %v6455
    %v6462 = vor.u32 %v6460, %v6461
    %v6463 = vshll.u32 2131351028, %v6454
    %v6464 = vshrl.u32 2102212464, %v6455
    %v6465 = vor.u32 %v6463, %v6464
    %v6466 = vshll.u32 2102212464, %v6454
    %v6467 = vshrl.u32 920167782, %v6455
    %v6468 = vor.u32 %v6466, %v6467
    %v6469 = vshll.u32 920167782, %v6454
    %v6470 = vshrl.u32 1326507024, %v6455
    %v6471 = vor.u32 %v6469, %v6470
    %vm6472 = vcmp.lt.s32.totalorder %v6453, 1
    %vm6473 = vcmp.lt.s32.totalorder %v6453, 2
    %vm6474 = vcmp.lt.s32.totalorder %v6453, 3
    %vm6475 = vcmp.lt.s32.totalorder %v6453, 4
    %v6476 = vsel %vm6472, %v6456, %v6459
    %v6477 = vsel %vm6475, %v6465, 2102212464
    %v6478 = vsel %vm6474, %v6462, %v6477
    %v6479 = vsel %vm6473, %v6476, %v6478
    %v6480 = vsel %vm6472, %v6459, %v6462
    %v6481 = vsel %vm6475, %v6468, 920167782
    %v6482 = vsel %vm6474, %v6465, %v6481
    %v6483 = vsel %vm6473, %v6480, %v6482
    %v6484 = vsel %vm6472, %v6462, %v6465
    %v6485 = vsel %vm6475, %v6471, 1326507024
    %v6486 = vsel %vm6474, %v6468, %v6485
    %v6487 = vsel %vm6473, %v6484, %v6486
    %v6488 = vshll.u32 %v6448, 8
    %v6489 = vmul.u32.u64.compose %v6488, %v6487
    %v6490 = vextract.low.u32 %v6489
    %v6491 = vextract.high.u32 %v6489
    %v6492 = vmul.u32.u64.compose %v6488, %v6483
    %v6493 = vextract.low.u32 %v6492
    %v6494 = vextract.high.u32 %v6492
    %v6495 = vmul.u32 %v6488, %v6479
    %v6496 = vadd.s32 %v6491, %v6493
    %vm6497 = vc.u32 %v6491, %v6493
    %v6498 = vadd.s32 %v6494, 1
    %v6499 = vsel %vm6497, %v6498, %v6494
    %v6500 = vadd.s32 %v6495, %v6499
    %v6501 = vadd.s32 %v6500, 536870912
    %v6502 = vshrl.u32 %v6501, 30
    %v6503 = vshll.u32 %v6502, 30
    %v6504 = vsub.s32 %v6500, %v6503
    %vm6505 = vcmp.lt.s32.totalorder %v6504, 0
    %v6506 = vsub.s32 0, %v6504
    %v6507 = vsel %vm6505, %v6506, %v6504
    %v6508 = vclz %v6507
    %v6509 = vsub.s32 %v6508, 2
    %vm6510 = vcmp.gt.s32.totalorder 0, %v6509
    %v6511 = vsel %vm6510, 0, %v6509
    %v6512 = vsub.s32 32, %v6511
    %v6513 = vshll.u32 %v6504, %v6511
    %v6514 = vshrl.u32 %v6496, %v6512
    %v6515 = vor.u32 %v6513, %v6514
    %v6516 = vsub.s32 4294967266, %v6511
    %v6517 = vadd.s32 %v6516, 127
    %v6518 = vshll.u32 %v6517, 23
    %v6519 = vor.u32 4788187, %v6518
    %v6520 = vand.u32 2147483647, %v6519
    %v6522 = vcvt.s32.f32 %v6515
    %v6523 = vmul.f32 %v6522, %v6520
    %v6524 = vxor.u32 %v6523, 2147483648
    %v6525 = vsel %vm6442, %v6524, %v6523
    %v6526 = vsub.s32 4, %v6502
    %v6527 = vsel %vm6442, %v6526, %v6502
    %v6528 = vsel %vm6441, %v670, %v6525
    %v6529 = vsel %vm6441, 0, %v6527
    %v6530 = vcosq.f32.pop %v6528
    %v6531 = vsinq.f32.pop %v6528
    %vm6532 = vweird.f32 %v670
    %v6533 = vand.u32 %v6529, 3
    %vm6534 = vcmp.lt.s32.totalorder %v6533, 2
    %vm6535 = vcmp.eq.s32.totalorder %v6533, 0
    %v6536 = vxor.u32 %v6531, 2147483648
    %v6537 = vsel %vm6535, %v6530, %v6536
    %vm6538 = vcmp.eq.s32.totalorder %v6533, 2
    %v6539 = vxor.u32 %v6530, 2147483648
    %v6540 = vsel %vm6538, %v6539, %v6531
    %v6541 = vsel %vm6534, %v6537, %v6540
    %v6542 = vsel %vm6532, nan, %v6541
    %v6543 = vand.u32 2147483647, %v671
    %vm6544 = vcmp.le.f32.partialorder %v6543, 0.7853982
    %vm6545 = vcmp.lt.s32.totalorder %v671, 0
    %v6546 = vand.u32 %v671, 2139095040
    %v6547 = vshrl.u32 %v6546, 23
    %v6548 = vsub.s32 %v6547, 127
    %v6549 = vand.u32 2147483647, %v671
    %v6550 = vand.u32 %v6549, 8388607
    %v6551 = vor.u32 %v6550, 8388608
    %v6552 = vsub.s32 0, %v6551
    %v6553 = vadd.s32 %v6548, 1
    %vm6554 = vcmp.gt.s32.totalorder %v6553, 0
    %v6555 = vsel %vm6554, %v6553, 0
    %v6556 = vshrl.u32 %v6555, 5
    %v6557 = vand.u32 %v6555, 31
    %v6558 = vsub.s32 32, %v6557
    %v6559 = vshrl.u32 683565275, %v6558
    %v6560 = vshll.u32 683565275, %v6557
    %v6561 = vshrl.u32 2475754826, %v6558
    %v6562 = vor.u32 %v6560, %v6561
    %v6563 = vshll.u32 2475754826, %v6557
    %v6564 = vshrl.u32 2131351028, %v6558
    %v6565 = vor.u32 %v6563, %v6564
    %v6566 = vshll.u32 2131351028, %v6557
    %v6567 = vshrl.u32 2102212464, %v6558
    %v6568 = vor.u32 %v6566, %v6567
    %v6569 = vshll.u32 2102212464, %v6557
    %v6570 = vshrl.u32 920167782, %v6558
    %v6571 = vor.u32 %v6569, %v6570
    %v6572 = vshll.u32 920167782, %v6557
    %v6573 = vshrl.u32 1326507024, %v6558
    %v6574 = vor.u32 %v6572, %v6573
    %vm6575 = vcmp.lt.s32.totalorder %v6556, 1
    %vm6576 = vcmp.lt.s32.totalorder %v6556, 2
    %vm6577 = vcmp.lt.s32.totalorder %v6556, 3
    %vm6578 = vcmp.lt.s32.totalorder %v6556, 4
    %v6579 = vsel %vm6575, %v6559, %v6562
    %v6580 = vsel %vm6578, %v6568, 2102212464
    %v6581 = vsel %vm6577, %v6565, %v6580
    %v6582 = vsel %vm6576, %v6579, %v6581
    %v6583 = vsel %vm6575, %v6562, %v6565
    %v6584 = vsel %vm6578, %v6571, 920167782
    %v6585 = vsel %vm6577, %v6568, %v6584
    %v6586 = vsel %vm6576, %v6583, %v6585
    %v6587 = vsel %vm6575, %v6565, %v6568
    %v6588 = vsel %vm6578, %v6574, 1326507024
    %v6589 = vsel %vm6577, %v6571, %v6588
    %v6590 = vsel %vm6576, %v6587, %v6589
    %v6591 = vshll.u32 %v6551, 8
    %v6592 = vmul.u32.u64.compose %v6591, %v6590
    %v6593 = vextract.low.u32 %v6592
    %v6594 = vextract.high.u32 %v6592
    %v6595 = vmul.u32.u64.compose %v6591, %v6586
    %v6596 = vextract.low.u32 %v6595
    %v6597 = vextract.high.u32 %v6595
    %v6598 = vmul.u32 %v6591, %v6582
    %v6599 = vadd.s32 %v6594, %v6596
    %vm6600 = vc.u32 %v6594, %v6596
    %v6601 = vadd.s32 %v6597, 1
    %v6602 = vsel %vm6600, %v6601, %v6597
    %v6603 = vadd.s32 %v6598, %v6602
    %v6604 = vadd.s32 %v6603, 536870912
    %v6605 = vshrl.u32 %v6604, 30
    %v6606 = vshll.u32 %v6605, 30
    %v6607 = vsub.s32 %v6603, %v6606
    %vm6608 = vcmp.lt.s32.totalorder %v6607, 0
    %v6609 = vsub.s32 0, %v6607
    %v6610 = vsel %vm6608, %v6609, %v6607
    %v6611 = vclz %v6610
    %v6612 = vsub.s32 %v6611, 2
    %vm6613 = vcmp.gt.s32.totalorder 0, %v6612
    %v6614 = vsel %vm6613, 0, %v6612
    %v6615 = vsub.s32 32, %v6614
    %v6616 = vshll.u32 %v6607, %v6614
    %v6617 = vshrl.u32 %v6599, %v6615
    %v6618 = vor.u32 %v6616, %v6617
    %v6619 = vsub.s32 4294967266, %v6614
    %v6620 = vadd.s32 %v6619, 127
    %v6621 = vshll.u32 %v6620, 23
    %v6622 = vor.u32 4788187, %v6621
    %v6623 = vand.u32 2147483647, %v6622
    %v6625 = vcvt.s32.f32 %v6618
    %v6626 = vmul.f32 %v6625, %v6623
    %v6627 = vxor.u32 %v6626, 2147483648
    %v6628 = vsel %vm6545, %v6627, %v6626
    %v6629 = vsub.s32 4, %v6605
    %v6630 = vsel %vm6545, %v6629, %v6605
    %v6631 = vsel %vm6544, %v671, %v6628
    %v6632 = vsel %vm6544, 0, %v6630
    %v6633 = vcosq.f32.pop %v6631
    %v6634 = vsinq.f32.pop %v6631
    %vm6635 = vweird.f32 %v671
    %v6636 = vand.u32 %v6632, 3
    %vm6637 = vcmp.lt.s32.totalorder %v6636, 2
    %vm6638 = vcmp.eq.s32.totalorder %v6636, 0
    %v6639 = vxor.u32 %v6634, 2147483648
    %v6640 = vsel %vm6638, %v6633, %v6639
    %vm6641 = vcmp.eq.s32.totalorder %v6636, 2
    %v6642 = vxor.u32 %v6633, 2147483648
    %v6643 = vsel %vm6641, %v6642, %v6634
    %v6644 = vsel %vm6637, %v6640, %v6643
    %v6645 = vsel %vm6635, nan, %v6644
    %v6646 = vand.u32 2147483647, %v672
    %vm6647 = vcmp.le.f32.partialorder %v6646, 0.7853982
    %vm6648 = vcmp.lt.s32.totalorder %v672, 0
    %v6649 = vand.u32 %v672, 2139095040
    %v6650 = vshrl.u32 %v6649, 23
    %v6651 = vsub.s32 %v6650, 127
    %v6652 = vand.u32 2147483647, %v672
    %v6653 = vand.u32 %v6652, 8388607
    %v6654 = vor.u32 %v6653, 8388608
    %v6655 = vsub.s32 0, %v6654
    %v6656 = vadd.s32 %v6651, 1
    %vm6657 = vcmp.gt.s32.totalorder %v6656, 0
    %v6658 = vsel %vm6657, %v6656, 0
    %v6659 = vshrl.u32 %v6658, 5
    %v6660 = vand.u32 %v6658, 31
    %v6661 = vsub.s32 32, %v6660
    %v6662 = vshrl.u32 683565275, %v6661
    %v6663 = vshll.u32 683565275, %v6660
    %v6664 = vshrl.u32 2475754826, %v6661
    %v6665 = vor.u32 %v6663, %v6664
    %v6666 = vshll.u32 2475754826, %v6660
    %v6667 = vshrl.u32 2131351028, %v6661
    %v6668 = vor.u32 %v6666, %v6667
    %v6669 = vshll.u32 2131351028, %v6660
    %v6670 = vshrl.u32 2102212464, %v6661
    %v6671 = vor.u32 %v6669, %v6670
    %v6672 = vshll.u32 2102212464, %v6660
    %v6673 = vshrl.u32 920167782, %v6661
    %v6674 = vor.u32 %v6672, %v6673
    %v6675 = vshll.u32 920167782, %v6660
    %v6676 = vshrl.u32 1326507024, %v6661
    %v6677 = vor.u32 %v6675, %v6676
    %vm6678 = vcmp.lt.s32.totalorder %v6659, 1
    %vm6679 = vcmp.lt.s32.totalorder %v6659, 2
    %vm6680 = vcmp.lt.s32.totalorder %v6659, 3
    %vm6681 = vcmp.lt.s32.totalorder %v6659, 4
    %v6682 = vsel %vm6678, %v6662, %v6665
    %v6683 = vsel %vm6681, %v6671, 2102212464
    %v6684 = vsel %vm6680, %v6668, %v6683
    %v6685 = vsel %vm6679, %v6682, %v6684
    %v6686 = vsel %vm6678, %v6665, %v6668
    %v6687 = vsel %vm6681, %v6674, 920167782
    %v6688 = vsel %vm6680, %v6671, %v6687
    %v6689 = vsel %vm6679, %v6686, %v6688
    %v6690 = vsel %vm6678, %v6668, %v6671
    %v6691 = vsel %vm6681, %v6677, 1326507024
    %v6692 = vsel %vm6680, %v6674, %v6691
    %v6693 = vsel %vm6679, %v6690, %v6692
    %v6694 = vshll.u32 %v6654, 8
    %v6695 = vmul.u32.u64.compose %v6694, %v6693
    %v6696 = vextract.low.u32 %v6695
    %v6697 = vextract.high.u32 %v6695
    %v6698 = vmul.u32.u64.compose %v6694, %v6689
    %v6699 = vextract.low.u32 %v6698
    %v6700 = vextract.high.u32 %v6698
    %v6701 = vmul.u32 %v6694, %v6685
    %v6702 = vadd.s32 %v6697, %v6699
    %vm6703 = vc.u32 %v6697, %v6699
    %v6704 = vadd.s32 %v6700, 1
    %v6705 = vsel %vm6703, %v6704, %v6700
    %v6706 = vadd.s32 %v6701, %v6705
    %v6707 = vadd.s32 %v6706, 536870912
    %v6708 = vshrl.u32 %v6707, 30
    %v6709 = vshll.u32 %v6708, 30
    %v6710 = vsub.s32 %v6706, %v6709
    %vm6711 = vcmp.lt.s32.totalorder %v6710, 0
    %v6712 = vsub.s32 0, %v6710
    %v6713 = vsel %vm6711, %v6712, %v6710
    %v6714 = vclz %v6713
    %v6715 = vsub.s32 %v6714, 2
    %vm6716 = vcmp.gt.s32.totalorder 0, %v6715
    %v6717 = vsel %vm6716, 0, %v6715
    %v6718 = vsub.s32 32, %v6717
    %v6719 = vshll.u32 %v6710, %v6717
    %v6720 = vshrl.u32 %v6702, %v6718
    %v6721 = vor.u32 %v6719, %v6720
    %v6722 = vsub.s32 4294967266, %v6717
    %v6723 = vadd.s32 %v6722, 127
    %v6724 = vshll.u32 %v6723, 23
    %v6725 = vor.u32 4788187, %v6724
    %v6726 = vand.u32 2147483647, %v6725
    %v6728 = vcvt.s32.f32 %v6721
    %v6729 = vmul.f32 %v6728, %v6726
    %v6730 = vxor.u32 %v6729, 2147483648
    %v6731 = vsel %vm6648, %v6730, %v6729
    %v6732 = vsub.s32 4, %v6708
    %v6733 = vsel %vm6648, %v6732, %v6708
    %v6734 = vsel %vm6647, %v672, %v6731
    %v6735 = vsel %vm6647, 0, %v6733
    %v6736 = vcosq.f32.pop %v6734
    %v6737 = vsinq.f32.pop %v6734
    %vm6738 = vweird.f32 %v672
    %v6739 = vand.u32 %v6735, 3
    %vm6740 = vcmp.lt.s32.totalorder %v6739, 2
    %vm6741 = vcmp.eq.s32.totalorder %v6739, 0
    %v6742 = vxor.u32 %v6737, 2147483648
    %v6743 = vsel %vm6741, %v6736, %v6742
    %vm6744 = vcmp.eq.s32.totalorder %v6739, 2
    %v6745 = vxor.u32 %v6736, 2147483648
    %v6746 = vsel %vm6744, %v6745, %v6737
    %v6747 = vsel %vm6740, %v6743, %v6746
    %v6748 = vsel %vm6738, nan, %v6747
    %v6749 = vand.u32 2147483647, %v673
    %vm6750 = vcmp.le.f32.partialorder %v6749, 0.7853982
    %vm6751 = vcmp.lt.s32.totalorder %v673, 0
    %v6752 = vand.u32 %v673, 2139095040
    %v6753 = vshrl.u32 %v6752, 23
    %v6754 = vsub.s32 %v6753, 127
    %v6755 = vand.u32 2147483647, %v673
    %v6756 = vand.u32 %v6755, 8388607
    %v6757 = vor.u32 %v6756, 8388608
    %v6758 = vsub.s32 0, %v6757
    %v6759 = vadd.s32 %v6754, 1
    %vm6760 = vcmp.gt.s32.totalorder %v6759, 0
    %v6761 = vsel %vm6760, %v6759, 0
    %v6762 = vshrl.u32 %v6761, 5
    %v6763 = vand.u32 %v6761, 31
    %v6764 = vsub.s32 32, %v6763
    %v6765 = vshrl.u32 683565275, %v6764
    %v6766 = vshll.u32 683565275, %v6763
    %v6767 = vshrl.u32 2475754826, %v6764
    %v6768 = vor.u32 %v6766, %v6767
    %v6769 = vshll.u32 2475754826, %v6763
    %v6770 = vshrl.u32 2131351028, %v6764
    %v6771 = vor.u32 %v6769, %v6770
    %v6772 = vshll.u32 2131351028, %v6763
    %v6773 = vshrl.u32 2102212464, %v6764
    %v6774 = vor.u32 %v6772, %v6773
    %v6775 = vshll.u32 2102212464, %v6763
    %v6776 = vshrl.u32 920167782, %v6764
    %v6777 = vor.u32 %v6775, %v6776
    %v6778 = vshll.u32 920167782, %v6763
    %v6779 = vshrl.u32 1326507024, %v6764
    %v6780 = vor.u32 %v6778, %v6779
    %vm6781 = vcmp.lt.s32.totalorder %v6762, 1
    %vm6782 = vcmp.lt.s32.totalorder %v6762, 2
    %vm6783 = vcmp.lt.s32.totalorder %v6762, 3
    %vm6784 = vcmp.lt.s32.totalorder %v6762, 4
    %v6785 = vsel %vm6781, %v6765, %v6768
    %v6786 = vsel %vm6784, %v6774, 2102212464
    %v6787 = vsel %vm6783, %v6771, %v6786
    %v6788 = vsel %vm6782, %v6785, %v6787
    %v6789 = vsel %vm6781, %v6768, %v6771
    %v6790 = vsel %vm6784, %v6777, 920167782
    %v6791 = vsel %vm6783, %v6774, %v6790
    %v6792 = vsel %vm6782, %v6789, %v6791
    %v6793 = vsel %vm6781, %v6771, %v6774
    %v6794 = vsel %vm6784, %v6780, 1326507024
    %v6795 = vsel %vm6783, %v6777, %v6794
    %v6796 = vsel %vm6782, %v6793, %v6795
    %v6797 = vshll.u32 %v6757, 8
    %v6798 = vmul.u32.u64.compose %v6797, %v6796
    %v6799 = vextract.low.u32 %v6798
    %v6800 = vextract.high.u32 %v6798
    %v6801 = vmul.u32.u64.compose %v6797, %v6792
    %v6802 = vextract.low.u32 %v6801
    %v6803 = vextract.high.u32 %v6801
    %v6804 = vmul.u32 %v6797, %v6788
    %v6805 = vadd.s32 %v6800, %v6802
    %vm6806 = vc.u32 %v6800, %v6802
    %v6807 = vadd.s32 %v6803, 1
    %v6808 = vsel %vm6806, %v6807, %v6803
    %v6809 = vadd.s32 %v6804, %v6808
    %v6810 = vadd.s32 %v6809, 536870912
    %v6811 = vshrl.u32 %v6810, 30
    %v6812 = vshll.u32 %v6811, 30
    %v6813 = vsub.s32 %v6809, %v6812
    %vm6814 = vcmp.lt.s32.totalorder %v6813, 0
    %v6815 = vsub.s32 0, %v6813
    %v6816 = vsel %vm6814, %v6815, %v6813
    %v6817 = vclz %v6816
    %v6818 = vsub.s32 %v6817, 2
    %vm6819 = vcmp.gt.s32.totalorder 0, %v6818
    %v6820 = vsel %vm6819, 0, %v6818
    %v6821 = vsub.s32 32, %v6820
    %v6822 = vshll.u32 %v6813, %v6820
    %v6823 = vshrl.u32 %v6805, %v6821
    %v6824 = vor.u32 %v6822, %v6823
    %v6825 = vsub.s32 4294967266, %v6820
    %v6826 = vadd.s32 %v6825, 127
    %v6827 = vshll.u32 %v6826, 23
    %v6828 = vor.u32 4788187, %v6827
    %v6829 = vand.u32 2147483647, %v6828
    %v6831 = vcvt.s32.f32 %v6824
    %v6832 = vmul.f32 %v6831, %v6829
    %v6833 = vxor.u32 %v6832, 2147483648
    %v6834 = vsel %vm6751, %v6833, %v6832
    %v6835 = vsub.s32 4, %v6811
    %v6836 = vsel %vm6751, %v6835, %v6811
    %v6837 = vsel %vm6750, %v673, %v6834
    %v6838 = vsel %vm6750, 0, %v6836
    %v6839 = vcosq.f32.pop %v6837
    %v6840 = vsinq.f32.pop %v6837
    %vm6841 = vweird.f32 %v673
    %v6842 = vand.u32 %v6838, 3
    %vm6843 = vcmp.lt.s32.totalorder %v6842, 2
    %vm6844 = vcmp.eq.s32.totalorder %v6842, 0
    %v6845 = vxor.u32 %v6840, 2147483648
    %v6846 = vsel %vm6844, %v6839, %v6845
    %vm6847 = vcmp.eq.s32.totalorder %v6842, 2
    %v6848 = vxor.u32 %v6839, 2147483648
    %v6849 = vsel %vm6847, %v6848, %v6840
    %v6850 = vsel %vm6843, %v6846, %v6849
    %v6851 = vsel %vm6841, nan, %v6850
    %v6852 = vand.u32 2147483647, %v674
    %vm6853 = vcmp.le.f32.partialorder %v6852, 0.7853982
    %vm6854 = vcmp.lt.s32.totalorder %v674, 0
    %v6855 = vand.u32 %v674, 2139095040
    %v6856 = vshrl.u32 %v6855, 23
    %v6857 = vsub.s32 %v6856, 127
    %v6858 = vand.u32 2147483647, %v674
    %v6859 = vand.u32 %v6858, 8388607
    %v6860 = vor.u32 %v6859, 8388608
    %v6861 = vsub.s32 0, %v6860
    %v6862 = vadd.s32 %v6857, 1
    %vm6863 = vcmp.gt.s32.totalorder %v6862, 0
    %v6864 = vsel %vm6863, %v6862, 0
    %v6865 = vshrl.u32 %v6864, 5
    %v6866 = vand.u32 %v6864, 31
    %v6867 = vsub.s32 32, %v6866
    %v6868 = vshrl.u32 683565275, %v6867
    %v6869 = vshll.u32 683565275, %v6866
    %v6870 = vshrl.u32 2475754826, %v6867
    %v6871 = vor.u32 %v6869, %v6870
    %v6872 = vshll.u32 2475754826, %v6866
    %v6873 = vshrl.u32 2131351028, %v6867
    %v6874 = vor.u32 %v6872, %v6873
    %v6875 = vshll.u32 2131351028, %v6866
    %v6876 = vshrl.u32 2102212464, %v6867
    %v6877 = vor.u32 %v6875, %v6876
    %v6878 = vshll.u32 2102212464, %v6866
    %v6879 = vshrl.u32 920167782, %v6867
    %v6880 = vor.u32 %v6878, %v6879
    %v6881 = vshll.u32 920167782, %v6866
    %v6882 = vshrl.u32 1326507024, %v6867
    %v6883 = vor.u32 %v6881, %v6882
    %vm6884 = vcmp.lt.s32.totalorder %v6865, 1
    %vm6885 = vcmp.lt.s32.totalorder %v6865, 2
    %vm6886 = vcmp.lt.s32.totalorder %v6865, 3
    %vm6887 = vcmp.lt.s32.totalorder %v6865, 4
    %v6888 = vsel %vm6884, %v6868, %v6871
    %v6889 = vsel %vm6887, %v6877, 2102212464
    %v6890 = vsel %vm6886, %v6874, %v6889
    %v6891 = vsel %vm6885, %v6888, %v6890
    %v6892 = vsel %vm6884, %v6871, %v6874
    %v6893 = vsel %vm6887, %v6880, 920167782
    %v6894 = vsel %vm6886, %v6877, %v6893
    %v6895 = vsel %vm6885, %v6892, %v6894
    %v6896 = vsel %vm6884, %v6874, %v6877
    %v6897 = vsel %vm6887, %v6883, 1326507024
    %v6898 = vsel %vm6886, %v6880, %v6897
    %v6899 = vsel %vm6885, %v6896, %v6898
    %v6900 = vshll.u32 %v6860, 8
    %v6901 = vmul.u32.u64.compose %v6900, %v6899
    %v6902 = vextract.low.u32 %v6901
    %v6903 = vextract.high.u32 %v6901
    %v6904 = vmul.u32.u64.compose %v6900, %v6895
    %v6905 = vextract.low.u32 %v6904
    %v6906 = vextract.high.u32 %v6904
    %v6907 = vmul.u32 %v6900, %v6891
    %v6908 = vadd.s32 %v6903, %v6905
    %vm6909 = vc.u32 %v6903, %v6905
    %v6910 = vadd.s32 %v6906, 1
    %v6911 = vsel %vm6909, %v6910, %v6906
    %v6912 = vadd.s32 %v6907, %v6911
    %v6913 = vadd.s32 %v6912, 536870912
    %v6914 = vshrl.u32 %v6913, 30
    %v6915 = vshll.u32 %v6914, 30
    %v6916 = vsub.s32 %v6912, %v6915
    %vm6917 = vcmp.lt.s32.totalorder %v6916, 0
    %v6918 = vsub.s32 0, %v6916
    %v6919 = vsel %vm6917, %v6918, %v6916
    %v6920 = vclz %v6919
    %v6921 = vsub.s32 %v6920, 2
    %vm6922 = vcmp.gt.s32.totalorder 0, %v6921
    %v6923 = vsel %vm6922, 0, %v6921
    %v6924 = vsub.s32 32, %v6923
    %v6925 = vshll.u32 %v6916, %v6923
    %v6926 = vshrl.u32 %v6908, %v6924
    %v6927 = vor.u32 %v6925, %v6926
    %v6928 = vsub.s32 4294967266, %v6923
    %v6929 = vadd.s32 %v6928, 127
    %v6930 = vshll.u32 %v6929, 23
    %v6931 = vor.u32 4788187, %v6930
    %v6932 = vand.u32 2147483647, %v6931
    %v6934 = vcvt.s32.f32 %v6927
    %v6935 = vmul.f32 %v6934, %v6932
    %v6936 = vxor.u32 %v6935, 2147483648
    %v6937 = vsel %vm6854, %v6936, %v6935
    %v6938 = vsub.s32 4, %v6914
    %v6939 = vsel %vm6854, %v6938, %v6914
    %v6940 = vsel %vm6853, %v674, %v6937
    %v6941 = vsel %vm6853, 0, %v6939
    %v6942 = vcosq.f32.pop %v6940
    %v6943 = vsinq.f32.pop %v6940
    %vm6944 = vweird.f32 %v674
    %v6945 = vand.u32 %v6941, 3
    %vm6946 = vcmp.lt.s32.totalorder %v6945, 2
    %vm6947 = vcmp.eq.s32.totalorder %v6945, 0
    %v6948 = vxor.u32 %v6943, 2147483648
    %v6949 = vsel %vm6947, %v6942, %v6948
    %vm6950 = vcmp.eq.s32.totalorder %v6945, 2
    %v6951 = vxor.u32 %v6942, 2147483648
    %v6952 = vsel %vm6950, %v6951, %v6943
    %v6953 = vsel %vm6946, %v6949, %v6952
    %v6954 = vsel %vm6944, nan, %v6953
    %v6955 = vand.u32 2147483647, %v675
    %vm6956 = vcmp.le.f32.partialorder %v6955, 0.7853982
    %vm6957 = vcmp.lt.s32.totalorder %v675, 0
    %v6958 = vand.u32 %v675, 2139095040
    %v6959 = vshrl.u32 %v6958, 23
    %v6960 = vsub.s32 %v6959, 127
    %v6961 = vand.u32 2147483647, %v675
    %v6962 = vand.u32 %v6961, 8388607
    %v6963 = vor.u32 %v6962, 8388608
    %v6964 = vsub.s32 0, %v6963
    %v6965 = vadd.s32 %v6960, 1
    %vm6966 = vcmp.gt.s32.totalorder %v6965, 0
    %v6967 = vsel %vm6966, %v6965, 0
    %v6968 = vshrl.u32 %v6967, 5
    %v6969 = vand.u32 %v6967, 31
    %v6970 = vsub.s32 32, %v6969
    %v6971 = vshrl.u32 683565275, %v6970
    %v6972 = vshll.u32 683565275, %v6969
    %v6973 = vshrl.u32 2475754826, %v6970
    %v6974 = vor.u32 %v6972, %v6973
    %v6975 = vshll.u32 2475754826, %v6969
    %v6976 = vshrl.u32 2131351028, %v6970
    %v6977 = vor.u32 %v6975, %v6976
    %v6978 = vshll.u32 2131351028, %v6969
    %v6979 = vshrl.u32 2102212464, %v6970
    %v6980 = vor.u32 %v6978, %v6979
    %v6981 = vshll.u32 2102212464, %v6969
    %v6982 = vshrl.u32 920167782, %v6970
    %v6983 = vor.u32 %v6981, %v6982
    %v6984 = vshll.u32 920167782, %v6969
    %v6985 = vshrl.u32 1326507024, %v6970
    %v6986 = vor.u32 %v6984, %v6985
    %vm6987 = vcmp.lt.s32.totalorder %v6968, 1
    %vm6988 = vcmp.lt.s32.totalorder %v6968, 2
    %vm6989 = vcmp.lt.s32.totalorder %v6968, 3
    %vm6990 = vcmp.lt.s32.totalorder %v6968, 4
    %v6991 = vsel %vm6987, %v6971, %v6974
    %v6992 = vsel %vm6990, %v6980, 2102212464
    %v6993 = vsel %vm6989, %v6977, %v6992
    %v6994 = vsel %vm6988, %v6991, %v6993
    %v6995 = vsel %vm6987, %v6974, %v6977
    %v6996 = vsel %vm6990, %v6983, 920167782
    %v6997 = vsel %vm6989, %v6980, %v6996
    %v6998 = vsel %vm6988, %v6995, %v6997
    %v6999 = vsel %vm6987, %v6977, %v6980
    %v7000 = vsel %vm6990, %v6986, 1326507024
    %v7001 = vsel %vm6989, %v6983, %v7000
    %v7002 = vsel %vm6988, %v6999, %v7001
    %v7003 = vshll.u32 %v6963, 8
    %v7004 = vmul.u32.u64.compose %v7003, %v7002
    %v7005 = vextract.low.u32 %v7004
    %v7006 = vextract.high.u32 %v7004
    %v7007 = vmul.u32.u64.compose %v7003, %v6998
    %v7008 = vextract.low.u32 %v7007
    %v7009 = vextract.high.u32 %v7007
    %v7010 = vmul.u32 %v7003, %v6994
    %v7011 = vadd.s32 %v7006, %v7008
    %vm7012 = vc.u32 %v7006, %v7008
    %v7013 = vadd.s32 %v7009, 1
    %v7014 = vsel %vm7012, %v7013, %v7009
    %v7015 = vadd.s32 %v7010, %v7014
    %v7016 = vadd.s32 %v7015, 536870912
    %v7017 = vshrl.u32 %v7016, 30
    %v7018 = vshll.u32 %v7017, 30
    %v7019 = vsub.s32 %v7015, %v7018
    %vm7020 = vcmp.lt.s32.totalorder %v7019, 0
    %v7021 = vsub.s32 0, %v7019
    %v7022 = vsel %vm7020, %v7021, %v7019
    %v7023 = vclz %v7022
    %v7024 = vsub.s32 %v7023, 2
    %vm7025 = vcmp.gt.s32.totalorder 0, %v7024
    %v7026 = vsel %vm7025, 0, %v7024
    %v7027 = vsub.s32 32, %v7026
    %v7028 = vshll.u32 %v7019, %v7026
    %v7029 = vshrl.u32 %v7011, %v7027
    %v7030 = vor.u32 %v7028, %v7029
    %v7031 = vsub.s32 4294967266, %v7026
    %v7032 = vadd.s32 %v7031, 127
    %v7033 = vshll.u32 %v7032, 23
    %v7034 = vor.u32 4788187, %v7033
    %v7035 = vand.u32 2147483647, %v7034
    %v7037 = vcvt.s32.f32 %v7030
    %v7038 = vmul.f32 %v7037, %v7035
    %v7039 = vxor.u32 %v7038, 2147483648
    %v7040 = vsel %vm6957, %v7039, %v7038
    %v7041 = vsub.s32 4, %v7017
    %v7042 = vsel %vm6957, %v7041, %v7017
    %v7043 = vsel %vm6956, %v675, %v7040
    %v7044 = vsel %vm6956, 0, %v7042
    %v7045 = vcosq.f32.pop %v7043
    %v7046 = vsinq.f32.pop %v7043
    %vm7047 = vweird.f32 %v675
    %v7048 = vand.u32 %v7044, 3
    %vm7049 = vcmp.lt.s32.totalorder %v7048, 2
    %vm7050 = vcmp.eq.s32.totalorder %v7048, 0
    %v7051 = vxor.u32 %v7046, 2147483648
    %v7052 = vsel %vm7050, %v7045, %v7051
    %vm7053 = vcmp.eq.s32.totalorder %v7048, 2
    %v7054 = vxor.u32 %v7045, 2147483648
    %v7055 = vsel %vm7053, %v7054, %v7046
    %v7056 = vsel %vm7049, %v7052, %v7055
    %v7057 = vsel %vm7047, nan, %v7056
    %v7058 = vand.u32 2147483647, %v676
    %vm7059 = vcmp.le.f32.partialorder %v7058, 0.7853982
    %vm7060 = vcmp.lt.s32.totalorder %v676, 0
    %v7061 = vand.u32 %v676, 2139095040
    %v7062 = vshrl.u32 %v7061, 23
    %v7063 = vsub.s32 %v7062, 127
    %v7064 = vand.u32 2147483647, %v676
    %v7065 = vand.u32 %v7064, 8388607
    %v7066 = vor.u32 %v7065, 8388608
    %v7067 = vsub.s32 0, %v7066
    %v7068 = vadd.s32 %v7063, 1
    %vm7069 = vcmp.gt.s32.totalorder %v7068, 0
    %v7070 = vsel %vm7069, %v7068, 0
    %v7071 = vshrl.u32 %v7070, 5
    %v7072 = vand.u32 %v7070, 31
    %v7073 = vsub.s32 32, %v7072
    %v7074 = vshrl.u32 683565275, %v7073
    %v7075 = vshll.u32 683565275, %v7072
    %v7076 = vshrl.u32 2475754826, %v7073
    %v7077 = vor.u32 %v7075, %v7076
    %v7078 = vshll.u32 2475754826, %v7072
    %v7079 = vshrl.u32 2131351028, %v7073
    %v7080 = vor.u32 %v7078, %v7079
    %v7081 = vshll.u32 2131351028, %v7072
    %v7082 = vshrl.u32 2102212464, %v7073
    %v7083 = vor.u32 %v7081, %v7082
    %v7084 = vshll.u32 2102212464, %v7072
    %v7085 = vshrl.u32 920167782, %v7073
    %v7086 = vor.u32 %v7084, %v7085
    %v7087 = vshll.u32 920167782, %v7072
    %v7088 = vshrl.u32 1326507024, %v7073
    %v7089 = vor.u32 %v7087, %v7088
    %vm7090 = vcmp.lt.s32.totalorder %v7071, 1
    %vm7091 = vcmp.lt.s32.totalorder %v7071, 2
    %vm7092 = vcmp.lt.s32.totalorder %v7071, 3
    %vm7093 = vcmp.lt.s32.totalorder %v7071, 4
    %v7094 = vsel %vm7090, %v7074, %v7077
    %v7095 = vsel %vm7093, %v7083, 2102212464
    %v7096 = vsel %vm7092, %v7080, %v7095
    %v7097 = vsel %vm7091, %v7094, %v7096
    %v7098 = vsel %vm7090, %v7077, %v7080
    %v7099 = vsel %vm7093, %v7086, 920167782
    %v7100 = vsel %vm7092, %v7083, %v7099
    %v7101 = vsel %vm7091, %v7098, %v7100
    %v7102 = vsel %vm7090, %v7080, %v7083
    %v7103 = vsel %vm7093, %v7089, 1326507024
    %v7104 = vsel %vm7092, %v7086, %v7103
    %v7105 = vsel %vm7091, %v7102, %v7104
    %v7106 = vshll.u32 %v7066, 8
    %v7107 = vmul.u32.u64.compose %v7106, %v7105
    %v7108 = vextract.low.u32 %v7107
    %v7109 = vextract.high.u32 %v7107
    %v7110 = vmul.u32.u64.compose %v7106, %v7101
    %v7111 = vextract.low.u32 %v7110
    %v7112 = vextract.high.u32 %v7110
    %v7113 = vmul.u32 %v7106, %v7097
    %v7114 = vadd.s32 %v7109, %v7111
    %vm7115 = vc.u32 %v7109, %v7111
    %v7116 = vadd.s32 %v7112, 1
    %v7117 = vsel %vm7115, %v7116, %v7112
    %v7118 = vadd.s32 %v7113, %v7117
    %v7119 = vadd.s32 %v7118, 536870912
    %v7120 = vshrl.u32 %v7119, 30
    %v7121 = vshll.u32 %v7120, 30
    %v7122 = vsub.s32 %v7118, %v7121
    %vm7123 = vcmp.lt.s32.totalorder %v7122, 0
    %v7124 = vsub.s32 0, %v7122
    %v7125 = vsel %vm7123, %v7124, %v7122
    %v7126 = vclz %v7125
    %v7127 = vsub.s32 %v7126, 2
    %vm7128 = vcmp.gt.s32.totalorder 0, %v7127
    %v7129 = vsel %vm7128, 0, %v7127
    %v7130 = vsub.s32 32, %v7129
    %v7131 = vshll.u32 %v7122, %v7129
    %v7132 = vshrl.u32 %v7114, %v7130
    %v7133 = vor.u32 %v7131, %v7132
    %v7134 = vsub.s32 4294967266, %v7129
    %v7135 = vadd.s32 %v7134, 127
    %v7136 = vshll.u32 %v7135, 23
    %v7137 = vor.u32 4788187, %v7136
    %v7138 = vand.u32 2147483647, %v7137
    %v7140 = vcvt.s32.f32 %v7133
    %v7141 = vmul.f32 %v7140, %v7138
    %v7142 = vxor.u32 %v7141, 2147483648
    %v7143 = vsel %vm7060, %v7142, %v7141
    %v7144 = vsub.s32 4, %v7120
    %v7145 = vsel %vm7060, %v7144, %v7120
    %v7146 = vsel %vm7059, %v676, %v7143
    %v7147 = vsel %vm7059, 0, %v7145
    %v7148 = vcosq.f32.pop %v7146
    %v7149 = vsinq.f32.pop %v7146
    %vm7150 = vweird.f32 %v676
    %v7151 = vand.u32 %v7147, 3
    %vm7152 = vcmp.lt.s32.totalorder %v7151, 2
    %vm7153 = vcmp.eq.s32.totalorder %v7151, 0
    %v7154 = vxor.u32 %v7149, 2147483648
    %v7155 = vsel %vm7153, %v7148, %v7154
    %vm7156 = vcmp.eq.s32.totalorder %v7151, 2
    %v7157 = vxor.u32 %v7148, 2147483648
    %v7158 = vsel %vm7156, %v7157, %v7149
    %v7159 = vsel %vm7152, %v7155, %v7158
    %v7160 = vsel %vm7150, nan, %v7159
    %v7161 = vand.u32 2147483647, %v677
    %vm7162 = vcmp.le.f32.partialorder %v7161, 0.7853982
    %vm7163 = vcmp.lt.s32.totalorder %v677, 0
    %v7164 = vand.u32 %v677, 2139095040
    %v7165 = vshrl.u32 %v7164, 23
    %v7166 = vsub.s32 %v7165, 127
    %v7167 = vand.u32 2147483647, %v677
    %v7168 = vand.u32 %v7167, 8388607
    %v7169 = vor.u32 %v7168, 8388608
    %v7170 = vsub.s32 0, %v7169
    %v7171 = vadd.s32 %v7166, 1
    %vm7172 = vcmp.gt.s32.totalorder %v7171, 0
    %v7173 = vsel %vm7172, %v7171, 0
    %v7174 = vshrl.u32 %v7173, 5
    %v7175 = vand.u32 %v7173, 31
    %v7176 = vsub.s32 32, %v7175
    %v7177 = vshrl.u32 683565275, %v7176
    %v7178 = vshll.u32 683565275, %v7175
    %v7179 = vshrl.u32 2475754826, %v7176
    %v7180 = vor.u32 %v7178, %v7179
    %v7181 = vshll.u32 2475754826, %v7175
    %v7182 = vshrl.u32 2131351028, %v7176
    %v7183 = vor.u32 %v7181, %v7182
    %v7184 = vshll.u32 2131351028, %v7175
    %v7185 = vshrl.u32 2102212464, %v7176
    %v7186 = vor.u32 %v7184, %v7185
    %v7187 = vshll.u32 2102212464, %v7175
    %v7188 = vshrl.u32 920167782, %v7176
    %v7189 = vor.u32 %v7187, %v7188
    %v7190 = vshll.u32 920167782, %v7175
    %v7191 = vshrl.u32 1326507024, %v7176
    %v7192 = vor.u32 %v7190, %v7191
    %vm7193 = vcmp.lt.s32.totalorder %v7174, 1
    %vm7194 = vcmp.lt.s32.totalorder %v7174, 2
    %vm7195 = vcmp.lt.s32.totalorder %v7174, 3
    %vm7196 = vcmp.lt.s32.totalorder %v7174, 4
    %v7197 = vsel %vm7193, %v7177, %v7180
    %v7198 = vsel %vm7196, %v7186, 2102212464
    %v7199 = vsel %vm7195, %v7183, %v7198
    %v7200 = vsel %vm7194, %v7197, %v7199
    %v7201 = vsel %vm7193, %v7180, %v7183
    %v7202 = vsel %vm7196, %v7189, 920167782
    %v7203 = vsel %vm7195, %v7186, %v7202
    %v7204 = vsel %vm7194, %v7201, %v7203
    %v7205 = vsel %vm7193, %v7183, %v7186
    %v7206 = vsel %vm7196, %v7192, 1326507024
    %v7207 = vsel %vm7195, %v7189, %v7206
    %v7208 = vsel %vm7194, %v7205, %v7207
    %v7209 = vshll.u32 %v7169, 8
    %v7210 = vmul.u32.u64.compose %v7209, %v7208
    %v7211 = vextract.low.u32 %v7210
    %v7212 = vextract.high.u32 %v7210
    %v7213 = vmul.u32.u64.compose %v7209, %v7204
    %v7214 = vextract.low.u32 %v7213
    %v7215 = vextract.high.u32 %v7213
    %v7216 = vmul.u32 %v7209, %v7200
    %v7217 = vadd.s32 %v7212, %v7214
    %vm7218 = vc.u32 %v7212, %v7214
    %v7219 = vadd.s32 %v7215, 1
    %v7220 = vsel %vm7218, %v7219, %v7215
    %v7221 = vadd.s32 %v7216, %v7220
    %v7222 = vadd.s32 %v7221, 536870912
    %v7223 = vshrl.u32 %v7222, 30
    %v7224 = vshll.u32 %v7223, 30
    %v7225 = vsub.s32 %v7221, %v7224
    %vm7226 = vcmp.lt.s32.totalorder %v7225, 0
    %v7227 = vsub.s32 0, %v7225
    %v7228 = vsel %vm7226, %v7227, %v7225
    %v7229 = vclz %v7228
    %v7230 = vsub.s32 %v7229, 2
    %vm7231 = vcmp.gt.s32.totalorder 0, %v7230
    %v7232 = vsel %vm7231, 0, %v7230
    %v7233 = vsub.s32 32, %v7232
    %v7234 = vshll.u32 %v7225, %v7232
    %v7235 = vshrl.u32 %v7217, %v7233
    %v7236 = vor.u32 %v7234, %v7235
    %v7237 = vsub.s32 4294967266, %v7232
    %v7238 = vadd.s32 %v7237, 127
    %v7239 = vshll.u32 %v7238, 23
    %v7240 = vor.u32 4788187, %v7239
    %v7241 = vand.u32 2147483647, %v7240
    %v7243 = vcvt.s32.f32 %v7236
    %v7244 = vmul.f32 %v7243, %v7241
    %v7245 = vxor.u32 %v7244, 2147483648
    %v7246 = vsel %vm7163, %v7245, %v7244
    %v7247 = vsub.s32 4, %v7223
    %v7248 = vsel %vm7163, %v7247, %v7223
    %v7249 = vsel %vm7162, %v677, %v7246
    %v7250 = vsel %vm7162, 0, %v7248
    %v7251 = vcosq.f32.pop %v7249
    %v7252 = vsinq.f32.pop %v7249
    %vm7253 = vweird.f32 %v677
    %v7254 = vand.u32 %v7250, 3
    %vm7255 = vcmp.lt.s32.totalorder %v7254, 2
    %vm7256 = vcmp.eq.s32.totalorder %v7254, 0
    %v7257 = vxor.u32 %v7252, 2147483648
    %v7258 = vsel %vm7256, %v7251, %v7257
    %vm7259 = vcmp.eq.s32.totalorder %v7254, 2
    %v7260 = vxor.u32 %v7251, 2147483648
    %v7261 = vsel %vm7259, %v7260, %v7252
    %v7262 = vsel %vm7255, %v7258, %v7261
    %v7263 = vsel %vm7253, nan, %v7262
    %v7264 = vand.u32 2147483647, %v678
    %vm7265 = vcmp.le.f32.partialorder %v7264, 0.7853982
    %vm7266 = vcmp.lt.s32.totalorder %v678, 0
    %v7267 = vand.u32 %v678, 2139095040
    %v7268 = vshrl.u32 %v7267, 23
    %v7269 = vsub.s32 %v7268, 127
    %v7270 = vand.u32 2147483647, %v678
    %v7271 = vand.u32 %v7270, 8388607
    %v7272 = vor.u32 %v7271, 8388608
    %v7273 = vsub.s32 0, %v7272
    %v7274 = vadd.s32 %v7269, 1
    %vm7275 = vcmp.gt.s32.totalorder %v7274, 0
    %v7276 = vsel %vm7275, %v7274, 0
    %v7277 = vshrl.u32 %v7276, 5
    %v7278 = vand.u32 %v7276, 31
    %v7279 = vsub.s32 32, %v7278
    %v7280 = vshrl.u32 683565275, %v7279
    %v7281 = vshll.u32 683565275, %v7278
    %v7282 = vshrl.u32 2475754826, %v7279
    %v7283 = vor.u32 %v7281, %v7282
    %v7284 = vshll.u32 2475754826, %v7278
    %v7285 = vshrl.u32 2131351028, %v7279
    %v7286 = vor.u32 %v7284, %v7285
    %v7287 = vshll.u32 2131351028, %v7278
    %v7288 = vshrl.u32 2102212464, %v7279
    %v7289 = vor.u32 %v7287, %v7288
    %v7290 = vshll.u32 2102212464, %v7278
    %v7291 = vshrl.u32 920167782, %v7279
    %v7292 = vor.u32 %v7290, %v7291
    %v7293 = vshll.u32 920167782, %v7278
    %v7294 = vshrl.u32 1326507024, %v7279
    %v7295 = vor.u32 %v7293, %v7294
    %vm7296 = vcmp.lt.s32.totalorder %v7277, 1
    %vm7297 = vcmp.lt.s32.totalorder %v7277, 2
    %vm7298 = vcmp.lt.s32.totalorder %v7277, 3
    %vm7299 = vcmp.lt.s32.totalorder %v7277, 4
    %v7300 = vsel %vm7296, %v7280, %v7283
    %v7301 = vsel %vm7299, %v7289, 2102212464
    %v7302 = vsel %vm7298, %v7286, %v7301
    %v7303 = vsel %vm7297, %v7300, %v7302
    %v7304 = vsel %vm7296, %v7283, %v7286
    %v7305 = vsel %vm7299, %v7292, 920167782
    %v7306 = vsel %vm7298, %v7289, %v7305
    %v7307 = vsel %vm7297, %v7304, %v7306
    %v7308 = vsel %vm7296, %v7286, %v7289
    %v7309 = vsel %vm7299, %v7295, 1326507024
    %v7310 = vsel %vm7298, %v7292, %v7309
    %v7311 = vsel %vm7297, %v7308, %v7310
    %v7312 = vshll.u32 %v7272, 8
    %v7313 = vmul.u32.u64.compose %v7312, %v7311
    %v7314 = vextract.low.u32 %v7313
    %v7315 = vextract.high.u32 %v7313
    %v7316 = vmul.u32.u64.compose %v7312, %v7307
    %v7317 = vextract.low.u32 %v7316
    %v7318 = vextract.high.u32 %v7316
    %v7319 = vmul.u32 %v7312, %v7303
    %v7320 = vadd.s32 %v7315, %v7317
    %vm7321 = vc.u32 %v7315, %v7317
    %v7322 = vadd.s32 %v7318, 1
    %v7323 = vsel %vm7321, %v7322, %v7318
    %v7324 = vadd.s32 %v7319, %v7323
    %v7325 = vadd.s32 %v7324, 536870912
    %v7326 = vshrl.u32 %v7325, 30
    %v7327 = vshll.u32 %v7326, 30
    %v7328 = vsub.s32 %v7324, %v7327
    %vm7329 = vcmp.lt.s32.totalorder %v7328, 0
    %v7330 = vsub.s32 0, %v7328
    %v7331 = vsel %vm7329, %v7330, %v7328
    %v7332 = vclz %v7331
    %v7333 = vsub.s32 %v7332, 2
    %vm7334 = vcmp.gt.s32.totalorder 0, %v7333
    %v7335 = vsel %vm7334, 0, %v7333
    %v7336 = vsub.s32 32, %v7335
    %v7337 = vshll.u32 %v7328, %v7335
    %v7338 = vshrl.u32 %v7320, %v7336
    %v7339 = vor.u32 %v7337, %v7338
    %v7340 = vsub.s32 4294967266, %v7335
    %v7341 = vadd.s32 %v7340, 127
    %v7342 = vshll.u32 %v7341, 23
    %v7343 = vor.u32 4788187, %v7342
    %v7344 = vand.u32 2147483647, %v7343
    %v7346 = vcvt.s32.f32 %v7339
    %v7347 = vmul.f32 %v7346, %v7344
    %v7348 = vxor.u32 %v7347, 2147483648
    %v7349 = vsel %vm7266, %v7348, %v7347
    %v7350 = vsub.s32 4, %v7326
    %v7351 = vsel %vm7266, %v7350, %v7326
    %v7352 = vsel %vm7265, %v678, %v7349
    %v7353 = vsel %vm7265, 0, %v7351
    %v7354 = vcosq.f32.pop %v7352
    %v7355 = vsinq.f32.pop %v7352
    %vm7356 = vweird.f32 %v678
    %v7357 = vand.u32 %v7353, 3
    %vm7358 = vcmp.lt.s32.totalorder %v7357, 2
    %vm7359 = vcmp.eq.s32.totalorder %v7357, 0
    %v7360 = vxor.u32 %v7355, 2147483648
    %v7361 = vsel %vm7359, %v7354, %v7360
    %vm7362 = vcmp.eq.s32.totalorder %v7357, 2
    %v7363 = vxor.u32 %v7354, 2147483648
    %v7364 = vsel %vm7362, %v7363, %v7355
    %v7365 = vsel %vm7358, %v7361, %v7364
    %v7366 = vsel %vm7356, nan, %v7365
    %v7367 = vpack.c.bf16 %v4997, %v4173
    %v7368 = vpack.c.bf16 %v5100, %v4276
    %v7369 = vpack.c.bf16 %v5203, %v4379
    %v7370 = vpack.c.bf16 %v5306, %v4482
    %v7371 = vpack.c.bf16 %v5409, %v4585
    %v7372 = vpack.c.bf16 %v5512, %v4688
    %v7373 = vpack.c.bf16 %v5615, %v4791
    %v7374 = vpack.c.bf16 %v5718, %v4894
    %v7375 = vpack.c.bf16 %v6645, %v5821
    %v7376 = vpack.c.bf16 %v6748, %v5924
    %v7377 = vpack.c.bf16 %v6851, %v6027
    %v7378 = vpack.c.bf16 %v6954, %v6130
    %v7379 = vpack.c.bf16 %v7057, %v6233
    %v7380 = vpack.c.bf16 %v7160, %v6336
    %v7381 = vpack.c.bf16 %v7263, %v6439
    %v7382 = vpack.c.bf16 %v7366, %v6542
    %7383 = vst [vmem:[#allocation2 + $0x80] sm:$0xff] %v7367
    %7384 = vst [vmem:[#allocation2 + $0x88] sm:$0xff] %v7368
    %7385 = vst [vmem:[#allocation2 + $0x90] sm:$0xff] %v7369
    %7386 = vst [vmem:[#allocation2 + $0x98] sm:$0xff] %v7370
    %7387 = vst [vmem:[#allocation2 + $0xa0] sm:$0xff] %v7371
    %7388 = vst [vmem:[#allocation2 + $0xa8] sm:$0xff] %v7372
    %7389 = vst [vmem:[#allocation2 + $0xb0] sm:$0xff] %v7373
    %7390 = vst [vmem:[#allocation2 + $0xb8] sm:$0xff] %v7374
    %7391 = vst [vmem:[#allocation2 + $0xc0] sm:$0xff] %v7375
    %7392 = vst [vmem:[#allocation2 + $0xc8] sm:$0xff] %v7376
    %7393 = vst [vmem:[#allocation2 + $0xd0] sm:$0xff] %v7377
    %7394 = vst [vmem:[#allocation2 + $0xd8] sm:$0xff] %v7378
    %7395 = vst [vmem:[#allocation2 + $0xe0] sm:$0xff] %v7379
    %7396 = vst [vmem:[#allocation2 + $0xe8] sm:$0xff] %v7380
    %7397 = vst [vmem:[#allocation2 + $0xf0] sm:$0xff] %v7381
    %7398 = vst [vmem:[#allocation2 + $0xf8] sm:$0xff] %v7382
    %v7399 = vld [vmem:[#allocation8] sm:$0xf]
    %v7400 = vld [vmem:[#allocation8 + $0x4] sm:$0xf]
    %v7401 = vld [vmem:[#allocation8 + $0x8] sm:$0xf]
    %v7402 = vld [vmem:[#allocation8 + $0xc] sm:$0xf]
    %v7403 = vld [vmem:[#allocation2] sm:$0xff]
    %v7404 = vld [vmem:[#allocation2 + $0x8] sm:$0xff]
    %v7405 = vld [vmem:[#allocation2 + $0x10] sm:$0xff]
    %v7406 = vld [vmem:[#allocation2 + $0x18] sm:$0xff]
    %v7407 = vld [vmem:[#allocation2 + $0x20] sm:$0xff]
    %v7408 = vld [vmem:[#allocation2 + $0x28] sm:$0xff]
    %v7409 = vld [vmem:[#allocation2 + $0x30] sm:$0xff]
    %v7410 = vld [vmem:[#allocation2 + $0x38] sm:$0xff]
    %v7411 = vld [vmem:[#allocation2 + $0x40] sm:$0xff]
    %v7412 = vld [vmem:[#allocation2 + $0x48] sm:$0xff]
    %v7413 = vld [vmem:[#allocation2 + $0x50] sm:$0xff]
    %v7414 = vld [vmem:[#allocation2 + $0x58] sm:$0xff]
    %v7415 = vld [vmem:[#allocation2 + $0x60] sm:$0xff]
    %v7416 = vld [vmem:[#allocation2 + $0x68] sm:$0xff]
    %v7417 = vld [vmem:[#allocation2 + $0x70] sm:$0xff]
    %v7418 = vld [vmem:[#allocation2 + $0x78] sm:$0xff]
    %v7419 = vld [vmem:[#allocation2 + $0x80] sm:$0xff]
    %v7420 = vld [vmem:[#allocation2 + $0x88] sm:$0xff]
    %v7421 = vld [vmem:[#allocation2 + $0x90] sm:$0xff]
    %v7422 = vld [vmem:[#allocation2 + $0x98] sm:$0xff]
    %v7423 = vld [vmem:[#allocation2 + $0xa0] sm:$0xff]
    %v7424 = vld [vmem:[#allocation2 + $0xa8] sm:$0xff]
    %v7425 = vld [vmem:[#allocation2 + $0xb0] sm:$0xff]
    %v7426 = vld [vmem:[#allocation2 + $0xb8] sm:$0xff]
    %v7427 = vld [vmem:[#allocation2 + $0xc0] sm:$0xff]
    %v7428 = vld [vmem:[#allocation2 + $0xc8] sm:$0xff]
    %v7429 = vld [vmem:[#allocation2 + $0xd0] sm:$0xff]
    %v7430 = vld [vmem:[#allocation2 + $0xd8] sm:$0xff]
    %v7431 = vld [vmem:[#allocation2 + $0xe0] sm:$0xff]
    %v7432 = vld [vmem:[#allocation2 + $0xe8] sm:$0xff]
    %v7433 = vld [vmem:[#allocation2 + $0xf0] sm:$0xff]
    %v7434 = vld [vmem:[#allocation2 + $0xf8] sm:$0xff]
    %v7439 = vunpack.c.l.b16 %v7399
    %v7440 = vunpack.c.l.b16 %v7400
    %v7441 = vunpack.c.l.b16 %v7401
    %v7442 = vunpack.c.l.b16 %v7402
    %v7443 = vpack.c.b16 %v7440, %v7439
    %v7444 = vpack.c.b16 %v7442, %v7441
    %vm7445 = vcmask 523264
    %v7447 = vsel %vm7445, %v7443, 0
    %v7450 = vsel %vm7445, %v7444, 0
    %7452 = vmatprep.subr.bf16.mxu0 %v7404
    %7453 = vmatpush1.bf16.msra.mxu0 %v7403
    %7454 = vmatprep.subr.bf16.mxu0 %v7412
    %7455 = vmatpush1.bf16.msra.mxu0 %v7411
    %7456 = vmatprep.subr.bf16.mxu0 %v7420
    %7457 = vmatpush1.bf16.msra.mxu0 %v7419
    %7458 = vmatprep.subr.bf16.mxu0 %v7428
    %7459 = vmatpush1.bf16.msra.mxu0 %v7427
    %7460 = vmatprep.subr.bf16.mxu0 0
    %7461 = vmatpush1.bf16.msra.mxu0 0
    %7462 = vmatprep.subr.bf16.mxu0 0
    %7463 = vmatpush1.bf16.msra.mxu0 0
    %7464 = vmatprep.subr.bf16.mxu0 0
    %7465 = vmatpush1.bf16.msra.mxu0 0
    %7466 = vmatprep.subr.bf16.mxu0 0
    %7467 = vmatpush1.bf16.msra.mxu0 0
    %7468 = vmatprep.subr.bf16.mxu0 0
    %7469 = vmatpush1.bf16.msra.mxu0 0
    %7470 = vmatprep.subr.bf16.mxu0 0
    %7471 = vmatpush1.bf16.msra.mxu0 0
    %7472 = vmatprep.subr.bf16.mxu0 0
    %7473 = vmatpush1.bf16.msra.mxu0 0
    %7474 = vmatprep.subr.bf16.mxu0 0
    %7475 = vmatpush1.bf16.msra.mxu0 0
    %7476 = vmatprep.subr.bf16.mxu0 0
    %7477 = vmatpush1.bf16.msra.mxu0 0
    %7478 = vmatprep.subr.bf16.mxu0 0
    %7479 = vmatpush1.bf16.msra.mxu0 0
    %7480 = vmatprep.subr.bf16.mxu0 0
    %7481 = vmatpush1.bf16.msra.mxu0 0
    %7482 = vmatprep.subr.bf16.mxu0 0
    %7483 = vmatpush1.bf16.msra.mxu0 0
    %7484 = vmatprep.mubr.bf16.mxu0 0
    %7485 = vmatmul.mubr.bf16.gmra.mrb[0].mxu0 %v7447
    %v7486 = vpop.f32.mrb[0].mxu0
    %v7487 = vadd.f32 %v679, %v7486
    %v7488 = vpop.f32.mrb[0].mxu0
    %v7489 = vadd.f32 %v680, %v7488
    %v7490 = vpop.f32.mrb[0].mxu0
    %v7491 = vadd.f32 %v687, %v7490
    %v7492 = vpop.f32.mrb[0].mxu0
    %v7493 = vadd.f32 %v688, %v7492
    %7494 = vmatprep.mubr.bf16.mxu0 0
    %7495 = vmatmul.mubr.bf16.gmra.mrb[0].mxu0 %v7450
    %v7496 = vpop.f32.mrb[0].mxu0
    %v7497 = vadd.f32 %v695, %v7496
    %v7498 = vpop.f32.mrb[0].mxu0
    %v7499 = vadd.f32 %v696, %v7498
    %v7500 = vpop.f32.mrb[0].mxu0
    %v7501 = vadd.f32 %v703, %v7500
    %v7502 = vpop.f32.mrb[0].mxu0
    %v7503 = vadd.f32 %v704, %v7502
    %7504 = vdwg.mxu0
    %7505 = vmatprep.subr.bf16.mxu0 %v7406
    %7506 = vmatpush1.bf16.msra.mxu0 %v7405
    %7507 = vmatprep.subr.bf16.mxu0 %v7414
    %7508 = vmatpush1.bf16.msra.mxu0 %v7413
    %7509 = vmatprep.subr.bf16.mxu0 %v7422
    %7510 = vmatpush1.bf16.msra.mxu0 %v7421
    %7511 = vmatprep.subr.bf16.mxu0 %v7430
    %7512 = vmatpush1.bf16.msra.mxu0 %v7429
    %7513 = vmatprep.subr.bf16.mxu0 0
    %7514 = vmatpush1.bf16.msra.mxu0 0
    %7515 = vmatprep.subr.bf16.mxu0 0
    %7516 = vmatpush1.bf16.msra.mxu0 0
    %7517 = vmatprep.subr.bf16.mxu0 0
    %7518 = vmatpush1.bf16.msra.mxu0 0
    %7519 = vmatprep.subr.bf16.mxu0 0
    %7520 = vmatpush1.bf16.msra.mxu0 0
    %7521 = vmatprep.subr.bf16.mxu0 0
    %7522 = vmatpush1.bf16.msra.mxu0 0
    %7523 = vmatprep.subr.bf16.mxu0 0
    %7524 = vmatpush1.bf16.msra.mxu0 0
    %7525 = vmatprep.subr.bf16.mxu0 0
    %7526 = vmatpush1.bf16.msra.mxu0 0
    %7527 = vmatprep.subr.bf16.mxu0 0
    %7528 = vmatpush1.bf16.msra.mxu0 0
    %7529 = vmatprep.subr.bf16.mxu0 0
    %7530 = vmatpush1.bf16.msra.mxu0 0
    %7531 = vmatprep.subr.bf16.mxu0 0
    %7532 = vmatpush1.bf16.msra.mxu0 0
    %7533 = vmatprep.subr.bf16.mxu0 0
    %7534 = vmatpush1.bf16.msra.mxu0 0
    %7535 = vmatprep.subr.bf16.mxu0 0
    %7536 = vmatpush1.bf16.msra.mxu0 0
    %7537 = vmatprep.mubr.bf16.mxu0 0
    %7538 = vmatmul.mubr.bf16.gmra.mrb[0].mxu0 %v7447
    %v7539 = vpop.f32.mrb[0].mxu0
    %v7540 = vadd.f32 %v681, %v7539
    %v7541 = vpop.f32.mrb[0].mxu0
    %v7542 = vadd.f32 %v682, %v7541
    %v7543 = vpop.f32.mrb[0].mxu0
    %v7544 = vadd.f32 %v689, %v7543
    %v7545 = vpop.f32.mrb[0].mxu0
    %v7546 = vadd.f32 %v690, %v7545
    %7547 = vmatprep.mubr.bf16.mxu0 0
    %7548 = vmatmul.mubr.bf16.gmra.mrb[0].mxu0 %v7450
    %v7549 = vpop.f32.mrb[0].mxu0
    %v7550 = vadd.f32 %v697, %v7549
    %v7551 = vpop.f32.mrb[0].mxu0
    %v7552 = vadd.f32 %v698, %v7551
    %v7553 = vpop.f32.mrb[0].mxu0
    %v7554 = vadd.f32 %v705, %v7553
    %v7555 = vpop.f32.mrb[0].mxu0
    %v7556 = vadd.f32 %v706, %v7555
    %7557 = vdwg.mxu0
    %7558 = vmatprep.subr.bf16.mxu0 %v7408
    %7559 = vmatpush1.bf16.msra.mxu0 %v7407
    %7560 = vmatprep.subr.bf16.mxu0 %v7416
    %7561 = vmatpush1.bf16.msra.mxu0 %v7415
    %7562 = vmatprep.subr.bf16.mxu0 %v7424
    %7563 = vmatpush1.bf16.msra.mxu0 %v7423
    %7564 = vmatprep.subr.bf16.mxu0 %v7432
    %7565 = vmatpush1.bf16.msra.mxu0 %v7431
    %7566 = vmatprep.subr.bf16.mxu0 0
    %7567 = vmatpush1.bf16.msra.mxu0 0
    %7568 = vmatprep.subr.bf16.mxu0 0
    %7569 = vmatpush1.bf16.msra.mxu0 0
    %7570 = vmatprep.subr.bf16.mxu0 0
    %7571 = vmatpush1.bf16.msra.mxu0 0
    %7572 = vmatprep.subr.bf16.mxu0 0
    %7573 = vmatpush1.bf16.msra.mxu0 0
    %7574 = vmatprep.subr.bf16.mxu0 0
    %7575 = vmatpush1.bf16.msra.mxu0 0
    %7576 = vmatprep.subr.bf16.mxu0 0
    %7577 = vmatpush1.bf16.msra.mxu0 0
    %7578 = vmatprep.subr.bf16.mxu0 0
    %7579 = vmatpush1.bf16.msra.mxu0 0
    %7580 = vmatprep.subr.bf16.mxu0 0
    %7581 = vmatpush1.bf16.msra.mxu0 0
    %7582 = vmatprep.subr.bf16.mxu0 0
    %7583 = vmatpush1.bf16.msra.mxu0 0
    %7584 = vmatprep.subr.bf16.mxu0 0
    %7585 = vmatpush1.bf16.msra.mxu0 0
    %7586 = vmatprep.subr.bf16.mxu0 0
    %7587 = vmatpush1.bf16.msra.mxu0 0
    %7588 = vmatprep.subr.bf16.mxu0 0
    %7589 = vmatpush1.bf16.msra.mxu0 0
    %7590 = vmatprep.mubr.bf16.mxu0 0
    %7591 = vmatmul.mubr.bf16.gmra.mrb[0].mxu0 %v7447
    %v7592 = vpop.f32.mrb[0].mxu0
    %v7593 = vadd.f32 %v683, %v7592
    %v7594 = vpop.f32.mrb[0].mxu0
    %v7595 = vadd.f32 %v684, %v7594
    %v7596 = vpop.f32.mrb[0].mxu0
    %v7597 = vadd.f32 %v691, %v7596
    %v7598 = vpop.f32.mrb[0].mxu0
    %v7599 = vadd.f32 %v692, %v7598
    %7600 = vmatprep.mubr.bf16.mxu0 0
    %7601 = vmatmul.mubr.bf16.gmra.mrb[0].mxu0 %v7450
    %v7602 = vpop.f32.mrb[0].mxu0
    %v7603 = vadd.f32 %v699, %v7602
    %v7604 = vpop.f32.mrb[0].mxu0
    %v7605 = vadd.f32 %v700, %v7604
    %v7606 = vpop.f32.mrb[0].mxu0
    %v7607 = vadd.f32 %v707, %v7606
    %v7608 = vpop.f32.mrb[0].mxu0
    %v7609 = vadd.f32 %v708, %v7608
    %7610 = vdwg.mxu0
    %7611 = vmatprep.subr.bf16.mxu0 %v7410
    %7612 = vmatpush1.bf16.msra.mxu0 %v7409
    %7613 = vmatprep.subr.bf16.mxu0 %v7418
    %7614 = vmatpush1.bf16.msra.mxu0 %v7417
    %7615 = vmatprep.subr.bf16.mxu0 %v7426
    %7616 = vmatpush1.bf16.msra.mxu0 %v7425
    %7617 = vmatprep.subr.bf16.mxu0 %v7434
    %7618 = vmatpush1.bf16.msra.mxu0 %v7433
    %7619 = vmatprep.subr.bf16.mxu0 0
    %7620 = vmatpush1.bf16.msra.mxu0 0
    %7621 = vmatprep.subr.bf16.mxu0 0
    %7622 = vmatpush1.bf16.msra.mxu0 0
    %7623 = vmatprep.subr.bf16.mxu0 0
    %7624 = vmatpush1.bf16.msra.mxu0 0
    %7625 = vmatprep.subr.bf16.mxu0 0
    %7626 = vmatpush1.bf16.msra.mxu0 0
    %7627 = vmatprep.subr.bf16.mxu0 0
    %7628 = vmatpush1.bf16.msra.mxu0 0
    %7629 = vmatprep.subr.bf16.mxu0 0
    %7630 = vmatpush1.bf16.msra.mxu0 0
    %7631 = vmatprep.subr.bf16.mxu0 0
    %7632 = vmatpush1.bf16.msra.mxu0 0
    %7633 = vmatprep.subr.bf16.mxu0 0
    %7634 = vmatpush1.bf16.msra.mxu0 0
    %7635 = vmatprep.subr.bf16.mxu0 0
    %7636 = vmatpush1.bf16.msra.mxu0 0
    %7637 = vmatprep.subr.bf16.mxu0 0
    %7638 = vmatpush1.bf16.msra.mxu0 0
    %7639 = vmatprep.subr.bf16.mxu0 0
    %7640 = vmatpush1.bf16.msra.mxu0 0
    %7641 = vmatprep.subr.bf16.mxu0 0
    %7642 = vmatpush1.bf16.msra.mxu0 0
    %7643 = vmatprep.mubr.bf16.mxu0 0
    %7644 = vmatmul.mubr.bf16.gmra.mrb[0].mxu0 %v7447
    %v7645 = vpop.f32.mrb[0].mxu0
    %v7646 = vadd.f32 %v685, %v7645
    %v7647 = vpop.f32.mrb[0].mxu0
    %v7648 = vadd.f32 %v686, %v7647
    %v7649 = vpop.f32.mrb[0].mxu0
    %v7650 = vadd.f32 %v693, %v7649
    %v7651 = vpop.f32.mrb[0].mxu0
    %v7652 = vadd.f32 %v694, %v7651
    %7653 = vmatprep.mubr.bf16.mxu0 0
    %7654 = vmatmul.mubr.bf16.gmra.mrb[0].mxu0 %v7450
    %v7655 = vpop.f32.mrb[0].mxu0
    %v7656 = vadd.f32 %v701, %v7655
    %v7657 = vpop.f32.mrb[0].mxu0
    %v7658 = vadd.f32 %v702, %v7657
    %v7659 = vpop.f32.mrb[0].mxu0
    %v7660 = vadd.f32 %v709, %v7659
    %v7661 = vpop.f32.mrb[0].mxu0
    %v7662 = vadd.f32 %v710, %v7661
    %7663 = vdwg.mxu0
    %v7664 = vld [vmem:[#allocation6] sm:$0xff]
    %v7665 = vld [vmem:[#allocation6 + $0x8] sm:$0xff]
    %v7666 = vld [vmem:[#allocation6 + $0x10] sm:$0xff]
    %v7667 = vld [vmem:[#allocation6 + $0x18] sm:$0xff]
    %7669 = vset.pattern.permute.xlu0 3
    %7670 = vperm.xlu0 %7669, %v7664
    %v7671 = vpop.permute.xlu0 %7670
    %7674 = vset.pattern.permute.xlu0 3
    %7675 = vperm.xlu0 %7674, %v7665
    %v7676 = vpop.permute.xlu0 %7675
    %7679 = vset.pattern.permute.xlu0 3
    %7680 = vperm.xlu0 %7679, %v7666
    %v7681 = vpop.permute.xlu0 %7680
    %7684 = vset.pattern.permute.xlu0 3
    %7685 = vperm.xlu0 %7684, %v7667
    %v7686 = vpop.permute.xlu0 %7685
    %v7688 = vadd.f32 %v7487, %v7671
    %v7689 = vadd.f32 %v7489, %v7671
    %v7690 = vadd.f32 %v7540, %v7671
    %v7691 = vadd.f32 %v7542, %v7671
    %v7692 = vadd.f32 %v7593, %v7671
    %v7693 = vadd.f32 %v7595, %v7671
    %v7694 = vadd.f32 %v7646, %v7671
    %v7695 = vadd.f32 %v7648, %v7671
    %v7696 = vadd.f32 %v7491, %v7676
    %v7697 = vadd.f32 %v7493, %v7676
    %v7698 = vadd.f32 %v7544, %v7676
    %v7699 = vadd.f32 %v7546, %v7676
    %v7700 = vadd.f32 %v7597, %v7676
    %v7701 = vadd.f32 %v7599, %v7676
    %v7702 = vadd.f32 %v7650, %v7676
    %v7703 = vadd.f32 %v7652, %v7676
    %v7704 = vadd.f32 %v7497, %v7681
    %v7705 = vadd.f32 %v7499, %v7681
    %v7706 = vadd.f32 %v7550, %v7681
    %v7707 = vadd.f32 %v7552, %v7681
    %v7708 = vadd.f32 %v7603, %v7681
    %v7709 = vadd.f32 %v7605, %v7681
    %v7710 = vadd.f32 %v7656, %v7681
    %v7711 = vadd.f32 %v7658, %v7681
    %v7712 = vadd.f32 %v7501, %v7686
    %v7713 = vadd.f32 %v7503, %v7686
    %v7714 = vadd.f32 %v7554, %v7686
    %v7715 = vadd.f32 %v7556, %v7686
    %v7716 = vadd.f32 %v7607, %v7686
    %v7717 = vadd.f32 %v7609, %v7686
    %v7718 = vadd.f32 %v7660, %v7686
    %v7719 = vadd.f32 %v7662, %v7686
    %v7720 = vmax.f32 %v7688, 0.0
    %v7721 = vmax.f32 %v7689, 0.0
    %v7722 = vmax.f32 %v7690, 0.0
    %v7723 = vmax.f32 %v7691, 0.0
    %v7724 = vmax.f32 %v7692, 0.0
    %v7725 = vmax.f32 %v7693, 0.0
    %v7726 = vmax.f32 %v7694, 0.0
    %v7727 = vmax.f32 %v7695, 0.0
    %v7728 = vmax.f32 %v7696, 0.0
    %v7729 = vmax.f32 %v7697, 0.0
    %v7730 = vmax.f32 %v7698, 0.0
    %v7731 = vmax.f32 %v7699, 0.0
    %v7732 = vmax.f32 %v7700, 0.0
    %v7733 = vmax.f32 %v7701, 0.0
    %v7734 = vmax.f32 %v7702, 0.0
    %v7735 = vmax.f32 %v7703, 0.0
    %v7736 = vmax.f32 %v7704, 0.0
    %v7737 = vmax.f32 %v7705, 0.0
    %v7738 = vmax.f32 %v7706, 0.0
    %v7739 = vmax.f32 %v7707, 0.0
    %v7740 = vmax.f32 %v7708, 0.0
    %v7741 = vmax.f32 %v7709, 0.0
    %v7742 = vmax.f32 %v7710, 0.0
    %v7743 = vmax.f32 %v7711, 0.0
    %v7744 = vmax.f32 %v7712, 0.0
    %v7745 = vmax.f32 %v7713, 0.0
    %v7746 = vmax.f32 %v7714, 0.0
    %v7747 = vmax.f32 %v7715, 0.0
    %v7748 = vmax.f32 %v7716, 0.0
    %v7749 = vmax.f32 %v7717, 0.0
    %v7750 = vmax.f32 %v7718, 0.0
    %v7751 = vmax.f32 %v7719, 0.0
    %v7752 = vld [vmem:[#allocation8 + $0x10] sm:$0xf]
    %v7753 = vld [vmem:[#allocation8 + $0x14] sm:$0xf]
    %v7754 = vld [vmem:[#allocation8 + $0x18] sm:$0xf]
    %v7755 = vld [vmem:[#allocation8 + $0x1c] sm:$0xf]
    %v7756 = vpack.c.bf16 %v7728, %v7720
    %v7757 = vpack.c.bf16 %v7729, %v7721
    %v7758 = vpack.c.bf16 %v7730, %v7722
    %v7759 = vpack.c.bf16 %v7731, %v7723
    %v7760 = vpack.c.bf16 %v7732, %v7724
    %v7761 = vpack.c.bf16 %v7733, %v7725
    %v7762 = vpack.c.bf16 %v7734, %v7726
    %v7763 = vpack.c.bf16 %v7735, %v7727
    %v7764 = vpack.c.bf16 %v7744, %v7736
    %v7765 = vpack.c.bf16 %v7745, %v7737
    %v7766 = vpack.c.bf16 %v7746, %v7738
    %v7767 = vpack.c.bf16 %v7747, %v7739
    %v7768 = vpack.c.bf16 %v7748, %v7740
    %v7769 = vpack.c.bf16 %v7749, %v7741
    %v7770 = vpack.c.bf16 %v7750, %v7742
    %v7771 = vpack.c.bf16 %v7751, %v7743
    %7772 = vset.pattern.permute.xlu0 4
    %7773 = vperm.xlu0 %7772, %v7664
    %v7774 = vpop.permute.xlu0 %7773
    %7776 = vset.pattern.permute.xlu0 4
    %7777 = vperm.xlu0 %7776, %v7665
    %v7778 = vpop.permute.xlu0 %7777
    %7780 = vset.pattern.permute.xlu0 4
    %7781 = vperm.xlu0 %7780, %v7666
    %v7782 = vpop.permute.xlu0 %7781
    %7784 = vset.pattern.permute.xlu0 4
    %7785 = vperm.xlu0 %7784, %v7667
    %v7786 = vpop.permute.xlu0 %7785
    %v7792 = vunpack.c.l.b16 %v7752
    %v7793 = vunpack.c.l.b16 %v7753
    %v7794 = vunpack.c.l.b16 %v7754
    %v7795 = vunpack.c.l.b16 %v7755
    %v7796 = vpack.c.b16 %v7793, %v7792
    %v7797 = vpack.c.b16 %v7795, %v7794
    %vm7798 = vcmask 261120
    %v7800 = vsel %vm7798, %v7796, 0
    %v7803 = vsel %vm7798, %v7797, 0
    %7805 = vmatprep.subr.bf16.mxu0 %v7757
    %7806 = vmatpush1.bf16.msra.mxu0 %v7756
    %7807 = vmatprep.subr.bf16.mxu0 %v7765
    %7808 = vmatpush1.bf16.msra.mxu0 %v7764
    %7809 = vmatprep.subr.bf16.mxu0 0
    %7810 = vmatpush1.bf16.msra.mxu0 0
    %7811 = vmatprep.subr.bf16.mxu0 0
    %7812 = vmatpush1.bf16.msra.mxu0 0
    %7813 = vmatprep.subr.bf16.mxu0 0
    %7814 = vmatpush1.bf16.msra.mxu0 0
    %7815 = vmatprep.subr.bf16.mxu0 0
    %7816 = vmatpush1.bf16.msra.mxu0 0
    %7817 = vmatprep.subr.bf16.mxu0 0
    %7818 = vmatpush1.bf16.msra.mxu0 0
    %7819 = vmatprep.subr.bf16.mxu0 0
    %7820 = vmatpush1.bf16.msra.mxu0 0
    %7821 = vmatprep.subr.bf16.mxu0 0
    %7822 = vmatpush1.bf16.msra.mxu0 0
    %7823 = vmatprep.subr.bf16.mxu0 0
    %7824 = vmatpush1.bf16.msra.mxu0 0
    %7825 = vmatprep.subr.bf16.mxu0 0
    %7826 = vmatpush1.bf16.msra.mxu0 0
    %7827 = vmatprep.subr.bf16.mxu0 0
    %7828 = vmatpush1.bf16.msra.mxu0 0
    %7829 = vmatprep.subr.bf16.mxu0 0
    %7830 = vmatpush1.bf16.msra.mxu0 0
    %7831 = vmatprep.subr.bf16.mxu0 0
    %7832 = vmatpush1.bf16.msra.mxu0 0
    %7833 = vmatprep.subr.bf16.mxu0 0
    %7834 = vmatpush1.bf16.msra.mxu0 0
    %7835 = vmatprep.subr.bf16.mxu0 0
    %7836 = vmatpush1.bf16.msra.mxu0 0
    %7837 = vmatprep.mubr.bf16.mxu0 0
    %7838 = vmatmul.mubr.bf16.gmra.mrb[0].mxu0 %v7800
    %v7839 = vpop.f32.mrb[0].mxu0
    %v7840 = vadd.f32 %v7774, %v7839
    %v7841 = vpop.f32.mrb[0].mxu0
    %v7842 = vadd.f32 %v7774, %v7841
    %v7843 = vpop.f32.mrb[0].mxu0
    %v7844 = vadd.f32 %v7778, %v7843
    %v7845 = vpop.f32.mrb[0].mxu0
    %v7846 = vadd.f32 %v7778, %v7845
    %7847 = vmatprep.mubr.bf16.mxu0 0
    %7848 = vmatmul.mubr.bf16.gmra.mrb[0].mxu0 %v7803
    %v7849 = vpop.f32.mrb[0].mxu0
    %v7850 = vadd.f32 %v7782, %v7849
    %v7851 = vpop.f32.mrb[0].mxu0
    %v7852 = vadd.f32 %v7782, %v7851
    %v7853 = vpop.f32.mrb[0].mxu0
    %v7854 = vadd.f32 %v7786, %v7853
    %v7855 = vpop.f32.mrb[0].mxu0
    %v7856 = vadd.f32 %v7786, %v7855
    %7857 = vdwg.mxu0
    %7858 = vmatprep.subr.bf16.mxu0 %v7759
    %7859 = vmatpush1.bf16.msra.mxu0 %v7758
    %7860 = vmatprep.subr.bf16.mxu0 %v7767
    %7861 = vmatpush1.bf16.msra.mxu0 %v7766
    %7862 = vmatprep.subr.bf16.mxu0 0
    %7863 = vmatpush1.bf16.msra.mxu0 0
    %7864 = vmatprep.subr.bf16.mxu0 0
    %7865 = vmatpush1.bf16.msra.mxu0 0
    %7866 = vmatprep.subr.bf16.mxu0 0
    %7867 = vmatpush1.bf16.msra.mxu0 0
    %7868 = vmatprep.subr.bf16.mxu0 0
    %7869 = vmatpush1.bf16.msra.mxu0 0
    %7870 = vmatprep.subr.bf16.mxu0 0
    %7871 = vmatpush1.bf16.msra.mxu0 0
    %7872 = vmatprep.subr.bf16.mxu0 0
    %7873 = vmatpush1.bf16.msra.mxu0 0
    %7874 = vmatprep.subr.bf16.mxu0 0
    %7875 = vmatpush1.bf16.msra.mxu0 0
    %7876 = vmatprep.subr.bf16.mxu0 0
    %7877 = vmatpush1.bf16.msra.mxu0 0
    %7878 = vmatprep.subr.bf16.mxu0 0
    %7879 = vmatpush1.bf16.msra.mxu0 0
    %7880 = vmatprep.subr.bf16.mxu0 0
    %7881 = vmatpush1.bf16.msra.mxu0 0
    %7882 = vmatprep.subr.bf16.mxu0 0
    %7883 = vmatpush1.bf16.msra.mxu0 0
    %7884 = vmatprep.subr.bf16.mxu0 0
    %7885 = vmatpush1.bf16.msra.mxu0 0
    %7886 = vmatprep.subr.bf16.mxu0 0
    %7887 = vmatpush1.bf16.msra.mxu0 0
    %7888 = vmatprep.subr.bf16.mxu0 0
    %7889 = vmatpush1.bf16.msra.mxu0 0
    %7890 = vmatprep.mubr.bf16.mxu0 0
    %7891 = vmatmul.mubr.bf16.gmra.mrb[0].mxu0 %v7800
    %v7892 = vpop.f32.mrb[0].mxu0
    %v7893 = vadd.f32 %v7774, %v7892
    %v7894 = vpop.f32.mrb[0].mxu0
    %v7895 = vadd.f32 %v7774, %v7894
    %v7896 = vpop.f32.mrb[0].mxu0
    %v7897 = vadd.f32 %v7778, %v7896
    %v7898 = vpop.f32.mrb[0].mxu0
    %v7899 = vadd.f32 %v7778, %v7898
    %7900 = vmatprep.mubr.bf16.mxu0 0
    %7901 = vmatmul.mubr.bf16.gmra.mrb[0].mxu0 %v7803
    %v7902 = vpop.f32.mrb[0].mxu0
    %v7903 = vadd.f32 %v7782, %v7902
    %v7904 = vpop.f32.mrb[0].mxu0
    %v7905 = vadd.f32 %v7782, %v7904
    %v7906 = vpop.f32.mrb[0].mxu0
    %v7907 = vadd.f32 %v7786, %v7906
    %v7908 = vpop.f32.mrb[0].mxu0
    %v7909 = vadd.f32 %v7786, %v7908
    %7910 = vdwg.mxu0
    %7911 = vmatprep.subr.bf16.mxu0 %v7761
    %7912 = vmatpush1.bf16.msra.mxu0 %v7760
    %7913 = vmatprep.subr.bf16.mxu0 %v7769
    %7914 = vmatpush1.bf16.msra.mxu0 %v7768
    %7915 = vmatprep.subr.bf16.mxu0 0
    %7916 = vmatpush1.bf16.msra.mxu0 0
    %7917 = vmatprep.subr.bf16.mxu0 0
    %7918 = vmatpush1.bf16.msra.mxu0 0
    %7919 = vmatprep.subr.bf16.mxu0 0
    %7920 = vmatpush1.bf16.msra.mxu0 0
    %7921 = vmatprep.subr.bf16.mxu0 0
    %7922 = vmatpush1.bf16.msra.mxu0 0
    %7923 = vmatprep.subr.bf16.mxu0 0
    %7924 = vmatpush1.bf16.msra.mxu0 0
    %7925 = vmatprep.subr.bf16.mxu0 0
    %7926 = vmatpush1.bf16.msra.mxu0 0
    %7927 = vmatprep.subr.bf16.mxu0 0
    %7928 = vmatpush1.bf16.msra.mxu0 0
    %7929 = vmatprep.subr.bf16.mxu0 0
    %7930 = vmatpush1.bf16.msra.mxu0 0
    %7931 = vmatprep.subr.bf16.mxu0 0
    %7932 = vmatpush1.bf16.msra.mxu0 0
    %7933 = vmatprep.subr.bf16.mxu0 0
    %7934 = vmatpush1.bf16.msra.mxu0 0
    %7935 = vmatprep.subr.bf16.mxu0 0
    %7936 = vmatpush1.bf16.msra.mxu0 0
    %7937 = vmatprep.subr.bf16.mxu0 0
    %7938 = vmatpush1.bf16.msra.mxu0 0
    %7939 = vmatprep.subr.bf16.mxu0 0
    %7940 = vmatpush1.bf16.msra.mxu0 0
    %7941 = vmatprep.subr.bf16.mxu0 0
    %7942 = vmatpush1.bf16.msra.mxu0 0
    %7943 = vmatprep.mubr.bf16.mxu0 0
    %7944 = vmatmul.mubr.bf16.gmra.mrb[0].mxu0 %v7800
    %v7945 = vpop.f32.mrb[0].mxu0
    %v7946 = vadd.f32 %v7774, %v7945
    %v7947 = vpop.f32.mrb[0].mxu0
    %v7948 = vadd.f32 %v7774, %v7947
    %v7949 = vpop.f32.mrb[0].mxu0
    %v7950 = vadd.f32 %v7778, %v7949
    %v7951 = vpop.f32.mrb[0].mxu0
    %v7952 = vadd.f32 %v7778, %v7951
    %7953 = vmatprep.mubr.bf16.mxu0 0
    %7954 = vmatmul.mubr.bf16.gmra.mrb[0].mxu0 %v7803
    %v7955 = vpop.f32.mrb[0].mxu0
    %v7956 = vadd.f32 %v7782, %v7955
    %v7957 = vpop.f32.mrb[0].mxu0
    %v7958 = vadd.f32 %v7782, %v7957
    %v7959 = vpop.f32.mrb[0].mxu0
    %v7960 = vadd.f32 %v7786, %v7959
    %v7961 = vpop.f32.mrb[0].mxu0
    %v7962 = vadd.f32 %v7786, %v7961
    %7963 = vdwg.mxu0
    %7964 = vmatprep.subr.bf16.mxu0 %v7763
    %7965 = vmatpush1.bf16.msra.mxu0 %v7762
    %7966 = vmatprep.subr.bf16.mxu0 %v7771
    %7967 = vmatpush1.bf16.msra.mxu0 %v7770
    %7968 = vmatprep.subr.bf16.mxu0 0
    %7969 = vmatpush1.bf16.msra.mxu0 0
    %7970 = vmatprep.subr.bf16.mxu0 0
    %7971 = vmatpush1.bf16.msra.mxu0 0
    %7972 = vmatprep.subr.bf16.mxu0 0
    %7973 = vmatpush1.bf16.msra.mxu0 0
    %7974 = vmatprep.subr.bf16.mxu0 0
    %7975 = vmatpush1.bf16.msra.mxu0 0
    %7976 = vmatprep.subr.bf16.mxu0 0
    %7977 = vmatpush1.bf16.msra.mxu0 0
    %7978 = vmatprep.subr.bf16.mxu0 0
    %7979 = vmatpush1.bf16.msra.mxu0 0
    %7980 = vmatprep.subr.bf16.mxu0 0
    %7981 = vmatpush1.bf16.msra.mxu0 0
    %7982 = vmatprep.subr.bf16.mxu0 0
    %7983 = vmatpush1.bf16.msra.mxu0 0
    %7984 = vmatprep.subr.bf16.mxu0 0
    %7985 = vmatpush1.bf16.msra.mxu0 0
    %7986 = vmatprep.subr.bf16.mxu0 0
    %7987 = vmatpush1.bf16.msra.mxu0 0
    %7988 = vmatprep.subr.bf16.mxu0 0
    %7989 = vmatpush1.bf16.msra.mxu0 0
    %7990 = vmatprep.subr.bf16.mxu0 0
    %7991 = vmatpush1.bf16.msra.mxu0 0
    %7992 = vmatprep.subr.bf16.mxu0 0
    %7993 = vmatpush1.bf16.msra.mxu0 0
    %7994 = vmatprep.subr.bf16.mxu0 0
    %7995 = vmatpush1.bf16.msra.mxu0 0
    %7996 = vmatprep.mubr.bf16.mxu0 0
    %7997 = vmatmul.mubr.bf16.gmra.mrb[0].mxu0 %v7800
    %v7998 = vpop.f32.mrb[0].mxu0
    %v7999 = vadd.f32 %v7774, %v7998
    %v8000 = vpop.f32.mrb[0].mxu0
    %v8001 = vadd.f32 %v7774, %v8000
    %v8002 = vpop.f32.mrb[0].mxu0
    %v8003 = vadd.f32 %v7778, %v8002
    %v8004 = vpop.f32.mrb[0].mxu0
    %v8005 = vadd.f32 %v7778, %v8004
    %8006 = vmatprep.mubr.bf16.mxu0 0
    %8007 = vmatmul.mubr.bf16.gmra.mrb[0].mxu0 %v7803
    %v8008 = vpop.f32.mrb[0].mxu0
    %v8009 = vadd.f32 %v7782, %v8008
    %v8010 = vpop.f32.mrb[0].mxu0
    %v8011 = vadd.f32 %v7782, %v8010
    %v8012 = vpop.f32.mrb[0].mxu0
    %v8013 = vadd.f32 %v7786, %v8012
    %v8014 = vpop.f32.mrb[0].mxu0
    %v8015 = vadd.f32 %v7786, %v8014
    %8016 = vdwg.mxu0
    %v8017 = vmax.f32 %v7840, 0.0
    %v8018 = vmax.f32 %v7842, 0.0
    %v8019 = vmax.f32 %v7893, 0.0
    %v8020 = vmax.f32 %v7895, 0.0
    %v8021 = vmax.f32 %v7946, 0.0
    %v8022 = vmax.f32 %v7948, 0.0
    %v8023 = vmax.f32 %v7999, 0.0
    %v8024 = vmax.f32 %v8001, 0.0
    %v8025 = vmax.f32 %v7844, 0.0
    %v8026 = vmax.f32 %v7846, 0.0
    %v8027 = vmax.f32 %v7897, 0.0
    %v8028 = vmax.f32 %v7899, 0.0
    %v8029 = vmax.f32 %v7950, 0.0
    %v8030 = vmax.f32 %v7952, 0.0
    %v8031 = vmax.f32 %v8003, 0.0
    %v8032 = vmax.f32 %v8005, 0.0
    %v8033 = vmax.f32 %v7850, 0.0
    %v8034 = vmax.f32 %v7852, 0.0
    %v8035 = vmax.f32 %v7903, 0.0
    %v8036 = vmax.f32 %v7905, 0.0
    %v8037 = vmax.f32 %v7956, 0.0
    %v8038 = vmax.f32 %v7958, 0.0
    %v8039 = vmax.f32 %v8009, 0.0
    %v8040 = vmax.f32 %v8011, 0.0
    %v8041 = vmax.f32 %v7854, 0.0
    %v8042 = vmax.f32 %v7856, 0.0
    %v8043 = vmax.f32 %v7907, 0.0
    %v8044 = vmax.f32 %v7909, 0.0
    %v8045 = vmax.f32 %v7960, 0.0
    %v8046 = vmax.f32 %v7962, 0.0
    %v8047 = vmax.f32 %v8013, 0.0
    %v8048 = vmax.f32 %v8015, 0.0
    %v8049 = vld [vmem:[#allocation8 + $0x20] sm:$0xf]
    %v8050 = vld [vmem:[#allocation8 + $0x24] sm:$0xf]
    %v8051 = vld [vmem:[#allocation8 + $0x28] sm:$0xf]
    %v8052 = vld [vmem:[#allocation8 + $0x2c] sm:$0xf]
    %v8053 = vpack.c.bf16 %v8025, %v8017
    %v8054 = vpack.c.bf16 %v8026, %v8018
    %v8055 = vpack.c.bf16 %v8027, %v8019
    %v8056 = vpack.c.bf16 %v8028, %v8020
    %v8057 = vpack.c.bf16 %v8029, %v8021
    %v8058 = vpack.c.bf16 %v8030, %v8022
    %v8059 = vpack.c.bf16 %v8031, %v8023
    %v8060 = vpack.c.bf16 %v8032, %v8024
    %v8061 = vpack.c.bf16 %v8041, %v8033
    %v8062 = vpack.c.bf16 %v8042, %v8034
    %v8063 = vpack.c.bf16 %v8043, %v8035
    %v8064 = vpack.c.bf16 %v8044, %v8036
    %v8065 = vpack.c.bf16 %v8045, %v8037
    %v8066 = vpack.c.bf16 %v8046, %v8038
    %v8067 = vpack.c.bf16 %v8047, %v8039
    %v8068 = vpack.c.bf16 %v8048, %v8040
    %8069 = vset.pattern.permute.xlu0 5
    %8070 = vperm.xlu0 %8069, %v7664
    %v8071 = vpop.permute.xlu0 %8070
    %8073 = vset.pattern.permute.xlu0 5
    %8074 = vperm.xlu0 %8073, %v7665
    %v8075 = vpop.permute.xlu0 %8074
    %8077 = vset.pattern.permute.xlu0 5
    %8078 = vperm.xlu0 %8077, %v7666
    %v8079 = vpop.permute.xlu0 %8078
    %8081 = vset.pattern.permute.xlu0 5
    %8082 = vperm.xlu0 %8081, %v7667
    %v8083 = vpop.permute.xlu0 %8082
    %v8089 = vunpack.c.l.b16 %v8049
    %v8090 = vunpack.c.l.b16 %v8050
    %v8091 = vunpack.c.l.b16 %v8051
    %v8092 = vunpack.c.l.b16 %v8052
    %v8093 = vpack.c.b16 %v8090, %v8089
    %v8094 = vpack.c.b16 %v8092, %v8091
    %v8096 = vsel %vm7798, %v8093, 0
    %v8099 = vsel %vm7798, %v8094, 0
    %8101 = vmatprep.subr.bf16.mxu0 %v8054
    %8102 = vmatpush1.bf16.msra.mxu0 %v8053
    %8103 = vmatprep.subr.bf16.mxu0 %v8062
    %8104 = vmatpush1.bf16.msra.mxu0 %v8061
    %8105 = vmatprep.subr.bf16.mxu0 0
    %8106 = vmatpush1.bf16.msra.mxu0 0
    %8107 = vmatprep.subr.bf16.mxu0 0
    %8108 = vmatpush1.bf16.msra.mxu0 0
    %8109 = vmatprep.subr.bf16.mxu0 0
    %8110 = vmatpush1.bf16.msra.mxu0 0
    %8111 = vmatprep.subr.bf16.mxu0 0
    %8112 = vmatpush1.bf16.msra.mxu0 0
    %8113 = vmatprep.subr.bf16.mxu0 0
    %8114 = vmatpush1.bf16.msra.mxu0 0
    %8115 = vmatprep.subr.bf16.mxu0 0
    %8116 = vmatpush1.bf16.msra.mxu0 0
    %8117 = vmatprep.subr.bf16.mxu0 0
    %8118 = vmatpush1.bf16.msra.mxu0 0
    %8119 = vmatprep.subr.bf16.mxu0 0
    %8120 = vmatpush1.bf16.msra.mxu0 0
    %8121 = vmatprep.subr.bf16.mxu0 0
    %8122 = vmatpush1.bf16.msra.mxu0 0
    %8123 = vmatprep.subr.bf16.mxu0 0
    %8124 = vmatpush1.bf16.msra.mxu0 0
    %8125 = vmatprep.subr.bf16.mxu0 0
    %8126 = vmatpush1.bf16.msra.mxu0 0
    %8127 = vmatprep.subr.bf16.mxu0 0
    %8128 = vmatpush1.bf16.msra.mxu0 0
    %8129 = vmatprep.subr.bf16.mxu0 0
    %8130 = vmatpush1.bf16.msra.mxu0 0
    %8131 = vmatprep.subr.bf16.mxu0 0
    %8132 = vmatpush1.bf16.msra.mxu0 0
    %8133 = vmatprep.mubr.bf16.mxu0 0
    %8134 = vmatmul.mubr.bf16.gmra.mrb[0].mxu0 %v8096
    %v8135 = vpop.f32.mrb[0].mxu0
    %v8136 = vadd.f32 %v8071, %v8135
    %v8137 = vpop.f32.mrb[0].mxu0
    %v8138 = vadd.f32 %v8071, %v8137
    %v8139 = vpop.f32.mrb[0].mxu0
    %v8140 = vadd.f32 %v8075, %v8139
    %v8141 = vpop.f32.mrb[0].mxu0
    %v8142 = vadd.f32 %v8075, %v8141
    %8143 = vmatprep.mubr.bf16.mxu0 0
    %8144 = vmatmul.mubr.bf16.gmra.mrb[0].mxu0 %v8099
    %v8145 = vpop.f32.mrb[0].mxu0
    %v8146 = vadd.f32 %v8079, %v8145
    %v8147 = vpop.f32.mrb[0].mxu0
    %v8148 = vadd.f32 %v8079, %v8147
    %v8149 = vpop.f32.mrb[0].mxu0
    %v8150 = vadd.f32 %v8083, %v8149
    %v8151 = vpop.f32.mrb[0].mxu0
    %v8152 = vadd.f32 %v8083, %v8151
    %8153 = vdwg.mxu0
    %8154 = vmatprep.subr.bf16.mxu0 %v8056
    %8155 = vmatpush1.bf16.msra.mxu0 %v8055
    %8156 = vmatprep.subr.bf16.mxu0 %v8064
    %8157 = vmatpush1.bf16.msra.mxu0 %v8063
    %8158 = vmatprep.subr.bf16.mxu0 0
    %8159 = vmatpush1.bf16.msra.mxu0 0
    %8160 = vmatprep.subr.bf16.mxu0 0
    %8161 = vmatpush1.bf16.msra.mxu0 0
    %8162 = vmatprep.subr.bf16.mxu0 0
    %8163 = vmatpush1.bf16.msra.mxu0 0
    %8164 = vmatprep.subr.bf16.mxu0 0
    %8165 = vmatpush1.bf16.msra.mxu0 0
    %8166 = vmatprep.subr.bf16.mxu0 0
    %8167 = vmatpush1.bf16.msra.mxu0 0
    %8168 = vmatprep.subr.bf16.mxu0 0
    %8169 = vmatpush1.bf16.msra.mxu0 0
    %8170 = vmatprep.subr.bf16.mxu0 0
    %8171 = vmatpush1.bf16.msra.mxu0 0
    %8172 = vmatprep.subr.bf16.mxu0 0
    %8173 = vmatpush1.bf16.msra.mxu0 0
    %8174 = vmatprep.subr.bf16.mxu0 0
    %8175 = vmatpush1.bf16.msra.mxu0 0
    %8176 = vmatprep.subr.bf16.mxu0 0
    %8177 = vmatpush1.bf16.msra.mxu0 0
    %8178 = vmatprep.subr.bf16.mxu0 0
    %8179 = vmatpush1.bf16.msra.mxu0 0
    %8180 = vmatprep.subr.bf16.mxu0 0
    %8181 = vmatpush1.bf16.msra.mxu0 0
    %8182 = vmatprep.subr.bf16.mxu0 0
    %8183 = vmatpush1.bf16.msra.mxu0 0
    %8184 = vmatprep.subr.bf16.mxu0 0
    %8185 = vmatpush1.bf16.msra.mxu0 0
    %8186 = vmatprep.mubr.bf16.mxu0 0
    %8187 = vmatmul.mubr.bf16.gmra.mrb[0].mxu0 %v8096
    %v8188 = vpop.f32.mrb[0].mxu0
    %v8189 = vadd.f32 %v8071, %v8188
    %v8190 = vpop.f32.mrb[0].mxu0
    %v8191 = vadd.f32 %v8071, %v8190
    %v8192 = vpop.f32.mrb[0].mxu0
    %v8193 = vadd.f32 %v8075, %v8192
    %v8194 = vpop.f32.mrb[0].mxu0
    %v8195 = vadd.f32 %v8075, %v8194
    %8196 = vmatprep.mubr.bf16.mxu0 0
    %8197 = vmatmul.mubr.bf16.gmra.mrb[0].mxu0 %v8099
    %v8198 = vpop.f32.mrb[0].mxu0
    %v8199 = vadd.f32 %v8079, %v8198
    %v8200 = vpop.f32.mrb[0].mxu0
    %v8201 = vadd.f32 %v8079, %v8200
    %v8202 = vpop.f32.mrb[0].mxu0
    %v8203 = vadd.f32 %v8083, %v8202
    %v8204 = vpop.f32.mrb[0].mxu0
    %v8205 = vadd.f32 %v8083, %v8204
    %8206 = vdwg.mxu0
    %8207 = vmatprep.subr.bf16.mxu0 %v8058
    %8208 = vmatpush1.bf16.msra.mxu0 %v8057
    %8209 = vmatprep.subr.bf16.mxu0 %v8066
    %8210 = vmatpush1.bf16.msra.mxu0 %v8065
    %8211 = vmatprep.subr.bf16.mxu0 0
    %8212 = vmatpush1.bf16.msra.mxu0 0
    %8213 = vmatprep.subr.bf16.mxu0 0
    %8214 = vmatpush1.bf16.msra.mxu0 0
    %8215 = vmatprep.subr.bf16.mxu0 0
    %8216 = vmatpush1.bf16.msra.mxu0 0
    %8217 = vmatprep.subr.bf16.mxu0 0
    %8218 = vmatpush1.bf16.msra.mxu0 0
    %8219 = vmatprep.subr.bf16.mxu0 0
    %8220 = vmatpush1.bf16.msra.mxu0 0
    %8221 = vmatprep.subr.bf16.mxu0 0
    %8222 = vmatpush1.bf16.msra.mxu0 0
    %8223 = vmatprep.subr.bf16.mxu0 0
    %8224 = vmatpush1.bf16.msra.mxu0 0
    %8225 = vmatprep.subr.bf16.mxu0 0
    %8226 = vmatpush1.bf16.msra.mxu0 0
    %8227 = vmatprep.subr.bf16.mxu0 0
    %8228 = vmatpush1.bf16.msra.mxu0 0
    %8229 = vmatprep.subr.bf16.mxu0 0
    %8230 = vmatpush1.bf16.msra.mxu0 0
    %8231 = vmatprep.subr.bf16.mxu0 0
    %8232 = vmatpush1.bf16.msra.mxu0 0
    %8233 = vmatprep.subr.bf16.mxu0 0
    %8234 = vmatpush1.bf16.msra.mxu0 0
    %8235 = vmatprep.subr.bf16.mxu0 0
    %8236 = vmatpush1.bf16.msra.mxu0 0
    %8237 = vmatprep.subr.bf16.mxu0 0
    %8238 = vmatpush1.bf16.msra.mxu0 0
    %8239 = vmatprep.mubr.bf16.mxu0 0
    %8240 = vmatmul.mubr.bf16.gmra.mrb[0].mxu0 %v8096
    %v8241 = vpop.f32.mrb[0].mxu0
    %v8242 = vadd.f32 %v8071, %v8241
    %v8243 = vpop.f32.mrb[0].mxu0
    %v8244 = vadd.f32 %v8071, %v8243
    %v8245 = vpop.f32.mrb[0].mxu0
    %v8246 = vadd.f32 %v8075, %v8245
    %v8247 = vpop.f32.mrb[0].mxu0
    %v8248 = vadd.f32 %v8075, %v8247
    %8249 = vmatprep.mubr.bf16.mxu0 0
    %8250 = vmatmul.mubr.bf16.gmra.mrb[0].mxu0 %v8099
    %v8251 = vpop.f32.mrb[0].mxu0
    %v8252 = vadd.f32 %v8079, %v8251
    %v8253 = vpop.f32.mrb[0].mxu0
    %v8254 = vadd.f32 %v8079, %v8253
    %v8255 = vpop.f32.mrb[0].mxu0
    %v8256 = vadd.f32 %v8083, %v8255
    %v8257 = vpop.f32.mrb[0].mxu0
    %v8258 = vadd.f32 %v8083, %v8257
    %8259 = vdwg.mxu0
    %8260 = vmatprep.subr.bf16.mxu0 %v8060
    %8261 = vmatpush1.bf16.msra.mxu0 %v8059
    %8262 = vmatprep.subr.bf16.mxu0 %v8068
    %8263 = vmatpush1.bf16.msra.mxu0 %v8067
    %8264 = vmatprep.subr.bf16.mxu0 0
    %8265 = vmatpush1.bf16.msra.mxu0 0
    %8266 = vmatprep.subr.bf16.mxu0 0
    %8267 = vmatpush1.bf16.msra.mxu0 0
    %8268 = vmatprep.subr.bf16.mxu0 0
    %8269 = vmatpush1.bf16.msra.mxu0 0
    %8270 = vmatprep.subr.bf16.mxu0 0
    %8271 = vmatpush1.bf16.msra.mxu0 0
    %8272 = vmatprep.subr.bf16.mxu0 0
    %8273 = vmatpush1.bf16.msra.mxu0 0
    %8274 = vmatprep.subr.bf16.mxu0 0
    %8275 = vmatpush1.bf16.msra.mxu0 0
    %8276 = vmatprep.subr.bf16.mxu0 0
    %8277 = vmatpush1.bf16.msra.mxu0 0
    %8278 = vmatprep.subr.bf16.mxu0 0
    %8279 = vmatpush1.bf16.msra.mxu0 0
    %8280 = vmatprep.subr.bf16.mxu0 0
    %8281 = vmatpush1.bf16.msra.mxu0 0
    %8282 = vmatprep.subr.bf16.mxu0 0
    %8283 = vmatpush1.bf16.msra.mxu0 0
    %8284 = vmatprep.subr.bf16.mxu0 0
    %8285 = vmatpush1.bf16.msra.mxu0 0
    %8286 = vmatprep.subr.bf16.mxu0 0
    %8287 = vmatpush1.bf16.msra.mxu0 0
    %8288 = vmatprep.subr.bf16.mxu0 0
    %8289 = vmatpush1.bf16.msra.mxu0 0
    %8290 = vmatprep.subr.bf16.mxu0 0
    %8291 = vmatpush1.bf16.msra.mxu0 0
    %8292 = vmatprep.mubr.bf16.mxu0 0
    %8293 = vmatmul.mubr.bf16.gmra.mrb[0].mxu0 %v8096
    %v8294 = vpop.f32.mrb[0].mxu0
    %v8295 = vadd.f32 %v8071, %v8294
    %v8296 = vpop.f32.mrb[0].mxu0
    %v8297 = vadd.f32 %v8071, %v8296
    %v8298 = vpop.f32.mrb[0].mxu0
    %v8299 = vadd.f32 %v8075, %v8298
    %v8300 = vpop.f32.mrb[0].mxu0
    %v8301 = vadd.f32 %v8075, %v8300
    %8302 = vmatprep.mubr.bf16.mxu0 0
    %8303 = vmatmul.mubr.bf16.gmra.mrb[0].mxu0 %v8099
    %v8304 = vpop.f32.mrb[0].mxu0
    %v8305 = vadd.f32 %v8079, %v8304
    %v8306 = vpop.f32.mrb[0].mxu0
    %v8307 = vadd.f32 %v8079, %v8306
    %v8308 = vpop.f32.mrb[0].mxu0
    %v8309 = vadd.f32 %v8083, %v8308
    %v8310 = vpop.f32.mrb[0].mxu0
    %v8311 = vadd.f32 %v8083, %v8310
    %8312 = vdwg.mxu0
    %v8313 = vmax.f32 %v8136, 0.0
    %v8314 = vmax.f32 %v8138, 0.0
    %v8315 = vmax.f32 %v8189, 0.0
    %v8316 = vmax.f32 %v8191, 0.0
    %v8317 = vmax.f32 %v8242, 0.0
    %v8318 = vmax.f32 %v8244, 0.0
    %v8319 = vmax.f32 %v8295, 0.0
    %v8320 = vmax.f32 %v8297, 0.0
    %v8321 = vmax.f32 %v8140, 0.0
    %v8322 = vmax.f32 %v8142, 0.0
    %v8323 = vmax.f32 %v8193, 0.0
    %v8324 = vmax.f32 %v8195, 0.0
    %v8325 = vmax.f32 %v8246, 0.0
    %v8326 = vmax.f32 %v8248, 0.0
    %v8327 = vmax.f32 %v8299, 0.0
    %v8328 = vmax.f32 %v8301, 0.0
    %v8329 = vmax.f32 %v8146, 0.0
    %v8330 = vmax.f32 %v8148, 0.0
    %v8331 = vmax.f32 %v8199, 0.0
    %v8332 = vmax.f32 %v8201, 0.0
    %v8333 = vmax.f32 %v8252, 0.0
    %v8334 = vmax.f32 %v8254, 0.0
    %v8335 = vmax.f32 %v8305, 0.0
    %v8336 = vmax.f32 %v8307, 0.0
    %v8337 = vmax.f32 %v8150, 0.0
    %v8338 = vmax.f32 %v8152, 0.0
    %v8339 = vmax.f32 %v8203, 0.0
    %v8340 = vmax.f32 %v8205, 0.0
    %v8341 = vmax.f32 %v8256, 0.0
    %v8342 = vmax.f32 %v8258, 0.0
    %v8343 = vmax.f32 %v8309, 0.0
    %v8344 = vmax.f32 %v8311, 0.0
    %v8345 = vld [vmem:[#allocation8 + $0x30] sm:$0xf]
    %v8346 = vld [vmem:[#allocation8 + $0x34] sm:$0xf]
    %v8347 = vld [vmem:[#allocation8 + $0x38] sm:$0xf]
    %v8348 = vld [vmem:[#allocation8 + $0x3c] sm:$0xf]
    %v8349 = vld [vmem:[#allocation8 + $0x40] sm:$0xf]
    %v8350 = vld [vmem:[#allocation8 + $0x44] sm:$0xf]
    %v8351 = vld [vmem:[#allocation8 + $0x48] sm:$0xf]
    %v8352 = vld [vmem:[#allocation8 + $0x4c] sm:$0xf]
    %v8353 = vpack.c.bf16 %v8321, %v8313
    %v8354 = vpack.c.bf16 %v8322, %v8314
    %v8355 = vpack.c.bf16 %v8323, %v8315
    %v8356 = vpack.c.bf16 %v8324, %v8316
    %v8357 = vpack.c.bf16 %v8325, %v8317
    %v8358 = vpack.c.bf16 %v8326, %v8318
    %v8359 = vpack.c.bf16 %v8327, %v8319
    %v8360 = vpack.c.bf16 %v8328, %v8320
    %v8361 = vpack.c.bf16 %v8337, %v8329
    %v8362 = vpack.c.bf16 %v8338, %v8330
    %v8363 = vpack.c.bf16 %v8339, %v8331
    %v8364 = vpack.c.bf16 %v8340, %v8332
    %v8365 = vpack.c.bf16 %v8341, %v8333
    %v8366 = vpack.c.bf16 %v8342, %v8334
    %v8367 = vpack.c.bf16 %v8343, %v8335
    %v8368 = vpack.c.bf16 %v8344, %v8336
    %v8369 = vld [vmem:[#allocation6] sm:$0xff]
    %v8370 = vld [vmem:[#allocation6 + $0x8] sm:$0xff]
    %v8371 = vld [vmem:[#allocation6 + $0x10] sm:$0xff]
    %v8372 = vld [vmem:[#allocation6 + $0x18] sm:$0xff]
    %v8373 = vld [vmem:[#allocation6 + $0x20] sm:$0xff]
    %v8374 = vld [vmem:[#allocation6 + $0x28] sm:$0xff]
    %v8375 = vld [vmem:[#allocation6 + $0x30] sm:$0xff]
    %v8376 = vld [vmem:[#allocation6 + $0x38] sm:$0xff]
    %8378 = vset.pattern.permute.xlu0 6
    %8379 = vperm.xlu0 %8378, %v8369
    %v8380 = vpop.permute.xlu0 %8379
    %8383 = vset.pattern.permute.xlu0 6
    %8384 = vperm.xlu0 %8383, %v8370
    %v8385 = vpop.permute.xlu0 %8384
    %8388 = vset.pattern.permute.xlu0 6
    %8389 = vperm.xlu0 %8388, %v8371
    %v8390 = vpop.permute.xlu0 %8389
    %8393 = vset.pattern.permute.xlu0 6
    %8394 = vperm.xlu0 %8393, %v8372
    %v8395 = vpop.permute.xlu0 %8394
    %8398 = vset.pattern.permute.xlu0 6
    %8399 = vperm.xlu0 %8398, %v8373
    %v8400 = vpop.permute.xlu0 %8399
    %8403 = vset.pattern.permute.xlu0 6
    %8404 = vperm.xlu0 %8403, %v8374
    %v8405 = vpop.permute.xlu0 %8404
    %8408 = vset.pattern.permute.xlu0 6
    %8409 = vperm.xlu0 %8408, %v8375
    %v8410 = vpop.permute.xlu0 %8409
    %8413 = vset.pattern.permute.xlu0 6
    %8414 = vperm.xlu0 %8413, %v8376
    %v8415 = vpop.permute.xlu0 %8414
    %v8425 = vunpack.c.l.b16 %v8345
    %v8426 = vunpack.c.l.b16 %v8346
    %v8427 = vunpack.c.l.b16 %v8347
    %v8428 = vunpack.c.l.b16 %v8348
    %v8429 = vunpack.c.l.b16 %v8349
    %v8430 = vunpack.c.l.b16 %v8350
    %v8431 = vunpack.c.l.b16 %v8351
    %v8432 = vunpack.c.l.b16 %v8352
    %v8433 = vpack.c.b16 %v8426, %v8425
    %v8434 = vpack.c.b16 %v8428, %v8427
    %v8435 = vpack.c.b16 %v8430, %v8429
    %v8436 = vpack.c.b16 %v8432, %v8431
    %v8438 = vsel %vm7798, %v8433, 0
    %v8441 = vsel %vm7798, %v8434, 0
    %v8444 = vsel %vm7798, %v8435, 0
    %v8447 = vsel %vm7798, %v8436, 0
    %8449 = vmatprep.subr.bf16.mxu0 %v8354
    %8450 = vmatpush1.bf16.msra.mxu0 %v8353
    %8451 = vmatprep.subr.bf16.mxu0 %v8362
    %8452 = vmatpush1.bf16.msra.mxu0 %v8361
    %8453 = vmatprep.subr.bf16.mxu0 0
    %8454 = vmatpush1.bf16.msra.mxu0 0
    %8455 = vmatprep.subr.bf16.mxu0 0
    %8456 = vmatpush1.bf16.msra.mxu0 0
    %8457 = vmatprep.subr.bf16.mxu0 0
    %8458 = vmatpush1.bf16.msra.mxu0 0
    %8459 = vmatprep.subr.bf16.mxu0 0
    %8460 = vmatpush1.bf16.msra.mxu0 0
    %8461 = vmatprep.subr.bf16.mxu0 0
    %8462 = vmatpush1.bf16.msra.mxu0 0
    %8463 = vmatprep.subr.bf16.mxu0 0
    %8464 = vmatpush1.bf16.msra.mxu0 0
    %8465 = vmatprep.subr.bf16.mxu0 0
    %8466 = vmatpush1.bf16.msra.mxu0 0
    %8467 = vmatprep.subr.bf16.mxu0 0
    %8468 = vmatpush1.bf16.msra.mxu0 0
    %8469 = vmatprep.subr.bf16.mxu0 0
    %8470 = vmatpush1.bf16.msra.mxu0 0
    %8471 = vmatprep.subr.bf16.mxu0 0
    %8472 = vmatpush1.bf16.msra.mxu0 0
    %8473 = vmatprep.subr.bf16.mxu0 0
    %8474 = vmatpush1.bf16.msra.mxu0 0
    %8475 = vmatprep.subr.bf16.mxu0 0
    %8476 = vmatpush1.bf16.msra.mxu0 0
    %8477 = vmatprep.subr.bf16.mxu0 0
    %8478 = vmatpush1.bf16.msra.mxu0 0
    %8479 = vmatprep.subr.bf16.mxu0 0
    %8480 = vmatpush1.bf16.msra.mxu0 0
    %8481 = vmatprep.mubr.bf16.mxu0 0
    %8482 = vmatmul.mubr.bf16.gmra.mrb[0].mxu0 %v8438
    %v8483 = vpop.f32.mrb[0].mxu0
    %v8484 = vadd.f32 %v8380, %v8483
    %v8485 = vpop.f32.mrb[0].mxu0
    %v8486 = vadd.f32 %v8380, %v8485
    %v8487 = vpop.f32.mrb[0].mxu0
    %v8488 = vadd.f32 %v8385, %v8487
    %v8489 = vpop.f32.mrb[0].mxu0
    %v8490 = vadd.f32 %v8385, %v8489
    %8491 = vmatprep.mubr.bf16.mxu0 0
    %8492 = vmatmul.mubr.bf16.gmra.mrb[0].mxu0 %v8441
    %v8493 = vpop.f32.mrb[0].mxu0
    %v8494 = vadd.f32 %v8390, %v8493
    %v8495 = vpop.f32.mrb[0].mxu0
    %v8496 = vadd.f32 %v8390, %v8495
    %v8497 = vpop.f32.mrb[0].mxu0
    %v8498 = vadd.f32 %v8395, %v8497
    %v8499 = vpop.f32.mrb[0].mxu0
    %v8500 = vadd.f32 %v8395, %v8499
    %8501 = vmatprep.mubr.bf16.mxu0 0
    %8502 = vmatmul.mubr.bf16.gmra.mrb[0].mxu0 %v8444
    %v8503 = vpop.f32.mrb[0].mxu0
    %v8504 = vadd.f32 %v8400, %v8503
    %v8505 = vpop.f32.mrb[0].mxu0
    %v8506 = vadd.f32 %v8400, %v8505
    %v8507 = vpop.f32.mrb[0].mxu0
    %v8508 = vadd.f32 %v8405, %v8507
    %v8509 = vpop.f32.mrb[0].mxu0
    %v8510 = vadd.f32 %v8405, %v8509
    %8511 = vmatprep.mubr.bf16.mxu0 0
    %8512 = vmatmul.mubr.bf16.gmra.mrb[0].mxu0 %v8447
    %v8513 = vpop.f32.mrb[0].mxu0
    %v8514 = vadd.f32 %v8410, %v8513
    %v8515 = vpop.f32.mrb[0].mxu0
    %v8516 = vadd.f32 %v8410, %v8515
    %v8517 = vpop.f32.mrb[0].mxu0
    %v8518 = vadd.f32 %v8415, %v8517
    %v8519 = vpop.f32.mrb[0].mxu0
    %v8520 = vadd.f32 %v8415, %v8519
    %8521 = vdwg.mxu0
    %8522 = vmatprep.subr.bf16.mxu0 %v8356
    %8523 = vmatpush1.bf16.msra.mxu0 %v8355
    %8524 = vmatprep.subr.bf16.mxu0 %v8364
    %8525 = vmatpush1.bf16.msra.mxu0 %v8363
    %8526 = vmatprep.subr.bf16.mxu0 0
    %8527 = vmatpush1.bf16.msra.mxu0 0
    %8528 = vmatprep.subr.bf16.mxu0 0
    %8529 = vmatpush1.bf16.msra.mxu0 0
    %8530 = vmatprep.subr.bf16.mxu0 0
    %8531 = vmatpush1.bf16.msra.mxu0 0
    %8532 = vmatprep.subr.bf16.mxu0 0
    %8533 = vmatpush1.bf16.msra.mxu0 0
    %8534 = vmatprep.subr.bf16.mxu0 0
    %8535 = vmatpush1.bf16.msra.mxu0 0
    %8536 = vmatprep.subr.bf16.mxu0 0
    %8537 = vmatpush1.bf16.msra.mxu0 0
    %8538 = vmatprep.subr.bf16.mxu0 0
    %8539 = vmatpush1.bf16.msra.mxu0 0
    %8540 = vmatprep.subr.bf16.mxu0 0
    %8541 = vmatpush1.bf16.msra.mxu0 0
    %8542 = vmatprep.subr.bf16.mxu0 0
    %8543 = vmatpush1.bf16.msra.mxu0 0
    %8544 = vmatprep.subr.bf16.mxu0 0
    %8545 = vmatpush1.bf16.msra.mxu0 0
    %8546 = vmatprep.subr.bf16.mxu0 0
    %8547 = vmatpush1.bf16.msra.mxu0 0
    %8548 = vmatprep.subr.bf16.mxu0 0
    %8549 = vmatpush1.bf16.msra.mxu0 0
    %8550 = vmatprep.subr.bf16.mxu0 0
    %8551 = vmatpush1.bf16.msra.mxu0 0
    %8552 = vmatprep.subr.bf16.mxu0 0
    %8553 = vmatpush1.bf16.msra.mxu0 0
    %8554 = vmatprep.mubr.bf16.mxu0 0
    %8555 = vmatmul.mubr.bf16.gmra.mrb[0].mxu0 %v8438
    %v8556 = vpop.f32.mrb[0].mxu0
    %v8557 = vadd.f32 %v8380, %v8556
    %v8558 = vpop.f32.mrb[0].mxu0
    %v8559 = vadd.f32 %v8380, %v8558
    %v8560 = vpop.f32.mrb[0].mxu0
    %v8561 = vadd.f32 %v8385, %v8560
    %v8562 = vpop.f32.mrb[0].mxu0
    %v8563 = vadd.f32 %v8385, %v8562
    %8564 = vmatprep.mubr.bf16.mxu0 0
    %8565 = vmatmul.mubr.bf16.gmra.mrb[0].mxu0 %v8441
    %v8566 = vpop.f32.mrb[0].mxu0
    %v8567 = vadd.f32 %v8390, %v8566
    %v8568 = vpop.f32.mrb[0].mxu0
    %v8569 = vadd.f32 %v8390, %v8568
    %v8570 = vpop.f32.mrb[0].mxu0
    %v8571 = vadd.f32 %v8395, %v8570
    %v8572 = vpop.f32.mrb[0].mxu0
    %v8573 = vadd.f32 %v8395, %v8572
    %8574 = vmatprep.mubr.bf16.mxu0 0
    %8575 = vmatmul.mubr.bf16.gmra.mrb[0].mxu0 %v8444
    %v8576 = vpop.f32.mrb[0].mxu0
    %v8577 = vadd.f32 %v8400, %v8576
    %v8578 = vpop.f32.mrb[0].mxu0
    %v8579 = vadd.f32 %v8400, %v8578
    %v8580 = vpop.f32.mrb[0].mxu0
    %v8581 = vadd.f32 %v8405, %v8580
    %v8582 = vpop.f32.mrb[0].mxu0
    %v8583 = vadd.f32 %v8405, %v8582
    %8584 = vmatprep.mubr.bf16.mxu0 0
    %8585 = vmatmul.mubr.bf16.gmra.mrb[0].mxu0 %v8447
    %v8586 = vpop.f32.mrb[0].mxu0
    %v8587 = vadd.f32 %v8410, %v8586
    %v8588 = vpop.f32.mrb[0].mxu0
    %v8589 = vadd.f32 %v8410, %v8588
    %v8590 = vpop.f32.mrb[0].mxu0
    %v8591 = vadd.f32 %v8415, %v8590
    %v8592 = vpop.f32.mrb[0].mxu0
    %v8593 = vadd.f32 %v8415, %v8592
    %8594 = vdwg.mxu0
    %8595 = vmatprep.subr.bf16.mxu0 %v8358
    %8596 = vmatpush1.bf16.msra.mxu0 %v8357
    %8597 = vmatprep.subr.bf16.mxu0 %v8366
    %8598 = vmatpush1.bf16.msra.mxu0 %v8365
    %8599 = vmatprep.subr.bf16.mxu0 0
    %8600 = vmatpush1.bf16.msra.mxu0 0
    %8601 = vmatprep.subr.bf16.mxu0 0
    %8602 = vmatpush1.bf16.msra.mxu0 0
    %8603 = vmatprep.subr.bf16.mxu0 0
    %8604 = vmatpush1.bf16.msra.mxu0 0
    %8605 = vmatprep.subr.bf16.mxu0 0
    %8606 = vmatpush1.bf16.msra.mxu0 0
    %8607 = vmatprep.subr.bf16.mxu0 0
    %8608 = vmatpush1.bf16.msra.mxu0 0
    %8609 = vmatprep.subr.bf16.mxu0 0
    %8610 = vmatpush1.bf16.msra.mxu0 0
    %8611 = vmatprep.subr.bf16.mxu0 0
    %8612 = vmatpush1.bf16.msra.mxu0 0
    %8613 = vmatprep.subr.bf16.mxu0 0
    %8614 = vmatpush1.bf16.msra.mxu0 0
    %8615 = vmatprep.subr.bf16.mxu0 0
    %8616 = vmatpush1.bf16.msra.mxu0 0
    %8617 = vmatprep.subr.bf16.mxu0 0
    %8618 = vmatpush1.bf16.msra.mxu0 0
    %8619 = vmatprep.subr.bf16.mxu0 0
    %8620 = vmatpush1.bf16.msra.mxu0 0
    %8621 = vmatprep.subr.bf16.mxu0 0
    %8622 = vmatpush1.bf16.msra.mxu0 0
    %8623 = vmatprep.subr.bf16.mxu0 0
    %8624 = vmatpush1.bf16.msra.mxu0 0
    %8625 = vmatprep.subr.bf16.mxu0 0
    %8626 = vmatpush1.bf16.msra.mxu0 0
    %8627 = vmatprep.mubr.bf16.mxu0 0
    %8628 = vmatmul.mubr.bf16.gmra.mrb[0].mxu0 %v8438
    %v8629 = vpop.f32.mrb[0].mxu0
    %v8630 = vadd.f32 %v8380, %v8629
    %v8631 = vpop.f32.mrb[0].mxu0
    %v8632 = vadd.f32 %v8380, %v8631
    %v8633 = vpop.f32.mrb[0].mxu0
    %v8634 = vadd.f32 %v8385, %v8633
    %v8635 = vpop.f32.mrb[0].mxu0
    %v8636 = vadd.f32 %v8385, %v8635
    %8637 = vmatprep.mubr.bf16.mxu0 0
    %8638 = vmatmul.mubr.bf16.gmra.mrb[0].mxu0 %v8441
    %v8639 = vpop.f32.mrb[0].mxu0
    %v8640 = vadd.f32 %v8390, %v8639
    %v8641 = vpop.f32.mrb[0].mxu0
    %v8642 = vadd.f32 %v8390, %v8641
    %v8643 = vpop.f32.mrb[0].mxu0
    %v8644 = vadd.f32 %v8395, %v8643
    %v8645 = vpop.f32.mrb[0].mxu0
    %v8646 = vadd.f32 %v8395, %v8645
    %8647 = vmatprep.mubr.bf16.mxu0 0
    %8648 = vmatmul.mubr.bf16.gmra.mrb[0].mxu0 %v8444
    %v8649 = vpop.f32.mrb[0].mxu0
    %v8650 = vadd.f32 %v8400, %v8649
    %v8651 = vpop.f32.mrb[0].mxu0
    %v8652 = vadd.f32 %v8400, %v8651
    %v8653 = vpop.f32.mrb[0].mxu0
    %v8654 = vadd.f32 %v8405, %v8653
    %v8655 = vpop.f32.mrb[0].mxu0
    %v8656 = vadd.f32 %v8405, %v8655
    %8657 = vmatprep.mubr.bf16.mxu0 0
    %8658 = vmatmul.mubr.bf16.gmra.mrb[0].mxu0 %v8447
    %v8659 = vpop.f32.mrb[0].mxu0
    %v8660 = vadd.f32 %v8410, %v8659
    %v8661 = vpop.f32.mrb[0].mxu0
    %v8662 = vadd.f32 %v8410, %v8661
    %v8663 = vpop.f32.mrb[0].mxu0
    %v8664 = vadd.f32 %v8415, %v8663
    %v8665 = vpop.f32.mrb[0].mxu0
    %v8666 = vadd.f32 %v8415, %v8665
    %8667 = vdwg.mxu0
    %8668 = vmatprep.subr.bf16.mxu0 %v8360
    %8669 = vmatpush1.bf16.msra.mxu0 %v8359
    %8670 = vmatprep.subr.bf16.mxu0 %v8368
    %8671 = vmatpush1.bf16.msra.mxu0 %v8367
    %8672 = vmatprep.subr.bf16.mxu0 0
    %8673 = vmatpush1.bf16.msra.mxu0 0
    %8674 = vmatprep.subr.bf16.mxu0 0
    %8675 = vmatpush1.bf16.msra.mxu0 0
    %8676 = vmatprep.subr.bf16.mxu0 0
    %8677 = vmatpush1.bf16.msra.mxu0 0
    %8678 = vmatprep.subr.bf16.mxu0 0
    %8679 = vmatpush1.bf16.msra.mxu0 0
    %8680 = vmatprep.subr.bf16.mxu0 0
    %8681 = vmatpush1.bf16.msra.mxu0 0
    %8682 = vmatprep.subr.bf16.mxu0 0
    %8683 = vmatpush1.bf16.msra.mxu0 0
    %8684 = vmatprep.subr.bf16.mxu0 0
    %8685 = vmatpush1.bf16.msra.mxu0 0
    %8686 = vmatprep.subr.bf16.mxu0 0
    %8687 = vmatpush1.bf16.msra.mxu0 0
    %8688 = vmatprep.subr.bf16.mxu0 0
    %8689 = vmatpush1.bf16.msra.mxu0 0
    %8690 = vmatprep.subr.bf16.mxu0 0
    %8691 = vmatpush1.bf16.msra.mxu0 0
    %8692 = vmatprep.subr.bf16.mxu0 0
    %8693 = vmatpush1.bf16.msra.mxu0 0
    %8694 = vmatprep.subr.bf16.mxu0 0
    %8695 = vmatpush1.bf16.msra.mxu0 0
    %8696 = vmatprep.subr.bf16.mxu0 0
    %8697 = vmatpush1.bf16.msra.mxu0 0
    %8698 = vmatprep.subr.bf16.mxu0 0
    %8699 = vmatpush1.bf16.msra.mxu0 0
    %8700 = vmatprep.mubr.bf16.mxu0 0
    %8701 = vmatmul.mubr.bf16.gmra.mrb[0].mxu0 %v8438
    %v8702 = vpop.f32.mrb[0].mxu0
    %v8703 = vadd.f32 %v8380, %v8702
    %v8704 = vpop.f32.mrb[0].mxu0
    %v8705 = vadd.f32 %v8380, %v8704
    %v8706 = vpop.f32.mrb[0].mxu0
    %v8707 = vadd.f32 %v8385, %v8706
    %v8708 = vpop.f32.mrb[0].mxu0
    %v8709 = vadd.f32 %v8385, %v8708
    %8710 = vmatprep.mubr.bf16.mxu0 0
    %8711 = vmatmul.mubr.bf16.gmra.mrb[0].mxu0 %v8441
    %v8712 = vpop.f32.mrb[0].mxu0
    %v8713 = vadd.f32 %v8390, %v8712
    %v8714 = vpop.f32.mrb[0].mxu0
    %v8715 = vadd.f32 %v8390, %v8714
    %v8716 = vpop.f32.mrb[0].mxu0
    %v8717 = vadd.f32 %v8395, %v8716
    %v8718 = vpop.f32.mrb[0].mxu0
    %v8719 = vadd.f32 %v8395, %v8718
    %8720 = vmatprep.mubr.bf16.mxu0 0
    %8721 = vmatmul.mubr.bf16.gmra.mrb[0].mxu0 %v8444
    %v8722 = vpop.f32.mrb[0].mxu0
    %v8723 = vadd.f32 %v8400, %v8722
    %v8724 = vpop.f32.mrb[0].mxu0
    %v8725 = vadd.f32 %v8400, %v8724
    %v8726 = vpop.f32.mrb[0].mxu0
    %v8727 = vadd.f32 %v8405, %v8726
    %v8728 = vpop.f32.mrb[0].mxu0
    %v8729 = vadd.f32 %v8405, %v8728
    %8730 = vmatprep.mubr.bf16.mxu0 0
    %8731 = vmatmul.mubr.bf16.gmra.mrb[0].mxu0 %v8447
    %v8732 = vpop.f32.mrb[0].mxu0
    %v8733 = vadd.f32 %v8410, %v8732
    %v8734 = vpop.f32.mrb[0].mxu0
    %v8735 = vadd.f32 %v8410, %v8734
    %v8736 = vpop.f32.mrb[0].mxu0
    %v8737 = vadd.f32 %v8415, %v8736
    %v8738 = vpop.f32.mrb[0].mxu0
    %v8739 = vadd.f32 %v8415, %v8738
    %8740 = vdwg.mxu0
    %v8741 = vmax.f32 %v8484, 0.0
    %v8742 = vmax.f32 %v8486, 0.0
    %v8743 = vmax.f32 %v8557, 0.0
    %v8744 = vmax.f32 %v8559, 0.0
    %v8745 = vmax.f32 %v8630, 0.0
    %v8746 = vmax.f32 %v8632, 0.0
    %v8747 = vmax.f32 %v8703, 0.0
    %v8748 = vmax.f32 %v8705, 0.0
    %v8749 = vmax.f32 %v8488, 0.0
    %v8750 = vmax.f32 %v8490, 0.0
    %v8751 = vmax.f32 %v8561, 0.0
    %v8752 = vmax.f32 %v8563, 0.0
    %v8753 = vmax.f32 %v8634, 0.0
    %v8754 = vmax.f32 %v8636, 0.0
    %v8755 = vmax.f32 %v8707, 0.0
    %v8756 = vmax.f32 %v8709, 0.0
    %v8757 = vmax.f32 %v8494, 0.0
    %v8758 = vmax.f32 %v8496, 0.0
    %v8759 = vmax.f32 %v8567, 0.0
    %v8760 = vmax.f32 %v8569, 0.0
    %v8761 = vmax.f32 %v8640, 0.0
    %v8762 = vmax.f32 %v8642, 0.0
    %v8763 = vmax.f32 %v8713, 0.0
    %v8764 = vmax.f32 %v8715, 0.0
    %v8765 = vmax.f32 %v8498, 0.0
    %v8766 = vmax.f32 %v8500, 0.0
    %v8767 = vmax.f32 %v8571, 0.0
    %v8768 = vmax.f32 %v8573, 0.0
    %v8769 = vmax.f32 %v8644, 0.0
    %v8770 = vmax.f32 %v8646, 0.0
    %v8771 = vmax.f32 %v8717, 0.0
    %v8772 = vmax.f32 %v8719, 0.0
    %v8773 = vmax.f32 %v8504, 0.0
    %v8774 = vmax.f32 %v8506, 0.0
    %v8775 = vmax.f32 %v8577, 0.0
    %v8776 = vmax.f32 %v8579, 0.0
    %v8777 = vmax.f32 %v8650, 0.0
    %v8778 = vmax.f32 %v8652, 0.0
    %v8779 = vmax.f32 %v8723, 0.0
    %v8780 = vmax.f32 %v8725, 0.0
    %v8781 = vmax.f32 %v8508, 0.0
    %v8782 = vmax.f32 %v8510, 0.0
    %v8783 = vmax.f32 %v8581, 0.0
    %v8784 = vmax.f32 %v8583, 0.0
    %v8785 = vmax.f32 %v8654, 0.0
    %v8786 = vmax.f32 %v8656, 0.0
    %v8787 = vmax.f32 %v8727, 0.0
    %v8788 = vmax.f32 %v8729, 0.0
    %v8789 = vmax.f32 %v8514, 0.0
    %v8790 = vmax.f32 %v8516, 0.0
    %v8791 = vmax.f32 %v8587, 0.0
    %v8792 = vmax.f32 %v8589, 0.0
    %v8793 = vmax.f32 %v8660, 0.0
    %v8794 = vmax.f32 %v8662, 0.0
    %v8795 = vmax.f32 %v8733, 0.0
    %v8796 = vmax.f32 %v8735, 0.0
    %v8797 = vmax.f32 %v8518, 0.0
    %v8798 = vmax.f32 %v8520, 0.0
    %v8799 = vmax.f32 %v8591, 0.0
    %v8800 = vmax.f32 %v8593, 0.0
    %v8801 = vmax.f32 %v8664, 0.0
    %v8802 = vmax.f32 %v8666, 0.0
    %v8803 = vmax.f32 %v8737, 0.0
    %v8804 = vmax.f32 %v8739, 0.0
    %v8805 = vld [vmem:[#allocation8 + $0x50] sm:$0xf]
    %v8806 = vld [vmem:[#allocation8 + $0x54] sm:$0xf]
    %v8807 = vld [vmem:[#allocation8 + $0x58] sm:$0xf]
    %v8808 = vld [vmem:[#allocation8 + $0x5c] sm:$0xf]
    %v8809 = vld [vmem:[#allocation8 + $0x60] sm:$0xf]
    %v8810 = vld [vmem:[#allocation8 + $0x64] sm:$0xf]
    %v8811 = vld [vmem:[#allocation8 + $0x68] sm:$0xf]
    %v8812 = vld [vmem:[#allocation8 + $0x6c] sm:$0xf]
    %v8813 = vpack.c.bf16 %v8749, %v8741
    %v8814 = vpack.c.bf16 %v8750, %v8742
    %v8815 = vpack.c.bf16 %v8751, %v8743
    %v8816 = vpack.c.bf16 %v8752, %v8744
    %v8817 = vpack.c.bf16 %v8753, %v8745
    %v8818 = vpack.c.bf16 %v8754, %v8746
    %v8819 = vpack.c.bf16 %v8755, %v8747
    %v8820 = vpack.c.bf16 %v8756, %v8748
    %v8821 = vpack.c.bf16 %v8765, %v8757
    %v8822 = vpack.c.bf16 %v8766, %v8758
    %v8823 = vpack.c.bf16 %v8767, %v8759
    %v8824 = vpack.c.bf16 %v8768, %v8760
    %v8825 = vpack.c.bf16 %v8769, %v8761
    %v8826 = vpack.c.bf16 %v8770, %v8762
    %v8827 = vpack.c.bf16 %v8771, %v8763
    %v8828 = vpack.c.bf16 %v8772, %v8764
    %v8829 = vpack.c.bf16 %v8781, %v8773
    %v8830 = vpack.c.bf16 %v8782, %v8774
    %v8831 = vpack.c.bf16 %v8783, %v8775
    %v8832 = vpack.c.bf16 %v8784, %v8776
    %v8833 = vpack.c.bf16 %v8785, %v8777
    %v8834 = vpack.c.bf16 %v8786, %v8778
    %v8835 = vpack.c.bf16 %v8787, %v8779
    %v8836 = vpack.c.bf16 %v8788, %v8780
    %v8837 = vpack.c.bf16 %v8797, %v8789
    %v8838 = vpack.c.bf16 %v8798, %v8790
    %v8839 = vpack.c.bf16 %v8799, %v8791
    %v8840 = vpack.c.bf16 %v8800, %v8792
    %v8841 = vpack.c.bf16 %v8801, %v8793
    %v8842 = vpack.c.bf16 %v8802, %v8794
    %v8843 = vpack.c.bf16 %v8803, %v8795
    %v8844 = vpack.c.bf16 %v8804, %v8796
    %8845 = vset.pattern.permute.xlu0 7
    %8846 = vperm.xlu0 %8845, %v8369
    %v8847 = vpop.permute.xlu0 %8846
    %8849 = vset.pattern.permute.xlu0 7
    %8850 = vperm.xlu0 %8849, %v8370
    %v8851 = vpop.permute.xlu0 %8850
    %8853 = vset.pattern.permute.xlu0 7
    %8854 = vperm.xlu0 %8853, %v8371
    %v8855 = vpop.permute.xlu0 %8854
    %8857 = vset.pattern.permute.xlu0 7
    %8858 = vperm.xlu0 %8857, %v8372
    %v8859 = vpop.permute.xlu0 %8858
    %8861 = vset.pattern.permute.xlu0 7
    %8862 = vperm.xlu0 %8861, %v8373
    %v8863 = vpop.permute.xlu0 %8862
    %8865 = vset.pattern.permute.xlu0 7
    %8866 = vperm.xlu0 %8865, %v8374
    %v8867 = vpop.permute.xlu0 %8866
    %8869 = vset.pattern.permute.xlu0 7
    %8870 = vperm.xlu0 %8869, %v8375
    %v8871 = vpop.permute.xlu0 %8870
    %8873 = vset.pattern.permute.xlu0 7
    %8874 = vperm.xlu0 %8873, %v8376
    %v8875 = vpop.permute.xlu0 %8874
    %v8885 = vunpack.c.l.b16 %v8805
    %v8886 = vunpack.c.l.b16 %v8806
    %v8887 = vunpack.c.l.b16 %v8807
    %v8888 = vunpack.c.l.b16 %v8808
    %v8889 = vunpack.c.l.b16 %v8809
    %v8890 = vunpack.c.l.b16 %v8810
    %v8891 = vunpack.c.l.b16 %v8811
    %v8892 = vunpack.c.l.b16 %v8812
    %v8893 = vpack.c.b16 %v8886, %v8885
    %v8894 = vpack.c.b16 %v8888, %v8887
    %v8895 = vpack.c.b16 %v8890, %v8889
    %v8896 = vpack.c.b16 %v8892, %v8891
    %v8898 = vsel %vm7445, %v8893, 0
    %v8901 = vsel %vm7445, %v8894, 0
    %v8904 = vsel %vm7445, %v8895, 0
    %v8907 = vsel %vm7445, %v8896, 0
    %8909 = vmatprep.subr.bf16.mxu0 %v8814
    %8910 = vmatpush1.bf16.msra.mxu0 %v8813
    %8911 = vmatprep.subr.bf16.mxu0 %v8822
    %8912 = vmatpush1.bf16.msra.mxu0 %v8821
    %8913 = vmatprep.subr.bf16.mxu0 %v8830
    %8914 = vmatpush1.bf16.msra.mxu0 %v8829
    %8915 = vmatprep.subr.bf16.mxu0 %v8838
    %8916 = vmatpush1.bf16.msra.mxu0 %v8837
    %8917 = vmatprep.subr.bf16.mxu0 0
    %8918 = vmatpush1.bf16.msra.mxu0 0
    %8919 = vmatprep.subr.bf16.mxu0 0
    %8920 = vmatpush1.bf16.msra.mxu0 0
    %8921 = vmatprep.subr.bf16.mxu0 0
    %8922 = vmatpush1.bf16.msra.mxu0 0
    %8923 = vmatprep.subr.bf16.mxu0 0
    %8924 = vmatpush1.bf16.msra.mxu0 0
    %8925 = vmatprep.subr.bf16.mxu0 0
    %8926 = vmatpush1.bf16.msra.mxu0 0
    %8927 = vmatprep.subr.bf16.mxu0 0
    %8928 = vmatpush1.bf16.msra.mxu0 0
    %8929 = vmatprep.subr.bf16.mxu0 0
    %8930 = vmatpush1.bf16.msra.mxu0 0
    %8931 = vmatprep.subr.bf16.mxu0 0
    %8932 = vmatpush1.bf16.msra.mxu0 0
    %8933 = vmatprep.subr.bf16.mxu0 0
    %8934 = vmatpush1.bf16.msra.mxu0 0
    %8935 = vmatprep.subr.bf16.mxu0 0
    %8936 = vmatpush1.bf16.msra.mxu0 0
    %8937 = vmatprep.subr.bf16.mxu0 0
    %8938 = vmatpush1.bf16.msra.mxu0 0
    %8939 = vmatprep.subr.bf16.mxu0 0
    %8940 = vmatpush1.bf16.msra.mxu0 0
    %8941 = vmatprep.mubr.bf16.mxu0 0
    %8942 = vmatmul.mubr.bf16.gmra.mrb[0].mxu0 %v8898
    %v8943 = vpop.f32.mrb[0].mxu0
    %v8944 = vadd.f32 %v8847, %v8943
    %v8945 = vpop.f32.mrb[0].mxu0
    %v8946 = vadd.f32 %v8847, %v8945
    %v8947 = vpop.f32.mrb[0].mxu0
    %v8948 = vadd.f32 %v8851, %v8947
    %v8949 = vpop.f32.mrb[0].mxu0
    %v8950 = vadd.f32 %v8851, %v8949
    %8951 = vmatprep.mubr.bf16.mxu0 0
    %8952 = vmatmul.mubr.bf16.gmra.mrb[0].mxu0 %v8901
    %v8953 = vpop.f32.mrb[0].mxu0
    %v8954 = vadd.f32 %v8855, %v8953
    %v8955 = vpop.f32.mrb[0].mxu0
    %v8956 = vadd.f32 %v8855, %v8955
    %v8957 = vpop.f32.mrb[0].mxu0
    %v8958 = vadd.f32 %v8859, %v8957
    %v8959 = vpop.f32.mrb[0].mxu0
    %v8960 = vadd.f32 %v8859, %v8959
    %8961 = vmatprep.mubr.bf16.mxu0 0
    %8962 = vmatmul.mubr.bf16.gmra.mrb[0].mxu0 %v8904
    %v8963 = vpop.f32.mrb[0].mxu0
    %v8964 = vadd.f32 %v8863, %v8963
    %v8965 = vpop.f32.mrb[0].mxu0
    %v8966 = vadd.f32 %v8863, %v8965
    %v8967 = vpop.f32.mrb[0].mxu0
    %v8968 = vadd.f32 %v8867, %v8967
    %v8969 = vpop.f32.mrb[0].mxu0
    %v8970 = vadd.f32 %v8867, %v8969
    %8971 = vmatprep.mubr.bf16.mxu0 0
    %8972 = vmatmul.mubr.bf16.gmra.mrb[0].mxu0 %v8907
    %v8973 = vpop.f32.mrb[0].mxu0
    %v8974 = vadd.f32 %v8871, %v8973
    %v8975 = vpop.f32.mrb[0].mxu0
    %v8976 = vadd.f32 %v8871, %v8975
    %v8977 = vpop.f32.mrb[0].mxu0
    %v8978 = vadd.f32 %v8875, %v8977
    %v8979 = vpop.f32.mrb[0].mxu0
    %v8980 = vadd.f32 %v8875, %v8979
    %8981 = vdwg.mxu0
    %8982 = vmatprep.subr.bf16.mxu0 %v8816
    %8983 = vmatpush1.bf16.msra.mxu0 %v8815
    %8984 = vmatprep.subr.bf16.mxu0 %v8824
    %8985 = vmatpush1.bf16.msra.mxu0 %v8823
    %8986 = vmatprep.subr.bf16.mxu0 %v8832
    %8987 = vmatpush1.bf16.msra.mxu0 %v8831
    %8988 = vmatprep.subr.bf16.mxu0 %v8840
    %8989 = vmatpush1.bf16.msra.mxu0 %v8839
    %8990 = vmatprep.subr.bf16.mxu0 0
    %8991 = vmatpush1.bf16.msra.mxu0 0
    %8992 = vmatprep.subr.bf16.mxu0 0
    %8993 = vmatpush1.bf16.msra.mxu0 0
    %8994 = vmatprep.subr.bf16.mxu0 0
    %8995 = vmatpush1.bf16.msra.mxu0 0
    %8996 = vmatprep.subr.bf16.mxu0 0
    %8997 = vmatpush1.bf16.msra.mxu0 0
    %8998 = vmatprep.subr.bf16.mxu0 0
    %8999 = vmatpush1.bf16.msra.mxu0 0
    %9000 = vmatprep.subr.bf16.mxu0 0
    %9001 = vmatpush1.bf16.msra.mxu0 0
    %9002 = vmatprep.subr.bf16.mxu0 0
    %9003 = vmatpush1.bf16.msra.mxu0 0
    %9004 = vmatprep.subr.bf16.mxu0 0
    %9005 = vmatpush1.bf16.msra.mxu0 0
    %9006 = vmatprep.subr.bf16.mxu0 0
    %9007 = vmatpush1.bf16.msra.mxu0 0
    %9008 = vmatprep.subr.bf16.mxu0 0
    %9009 = vmatpush1.bf16.msra.mxu0 0
    %9010 = vmatprep.subr.bf16.mxu0 0
    %9011 = vmatpush1.bf16.msra.mxu0 0
    %9012 = vmatprep.subr.bf16.mxu0 0
    %9013 = vmatpush1.bf16.msra.mxu0 0
    %9014 = vmatprep.mubr.bf16.mxu0 0
    %9015 = vmatmul.mubr.bf16.gmra.mrb[0].mxu0 %v8898
    %v9016 = vpop.f32.mrb[0].mxu0
    %v9017 = vadd.f32 %v8847, %v9016
    %v9018 = vpop.f32.mrb[0].mxu0
    %v9019 = vadd.f32 %v8847, %v9018
    %v9020 = vpop.f32.mrb[0].mxu0
    %v9021 = vadd.f32 %v8851, %v9020
    %v9022 = vpop.f32.mrb[0].mxu0
    %v9023 = vadd.f32 %v8851, %v9022
    %9024 = vmatprep.mubr.bf16.mxu0 0
    %9025 = vmatmul.mubr.bf16.gmra.mrb[0].mxu0 %v8901
    %v9026 = vpop.f32.mrb[0].mxu0
    %v9027 = vadd.f32 %v8855, %v9026
    %v9028 = vpop.f32.mrb[0].mxu0
    %v9029 = vadd.f32 %v8855, %v9028
    %v9030 = vpop.f32.mrb[0].mxu0
    %v9031 = vadd.f32 %v8859, %v9030
    %v9032 = vpop.f32.mrb[0].mxu0
    %v9033 = vadd.f32 %v8859, %v9032
    %9034 = vmatprep.mubr.bf16.mxu0 0
    %9035 = vmatmul.mubr.bf16.gmra.mrb[0].mxu0 %v8904
    %v9036 = vpop.f32.mrb[0].mxu0
    %v9037 = vadd.f32 %v8863, %v9036
    %v9038 = vpop.f32.mrb[0].mxu0
    %v9039 = vadd.f32 %v8863, %v9038
    %v9040 = vpop.f32.mrb[0].mxu0
    %v9041 = vadd.f32 %v8867, %v9040
    %v9042 = vpop.f32.mrb[0].mxu0
    %v9043 = vadd.f32 %v8867, %v9042
    %9044 = vmatprep.mubr.bf16.mxu0 0
    %9045 = vmatmul.mubr.bf16.gmra.mrb[0].mxu0 %v8907
    %v9046 = vpop.f32.mrb[0].mxu0
    %v9047 = vadd.f32 %v8871, %v9046
    %v9048 = vpop.f32.mrb[0].mxu0
    %v9049 = vadd.f32 %v8871, %v9048
    %v9050 = vpop.f32.mrb[0].mxu0
    %v9051 = vadd.f32 %v8875, %v9050
    %v9052 = vpop.f32.mrb[0].mxu0
    %v9053 = vadd.f32 %v8875, %v9052
    %9054 = vdwg.mxu0
    %9055 = vmatprep.subr.bf16.mxu0 %v8818
    %9056 = vmatpush1.bf16.msra.mxu0 %v8817
    %9057 = vmatprep.subr.bf16.mxu0 %v8826
    %9058 = vmatpush1.bf16.msra.mxu0 %v8825
    %9059 = vmatprep.subr.bf16.mxu0 %v8834
    %9060 = vmatpush1.bf16.msra.mxu0 %v8833
    %9061 = vmatprep.subr.bf16.mxu0 %v8842
    %9062 = vmatpush1.bf16.msra.mxu0 %v8841
    %9063 = vmatprep.subr.bf16.mxu0 0
    %9064 = vmatpush1.bf16.msra.mxu0 0
    %9065 = vmatprep.subr.bf16.mxu0 0
    %9066 = vmatpush1.bf16.msra.mxu0 0
    %9067 = vmatprep.subr.bf16.mxu0 0
    %9068 = vmatpush1.bf16.msra.mxu0 0
    %9069 = vmatprep.subr.bf16.mxu0 0
    %9070 = vmatpush1.bf16.msra.mxu0 0
    %9071 = vmatprep.subr.bf16.mxu0 0
    %9072 = vmatpush1.bf16.msra.mxu0 0
    %9073 = vmatprep.subr.bf16.mxu0 0
    %9074 = vmatpush1.bf16.msra.mxu0 0
    %9075 = vmatprep.subr.bf16.mxu0 0
    %9076 = vmatpush1.bf16.msra.mxu0 0
    %9077 = vmatprep.subr.bf16.mxu0 0
    %9078 = vmatpush1.bf16.msra.mxu0 0
    %9079 = vmatprep.subr.bf16.mxu0 0
    %9080 = vmatpush1.bf16.msra.mxu0 0
    %9081 = vmatprep.subr.bf16.mxu0 0
    %9082 = vmatpush1.bf16.msra.mxu0 0
    %9083 = vmatprep.subr.bf16.mxu0 0
    %9084 = vmatpush1.bf16.msra.mxu0 0
    %9085 = vmatprep.subr.bf16.mxu0 0
    %9086 = vmatpush1.bf16.msra.mxu0 0
    %9087 = vmatprep.mubr.bf16.mxu0 0
    %9088 = vmatmul.mubr.bf16.gmra.mrb[0].mxu0 %v8898
    %v9089 = vpop.f32.mrb[0].mxu0
    %v9090 = vadd.f32 %v8847, %v9089
    %v9091 = vpop.f32.mrb[0].mxu0
    %v9092 = vadd.f32 %v8847, %v9091
    %v9093 = vpop.f32.mrb[0].mxu0
    %v9094 = vadd.f32 %v8851, %v9093
    %v9095 = vpop.f32.mrb[0].mxu0
    %v9096 = vadd.f32 %v8851, %v9095
    %9097 = vmatprep.mubr.bf16.mxu0 0
    %9098 = vmatmul.mubr.bf16.gmra.mrb[0].mxu0 %v8901
    %v9099 = vpop.f32.mrb[0].mxu0
    %v9100 = vadd.f32 %v8855, %v9099
    %v9101 = vpop.f32.mrb[0].mxu0
    %v9102 = vadd.f32 %v8855, %v9101
    %v9103 = vpop.f32.mrb[0].mxu0
    %v9104 = vadd.f32 %v8859, %v9103
    %v9105 = vpop.f32.mrb[0].mxu0
    %v9106 = vadd.f32 %v8859, %v9105
    %9107 = vmatprep.mubr.bf16.mxu0 0
    %9108 = vmatmul.mubr.bf16.gmra.mrb[0].mxu0 %v8904
    %v9109 = vpop.f32.mrb[0].mxu0
    %v9110 = vadd.f32 %v8863, %v9109
    %v9111 = vpop.f32.mrb[0].mxu0
    %v9112 = vadd.f32 %v8863, %v9111
    %v9113 = vpop.f32.mrb[0].mxu0
    %v9114 = vadd.f32 %v8867, %v9113
    %v9115 = vpop.f32.mrb[0].mxu0
    %v9116 = vadd.f32 %v8867, %v9115
    %9117 = vmatprep.mubr.bf16.mxu0 0
    %9118 = vmatmul.mubr.bf16.gmra.mrb[0].mxu0 %v8907
    %v9119 = vpop.f32.mrb[0].mxu0
    %v9120 = vadd.f32 %v8871, %v9119
    %v9121 = vpop.f32.mrb[0].mxu0
    %v9122 = vadd.f32 %v8871, %v9121
    %v9123 = vpop.f32.mrb[0].mxu0
    %v9124 = vadd.f32 %v8875, %v9123
    %v9125 = vpop.f32.mrb[0].mxu0
    %v9126 = vadd.f32 %v8875, %v9125
    %9127 = vdwg.mxu0
    %9128 = vmatprep.subr.bf16.mxu0 %v8820
    %9129 = vmatpush1.bf16.msra.mxu0 %v8819
    %9130 = vmatprep.subr.bf16.mxu0 %v8828
    %9131 = vmatpush1.bf16.msra.mxu0 %v8827
    %9132 = vmatprep.subr.bf16.mxu0 %v8836
    %9133 = vmatpush1.bf16.msra.mxu0 %v8835
    %9134 = vmatprep.subr.bf16.mxu0 %v8844
    %9135 = vmatpush1.bf16.msra.mxu0 %v8843
    %9136 = vmatprep.subr.bf16.mxu0 0
    %9137 = vmatpush1.bf16.msra.mxu0 0
    %9138 = vmatprep.subr.bf16.mxu0 0
    %9139 = vmatpush1.bf16.msra.mxu0 0
    %9140 = vmatprep.subr.bf16.mxu0 0
    %9141 = vmatpush1.bf16.msra.mxu0 0
    %9142 = vmatprep.subr.bf16.mxu0 0
    %9143 = vmatpush1.bf16.msra.mxu0 0
    %9144 = vmatprep.subr.bf16.mxu0 0
    %9145 = vmatpush1.bf16.msra.mxu0 0
    %9146 = vmatprep.subr.bf16.mxu0 0
    %9147 = vmatpush1.bf16.msra.mxu0 0
    %9148 = vmatprep.subr.bf16.mxu0 0
    %9149 = vmatpush1.bf16.msra.mxu0 0
    %9150 = vmatprep.subr.bf16.mxu0 0
    %9151 = vmatpush1.bf16.msra.mxu0 0
    %9152 = vmatprep.subr.bf16.mxu0 0
    %9153 = vmatpush1.bf16.msra.mxu0 0
    %9154 = vmatprep.subr.bf16.mxu0 0
    %9155 = vmatpush1.bf16.msra.mxu0 0
    %9156 = vmatprep.subr.bf16.mxu0 0
    %9157 = vmatpush1.bf16.msra.mxu0 0
    %9158 = vmatprep.subr.bf16.mxu0 0
    %9159 = vmatpush1.bf16.msra.mxu0 0
    %9160 = vmatprep.mubr.bf16.mxu0 0
    %9161 = vmatmul.mubr.bf16.gmra.mrb[0].mxu0 %v8898
    %v9162 = vpop.f32.mrb[0].mxu0
    %v9163 = vadd.f32 %v8847, %v9162
    %v9164 = vpop.f32.mrb[0].mxu0
    %v9165 = vadd.f32 %v8847, %v9164
    %v9166 = vpop.f32.mrb[0].mxu0
    %v9167 = vadd.f32 %v8851, %v9166
    %v9168 = vpop.f32.mrb[0].mxu0
    %v9169 = vadd.f32 %v8851, %v9168
    %9170 = vmatprep.mubr.bf16.mxu0 0
    %9171 = vmatmul.mubr.bf16.gmra.mrb[0].mxu0 %v8901
    %v9172 = vpop.f32.mrb[0].mxu0
    %v9173 = vadd.f32 %v8855, %v9172
    %v9174 = vpop.f32.mrb[0].mxu0
    %v9175 = vadd.f32 %v8855, %v9174
    %v9176 = vpop.f32.mrb[0].mxu0
    %v9177 = vadd.f32 %v8859, %v9176
    %v9178 = vpop.f32.mrb[0].mxu0
    %v9179 = vadd.f32 %v8859, %v9178
    %9180 = vmatprep.mubr.bf16.mxu0 0
    %9181 = vmatmul.mubr.bf16.gmra.mrb[0].mxu0 %v8904
    %v9182 = vpop.f32.mrb[0].mxu0
    %v9183 = vadd.f32 %v8863, %v9182
    %v9184 = vpop.f32.mrb[0].mxu0
    %v9185 = vadd.f32 %v8863, %v9184
    %v9186 = vpop.f32.mrb[0].mxu0
    %v9187 = vadd.f32 %v8867, %v9186
    %v9188 = vpop.f32.mrb[0].mxu0
    %v9189 = vadd.f32 %v8867, %v9188
    %9190 = vmatprep.mubr.bf16.mxu0 0
    %9191 = vmatmul.mubr.bf16.gmra.mrb[0].mxu0 %v8907
    %v9192 = vpop.f32.mrb[0].mxu0
    %v9193 = vadd.f32 %v8871, %v9192
    %v9194 = vpop.f32.mrb[0].mxu0
    %v9195 = vadd.f32 %v8871, %v9194
    %v9196 = vpop.f32.mrb[0].mxu0
    %v9197 = vadd.f32 %v8875, %v9196
    %v9198 = vpop.f32.mrb[0].mxu0
    %v9199 = vadd.f32 %v8875, %v9198
    %9200 = vdwg.mxu0
    %v9201 = vmax.f32 %v8944, 0.0
    %v9202 = vmax.f32 %v8946, 0.0
    %v9203 = vmax.f32 %v9017, 0.0
    %v9204 = vmax.f32 %v9019, 0.0
    %v9205 = vmax.f32 %v9090, 0.0
    %v9206 = vmax.f32 %v9092, 0.0
    %v9207 = vmax.f32 %v9163, 0.0
    %v9208 = vmax.f32 %v9165, 0.0
    %v9209 = vmax.f32 %v8948, 0.0
    %v9210 = vmax.f32 %v8950, 0.0
    %v9211 = vmax.f32 %v9021, 0.0
    %v9212 = vmax.f32 %v9023, 0.0
    %v9213 = vmax.f32 %v9094, 0.0
    %v9214 = vmax.f32 %v9096, 0.0
    %v9215 = vmax.f32 %v9167, 0.0
    %v9216 = vmax.f32 %v9169, 0.0
    %v9217 = vmax.f32 %v8954, 0.0
    %v9218 = vmax.f32 %v8956, 0.0
    %v9219 = vmax.f32 %v9027, 0.0
    %v9220 = vmax.f32 %v9029, 0.0
    %v9221 = vmax.f32 %v9100, 0.0
    %v9222 = vmax.f32 %v9102, 0.0
    %v9223 = vmax.f32 %v9173, 0.0
    %v9224 = vmax.f32 %v9175, 0.0
    %v9225 = vmax.f32 %v8958, 0.0
    %v9226 = vmax.f32 %v8960, 0.0
    %v9227 = vmax.f32 %v9031, 0.0
    %v9228 = vmax.f32 %v9033, 0.0
    %v9229 = vmax.f32 %v9104, 0.0
    %v9230 = vmax.f32 %v9106, 0.0
    %v9231 = vmax.f32 %v9177, 0.0
    %v9232 = vmax.f32 %v9179, 0.0
    %v9233 = vmax.f32 %v8964, 0.0
    %v9234 = vmax.f32 %v8966, 0.0
    %v9235 = vmax.f32 %v9037, 0.0
    %v9236 = vmax.f32 %v9039, 0.0
    %v9237 = vmax.f32 %v9110, 0.0
    %v9238 = vmax.f32 %v9112, 0.0
    %v9239 = vmax.f32 %v9183, 0.0
    %v9240 = vmax.f32 %v9185, 0.0
    %v9241 = vmax.f32 %v8968, 0.0
    %v9242 = vmax.f32 %v8970, 0.0
    %v9243 = vmax.f32 %v9041, 0.0
    %v9244 = vmax.f32 %v9043, 0.0
    %v9245 = vmax.f32 %v9114, 0.0
    %v9246 = vmax.f32 %v9116, 0.0
    %v9247 = vmax.f32 %v9187, 0.0
    %v9248 = vmax.f32 %v9189, 0.0
    %v9249 = vmax.f32 %v8974, 0.0
    %v9250 = vmax.f32 %v8976, 0.0
    %v9251 = vmax.f32 %v9047, 0.0
    %v9252 = vmax.f32 %v9049, 0.0
    %v9253 = vmax.f32 %v9120, 0.0
    %v9254 = vmax.f32 %v9122, 0.0
    %v9255 = vmax.f32 %v9193, 0.0
    %v9256 = vmax.f32 %v9195, 0.0
    %v9257 = vmax.f32 %v8978, 0.0
    %v9258 = vmax.f32 %v8980, 0.0
    %v9259 = vmax.f32 %v9051, 0.0
    %v9260 = vmax.f32 %v9053, 0.0
    %v9261 = vmax.f32 %v9124, 0.0
    %v9262 = vmax.f32 %v9126, 0.0
    %v9263 = vmax.f32 %v9197, 0.0
    %v9264 = vmax.f32 %v9199, 0.0
    %v9265 = vld [vmem:[#allocation6] sm:$0xf]
    %9267 = vset.pattern.permute.xlu0 8
    %9268 = vperm.xlu0 %9267, %v9265
    %v9269 = vpop.permute.xlu0 %9268
    %9271 = vrot.lane.b32.xlu0 %v9265, 112
    %v9272 = vpop.permute.xlu0 %9271
    %v9273 = vsel %vm7445, %v9272, 0
    %9275 = vmatprep.subr.mxu0 %v9202
    %9276 = vmatpush1.msra.mxu0 %v9201
    %9277 = vmatprep.subr.mxu0 %v9210
    %9278 = vmatpush1.msra.mxu0 %v9209
    %9279 = vmatprep.subr.mxu0 %v9218
    %9280 = vmatpush1.msra.mxu0 %v9217
    %9281 = vmatprep.subr.mxu0 %v9226
    %9282 = vmatpush1.msra.mxu0 %v9225
    %9283 = vmatprep.subr.mxu0 %v9234
    %9284 = vmatpush1.msra.mxu0 %v9233
    %9285 = vmatprep.subr.mxu0 %v9242
    %9286 = vmatpush1.msra.mxu0 %v9241
    %9287 = vmatprep.subr.mxu0 %v9250
    %9288 = vmatpush1.msra.mxu0 %v9249
    %9289 = vmatprep.subr.mxu0 %v9258
    %9290 = vmatpush1.msra.mxu0 %v9257
    %9291 = vmatprep.subr.mxu0 0.0
    %9292 = vmatpush1.msra.mxu0 0.0
    %9293 = vmatprep.subr.mxu0 0.0
    %9294 = vmatpush1.msra.mxu0 0.0
    %9295 = vmatprep.subr.mxu0 0.0
    %9296 = vmatpush1.msra.mxu0 0.0
    %9297 = vmatprep.subr.mxu0 0.0
    %9298 = vmatpush1.msra.mxu0 0.0
    %9299 = vmatprep.subr.mxu0 0.0
    %9300 = vmatpush1.msra.mxu0 0.0
    %9301 = vmatprep.subr.mxu0 0.0
    %9302 = vmatpush1.msra.mxu0 0.0
    %9303 = vmatprep.subr.mxu0 0.0
    %9304 = vmatpush1.msra.mxu0 0.0
    %9305 = vmatprep.subr.mxu0 0.0
    %9306 = vmatpush1.msra.mxu0 0.0
    %9307 = vmatprep.subr.mxu0 0.0
    %9308 = vmatpush1.msra.mxu0 0.0
    %9309 = vmatprep.subr.mxu0 0.0
    %9310 = vmatpush1.msra.mxu0 0.0
    %9311 = vmatprep.subr.mxu0 0.0
    %9312 = vmatpush1.msra.mxu0 0.0
    %9313 = vmatprep.subr.mxu0 0.0
    %9314 = vmatpush1.msra.mxu0 0.0
    %9315 = vmatprep.subr.mxu0 0.0
    %9316 = vmatpush1.msra.mxu0 0.0
    %9317 = vmatprep.subr.mxu0 0.0
    %9318 = vmatpush1.msra.mxu0 0.0
    %9319 = vmatprep.subr.mxu0 0.0
    %9320 = vmatpush1.msra.mxu0 0.0
    %9321 = vmatprep.subr.mxu0 0.0
    %9322 = vmatpush1.msra.mxu0 0.0
    %9323 = vmatprep.subr.mxu0 0.0
    %9324 = vmatpush1.msra.mxu0 0.0
    %9325 = vmatprep.subr.mxu0 0.0
    %9326 = vmatpush1.msra.mxu0 0.0
    %9327 = vmatprep.subr.mxu0 0.0
    %9328 = vmatpush1.msra.mxu0 0.0
    %9329 = vmatprep.subr.mxu0 0.0
    %9330 = vmatpush1.msra.mxu0 0.0
    %9331 = vmatprep.subr.mxu0 0.0
    %9332 = vmatpush1.msra.mxu0 0.0
    %9333 = vmatprep.subr.mxu0 0.0
    %9334 = vmatpush1.msra.mxu0 0.0
    %9335 = vmatprep.subr.mxu0 0.0
    %9336 = vmatpush1.msra.mxu0 0.0
    %9337 = vmatprep.subr.mxu0 0.0
    %9338 = vmatpush1.msra.mxu0 0.0
    %9339 = vmatprep.mubr.f32.mxu0 0.0
    %9340 = vmatmul.mubr.f32.gmra.mrb[0].mxu0 %v9273
    %v9341 = vpop.f32.mrb[0].mxu0
    %v9342 = vadd.f32 %v9269, %v9341
    %v9343 = vpop.f32.mrb[0].mxu0
    %v9344 = vadd.f32 %v9269, %v9343
    %9345 = vdwg.mxu0
    %9346 = vmatprep.subr.mxu0 %v9204
    %9347 = vmatpush1.msra.mxu0 %v9203
    %9348 = vmatprep.subr.mxu0 %v9212
    %9349 = vmatpush1.msra.mxu0 %v9211
    %9350 = vmatprep.subr.mxu0 %v9220
    %9351 = vmatpush1.msra.mxu0 %v9219
    %9352 = vmatprep.subr.mxu0 %v9228
    %9353 = vmatpush1.msra.mxu0 %v9227
    %9354 = vmatprep.subr.mxu0 %v9236
    %9355 = vmatpush1.msra.mxu0 %v9235
    %9356 = vmatprep.subr.mxu0 %v9244
    %9357 = vmatpush1.msra.mxu0 %v9243
    %9358 = vmatprep.subr.mxu0 %v9252
    %9359 = vmatpush1.msra.mxu0 %v9251
    %9360 = vmatprep.subr.mxu0 %v9260
    %9361 = vmatpush1.msra.mxu0 %v9259
    %9362 = vmatprep.subr.mxu0 0.0
    %9363 = vmatpush1.msra.mxu0 0.0
    %9364 = vmatprep.subr.mxu0 0.0
    %9365 = vmatpush1.msra.mxu0 0.0
    %9366 = vmatprep.subr.mxu0 0.0
    %9367 = vmatpush1.msra.mxu0 0.0
    %9368 = vmatprep.subr.mxu0 0.0
    %9369 = vmatpush1.msra.mxu0 0.0
    %9370 = vmatprep.subr.mxu0 0.0
    %9371 = vmatpush1.msra.mxu0 0.0
    %9372 = vmatprep.subr.mxu0 0.0
    %9373 = vmatpush1.msra.mxu0 0.0
    %9374 = vmatprep.subr.mxu0 0.0
    %9375 = vmatpush1.msra.mxu0 0.0
    %9376 = vmatprep.subr.mxu0 0.0
    %9377 = vmatpush1.msra.mxu0 0.0
    %9378 = vmatprep.subr.mxu0 0.0
    %9379 = vmatpush1.msra.mxu0 0.0
    %9380 = vmatprep.subr.mxu0 0.0
    %9381 = vmatpush1.msra.mxu0 0.0
    %9382 = vmatprep.subr.mxu0 0.0
    %9383 = vmatpush1.msra.mxu0 0.0
    %9384 = vmatprep.subr.mxu0 0.0
    %9385 = vmatpush1.msra.mxu0 0.0
    %9386 = vmatprep.subr.mxu0 0.0
    %9387 = vmatpush1.msra.mxu0 0.0
    %9388 = vmatprep.subr.mxu0 0.0
    %9389 = vmatpush1.msra.mxu0 0.0
    %9390 = vmatprep.subr.mxu0 0.0
    %9391 = vmatpush1.msra.mxu0 0.0
    %9392 = vmatprep.subr.mxu0 0.0
    %9393 = vmatpush1.msra.mxu0 0.0
    %9394 = vmatprep.subr.mxu0 0.0
    %9395 = vmatpush1.msra.mxu0 0.0
    %9396 = vmatprep.subr.mxu0 0.0
    %9397 = vmatpush1.msra.mxu0 0.0
    %9398 = vmatprep.subr.mxu0 0.0
    %9399 = vmatpush1.msra.mxu0 0.0
    %9400 = vmatprep.subr.mxu0 0.0
    %9401 = vmatpush1.msra.mxu0 0.0
    %9402 = vmatprep.subr.mxu0 0.0
    %9403 = vmatpush1.msra.mxu0 0.0
    %9404 = vmatprep.subr.mxu0 0.0
    %9405 = vmatpush1.msra.mxu0 0.0
    %9406 = vmatprep.subr.mxu0 0.0
    %9407 = vmatpush1.msra.mxu0 0.0
    %9408 = vmatprep.subr.mxu0 0.0
    %9409 = vmatpush1.msra.mxu0 0.0
    %9410 = vmatprep.mubr.f32.mxu0 0.0
    %9411 = vmatmul.mubr.f32.gmra.mrb[0].mxu0 %v9273
    %v9412 = vpop.f32.mrb[0].mxu0
    %v9413 = vadd.f32 %v9269, %v9412
    %v9414 = vpop.f32.mrb[0].mxu0
    %v9415 = vadd.f32 %v9269, %v9414
    %9416 = vdwg.mxu0
    %9417 = vmatprep.subr.mxu0 %v9206
    %9418 = vmatpush1.msra.mxu0 %v9205
    %9419 = vmatprep.subr.mxu0 %v9214
    %9420 = vmatpush1.msra.mxu0 %v9213
    %9421 = vmatprep.subr.mxu0 %v9222
    %9422 = vmatpush1.msra.mxu0 %v9221
    %9423 = vmatprep.subr.mxu0 %v9230
    %9424 = vmatpush1.msra.mxu0 %v9229
    %9425 = vmatprep.subr.mxu0 %v9238
    %9426 = vmatpush1.msra.mxu0 %v9237
    %9427 = vmatprep.subr.mxu0 %v9246
    %9428 = vmatpush1.msra.mxu0 %v9245
    %9429 = vmatprep.subr.mxu0 %v9254
    %9430 = vmatpush1.msra.mxu0 %v9253
    %9431 = vmatprep.subr.mxu0 %v9262
    %9432 = vmatpush1.msra.mxu0 %v9261
    %9433 = vmatprep.subr.mxu0 0.0
    %9434 = vmatpush1.msra.mxu0 0.0
    %9435 = vmatprep.subr.mxu0 0.0
    %9436 = vmatpush1.msra.mxu0 0.0
    %9437 = vmatprep.subr.mxu0 0.0
    %9438 = vmatpush1.msra.mxu0 0.0
    %9439 = vmatprep.subr.mxu0 0.0
    %9440 = vmatpush1.msra.mxu0 0.0
    %9441 = vmatprep.subr.mxu0 0.0
    %9442 = vmatpush1.msra.mxu0 0.0
    %9443 = vmatprep.subr.mxu0 0.0
    %9444 = vmatpush1.msra.mxu0 0.0
    %9445 = vmatprep.subr.mxu0 0.0
    %9446 = vmatpush1.msra.mxu0 0.0
    %9447 = vmatprep.subr.mxu0 0.0
    %9448 = vmatpush1.msra.mxu0 0.0
    %9449 = vmatprep.subr.mxu0 0.0
    %9450 = vmatpush1.msra.mxu0 0.0
    %9451 = vmatprep.subr.mxu0 0.0
    %9452 = vmatpush1.msra.mxu0 0.0
    %9453 = vmatprep.subr.mxu0 0.0
    %9454 = vmatpush1.msra.mxu0 0.0
    %9455 = vmatprep.subr.mxu0 0.0
    %9456 = vmatpush1.msra.mxu0 0.0
    %9457 = vmatprep.subr.mxu0 0.0
    %9458 = vmatpush1.msra.mxu0 0.0
    %9459 = vmatprep.subr.mxu0 0.0
    %9460 = vmatpush1.msra.mxu0 0.0
    %9461 = vmatprep.subr.mxu0 0.0
    %9462 = vmatpush1.msra.mxu0 0.0
    %9463 = vmatprep.subr.mxu0 0.0
    %9464 = vmatpush1.msra.mxu0 0.0
    %9465 = vmatprep.subr.mxu0 0.0
    %9466 = vmatpush1.msra.mxu0 0.0
    %9467 = vmatprep.subr.mxu0 0.0
    %9468 = vmatpush1.msra.mxu0 0.0
    %9469 = vmatprep.subr.mxu0 0.0
    %9470 = vmatpush1.msra.mxu0 0.0
    %9471 = vmatprep.subr.mxu0 0.0
    %9472 = vmatpush1.msra.mxu0 0.0
    %9473 = vmatprep.subr.mxu0 0.0
    %9474 = vmatpush1.msra.mxu0 0.0
    %9475 = vmatprep.subr.mxu0 0.0
    %9476 = vmatpush1.msra.mxu0 0.0
    %9477 = vmatprep.subr.mxu0 0.0
    %9478 = vmatpush1.msra.mxu0 0.0
    %9479 = vmatprep.subr.mxu0 0.0
    %9480 = vmatpush1.msra.mxu0 0.0
    %9481 = vmatprep.mubr.f32.mxu0 0.0
    %9482 = vmatmul.mubr.f32.gmra.mrb[0].mxu0 %v9273
    %v9483 = vpop.f32.mrb[0].mxu0
    %v9484 = vadd.f32 %v9269, %v9483
    %v9485 = vpop.f32.mrb[0].mxu0
    %v9486 = vadd.f32 %v9269, %v9485
    %9487 = vdwg.mxu0
    %9488 = vmatprep.subr.mxu0 %v9208
    %9489 = vmatpush1.msra.mxu0 %v9207
    %9490 = vmatprep.subr.mxu0 %v9216
    %9491 = vmatpush1.msra.mxu0 %v9215
    %9492 = vmatprep.subr.mxu0 %v9224
    %9493 = vmatpush1.msra.mxu0 %v9223
    %9494 = vmatprep.subr.mxu0 %v9232
    %9495 = vmatpush1.msra.mxu0 %v9231
    %9496 = vmatprep.subr.mxu0 %v9240
    %9497 = vmatpush1.msra.mxu0 %v9239
    %9498 = vmatprep.subr.mxu0 %v9248
    %9499 = vmatpush1.msra.mxu0 %v9247
    %9500 = vmatprep.subr.mxu0 %v9256
    %9501 = vmatpush1.msra.mxu0 %v9255
    %9502 = vmatprep.subr.mxu0 %v9264
    %9503 = vmatpush1.msra.mxu0 %v9263
    %9504 = vmatprep.subr.mxu0 0.0
    %9505 = vmatpush1.msra.mxu0 0.0
    %9506 = vmatprep.subr.mxu0 0.0
    %9507 = vmatpush1.msra.mxu0 0.0
    %9508 = vmatprep.subr.mxu0 0.0
    %9509 = vmatpush1.msra.mxu0 0.0
    %9510 = vmatprep.subr.mxu0 0.0
    %9511 = vmatpush1.msra.mxu0 0.0
    %9512 = vmatprep.subr.mxu0 0.0
    %9513 = vmatpush1.msra.mxu0 0.0
    %9514 = vmatprep.subr.mxu0 0.0
    %9515 = vmatpush1.msra.mxu0 0.0
    %9516 = vmatprep.subr.mxu0 0.0
    %9517 = vmatpush1.msra.mxu0 0.0
    %9518 = vmatprep.subr.mxu0 0.0
    %9519 = vmatpush1.msra.mxu0 0.0
    %9520 = vmatprep.subr.mxu0 0.0
    %9521 = vmatpush1.msra.mxu0 0.0
    %9522 = vmatprep.subr.mxu0 0.0
    %9523 = vmatpush1.msra.mxu0 0.0
    %9524 = vmatprep.subr.mxu0 0.0
    %9525 = vmatpush1.msra.mxu0 0.0
    %9526 = vmatprep.subr.mxu0 0.0
    %9527 = vmatpush1.msra.mxu0 0.0
    %9528 = vmatprep.subr.mxu0 0.0
    %9529 = vmatpush1.msra.mxu0 0.0
    %9530 = vmatprep.subr.mxu0 0.0
    %9531 = vmatpush1.msra.mxu0 0.0
    %9532 = vmatprep.subr.mxu0 0.0
    %9533 = vmatpush1.msra.mxu0 0.0
    %9534 = vmatprep.subr.mxu0 0.0
    %9535 = vmatpush1.msra.mxu0 0.0
    %9536 = vmatprep.subr.mxu0 0.0
    %9537 = vmatpush1.msra.mxu0 0.0
    %9538 = vmatprep.subr.mxu0 0.0
    %9539 = vmatpush1.msra.mxu0 0.0
    %9540 = vmatprep.subr.mxu0 0.0
    %9541 = vmatpush1.msra.mxu0 0.0
    %9542 = vmatprep.subr.mxu0 0.0
    %9543 = vmatpush1.msra.mxu0 0.0
    %9544 = vmatprep.subr.mxu0 0.0
    %9545 = vmatpush1.msra.mxu0 0.0
    %9546 = vmatprep.subr.mxu0 0.0
    %9547 = vmatpush1.msra.mxu0 0.0
    %9548 = vmatprep.subr.mxu0 0.0
    %9549 = vmatpush1.msra.mxu0 0.0
    %9550 = vmatprep.subr.mxu0 0.0
    %9551 = vmatpush1.msra.mxu0 0.0
    %9552 = vmatprep.mubr.f32.mxu0 0.0
    %9553 = vmatmul.mubr.f32.gmra.mrb[0].mxu0 %v9273
    %v9554 = vpop.f32.mrb[0].mxu0
    %v9555 = vadd.f32 %v9269, %v9554
    %v9556 = vpop.f32.mrb[0].mxu0
    %v9557 = vadd.f32 %v9269, %v9556
    %9558 = vdwg.mxu0
    %v9559 = vtanh.pop %v9342
    %v9560 = vtanh.pop %v9344
    %v9561 = vtanh.pop %v9413
    %v9562 = vtanh.pop %v9415
    %v9563 = vtanh.pop %v9484
    %v9564 = vtanh.pop %v9486
    %v9565 = vtanh.pop %v9555
    %v9566 = vtanh.pop %v9557
    %9567 = vset.pattern.permute.xlu0 9
    %9568 = vperm.xlu0 %9567, %v9265
    %v9569 = vpop.permute.xlu0 %9568
    %v9571 = vmul.f32 %v9559, %v9569
    %v9572 = vmul.f32 %v9560, %v9569
    %v9573 = vmul.f32 %v9561, %v9569
    %v9574 = vmul.f32 %v9562, %v9569
    %v9575 = vmul.f32 %v9563, %v9569
    %v9576 = vmul.f32 %v9564, %v9569
    %v9577 = vmul.f32 %v9565, %v9569
    %v9578 = vmul.f32 %v9566, %v9569
    %v9587 = vcombine.low %v9571, %v9572
    %v9588 = vcombine.low %v9573, %v9574
    %v9589 = vcombine.low %v9575, %v9576
    %v9590 = vcombine.low %v9577, %v9578
    %9595 = vst [vmem:[#allocation9] sm:$0xff] %v9587
    %9596 = vst [vmem:[#allocation9 + $0x8] sm:$0xff] %v9588
    %9597 = vst [vmem:[#allocation9 + $0x10] sm:$0xff] %v9589
    %9598 = vst [vmem:[#allocation9 + $0x18] sm:$0xff] %v9590
    // Predicated region
    $region26: #{tpu_custom_call.1} parent=1 // pred_check
      _
    $region27: #{tpu_custom_call.1} parent=1 // pred_check_branch
      %9600 = sbr.rel (0) target = $region29
    $region28: #{tpu_custom_call.1} parent=1 // pred_region
      %s9602 = ssub.s32 512, 512
      %9603 = vsyncadd [#allocation5], %s9602
      %s9605 = sshll.u32 [#allocation9], 4
      %s9606 = int_to_ptr.vmem [resolvable:$true] %s9605
      %9608 = dma.vmem_to_hbm [thread:$0]  %s9606, 512, %s3, [#allocation5]
    $region29: #{tpu_custom_call.1} parent=1 // pred_fallthru
      _
    // Predicated region
    $region30: #{tpu_custom_call.1} parent=1 // pred_check
      _
    $region31: #{tpu_custom_call.1} parent=1 // pred_check_branch
      %9610 = sbr.rel (0) target = $region33
    $region32: #{tpu_custom_call.1} parent=1 // pred_region
      %9611 = dma.done [#allocation5], 512
    $region33: #{tpu_custom_call.1} parent=1 // pred_fallthru
      _
    %9612 = vsyncpa [#allocation4], 1
    %9613 = vsyncpa [#allocation7], 1
    %9614 = vsyncpa [#allocation5], 1

</llo_original>
